<compile_context>
chip_gen: v7x
topology: tpu7x:2x2x1
jax: 0.10.0
libtpu: 0.0.40
codegen_flags: <defaults>
</compile_context>

<pallas_src>
import math

import jax
import jax.numpy as jnp
from jax.experimental import pallas as pl
from jax.experimental.pallas import tpu as pltpu

# Make the pure-JAX reference use full f32 matmuls (matches the in-kernel math).
jax.config.update("jax_default_matmul_precision", "highest")


# -----------------------------------------------------------------------------
# Pallas kernel: one grid step == one block of T_BLK time steps of the filter.
# -----------------------------------------------------------------------------
def egblstm_kernel(
    x_ref, init_ref, lstm_w_ref, lstm_b_ref, w0_ref, b0_ref, w1_ref, b1_ref,
    ft_ref, hT_ref, kff_ref, phs_ref, e12_ref, noise_ref,
    out_ref,
    h_sc, lc_sc, st_sc, p_sc,
):
    f32 = jnp.float32
    t_blk, B, M = x_ref.shape
    H = h_sc.shape[1]
    D = st_sc.shape[1]
    DD, MM, DM = D * D, M * M, D * M
    head_w = w1_ref.shape[1]          # D + 2*DD + 2*MM

    is_first = pl.program_id(0) == 0

    # ----- initialize the recurrent state carried across time blocks -----
    @pl.when(is_first)
    def _():
        h_sc[...] = init_ref[:, H:2 * H]
        lc_sc[...] = init_ref[:, 2 * H:3 * H]
        st_sc[...] = init_ref[:, 3 * H:3 * H + D]
        p_sc[...] = init_ref[:, 3 * H + D:3 * H + D + DD]

    h0 = h_sc[...]
    lc0 = lc_sc[...]
    st0 = st_sc[...]
    p0 = p_sc[...]
    # Memory c and LSTM h only differ at the very first time step (different inits);
    # afterwards c == h, so one scratch buffer carries both across blocks.
    m_first = is_first.astype(f32)
    c0 = m_first * init_ref[:, 0:H] + (1.0 - m_first) * h0

    # ----- loop-invariant weights / constants, hoisted out of the time loop -----
    # (the 1/60 input normalization is already folded into the st / z rows)
    w_c = lstm_w_ref[0:H, :]          # [H, 4H]   multiplies memory c
    w_s = lstm_w_ref[H:H + D, :]      # [D, 4H]   multiplies state (scale folded)
    w_h = lstm_w_ref[H + D:, :]       # [H, 4H]   multiplies lstm hidden
    b_lstm = jnp.broadcast_to(lstm_b_ref[...], (B, 4 * H))

    w0_h = w0_ref[0:H, :]             # [H, 3H]
    w0_s = w0_ref[H:H + D, :]         # [D, 3H]   (scale folded)
    w0_z = w0_ref[H + D:, :]          # [M, 3H]   (scale folded)
    b0_b = jnp.broadcast_to(b0_ref[...], (B, w0_ref.shape[1]))
    w1 = w1_ref[...]                  # [3H, D + 2*DD + 2*MM]
    b1_b = jnp.broadcast_to(b1_ref[...], (B, head_w))

    fT = ft_ref[...]                  # [D, D]   trans^T
    hT = hT_ref[...]                  # [D, M]   hmat^T
    kff_T = kff_ref[...]              # [DD, DD]   vec(P)      -> vec(F P F^T)
    phs_op = phs_ref[...]             # [DD, DM+MM] vec(P_pred) -> [P_pred H^T | H P_pred H^T]
    E1d = e12_ref[:, 0:DD]            # [D, DD]  v -> v_i replicated along j
    E2d = e12_ref[:, DD:2 * DD]       # [D, DD]  v -> v_j replicated along i
    qn_b = jnp.broadcast_to(noise_ref[:, 0:DD], (B, DD))
    rn_b = jnp.broadcast_to(noise_ref[:, DD:DD + MM], (B, MM))

    def _acc(terms):
        out = terms[0]
        for term in terms[1:]:
            out = out + term
        return out

    def step(t, carry):
        c_prev, h_prev, lc_prev, st_prev, p_flat = carry
        z = x_ref[t]                               # [B, M]

        # ----- MUG: LSTM cell (pre-split weights -> no lane concatenation) -----
        gates = (jnp.dot(c_prev, w_c, preferred_element_type=f32)
                 + jnp.dot(st_prev, w_s, preferred_element_type=f32)
                 + jnp.dot(h_prev, w_h, preferred_element_type=f32)
                 + b_lstm)                          # [B, 4H]
        i_g = jax.nn.sigmoid(gates[:, 0:H])
        f_g = jax.nn.sigmoid(gates[:, H:2 * H])
        g_g = jnp.tanh(gates[:, 2 * H:3 * H])
        o_g = jax.nn.sigmoid(gates[:, 3 * H:4 * H])
        lc_new = f_g * lc_prev + i_g * g_g
        h_new = o_g * jnp.tanh(lc_new)              # == c_update

        # ----- fused SPG + SUG MLPs (single layer-0 / layer-1 matmuls) -----
        hid = jnp.tanh(jnp.dot(h_new, w0_h, preferred_element_type=f32)
                       + jnp.dot(st_prev, w0_s, preferred_element_type=f32)
                       + jnp.dot(z, w0_z, preferred_element_type=f32)
                       + b0_b)                      # [B, 3H]
        head = jnp.dot(hid, w1, preferred_element_type=f32) + b1_b
        # ffom^T is folded into w1 -> head[:, :D] is already delta_k_f @ ffom^T
        state_incr = head[:, 0:D]
        pkf_flat = head[:, D:D + DD] * head[:, D + DD:D + 2 * DD]          # vec(pv pv^T)
        pkh_flat = (head[:, D + 2 * DD:D + 2 * DD + MM]
                    * head[:, D + 2 * DD + MM:D + 2 * DD + 2 * MM])        # vec(pvh pvh^T)

        # ----- SPG: state / covariance prediction (flattened covariance) -----
        state_pred = jnp.dot(st_prev, fT, preferred_element_type=f32) + state_incr
        p_pred_flat = (jnp.dot(p_flat, kff_T, preferred_element_type=f32)
                       + pkf_flat + qn_b)                                  # [B, DD]

        # ----- SUG: innovation, gain, update -----
        inna = z - jnp.dot(state_pred, hT, preferred_element_type=f32)     # [B, M]
        phs = jnp.dot(p_pred_flat, phs_op, preferred_element_type=f32)     # [B, DM+MM]
        pht = [phs[:, m * D:(m + 1) * D] for m in range(M)]                # cols of P_pred H^T
        s_flat = phs[:, DM:DM + MM] + pkh_flat + rn_b                      # vec(S), [B, MM]

        # 2x2 inverse via adjugate (exact division, no approximate reciprocal).
        # TODO(synk): generalize matrix inversion for meas_dim != 2 (no in-kernel linalg.inv).
        s00 = s_flat[:, 0:1]
        s01 = s_flat[:, 1:2]
        s10 = s_flat[:, 2:3]
        s11 = s_flat[:, 3:4]
        rdet = 1.0 / (s00 * s11 - s01 * s10)
        s_inv = [[s11 * rdet, -s01 * rdet], [-s10 * rdet, s00 * rdet]]

        # Kalman gain columns K[:, :, n] (each [B, D]), state update.
        k_cols = [_acc([pht[m] * s_inv[m][n] for m in range(M)]) for n in range(M)]
        state_upd = state_pred + _acc([k_cols[n] * inna[:, n:n + 1] for n in range(M)])

        # p_update = p_pred - (K S) K^T, kept in flattened form throughout.
        s_el = [[s_flat[:, n * M + m2:n * M + m2 + 1] for m2 in range(M)] for n in range(M)]
        ks_cols = [_acc([k_cols[n] * s_el[n][m2] for n in range(M)]) for m2 in range(M)]
        ksk_flat = _acc([jnp.dot(ks_cols[m2], E1d, preferred_element_type=f32)
                         * jnp.dot(k_cols[m2], E2d, preferred_element_type=f32)
                         for m2 in range(M)])
        p_upd_flat = p_pred_flat - ksk_flat

        out_ref[t] = state_upd.astype(out_ref.dtype)
        return (h_new, h_new, lc_new, state_upd, p_upd_flat)

    _, h_f, lc_f, st_f, p_f = jax.lax.fori_loop(0, t_blk, step, (c0, h0, lc0, st0, p0))

    h_sc[...] = h_f
    lc_sc[...] = lc_f
    st_sc[...] = st_f
    p_sc[...] = p_f


def _const_spec(arr):
    nd = arr.ndim
    return pl.BlockSpec(arr.shape, lambda t, _nd=nd: (0,) * _nd)


# -----------------------------------------------------------------------------
# Wrapper: packs weights / constants and launches the time-blocked kernel.
# -----------------------------------------------------------------------------
def egblstm_pallas(x, target, P, C, time_block=256):
    f32 = jnp.float32
    B, S, M = x.shape
    D = C["trans"].shape[0]
    H = P["c0"].shape[1]
    DD, MM, DM = D * D, M * M, D * M
    assert M == 2, "in-kernel adjugate inverse assumes meas_dim == 2"

    scale = jnp.asarray(1.0 / 60.0, f32)   # input normalization, folded into weights

    t_blk = max(1, min(int(time_block), S))
    n_blk = (S + t_blk - 1) // t_blk
    s_pad = n_blk * t_blk

    x_t = jnp.transpose(x, (1, 0, 2)).astype(f32)             # [S, B, M] time-major
    if s_pad != S:
        x_t = jnp.pad(x_t, ((0, s_pad - S), (0, 0), (0, 0)))  # padded steps sliced off later

    # packed initial recurrent state: [c0 | lstm_h0 | lstm_c0 | state0 | vec(P0)]
    state0 = jnp.zeros((B, D), f32).at[:, :4].set(target[:, 0, :4].astype(f32))
    p0 = jnp.broadcast_to(jnp.eye(D, dtype=f32).reshape(1, DD), (B, DD))
    init = jnp.concatenate([P["c0"], P["lh0"], P["lc0"], state0, p0], axis=1)

    # packed LSTM weights (rows: memory-c block | state block (1/60 folded) | hidden block)
    lstm_w = jnp.concatenate(
        [P["wih_T"][:H], P["wih_T"][H:] * scale, P["whh_T"]], axis=0)       # [2H+D, 4H]
    lstm_b = P["b_lstm"]                                                    # [1, 4H]

    # fused MLP layer 0: columns = [F first-order | F second-order | H second-order],
    # rows = [c_update | state (1/60 folded) | measurement (1/60 folded)]
    zeros_z = jnp.zeros((M, 2 * H), f32)
    w0_hrows = jnp.concatenate([P["wf0"][:H], P["wp0"][:H], P["wh0"][:H]], axis=1)
    w0_srows = jnp.concatenate([P["wf0"][H:], P["wp0"][H:], P["wh0"][H:H + D]], axis=1) * scale
    w0_zrows = jnp.concatenate([zeros_z, P["wh0"][H + D:]], axis=1) * scale
    w0 = jnp.concatenate([w0_hrows, w0_srows, w0_zrows], axis=0)            # [H+D+M, 3H]
    b0 = jnp.concatenate([P["bf0"], P["bp0"], P["bh0"]], axis=1)            # [1, 3H]

    # fused layer 1 with (a) ffom^T folded into the delta_k_f columns and
    # (b) the pv/pvh outer-product expansions folded in via Kronecker selectors.
    eD = jnp.eye(D, dtype=f32)
    eM = jnp.eye(M, dtype=f32)
    E1d = jnp.kron(eD, jnp.ones((1, D), f32))       # [D, DD]
    E2d = jnp.kron(jnp.ones((1, D), f32), eD)       # [D, DD]
    E1m = jnp.kron(eM, jnp.ones((1, M), f32))       # [M, MM]
    E2m = jnp.kron(jnp.ones((1, M), f32), eM)       # [M, MM]
    gT = C["ffom"].T                                # [Fd, D]
    head_w = D + 2 * DD + 2 * MM
    w1 = jnp.zeros((3 * H, head_w), f32)
    w1 = w1.at[0:H, 0:D].set(P["wf1"] @ gT)
    w1 = w1.at[H:2 * H, D:D + DD].set(P["wp1"] @ E1d)
    w1 = w1.at[H:2 * H, D + DD:D + 2 * DD].set(P["wp1"] @ E2d)
    w1 = w1.at[2 * H:3 * H, D + 2 * DD:D + 2 * DD + MM].set(P["wh1"] @ E1m)
    w1 = w1.at[2 * H:3 * H, D + 2 * DD + MM:].set(P["wh1"] @ E2m)
    b1 = jnp.concatenate([P["bf1"] @ gT, P["bp1"] @ E1d, P["bp1"] @ E2d,
                          P["bh1"] @ E1m, P["bh1"] @ E2m], axis=1)          # [1, head_w]

    # constant model operators (all used as 2-D right-multipliers inside the kernel)
    trans, hmat = C["trans"], C["hmat"]
    ft = trans.T                                                            # [D, D]
    hT = hmat.T                                                             # [D, M]
    kff_T = jnp.kron(trans, trans).T                                        # vec(P) -> vec(F P F^T)
    opht = jnp.einsum("jd,ml->jlmd", eD, hmat).reshape(DD, DM)              # vec(P_pred) -> cols of P_pred H^T
    khh_T = jnp.kron(hmat, hmat).T                                          # vec(P_pred) -> vec(H P_pred H^T)
    phs_op = jnp.concatenate([opht, khh_T], axis=1)                         # [DD, DM+MM]
    e12 = jnp.concatenate([E1d, E2d], axis=1)                               # [D, 2*DD]
    noise = jnp.concatenate([C["qn"].reshape(1, DD), C["rn"].reshape(1, MM)], axis=1)

    inputs = [x_t, init, lstm_w, lstm_b, w0, b0, w1, b1,
              ft, hT, kff_T, phs_op, e12, noise]
    in_specs = [pl.BlockSpec((t_blk, B, M), lambda t: (t, 0, 0))] + \
               [_const_spec(a) for a in inputs[1:]]
    out_spec = pl.BlockSpec((t_blk, B, D), lambda t: (t, 0, 0))

    grid_spec = pltpu.PrefetchScalarGridSpec(
        num_scalar_prefetch=0,
        grid=(n_blk,),
        in_specs=in_specs,
        out_specs=out_spec,
        scratch_shapes=[
            pltpu.VMEM((B, H), f32),      # memory / lstm hidden (identical after t=0)
            pltpu.VMEM((B, H), f32),      # lstm cell
            pltpu.VMEM((B, D), f32),      # filtered state
            pltpu.VMEM((B, DD), f32),     # covariance, flattened row-major
        ],
    )

    out = pl.pallas_call(
        egblstm_kernel,
        out_shape=jax.ShapeDtypeStruct((s_pad, B, D), f32),
        grid_spec=grid_spec,
        compiler_params=pltpu.CompilerParams(dimension_semantics=("arbitrary",)),
    )(*inputs)
    return jnp.transpose(out[:S], (1, 0, 2))                                # [B, S, D]


# -----------------------------------------------------------------------------
# Deterministic parameter / constant construction
# -----------------------------------------------------------------------------
def init_egblstm_params(key, B, H, D, M, Fd):
    ks = iter(jax.random.split(key, 32))

    def u(shape, bound):
        return jax.random.uniform(next(ks), shape, jnp.float32, -bound, bound)

    kb = 1.0 / math.sqrt(H)
    wih = u((4 * H, H + D), kb)
    whh = u((4 * H, H), kb)
    bih = u((4 * H,), kb)
    bhh = u((4 * H,), kb)

    def linear(in_f, out_f):
        b = 1.0 / math.sqrt(in_f)
        return u((in_f, out_f), b), u((1, out_f), b)     # stored already transposed: [in, out]

    wf0, bf0 = linear(D + H, H)
    wf1, bf1 = linear(H, Fd)
    wp0, bp0 = linear(D + H, H)
    wp1, bp1 = linear(H, D)
    wh0, bh0 = linear(D + H + M, H)
    wh1, bh1 = linear(H, M)

    # Deterministic stand-ins for the (otherwise random) xavier_uniform "start" tensors.
    c0 = u((B, H), math.sqrt(6.0 / (1 * H + B * H)))
    lh0 = u((B, H), math.sqrt(6.0 / (H + B)))
    lc0 = u((B, H), math.sqrt(6.0 / (H + B)))

    return dict(
        wih_T=wih.T, whh_T=whh.T, b_lstm=(bih + bhh).reshape(1, 4 * H),
        wf0=wf0, bf0=bf0, wf1=wf1, bf1=bf1,
        wp0=wp0, bp0=bp0, wp1=wp1, bp1=bp1,
        wh0=wh0, bh0=bh0, wh1=wh1, bh1=bh1,
        c0=c0, lh0=lh0, lc0=lc0,
    )


def make_model_consts(dt=1.0):
    trans = jnp.array([[1, 0, dt, 0],
                       [0, 1, 0, dt],
                       [0, 0, 1, 0],
                       [0, 0, 0, 1]], jnp.float32)                 # [D, D]
    ffom = jnp.array([[dt * dt / 2, 0],
                      [0, dt * dt / 2],
                      [dt, 0],
                      [0, dt]], jnp.float32)                       # [D, Fd]
    hmat = jnp.array([[1, 0, 0, 0],
                      [0, 1, 0, 0]], jnp.float32)                  # [M, D]
    qn = 0.1 * jnp.eye(4, dtype=jnp.float32)
    rn = 1.0 * jnp.eye(2, dtype=jnp.float32)
    return dict(trans=trans, ffom=ffom, hmat=hmat, qn=qn, rn=rn)


# -----------------------------------------------------------------------------
# Pure-JAX reference (mirrors the PyTorch forward) for a correctness check
# -----------------------------------------------------------------------------
def egblstm_ref(x, target, P, C):
    B, S, M = x.shape
    D = C["trans"].shape[0]
    H = P["c0"].shape[1]
    c, lh, lc = P["c0"], P["lh0"], P["lc0"]
    st = jnp.zeros((B, D), jnp.float32).at[:, :4].set(target[:, 0, :4])
    p = jnp.broadcast_to(jnp.eye(D, dtype=jnp.float32), (B, D, D))
    outs = []
    for t in range(S):
        z = x[:, t, :]
        st_n, z_n = st / 60.0, z / 60.0
        lstm_in = jnp.concatenate([c, st_n], axis=-1)
        gates = lstm_in @ P["wih_T"] + lh @ P["whh_T"] + P["b_lstm"]
        i_g = jax.nn.sigmoid(gates[:, :H]); f_g = jax.nn.sigmoid(gates[:, H:2 * H])
        g_g = jnp.tanh(gates[:, 2 * H:3 * H]); o_g = jax.nn.sigmoid(gates[:, 3 * H:])
        lc = f_g * lc + i_g * g_g
        lh = o_g * jnp.tanh(lc)
        c = lh
        feat = jnp.concatenate([c, st_n], axis=-1)
        dkf = jnp.tanh(feat @ P["wf0"] + P["bf0"]) @ P["wf1"] + P["bf1"]
        state_pred = st @ C["trans"].T + dkf @ C["ffom"].T
        pv = jnp.tanh(feat @ P["wp0"] + P["bp0"]) @ P["wp1"] + P["bp1"]
        pkf = pv[:, :, None] * pv[:, None, :]
        p_pred = jnp.einsum('ij,bjk,lk->bil', C["trans"], p, C["trans"]) + pkf + C["qn"]
        inna = z - state_pred @ C["hmat"].T
        feat_h = jnp.concatenate([c, st_n, z_n], axis=-1)
        pvh = jnp.tanh(feat_h @ P["wh0"] + P["bh0"]) @ P["wh1"] + P["bh1"]
        pkh = pvh[:, :, None] * pvh[:, None, :]
        s = jnp.einsum('ij,bjk,lk->bil', C["hmat"], p_pred, C["hmat"]) + pkh + C["rn"]
        s_inv = jnp.linalg.inv(s)
        pht = jnp.einsum('bij,kj->bik', p_pred, C["hmat"])
        k = jnp.einsum('bdm,bmn->bdn', pht, s_inv)
        st = state_pred + jnp.einsum('bdm,bm->bd', k, inna)
        p = p_pred - jnp.einsum('bdm,bmn,ben->bde', k, s, k)
        outs.append(st)
    return jnp.stack(outs, axis=1)


# -----------------------------------------------------------------------------
if __name__ == "__main__":
    B, S, H, D, M, Fd = 4, 8, 32, 4, 2, 2

    key = jax.random.PRNGKey(0)
    kx, kt, kp = jax.random.split(key, 3)
    x = jax.random.normal(kx, (B, S, M), jnp.float32) * 5.0        # measurements
    target = jax.random.normal(kt, (B, S, D), jnp.float32) * 5.0   # ground-truth track (init only)

    P = init_egblstm_params(kp, B, H, D, M, Fd)
    C = make_model_consts(dt=1.0)

    out = egblstm_pallas(x, target, P, C)
    out = jax.block_until_ready(out)

    assert out.shape == (B, S, D)
    assert bool(jnp.all(jnp.isfinite(out)))

    ref = egblstm_ref(x, target, P, C)
    assert jnp.allclose(out, ref, rtol=1e-2, atol=1e-2), \
        f"max abs diff {float(jnp.max(jnp.abs(out - ref)))}"

    print("KERNEL_OK")
</pallas_src>

<mosaic_0001>
module attributes {stable_mosaic.version = 11 : i64} {
  func.func @egblstm_kernel(%arg0: i32, %arg1: memref<8x4x2xf32, #tpu.memory_space<vmem>>, %arg2: memref<4x116xf32, #tpu.memory_space<vmem>>, %arg3: memref<68x128xf32, #tpu.memory_space<vmem>>, %arg4: memref<1x128xf32, #tpu.memory_space<vmem>>, %arg5: memref<38x96xf32, #tpu.memory_space<vmem>>, %arg6: memref<1x96xf32, #tpu.memory_space<vmem>>, %arg7: memref<96x44xf32, #tpu.memory_space<vmem>>, %arg8: memref<1x44xf32, #tpu.memory_space<vmem>>, %arg9: memref<4x4xf32, #tpu.memory_space<vmem>>, %arg10: memref<4x2xf32, #tpu.memory_space<vmem>>, %arg11: memref<16x16xf32, #tpu.memory_space<vmem>>, %arg12: memref<16x12xf32, #tpu.memory_space<vmem>>, %arg13: memref<4x32xf32, #tpu.memory_space<vmem>>, %arg14: memref<1x20xf32, #tpu.memory_space<vmem>>, %arg15: memref<8x4x4xf32, #tpu.memory_space<vmem>>, %arg16: memref<4x32xf32, #tpu.memory_space<vmem>>, %arg17: memref<4x32xf32, #tpu.memory_space<vmem>>, %arg18: memref<4x4xf32, #tpu.memory_space<vmem>>, %arg19: memref<4x16xf32, #tpu.memory_space<vmem>>) attributes {dimension_semantics = [#tpu.dimension_semantics<arbitrary>], iteration_bounds = array<i64: 1>, scalar_prefetch = 0 : i64, scratch_operands = 4 : i64, tpu.core_type = #tpu.core_type<tc>, window_params = [{transform_indices = @transform_0, window_bounds = array<i64: 8, 4, 2>}, {pipeline_mode = #tpu.pipeline_mode<synchronous>, transform_indices = @transform_1, window_bounds = array<i64: 4, 116>}, {pipeline_mode = #tpu.pipeline_mode<synchronous>, transform_indices = @transform_2, window_bounds = array<i64: 68, 128>}, {pipeline_mode = #tpu.pipeline_mode<synchronous>, transform_indices = @transform_3, window_bounds = array<i64: 1, 128>}, {pipeline_mode = #tpu.pipeline_mode<synchronous>, transform_indices = @transform_4, window_bounds = array<i64: 38, 96>}, {pipeline_mode = #tpu.pipeline_mode<synchronous>, transform_indices = @transform_5, window_bounds = array<i64: 1, 96>}, {pipeline_mode = #tpu.pipeline_mode<synchronous>, transform_indices = @transform_6, window_bounds = array<i64: 96, 44>}, {pipeline_mode = #tpu.pipeline_mode<synchronous>, transform_indices = @transform_7, window_bounds = array<i64: 1, 44>}, {pipeline_mode = #tpu.pipeline_mode<synchronous>, transform_indices = @transform_8, window_bounds = array<i64: 4, 4>}, {pipeline_mode = #tpu.pipeline_mode<synchronous>, transform_indices = @transform_9, window_bounds = array<i64: 4, 2>}, {pipeline_mode = #tpu.pipeline_mode<synchronous>, transform_indices = @transform_10, window_bounds = array<i64: 16, 16>}, {pipeline_mode = #tpu.pipeline_mode<synchronous>, transform_indices = @transform_11, window_bounds = array<i64: 16, 12>}, {pipeline_mode = #tpu.pipeline_mode<synchronous>, transform_indices = @transform_12, window_bounds = array<i64: 4, 32>}, {pipeline_mode = #tpu.pipeline_mode<synchronous>, transform_indices = @transform_13, window_bounds = array<i64: 1, 20>}, {transform_indices = @transform_14, window_bounds = array<i64: 8, 4, 4>}]} {
    %c0_i32 = arith.constant 0 : i32
    %0 = arith.cmpi eq, %arg0, %c0_i32 : i32
    %1 = arith.extui %0 : i1 to i32
    %c0_i32_0 = arith.constant 0 : i32
    %2 = arith.cmpi ne, %1, %c0_i32_0 : i32
    scf.if %2 {
      %c0_53 = arith.constant 0 : index
      %c32_54 = arith.constant 32 : index
      %50 = vector.load %arg2[%c0_53, %c32_54] : memref<4x116xf32, #tpu.memory_space<vmem>>, vector<4x32xf32>
      %c0_55 = arith.constant 0 : index
      %c0_56 = arith.constant 0 : index
      %51 = vector.load %arg16[%c0_55, %c0_56] : memref<4x32xf32, #tpu.memory_space<vmem>>, vector<4x32xf32>
      tpu.vector_store %arg16[%c0_55, %c0_56], %50 {strides = array<i32>} : memref<4x32xf32, #tpu.memory_space<vmem>>, vector<4x32xf32>,
      %c0_57 = arith.constant 0 : index
      %c64 = arith.constant 64 : index
      %52 = vector.load %arg2[%c0_57, %c64] : memref<4x116xf32, #tpu.memory_space<vmem>>, vector<4x32xf32>
      %c0_58 = arith.constant 0 : index
      %c0_59 = arith.constant 0 : index
      %53 = vector.load %arg17[%c0_58, %c0_59] : memref<4x32xf32, #tpu.memory_space<vmem>>, vector<4x32xf32>
      tpu.vector_store %arg17[%c0_58, %c0_59], %52 {strides = array<i32>} : memref<4x32xf32, #tpu.memory_space<vmem>>, vector<4x32xf32>,
      %c0_60 = arith.constant 0 : index
      %c96 = arith.constant 96 : index
      %54 = vector.load %arg2[%c0_60, %c96] : memref<4x116xf32, #tpu.memory_space<vmem>>, vector<4x4xf32>
      %c0_61 = arith.constant 0 : index
      %c0_62 = arith.constant 0 : index
      %55 = vector.load %arg18[%c0_61, %c0_62] : memref<4x4xf32, #tpu.memory_space<vmem>>, vector<4x4xf32>
      tpu.vector_store %arg18[%c0_61, %c0_62], %54 {strides = array<i32>} : memref<4x4xf32, #tpu.memory_space<vmem>>, vector<4x4xf32>,
      %c0_63 = arith.constant 0 : index
      %c100 = arith.constant 100 : index
      %56 = vector.load %arg2[%c0_63, %c100] : memref<4x116xf32, #tpu.memory_space<vmem>>, vector<4x16xf32>
      %c0_64 = arith.constant 0 : index
      %c0_65 = arith.constant 0 : index
      %57 = vector.load %arg19[%c0_64, %c0_65] : memref<4x16xf32, #tpu.memory_space<vmem>>, vector<4x16xf32>
      tpu.vector_store %arg19[%c0_64, %c0_65], %56 {strides = array<i32>} : memref<4x16xf32, #tpu.memory_space<vmem>>, vector<4x16xf32>,
    } else {
    }
    %c0 = arith.constant 0 : index
    %c0_1 = arith.constant 0 : index
    %3 = vector.load %arg16[%c0, %c0_1] : memref<4x32xf32, #tpu.memory_space<vmem>>, vector<4x32xf32>
    %c0_2 = arith.constant 0 : index
    %c0_3 = arith.constant 0 : index
    %4 = vector.load %arg17[%c0_2, %c0_3] : memref<4x32xf32, #tpu.memory_space<vmem>>, vector<4x32xf32>
    %c0_4 = arith.constant 0 : index
    %c0_5 = arith.constant 0 : index
    %5 = vector.load %arg18[%c0_4, %c0_5] : memref<4x4xf32, #tpu.memory_space<vmem>>, vector<4x4xf32>
    %c0_6 = arith.constant 0 : index
    %c0_7 = arith.constant 0 : index
    %6 = vector.load %arg19[%c0_6, %c0_7] : memref<4x16xf32, #tpu.memory_space<vmem>>, vector<4x16xf32>
    %7 = arith.extui %0 : i1 to i32
    %8 = arith.sitofp %7 : i32 to f32
    %c0_8 = arith.constant 0 : index
    %c0_9 = arith.constant 0 : index
    %9 = vector.load %arg2[%c0_8, %c0_9] : memref<4x116xf32, #tpu.memory_space<vmem>>, vector<4x32xf32>
    %10 = vector.broadcast %8 : f32 to vector<4x32xf32>
    %11 = arith.mulf %10, %9 : vector<4x32xf32>
    %cst = arith.constant 1.000000e+00 : f32
    %12 = arith.subf %cst, %8 : f32
    %13 = vector.broadcast %12 : f32 to vector<4x32xf32>
    %14 = arith.mulf %13, %3 : vector<4x32xf32>
    %15 = arith.addf %11, %14 : vector<4x32xf32>
    %c0_10 = arith.constant 0 : index
    %c0_11 = arith.constant 0 : index
    %16 = vector.load %arg3[%c0_10, %c0_11] : memref<68x128xf32, #tpu.memory_space<vmem>>, vector<32x128xf32>
    %c32 = arith.constant 32 : index
    %c0_12 = arith.constant 0 : index
    %17 = vector.load %arg3[%c32, %c0_12] : memref<68x128xf32, #tpu.memory_space<vmem>>, vector<4x128xf32>
    %c36 = arith.constant 36 : index
    %c0_13 = arith.constant 0 : index
    %18 = vector.load %arg3[%c36, %c0_13] : memref<68x128xf32, #tpu.memory_space<vmem>>, vector<32x128xf32>
    %c0_14 = arith.constant 0 : index
    %c0_15 = arith.constant 0 : index
    %19 = vector.load %arg4[%c0_14, %c0_15] : memref<1x128xf32, #tpu.memory_space<vmem>>, vector<1x128xf32>
    %20 = vector.shape_cast %19 : vector<1x128xf32> to vector<1x128xf32>
    %21 = vector.broadcast %20 : vector<1x128xf32> to vector<4x128xf32>
    %c0_16 = arith.constant 0 : index
    %c0_17 = arith.constant 0 : index
    %22 = vector.load %arg5[%c0_16, %c0_17] : memref<38x96xf32, #tpu.memory_space<vmem>>, vector<32x96xf32>
    %c32_18 = arith.constant 32 : index
    %c0_19 = arith.constant 0 : index
    %23 = vector.load %arg5[%c32_18, %c0_19] : memref<38x96xf32, #tpu.memory_space<vmem>>, vector<4x96xf32>
    %c36_20 = arith.constant 36 : index
    %c0_21 = arith.constant 0 : index
    %24 = vector.load %arg5[%c36_20, %c0_21] : memref<38x96xf32, #tpu.memory_space<vmem>>, vector<2x96xf32>
    %c0_22 = arith.constant 0 : index
    %c0_23 = arith.constant 0 : index
    %25 = vector.load %arg6[%c0_22, %c0_23] : memref<1x96xf32, #tpu.memory_space<vmem>>, vector<1x96xf32>
    %26 = vector.shape_cast %25 : vector<1x96xf32> to vector<1x96xf32>
    %27 = vector.broadcast %26 : vector<1x96xf32> to vector<4x96xf32>
    %c0_24 = arith.constant 0 : index
    %c0_25 = arith.constant 0 : index
    %28 = vector.load %arg7[%c0_24, %c0_25] : memref<96x44xf32, #tpu.memory_space<vmem>>, vector<96x44xf32>
    %c0_26 = arith.constant 0 : index
    %c0_27 = arith.constant 0 : index
    %29 = vector.load %arg8[%c0_26, %c0_27] : memref<1x44xf32, #tpu.memory_space<vmem>>, vector<1x44xf32>
    %30 = vector.shape_cast %29 : vector<1x44xf32> to vector<1x44xf32>
    %31 = vector.broadcast %30 : vector<1x44xf32> to vector<4x44xf32>
    %c0_28 = arith.constant 0 : index
    %c0_29 = arith.constant 0 : index
    %32 = vector.load %arg9[%c0_28, %c0_29] : memref<4x4xf32, #tpu.memory_space<vmem>>, vector<4x4xf32>
    %c0_30 = arith.constant 0 : index
    %c0_31 = arith.constant 0 : index
    %33 = vector.load %arg10[%c0_30, %c0_31] : memref<4x2xf32, #tpu.memory_space<vmem>>, vector<4x2xf32>
    %c0_32 = arith.constant 0 : index
    %c0_33 = arith.constant 0 : index
    %34 = vector.load %arg11[%c0_32, %c0_33] : memref<16x16xf32, #tpu.memory_space<vmem>>, vector<16x16xf32>
    %c0_34 = arith.constant 0 : index
    %c0_35 = arith.constant 0 : index
    %35 = vector.load %arg12[%c0_34, %c0_35] : memref<16x12xf32, #tpu.memory_space<vmem>>, vector<16x12xf32>
    %c0_36 = arith.constant 0 : index
    %c0_37 = arith.constant 0 : index
    %36 = vector.load %arg13[%c0_36, %c0_37] : memref<4x32xf32, #tpu.memory_space<vmem>>, vector<4x16xf32>
    %c0_38 = arith.constant 0 : index
    %c16 = arith.constant 16 : index
    %37 = vector.load %arg13[%c0_38, %c16] : memref<4x32xf32, #tpu.memory_space<vmem>>, vector<4x16xf32>
    %c0_39 = arith.constant 0 : index
    %c0_40 = arith.constant 0 : index
    %38 = vector.load %arg14[%c0_39, %c0_40] : memref<1x20xf32, #tpu.memory_space<vmem>>, vector<1x16xf32>
    %39 = vector.shape_cast %38 : vector<1x16xf32> to vector<1x16xf32>
    %40 = vector.broadcast %39 : vector<1x16xf32> to vector<4x16xf32>
    %c0_41 = arith.constant 0 : index
    %c16_42 = arith.constant 16 : index
    %41 = vector.load %arg14[%c0_41, %c16_42] : memref<1x20xf32, #tpu.memory_space<vmem>>, vector<1x4xf32>
    %42 = vector.shape_cast %41 : vector<1x4xf32> to vector<1x4xf32>
    %43 = vector.broadcast %42 : vector<1x4xf32> to vector<4x4xf32>
    %c0_i32_43 = arith.constant 0 : i32
    %c8_i32 = arith.constant 8 : i32
    %44 = arith.addi %c0_i32_43, %c8_i32 : i32
    %c1_i32 = arith.constant 1 : i32
    %45:5 = scf.for %arg20 = %c0_i32_43 to %44 step %c1_i32 iter_args(%arg21 = %15, %arg22 = %3, %arg23 = %4, %arg24 = %5, %arg25 = %6) -> (vector<4x32xf32>, vector<4x32xf32>, vector<4x32xf32>, vector<4x4xf32>, vector<4x16xf32>)  : i32 {
      %50 = arith.index_cast %arg20 : i32 to index
      %c0_53 = arith.constant 0 : index
      %c0_54 = arith.constant 0 : index
      %51 = vector.load %arg1[%50, %c0_53, %c0_54] : memref<8x4x2xf32, #tpu.memory_space<vmem>>, vector<1x4x2xf32>
      %52 = vector.shape_cast %51 : vector<1x4x2xf32> to vector<4x2xf32>
      %cst_55 = arith.constant dense<0.000000e+00> : vector<4x128xf32>
      %53 = tpu.matmul %arg21, %16, %cst_55 {dimension_numbers = #tpu.dot_dimension_numbers<[1], [0], [0], [1], [0, 0, 1, 1], [], []>, precision = #tpu.contract_precision<fp32>} : vector<4x32xf32>, vector<32x128xf32>, vector<4x128xf32> -> vector<4x128xf32>
      %cst_56 = arith.constant dense<0.000000e+00> : vector<4x128xf32>
      %54 = tpu.matmul %arg24, %17, %cst_56 {dimension_numbers = #tpu.dot_dimension_numbers<[1], [0], [0], [1], [0, 0, 1, 1], [], []>, precision = #tpu.contract_precision<fp32>} : vector<4x4xf32>, vector<4x128xf32>, vector<4x128xf32> -> vector<4x128xf32>
      %55 = arith.addf %53, %54 : vector<4x128xf32>
      %cst_57 = arith.constant dense<0.000000e+00> : vector<4x128xf32>
      %56 = tpu.matmul %arg22, %18, %cst_57 {dimension_numbers = #tpu.dot_dimension_numbers<[1], [0], [0], [1], [0, 0, 1, 1], [], []>, precision = #tpu.contract_precision<fp32>} : vector<4x32xf32>, vector<32x128xf32>, vector<4x128xf32> -> vector<4x128xf32>
      %57 = arith.addf %55, %56 : vector<4x128xf32>
      %58 = arith.addf %57, %21 : vector<4x128xf32>
      %59 = vector.extract_strided_slice %58 {offsets = [0, 0], sizes = [4, 32], strides = [1, 1]} : vector<4x128xf32> to vector<4x32xf32>
      %60 = arith.negf %59 : vector<4x32xf32>
      %61 = math.exp %60 : vector<4x32xf32>
      %cst_58 = arith.constant 1.000000e+00 : f32
      %62 = vector.broadcast %cst_58 : f32 to vector<4x32xf32>
      %63 = arith.addf %62, %61 : vector<4x32xf32>
      %64 = arith.divf %62, %63 : vector<4x32xf32>
      %65 = vector.extract_strided_slice %58 {offsets = [0, 32], sizes = [4, 32], strides = [1, 1]} : vector<4x128xf32> to vector<4x32xf32>
      %66 = arith.negf %65 : vector<4x32xf32>
      %67 = math.exp %66 : vector<4x32xf32>
      %cst_59 = arith.constant 1.000000e+00 : f32
      %68 = vector.broadcast %cst_59 : f32 to vector<4x32xf32>
      %69 = arith.addf %68, %67 : vector<4x32xf32>
      %70 = arith.divf %68, %69 : vector<4x32xf32>
      %71 = vector.extract_strided_slice %58 {offsets = [0, 64], sizes = [4, 32], strides = [1, 1]} : vector<4x128xf32> to vector<4x32xf32>
      %72 = math.tanh %71 : vector<4x32xf32>
      %73 = vector.extract_strided_slice %58 {offsets = [0, 96], sizes = [4, 32], strides = [1, 1]} : vector<4x128xf32> to vector<4x32xf32>
      %74 = arith.negf %73 : vector<4x32xf32>
      %75 = math.exp %74 : vector<4x32xf32>
      %cst_60 = arith.constant 1.000000e+00 : f32
      %76 = vector.broadcast %cst_60 : f32 to vector<4x32xf32>
      %77 = arith.addf %76, %75 : vector<4x32xf32>
      %78 = arith.divf %76, %77 : vector<4x32xf32>
      %79 = arith.mulf %70, %arg23 : vector<4x32xf32>
      %80 = arith.mulf %64, %72 : vector<4x32xf32>
      %81 = arith.addf %79, %80 : vector<4x32xf32>
      %82 = math.tanh %81 : vector<4x32xf32>
      %83 = arith.mulf %78, %82 : vector<4x32xf32>
      %cst_61 = arith.constant dense<0.000000e+00> : vector<4x96xf32>
      %84 = tpu.matmul %83, %22, %cst_61 {dimension_numbers = #tpu.dot_dimension_numbers<[1], [0], [0], [1], [0, 0, 1, 1], [], []>, precision = #tpu.contract_precision<fp32>} : vector<4x32xf32>, vector<32x96xf32>, vector<4x96xf32> -> vector<4x96xf32>
      %cst_62 = arith.constant dense<0.000000e+00> : vector<4x96xf32>
      %85 = tpu.matmul %arg24, %23, %cst_62 {dimension_numbers = #tpu.dot_dimension_numbers<[1], [0], [0], [1], [0, 0, 1, 1], [], []>, precision = #tpu.contract_precision<fp32>} : vector<4x4xf32>, vector<4x96xf32>, vector<4x96xf32> -> vector<4x96xf32>
      %86 = arith.addf %84, %85 : vector<4x96xf32>
      %cst_63 = arith.constant dense<0.000000e+00> : vector<4x96xf32>
      %87 = tpu.matmul %52, %24, %cst_63 {dimension_numbers = #tpu.dot_dimension_numbers<[1], [0], [0], [1], [0, 0, 1, 1], [], []>, precision = #tpu.contract_precision<fp32>} : vector<4x2xf32>, vector<2x96xf32>, vector<4x96xf32> -> vector<4x96xf32>
      %88 = arith.addf %86, %87 : vector<4x96xf32>
      %89 = arith.addf %88, %27 : vector<4x96xf32>
      %90 = math.tanh %89 : vector<4x96xf32>
      %cst_64 = arith.constant dense<0.000000e+00> : vector<4x44xf32>
      %91 = tpu.matmul %90, %28, %cst_64 {dimension_numbers = #tpu.dot_dimension_numbers<[1], [0], [0], [1], [0, 0, 1, 1], [], []>, precision = #tpu.contract_precision<fp32>} : vector<4x96xf32>, vector<96x44xf32>, vector<4x44xf32> -> vector<4x44xf32>
      %92 = arith.addf %91, %31 : vector<4x44xf32>
      %93 = vector.extract_strided_slice %92 {offsets = [0, 0], sizes = [4, 4], strides = [1, 1]} : vector<4x44xf32> to vector<4x4xf32>
      %94 = vector.extract_strided_slice %92 {offsets = [0, 4], sizes = [4, 16], strides = [1, 1]} : vector<4x44xf32> to vector<4x16xf32>
      %95 = vector.extract_strided_slice %92 {offsets = [0, 20], sizes = [4, 16], strides = [1, 1]} : vector<4x44xf32> to vector<4x16xf32>
      %96 = arith.mulf %94, %95 : vector<4x16xf32>
      %97 = vector.extract_strided_slice %92 {offsets = [0, 36], sizes = [4, 4], strides = [1, 1]} : vector<4x44xf32> to vector<4x4xf32>
      %98 = vector.extract_strided_slice %92 {offsets = [0, 40], sizes = [4, 4], strides = [1, 1]} : vector<4x44xf32> to vector<4x4xf32>
      %99 = arith.mulf %97, %98 : vector<4x4xf32>
      %cst_65 = arith.constant dense<0.000000e+00> : vector<4x4xf32>
      %100 = tpu.matmul %arg24, %32, %cst_65 {dimension_numbers = #tpu.dot_dimension_numbers<[1], [0], [0], [1], [0, 0, 1, 1], [], []>, precision = #tpu.contract_precision<fp32>} : vector<4x4xf32>, vector<4x4xf32>, vector<4x4xf32> -> vector<4x4xf32>
      %101 = arith.addf %100, %93 : vector<4x4xf32>
      %cst_66 = arith.constant dense<0.000000e+00> : vector<4x16xf32>
      %102 = tpu.matmul %arg25, %34, %cst_66 {dimension_numbers = #tpu.dot_dimension_numbers<[1], [0], [0], [1], [0, 0, 1, 1], [], []>, precision = #tpu.contract_precision<fp32>} : vector<4x16xf32>, vector<16x16xf32>, vector<4x16xf32> -> vector<4x16xf32>
      %103 = arith.addf %102, %96 : vector<4x16xf32>
      %104 = arith.addf %103, %40 : vector<4x16xf32>
      %cst_67 = arith.constant dense<0.000000e+00> : vector<4x2xf32>
      %105 = tpu.matmul %101, %33, %cst_67 {dimension_numbers = #tpu.dot_dimension_numbers<[1], [0], [0], [1], [0, 0, 1, 1], [], []>, precision = #tpu.contract_precision<fp32>} : vector<4x4xf32>, vector<4x2xf32>, vector<4x2xf32> -> vector<4x2xf32>
      %106 = arith.subf %52, %105 : vector<4x2xf32>
      %cst_68 = arith.constant dense<0.000000e+00> : vector<4x12xf32>
      %107 = tpu.matmul %104, %35, %cst_68 {dimension_numbers = #tpu.dot_dimension_numbers<[1], [0], [0], [1], [0, 0, 1, 1], [], []>, precision = #tpu.contract_precision<fp32>} : vector<4x16xf32>, vector<16x12xf32>, vector<4x12xf32> -> vector<4x12xf32>
      %108 = vector.extract_strided_slice %107 {offsets = [0, 0], sizes = [4, 4], strides = [1, 1]} : vector<4x12xf32> to vector<4x4xf32>
      %109 = vector.extract_strided_slice %107 {offsets = [0, 4], sizes = [4, 4], strides = [1, 1]} : vector<4x12xf32> to vector<4x4xf32>
      %110 = vector.extract_strided_slice %107 {offsets = [0, 8], sizes = [4, 4], strides = [1, 1]} : vector<4x12xf32> to vector<4x4xf32>
      %111 = arith.addf %110, %99 : vector<4x4xf32>
      %112 = arith.addf %111, %43 : vector<4x4xf32>
      %113 = vector.extract_strided_slice %112 {offsets = [0, 0], sizes = [4, 1], strides = [1, 1]} : vector<4x4xf32> to vector<4x1xf32>
      %114 = vector.extract_strided_slice %112 {offsets = [0, 1], sizes = [4, 1], strides = [1, 1]} : vector<4x4xf32> to vector<4x1xf32>
      %115 = vector.extract_strided_slice %112 {offsets = [0, 2], sizes = [4, 1], strides = [1, 1]} : vector<4x4xf32> to vector<4x1xf32>
      %116 = vector.extract_strided_slice %112 {offsets = [0, 3], sizes = [4, 1], strides = [1, 1]} : vector<4x4xf32> to vector<4x1xf32>
      %117 = arith.mulf %113, %116 : vector<4x1xf32>
      %118 = arith.mulf %114, %115 : vector<4x1xf32>
      %119 = arith.subf %117, %118 : vector<4x1xf32>
      %cst_69 = arith.constant 1.000000e+00 : f32
      %120 = vector.broadcast %cst_69 : f32 to vector<4x1xf32>
      %121 = arith.divf %120, %119 : vector<4x1xf32>
      %122 = arith.mulf %116, %121 : vector<4x1xf32>
      %cst_70 = arith.constant 0.000000e+00 : f32
      %123 = vector.broadcast %cst_70 : f32 to vector<4x1xf32>
      %124 = arith.subf %123, %114 : vector<4x1xf32>
      %125 = arith.mulf %124, %121 : vector<4x1xf32>
      %cst_71 = arith.constant 0.000000e+00 : f32
      %126 = vector.broadcast %cst_71 : f32 to vector<4x1xf32>
      %127 = arith.subf %126, %115 : vector<4x1xf32>
      %128 = arith.mulf %127, %121 : vector<4x1xf32>
      %129 = arith.mulf %113, %121 : vector<4x1xf32>
      %130 = vector.broadcast %122 : vector<4x1xf32> to vector<4x4xf32>
      %131 = arith.mulf %108, %130 : vector<4x4xf32>
      %132 = vector.broadcast %128 : vector<4x1xf32> to vector<4x4xf32>
      %133 = arith.mulf %109, %132 : vector<4x4xf32>
      %134 = arith.addf %131, %133 : vector<4x4xf32>
      %135 = vector.broadcast %125 : vector<4x1xf32> to vector<4x4xf32>
      %136 = arith.mulf %108, %135 : vector<4x4xf32>
      %137 = vector.broadcast %129 : vector<4x1xf32> to vector<4x4xf32>
      %138 = arith.mulf %109, %137 : vector<4x4xf32>
      %139 = arith.addf %136, %138 : vector<4x4xf32>
      %140 = vector.extract_strided_slice %106 {offsets = [0, 0], sizes = [4, 1], strides = [1, 1]} : vector<4x2xf32> to vector<4x1xf32>
      %141 = vector.broadcast %140 : vector<4x1xf32> to vector<4x4xf32>
      %142 = arith.mulf %134, %141 : vector<4x4xf32>
      %143 = vector.extract_strided_slice %106 {offsets = [0, 1], sizes = [4, 1], strides = [1, 1]} : vector<4x2xf32> to vector<4x1xf32>
      %144 = vector.broadcast %143 : vector<4x1xf32> to vector<4x4xf32>
      %145 = arith.mulf %139, %144 : vector<4x4xf32>
      %146 = arith.addf %142, %145 : vector<4x4xf32>
      %147 = arith.addf %101, %146 : vector<4x4xf32>
      %148 = vector.extract_strided_slice %112 {offsets = [0, 0], sizes = [4, 1], strides = [1, 1]} : vector<4x4xf32> to vector<4x1xf32>
      %149 = vector.extract_strided_slice %112 {offsets = [0, 1], sizes = [4, 1], strides = [1, 1]} : vector<4x4xf32> to vector<4x1xf32>
      %150 = vector.extract_strided_slice %112 {offsets = [0, 2], sizes = [4, 1], strides = [1, 1]} : vector<4x4xf32> to vector<4x1xf32>
      %151 = vector.extract_strided_slice %112 {offsets = [0, 3], sizes = [4, 1], strides = [1, 1]} : vector<4x4xf32> to vector<4x1xf32>
      %152 = vector.broadcast %148 : vector<4x1xf32> to vector<4x4xf32>
      %153 = arith.mulf %134, %152 : vector<4x4xf32>
      %154 = vector.broadcast %150 : vector<4x1xf32> to vector<4x4xf32>
      %155 = arith.mulf %139, %154 : vector<4x4xf32>
      %156 = arith.addf %153, %155 : vector<4x4xf32>
      %157 = vector.broadcast %149 : vector<4x1xf32> to vector<4x4xf32>
      %158 = arith.mulf %134, %157 : vector<4x4xf32>
      %159 = vector.broadcast %151 : vector<4x1xf32> to vector<4x4xf32>
      %160 = arith.mulf %139, %159 : vector<4x4xf32>
      %161 = arith.addf %158, %160 : vector<4x4xf32>
      %cst_72 = arith.constant dense<0.000000e+00> : vector<4x16xf32>
      %162 = tpu.matmul %156, %36, %cst_72 {dimension_numbers = #tpu.dot_dimension_numbers<[1], [0], [0], [1], [0, 0, 1, 1], [], []>, precision = #tpu.contract_precision<fp32>} : vector<4x4xf32>, vector<4x16xf32>, vector<4x16xf32> -> vector<4x16xf32>
      %cst_73 = arith.constant dense<0.000000e+00> : vector<4x16xf32>
      %163 = tpu.matmul %134, %37, %cst_73 {dimension_numbers = #tpu.dot_dimension_numbers<[1], [0], [0], [1], [0, 0, 1, 1], [], []>, precision = #tpu.contract_precision<fp32>} : vector<4x4xf32>, vector<4x16xf32>, vector<4x16xf32> -> vector<4x16xf32>
      %164 = arith.mulf %162, %163 : vector<4x16xf32>
      %cst_74 = arith.constant dense<0.000000e+00> : vector<4x16xf32>
      %165 = tpu.matmul %161, %36, %cst_74 {dimension_numbers = #tpu.dot_dimension_numbers<[1], [0], [0], [1], [0, 0, 1, 1], [], []>, precision = #tpu.contract_precision<fp32>} : vector<4x4xf32>, vector<4x16xf32>, vector<4x16xf32> -> vector<4x16xf32>
      %cst_75 = arith.constant dense<0.000000e+00> : vector<4x16xf32>
      %166 = tpu.matmul %139, %37, %cst_75 {dimension_numbers = #tpu.dot_dimension_numbers<[1], [0], [0], [1], [0, 0, 1, 1], [], []>, precision = #tpu.contract_precision<fp32>} : vector<4x4xf32>, vector<4x16xf32>, vector<4x16xf32> -> vector<4x16xf32>
      %167 = arith.mulf %165, %166 : vector<4x16xf32>
      %168 = arith.addf %164, %167 : vector<4x16xf32>
      %169 = arith.subf %104, %168 : vector<4x16xf32>
      %170 = arith.index_cast %arg20 : i32 to index
      %c0_76 = arith.constant 0 : index
      %c0_77 = arith.constant 0 : index
      %171 = vector.load %arg15[%170, %c0_76, %c0_77] : memref<8x4x4xf32, #tpu.memory_space<vmem>>, vector<1x4x4xf32>
      %172 = vector.shape_cast %171 : vector<1x4x4xf32> to vector<4x4xf32>
      %173 = vector.shape_cast %147 : vector<4x4xf32> to vector<1x4x4xf32>
      tpu.vector_store %arg15[%170, %c0_76, %c0_77], %173 {strides = array<i32>} : memref<8x4x4xf32, #tpu.memory_space<vmem>>, vector<1x4x4xf32>,
      scf.yield %83, %83, %81, %147, %169 : vector<4x32xf32>, vector<4x32xf32>, vector<4x32xf32>, vector<4x4xf32>, vector<4x16xf32>
    }
    %c8_i32_44 = arith.constant 8 : i32
    %c0_45 = arith.constant 0 : index
    %c0_46 = arith.constant 0 : index
    %46 = vector.load %arg16[%c0_45, %c0_46] : memref<4x32xf32, #tpu.memory_space<vmem>>, vector<4x32xf32>
    tpu.vector_store %arg16[%c0_45, %c0_46], %45#1 {strides = array<i32>} : memref<4x32xf32, #tpu.memory_space<vmem>>, vector<4x32xf32>,
    %c0_47 = arith.constant 0 : index
    %c0_48 = arith.constant 0 : index
    %47 = vector.load %arg17[%c0_47, %c0_48] : memref<4x32xf32, #tpu.memory_space<vmem>>, vector<4x32xf32>
    tpu.vector_store %arg17[%c0_47, %c0_48], %45#2 {strides = array<i32>} : memref<4x32xf32, #tpu.memory_space<vmem>>, vector<4x32xf32>,
    %c0_49 = arith.constant 0 : index
    %c0_50 = arith.constant 0 : index
    %48 = vector.load %arg18[%c0_49, %c0_50] : memref<4x4xf32, #tpu.memory_space<vmem>>, vector<4x4xf32>
    tpu.vector_store %arg18[%c0_49, %c0_50], %45#3 {strides = array<i32>} : memref<4x4xf32, #tpu.memory_space<vmem>>, vector<4x4xf32>,
    %c0_51 = arith.constant 0 : index
    %c0_52 = arith.constant 0 : index
    %49 = vector.load %arg19[%c0_51, %c0_52] : memref<4x16xf32, #tpu.memory_space<vmem>>, vector<4x16xf32>
    tpu.vector_store %arg19[%c0_51, %c0_52], %45#4 {strides = array<i32>} : memref<4x16xf32, #tpu.memory_space<vmem>>, vector<4x16xf32>,
    return
  }
  func.func @transform_0(%arg0: i32) -> (i32, i32, i32) {
    %c0_i32 = arith.constant 0 : i32
    %c0_i32_0 = arith.constant 0 : i32
    %c0_i32_1 = arith.constant 0 : i32
    return %arg0, %c0_i32, %c0_i32_0 : i32, i32, i32
  }
  func.func @transform_1(%arg0: i32) -> (i32, i32) {
    %c0_i32 = arith.constant 0 : i32
    %c0_i32_0 = arith.constant 0 : i32
    %c0_i32_1 = arith.constant 0 : i32
    return %c0_i32, %c0_i32_0 : i32, i32
  }
  func.func @transform_2(%arg0: i32) -> (i32, i32) {
    %c0_i32 = arith.constant 0 : i32
    %c0_i32_0 = arith.constant 0 : i32
    %c0_i32_1 = arith.constant 0 : i32
    return %c0_i32, %c0_i32_0 : i32, i32
  }
  func.func @transform_3(%arg0: i32) -> (i32, i32) {
    %c0_i32 = arith.constant 0 : i32
    %c0_i32_0 = arith.constant 0 : i32
    %c0_i32_1 = arith.constant 0 : i32
    return %c0_i32, %c0_i32_0 : i32, i32
  }
  func.func @transform_4(%arg0: i32) -> (i32, i32) {
    %c0_i32 = arith.constant 0 : i32
    %c0_i32_0 = arith.constant 0 : i32
    %c0_i32_1 = arith.constant 0 : i32
    return %c0_i32, %c0_i32_0 : i32, i32
  }
  func.func @transform_5(%arg0: i32) -> (i32, i32) {
    %c0_i32 = arith.constant 0 : i32
    %c0_i32_0 = arith.constant 0 : i32
    %c0_i32_1 = arith.constant 0 : i32
    return %c0_i32, %c0_i32_0 : i32, i32
  }
  func.func @transform_6(%arg0: i32) -> (i32, i32) {
    %c0_i32 = arith.constant 0 : i32
    %c0_i32_0 = arith.constant 0 : i32
    %c0_i32_1 = arith.constant 0 : i32
    return %c0_i32, %c0_i32_0 : i32, i32
  }
  func.func @transform_7(%arg0: i32) -> (i32, i32) {
    %c0_i32 = arith.constant 0 : i32
    %c0_i32_0 = arith.constant 0 : i32
    %c0_i32_1 = arith.constant 0 : i32
    return %c0_i32, %c0_i32_0 : i32, i32
  }
  func.func @transform_8(%arg0: i32) -> (i32, i32) {
    %c0_i32 = arith.constant 0 : i32
    %c0_i32_0 = arith.constant 0 : i32
    %c0_i32_1 = arith.constant 0 : i32
    return %c0_i32, %c0_i32_0 : i32, i32
  }
  func.func @transform_9(%arg0: i32) -> (i32, i32) {
    %c0_i32 = arith.constant 0 : i32
    %c0_i32_0 = arith.constant 0 : i32
    %c0_i32_1 = arith.constant 0 : i32
    return %c0_i32, %c0_i32_0 : i32, i32
  }
  func.func @transform_10(%arg0: i32) -> (i32, i32) {
    %c0_i32 = arith.constant 0 : i32
    %c0_i32_0 = arith.constant 0 : i32
    %c0_i32_1 = arith.constant 0 : i32
    return %c0_i32, %c0_i32_0 : i32, i32
  }
  func.func @transform_11(%arg0: i32) -> (i32, i32) {
    %c0_i32 = arith.constant 0 : i32
    %c0_i32_0 = arith.constant 0 : i32
    %c0_i32_1 = arith.constant 0 : i32
    return %c0_i32, %c0_i32_0 : i32, i32
  }
  func.func @transform_12(%arg0: i32) -> (i32, i32) {
    %c0_i32 = arith.constant 0 : i32
    %c0_i32_0 = arith.constant 0 : i32
    %c0_i32_1 = arith.constant 0 : i32
    return %c0_i32, %c0_i32_0 : i32, i32
  }
  func.func @transform_13(%arg0: i32) -> (i32, i32) {
    %c0_i32 = arith.constant 0 : i32
    %c0_i32_0 = arith.constant 0 : i32
    %c0_i32_1 = arith.constant 0 : i32
    return %c0_i32, %c0_i32_0 : i32, i32
  }
  func.func @transform_14(%arg0: i32) -> (i32, i32, i32) {
    %c0_i32 = arith.constant 0 : i32
    %c0_i32_0 = arith.constant 0 : i32
    %c0_i32_1 = arith.constant 0 : i32
    return %arg0, %c0_i32, %c0_i32_0 : i32, i32, i32
  }
}

</mosaic_0001>

<llo_original>
// kernel: tpu_custom_call.1
$region0: #{tpu_custom_call.1}
  #allocation0 [shape = 'u32[]', space=smem, size = 0x4, offset = 0x4, fixed_abs, tag = 'smem constant byte address 0x4 - core index']
  #allocation1 [shape = 'u32[144,128]{1,0:T(1,128)}', space=vmem, size = 0x12000, scoped, tag = 'internal scratch']
  #allocation2 [shape = 'f32[4,32]{1,0:T(4,128)}', space=vmem, size = 0x800, scoped, tag = 'scratch operand']
  #allocation3 [shape = 'f32[4,32]{1,0:T(4,128)}', space=vmem, size = 0x800, scoped, tag = 'scratch operand']
  #allocation4 [shape = 'f32[4,4]{1,0:T(4,128)}', space=vmem, size = 0x800, scoped, tag = 'scratch operand']
  #allocation5 [shape = 'f32[4,16]{1,0:T(4,128)}', space=vmem, size = 0x800, scoped, tag = 'scratch operand']
  %s0 = inlined_call_operand.vmem [shape: f32[8,4,2], index: 0, kind: input, shape index: {}]
  %s1 = inlined_call_operand.vmem [shape: f32[4,116], index: 1, kind: input, shape index: {}]
  %s2 = inlined_call_operand.vmem [shape: f32[68,128], index: 2, kind: input, shape index: {}]
  %s3 = inlined_call_operand.vmem [shape: f32[1,128], index: 3, kind: input, shape index: {}]
  %s4 = inlined_call_operand.vmem [shape: f32[38,96], index: 4, kind: input, shape index: {}]
  %s5 = inlined_call_operand.vmem [shape: f32[1,96], index: 5, kind: input, shape index: {}]
  %s6 = inlined_call_operand.vmem [shape: f32[96,44], index: 6, kind: input, shape index: {}]
  %s7 = inlined_call_operand.vmem [shape: f32[1,44], index: 7, kind: input, shape index: {}]
  %s8 = inlined_call_operand.vmem [shape: f32[4,4], index: 8, kind: input, shape index: {}]
  %s9 = inlined_call_operand.vmem [shape: f32[4,2], index: 9, kind: input, shape index: {}]
  %s10 = inlined_call_operand.vmem [shape: f32[16,16], index: 10, kind: input, shape index: {}]
  %s11 = inlined_call_operand.vmem [shape: f32[16,12], index: 11, kind: input, shape index: {}]
  %s12 = inlined_call_operand.vmem [shape: f32[4,32], index: 12, kind: input, shape index: {}]
  %s13 = inlined_call_operand.vmem [shape: f32[1,20], index: 13, kind: input, shape index: {}]
  %s14 = inlined_call_operand.vmem [shape: f32[8,4,4], index: 14, kind: output, shape index: {}]
  %s15 = sld [smem:[#allocation0]]
  $region77: #{tpu_custom_call.1} parent=0
    _
  %s17 = ssub.s32 1, %s15
  %s18 = scalar_select 0, %s17, %s15
  // Predicated region
  $region2: #{tpu_custom_call.1} parent=0 // pred_check
    _
  $region3: #{tpu_custom_call.1} parent=0 // pred_check_branch
    %20 = sbr.rel (0) target = $region5
  $region4: #{tpu_custom_call.1} parent=0 // pred_region
    _
  $region5: #{tpu_custom_call.1} parent=0 // pred_fallthru
    _
  // Predicated region
  $region6: #{tpu_custom_call.1} parent=0 // pred_check
    _
  $region7: #{tpu_custom_call.1} parent=0 // pred_check_branch
    %22 = sbr.rel (0) target = $region9
  $region8: #{tpu_custom_call.1} parent=0 // pred_region
    _
  $region9: #{tpu_custom_call.1} parent=0 // pred_fallthru
    _
  // Predicated region
  $region10: #{tpu_custom_call.1} parent=0 // pred_check
    _
  $region11: #{tpu_custom_call.1} parent=0 // pred_check_branch
    %24 = sbr.rel (0) target = $region13
  $region12: #{tpu_custom_call.1} parent=0 // pred_region
    _
  $region13: #{tpu_custom_call.1} parent=0 // pred_fallthru
    _
  // Predicated region
  $region14: #{tpu_custom_call.1} parent=0 // pred_check
    _
  $region15: #{tpu_custom_call.1} parent=0 // pred_check_branch
    %26 = sbr.rel (0) target = $region17
  $region16: #{tpu_custom_call.1} parent=0 // pred_region
    _
  $region17: #{tpu_custom_call.1} parent=0 // pred_fallthru
    _
  // Predicated region
  $region18: #{tpu_custom_call.1} parent=0 // pred_check
    _
  $region19: #{tpu_custom_call.1} parent=0 // pred_check_branch
    %28 = sbr.rel (0) target = $region21
  $region20: #{tpu_custom_call.1} parent=0 // pred_region
    _
  $region21: #{tpu_custom_call.1} parent=0 // pred_fallthru
    _
  // Predicated region
  $region22: #{tpu_custom_call.1} parent=0 // pred_check
    _
  $region23: #{tpu_custom_call.1} parent=0 // pred_check_branch
    %30 = sbr.rel (0) target = $region25
  $region24: #{tpu_custom_call.1} parent=0 // pred_region
    _
  $region25: #{tpu_custom_call.1} parent=0 // pred_fallthru
    _
  // Predicated region
  $region26: #{tpu_custom_call.1} parent=0 // pred_check
    _
  $region27: #{tpu_custom_call.1} parent=0 // pred_check_branch
    %32 = sbr.rel (0) target = $region29
  $region28: #{tpu_custom_call.1} parent=0 // pred_region
    _
  $region29: #{tpu_custom_call.1} parent=0 // pred_fallthru
    _
  // Predicated region
  $region30: #{tpu_custom_call.1} parent=0 // pred_check
    _
  $region31: #{tpu_custom_call.1} parent=0 // pred_check_branch
    %34 = sbr.rel (0) target = $region33
  $region32: #{tpu_custom_call.1} parent=0 // pred_region
    _
  $region33: #{tpu_custom_call.1} parent=0 // pred_fallthru
    _
  // Predicated region
  $region34: #{tpu_custom_call.1} parent=0 // pred_check
    _
  $region35: #{tpu_custom_call.1} parent=0 // pred_check_branch
    %36 = sbr.rel (0) target = $region37
  $region36: #{tpu_custom_call.1} parent=0 // pred_region
    _
  $region37: #{tpu_custom_call.1} parent=0 // pred_fallthru
    _
  // Predicated region
  $region38: #{tpu_custom_call.1} parent=0 // pred_check
    _
  $region39: #{tpu_custom_call.1} parent=0 // pred_check_branch
    %38 = sbr.rel (0) target = $region41
  $region40: #{tpu_custom_call.1} parent=0 // pred_region
    _
  $region41: #{tpu_custom_call.1} parent=0 // pred_fallthru
    _
  // Predicated region
  $region42: #{tpu_custom_call.1} parent=0 // pred_check
    _
  $region43: #{tpu_custom_call.1} parent=0 // pred_check_branch
    %40 = sbr.rel (0) target = $region45
  $region44: #{tpu_custom_call.1} parent=0 // pred_region
    _
  $region45: #{tpu_custom_call.1} parent=0 // pred_fallthru
    _
  // Predicated region
  $region46: #{tpu_custom_call.1} parent=0 // pred_check
    _
  $region47: #{tpu_custom_call.1} parent=0 // pred_check_branch
    %42 = sbr.rel (0) target = $region49
  $region48: #{tpu_custom_call.1} parent=0 // pred_region
    _
  $region49: #{tpu_custom_call.1} parent=0 // pred_fallthru
    _
  // Predicated region
  $region50: #{tpu_custom_call.1} parent=0 // pred_check
    _
  $region51: #{tpu_custom_call.1} parent=0 // pred_check_branch
    %44 = sbr.rel (0) target = $region53
  $region52: #{tpu_custom_call.1} parent=0 // pred_region
    _
  $region53: #{tpu_custom_call.1} parent=0 // pred_fallthru
    _
  // Predicated region
  $region54: #{tpu_custom_call.1} parent=0 // pred_check
    _
  $region55: #{tpu_custom_call.1} parent=0 // pred_check_branch
    %46 = sbr.rel (0) target = $region57
  $region56: #{tpu_custom_call.1} parent=0 // pred_region
    _
  $region57: #{tpu_custom_call.1} parent=0 // pred_fallthru
    _
  %p47 = scmp.eq.s32.totalorder 0, 0
  // Predicated region
  $region58: #{tpu_custom_call.1} parent=0 // pred_check
    %p48 = pneg %p47
  $region59: #{tpu_custom_call.1} parent=0 // pred_check_branch
    %50 = sbr.rel (%p48) target = $region61
  $region60: #{tpu_custom_call.1} parent=0 // pred_region
    %v51 = vld [vmem:[%s1] sm:$0xf]
    %53 = vrot.lane.b32.xlu0 %v51, 96
    %v54 = vpop.permute.xlu0 %53
    %vm56 = vcmask 257024
    %57 = vst.msk [vmem:[#allocation2] sm:$0xf] %vm56, %v54
    %v58 = vld [vmem:[%s1] sm:$0xf]
    %60 = vrot.lane.b32.xlu0 %v58, 64
    %v61 = vpop.permute.xlu0 %60
    %63 = vst.msk [vmem:[#allocation3] sm:$0xf] %vm56, %v61
    %v64 = vld [vmem:[%s1] sm:$0xf]
    %66 = vrot.lane.b32.xlu0 %v64, 32
    %v67 = vpop.permute.xlu0 %66
    %vm69 = vcmask 27648
    %70 = vst.msk [vmem:[#allocation4] sm:$0xf] %vm69, %v67
    %v71 = vld [vmem:[%s1] sm:$0xf]
    %73 = vrot.lane.b32.xlu0 %v71, 28
    %v74 = vpop.permute.xlu0 %73
    %vm76 = vcmask 125952
    %77 = vst.msk [vmem:[#allocation5] sm:$0xf] %vm76, %v74
  $region61: #{tpu_custom_call.1} parent=0 // pred_fallthru
    _
  %v78 = vld [vmem:[#allocation2] sm:$0xf]
  %v79 = vld [vmem:[#allocation3] sm:$0xf]
  %v80 = vld [vmem:[#allocation4] sm:$0xf]
  %v81 = vld [vmem:[#allocation5] sm:$0xf]
  %s82 = scalar_select %p47, 1, 0
  %s83 = scvt.s32.f32 %s82
  %v84 = vld [vmem:[%s1] sm:$0xf]
  %v85 = vstv %s83
  %v86 = vmul.f32 %v85, %v84
  %s87 = ssub.f32 1.0, %s83
  %v88 = vstv %s87
  %v89 = vmul.f32 %v88, %v78
  %v90 = vadd.f32 %v86, %v89
  %v91 = vld [vmem:[%s2] sm:$0xff]
  %v92 = vld [vmem:[%s2 + $0x8] sm:$0xff]
  %v93 = vld [vmem:[%s2 + $0x10] sm:$0xff]
  %v94 = vld [vmem:[%s2 + $0x18] sm:$0xff]
  %v95 = vld [vmem:[%s2 + $0x20] sm:$0xf]
  %v96 = vld [vmem:[%s2 + $0x24] sm:$0xff]
  %v97 = vld [vmem:[%s2 + $0x2c] sm:$0xff]
  %v98 = vld [vmem:[%s2 + $0x34] sm:$0xff]
  %v99 = vld [vmem:[%s2 + $0x3c] sm:$0xff]
  %v100 = vld [vmem:[%s3] sm:$0x1]
  %v102 = vlaneseq
  %v103 = vshrl.u32 %v102, 7
  %v104 = vsub.s32 0, %v103
  %v105 = vrot.slane %v100, %v104
  %v107 = vld [vmem:[%s4] sm:$0xff]
  %v108 = vld [vmem:[%s4 + $0x8] sm:$0xff]
  %v109 = vld [vmem:[%s4 + $0x10] sm:$0xff]
  %v110 = vld [vmem:[%s4 + $0x18] sm:$0xff]
  %v111 = vld [vmem:[%s4 + $0x20] sm:$0xf]
  %v112 = vld [vmem:[%s4 + $0x24] sm:$0x3]
  %v113 = vld [vmem:[%s5] sm:$0x1]
  %v115 = vlaneseq
  %v116 = vshrl.u32 %v115, 7
  %v117 = vsub.s32 0, %v116
  %v118 = vrot.slane %v113, %v117
  %v120 = vld [vmem:[%s6] sm:$0xff]
  %v121 = vld [vmem:[%s6 + $0x8] sm:$0xff]
  %v122 = vld [vmem:[%s6 + $0x10] sm:$0xff]
  %v123 = vld [vmem:[%s6 + $0x18] sm:$0xff]
  %v124 = vld [vmem:[%s6 + $0x20] sm:$0xff]
  %v125 = vld [vmem:[%s6 + $0x28] sm:$0xff]
  %v126 = vld [vmem:[%s6 + $0x30] sm:$0xff]
  %v127 = vld [vmem:[%s6 + $0x38] sm:$0xff]
  %v128 = vld [vmem:[%s6 + $0x40] sm:$0xff]
  %v129 = vld [vmem:[%s6 + $0x48] sm:$0xff]
  %v130 = vld [vmem:[%s6 + $0x50] sm:$0xff]
  %v131 = vld [vmem:[%s6 + $0x58] sm:$0xff]
  %v132 = vld [vmem:[%s7] sm:$0x1]
  %v134 = vlaneseq
  %v135 = vshrl.u32 %v134, 7
  %v136 = vsub.s32 0, %v135
  %v137 = vrot.slane %v132, %v136
  %v139 = vld [vmem:[%s8] sm:$0xf]
  %v140 = vld [vmem:[%s9] sm:$0xf]
  %v141 = vld [vmem:[%s10] sm:$0xff]
  %v142 = vld [vmem:[%s10 + $0x8] sm:$0xff]
  %v143 = vld [vmem:[%s11] sm:$0xff]
  %v144 = vld [vmem:[%s11 + $0x8] sm:$0xff]
  %v145 = vld [vmem:[%s12] sm:$0xf]
  %v146 = vld [vmem:[%s13] sm:$0x1]
  %v148 = vlaneseq
  %v149 = vshrl.u32 %v148, 7
  %v150 = vsub.s32 0, %v149
  %v151 = vrot.slane %v146, %v150
  loop: start=0, step=1, limit=8
  $region62: #{tpu_custom_call.1} parent=0 // loop_pre_header
    _
  $region63: #{tpu_custom_call.1} parent=0 // loop_header
    %s154 = sphi 0, %s158
    %p155 = scmp.ge.s32.totalorder %s154, 8
    %v159 = vphi %v90, %v2079
    %v160 = vphi %v78, %v2079
    %v161 = vphi %v79, %v7380
    %v162 = vphi %v80, %v5544
    %v163 = vphi %v81, %v7373
  $region64: #{tpu_custom_call.1} parent=0 // loop_header_branch
    %157 = sbr.rel (%p155) target = $region68
  $region65: #{tpu_custom_call.1} parent=0 // loop_body
    %s164 = smul.u32 %s154, 4
    %s165 = scalar_lea.vmem %s0, %s164
    %v166 = vld [vmem:[%s165] sm:$0xf]
    %vm167 = vcmask 31744
    %v169 = vsel %vm167, %v162, 0
    %vm171 = vcmask 1043456
    %v173 = vsel %vm171, %v95, 0
    %175 = vmatprep.subr.mxu0 0.0
    %v176 = vand.u32 %v173, 4294901760
    %177 = vmatpush1.msra.mxu0 %v176
    %178 = vmatprep.subr.mxu0 0.0
    %179 = vmatpush1.msra.mxu0 0.0
    %180 = vmatprep.subr.mxu0 0.0
    %181 = vmatpush1.msra.mxu0 0.0
    %182 = vmatprep.subr.mxu0 0.0
    %183 = vmatpush1.msra.mxu0 0.0
    %184 = vmatprep.subr.mxu0 0.0
    %185 = vmatpush1.msra.mxu0 0.0
    %186 = vmatprep.subr.mxu0 0.0
    %187 = vmatpush1.msra.mxu0 0.0
    %188 = vmatprep.subr.mxu0 0.0
    %189 = vmatpush1.msra.mxu0 0.0
    %190 = vmatprep.subr.mxu0 0.0
    %191 = vmatpush1.msra.mxu0 0.0
    %192 = vmatprep.subr.mxu0 0.0
    %193 = vmatpush1.msra.mxu0 0.0
    %194 = vmatprep.subr.mxu0 0.0
    %195 = vmatpush1.msra.mxu0 0.0
    %196 = vmatprep.subr.mxu0 0.0
    %197 = vmatpush1.msra.mxu0 0.0
    %198 = vmatprep.subr.mxu0 0.0
    %199 = vmatpush1.msra.mxu0 0.0
    %200 = vmatprep.subr.mxu0 0.0
    %201 = vmatpush1.msra.mxu0 0.0
    %202 = vmatprep.subr.mxu0 0.0
    %203 = vmatpush1.msra.mxu0 0.0
    %204 = vmatprep.subr.mxu0 0.0
    %205 = vmatpush1.msra.mxu0 0.0
    %206 = vmatprep.subr.mxu0 0.0
    %207 = vmatpush1.msra.mxu0 0.0
    %208 = vmatprep.subr.mxu0 0.0
    %209 = vmatpush1.msra.mxu0 0.0
    %210 = vmatprep.subr.mxu0 0.0
    %211 = vmatpush1.msra.mxu0 0.0
    %212 = vmatprep.subr.mxu0 0.0
    %213 = vmatpush1.msra.mxu0 0.0
    %214 = vmatprep.subr.mxu0 0.0
    %215 = vmatpush1.msra.mxu0 0.0
    %216 = vmatprep.subr.mxu0 0.0
    %217 = vmatpush1.msra.mxu0 0.0
    %218 = vmatprep.subr.mxu0 0.0
    %219 = vmatpush1.msra.mxu0 0.0
    %220 = vmatprep.subr.mxu0 0.0
    %221 = vmatpush1.msra.mxu0 0.0
    %222 = vmatprep.subr.mxu0 0.0
    %223 = vmatpush1.msra.mxu0 0.0
    %224 = vmatprep.subr.mxu0 0.0
    %225 = vmatpush1.msra.mxu0 0.0
    %226 = vmatprep.subr.mxu0 0.0
    %227 = vmatpush1.msra.mxu0 0.0
    %228 = vmatprep.subr.mxu0 0.0
    %229 = vmatpush1.msra.mxu0 0.0
    %230 = vmatprep.subr.mxu0 0.0
    %231 = vmatpush1.msra.mxu0 0.0
    %232 = vmatprep.subr.mxu0 0.0
    %233 = vmatpush1.msra.mxu0 0.0
    %234 = vmatprep.subr.mxu0 0.0
    %235 = vmatpush1.msra.mxu0 0.0
    %236 = vmatprep.subr.mxu0 0.0
    %237 = vmatpush1.msra.mxu0 0.0
    %238 = vmatprep.subr.mxu0 0.0
    %239 = vmatpush1.msra.mxu0 0.0
    %240 = vmatprep.mubr.f32.mxu0 0.0
    %v241 = vand.u32 %v169, 4294901760
    %v242 = vsub.f32 %v169, %v241
    %v243 = vand.u32 %v242, 4294901760
    %v244 = vsub.f32 %v242, %v243
    %v245 = vand.u32 %v244, 4294901760
    %246 = vmatmul.mubr.f32.gmra.mrb[0].mxu0 %v245
    %v247 = vpop.f32.mrb[0].mxu0
    %v248 = vadd.f32 0.0, %v247
    %v249 = vpop.f32.mrb[0].mxu0
    %250 = vdwg.mxu0
    %251 = vmatprep.subr.mxu0 0.0
    %v252 = vand.u32 %v173, 4294901760
    %v253 = vsub.f32 %v173, %v252
    %v254 = vand.u32 %v253, 4294901760
    %v255 = vsub.f32 %v253, %v254
    %v256 = vand.u32 %v255, 4294901760
    %257 = vmatpush1.msra.mxu0 %v256
    %258 = vmatprep.subr.mxu0 0.0
    %259 = vmatpush1.msra.mxu0 0.0
    %260 = vmatprep.subr.mxu0 0.0
    %261 = vmatpush1.msra.mxu0 0.0
    %262 = vmatprep.subr.mxu0 0.0
    %263 = vmatpush1.msra.mxu0 0.0
    %264 = vmatprep.subr.mxu0 0.0
    %265 = vmatpush1.msra.mxu0 0.0
    %266 = vmatprep.subr.mxu0 0.0
    %267 = vmatpush1.msra.mxu0 0.0
    %268 = vmatprep.subr.mxu0 0.0
    %269 = vmatpush1.msra.mxu0 0.0
    %270 = vmatprep.subr.mxu0 0.0
    %271 = vmatpush1.msra.mxu0 0.0
    %272 = vmatprep.subr.mxu0 0.0
    %273 = vmatpush1.msra.mxu0 0.0
    %274 = vmatprep.subr.mxu0 0.0
    %275 = vmatpush1.msra.mxu0 0.0
    %276 = vmatprep.subr.mxu0 0.0
    %277 = vmatpush1.msra.mxu0 0.0
    %278 = vmatprep.subr.mxu0 0.0
    %279 = vmatpush1.msra.mxu0 0.0
    %280 = vmatprep.subr.mxu0 0.0
    %281 = vmatpush1.msra.mxu0 0.0
    %282 = vmatprep.subr.mxu0 0.0
    %283 = vmatpush1.msra.mxu0 0.0
    %284 = vmatprep.subr.mxu0 0.0
    %285 = vmatpush1.msra.mxu0 0.0
    %286 = vmatprep.subr.mxu0 0.0
    %287 = vmatpush1.msra.mxu0 0.0
    %288 = vmatprep.subr.mxu0 0.0
    %289 = vmatpush1.msra.mxu0 0.0
    %290 = vmatprep.subr.mxu0 0.0
    %291 = vmatpush1.msra.mxu0 0.0
    %292 = vmatprep.subr.mxu0 0.0
    %293 = vmatpush1.msra.mxu0 0.0
    %294 = vmatprep.subr.mxu0 0.0
    %295 = vmatpush1.msra.mxu0 0.0
    %296 = vmatprep.subr.mxu0 0.0
    %297 = vmatpush1.msra.mxu0 0.0
    %298 = vmatprep.subr.mxu0 0.0
    %299 = vmatpush1.msra.mxu0 0.0
    %300 = vmatprep.subr.mxu0 0.0
    %301 = vmatpush1.msra.mxu0 0.0
    %302 = vmatprep.subr.mxu0 0.0
    %303 = vmatpush1.msra.mxu0 0.0
    %304 = vmatprep.subr.mxu0 0.0
    %305 = vmatpush1.msra.mxu0 0.0
    %306 = vmatprep.subr.mxu0 0.0
    %307 = vmatpush1.msra.mxu0 0.0
    %308 = vmatprep.subr.mxu0 0.0
    %309 = vmatpush1.msra.mxu0 0.0
    %310 = vmatprep.subr.mxu0 0.0
    %311 = vmatpush1.msra.mxu0 0.0
    %312 = vmatprep.subr.mxu0 0.0
    %313 = vmatpush1.msra.mxu0 0.0
    %314 = vmatprep.subr.mxu0 0.0
    %315 = vmatpush1.msra.mxu0 0.0
    %316 = vmatprep.subr.mxu0 0.0
    %317 = vmatpush1.msra.mxu0 0.0
    %318 = vmatprep.subr.mxu0 0.0
    %319 = vmatpush1.msra.mxu0 0.0
    %320 = vmatprep.mubr.f32.mxu0 0.0
    %v321 = vand.u32 %v169, 4294901760
    %322 = vmatmul.mubr.f32.gmra.mrb[0].mxu0 %v321
    %v323 = vpop.f32.mrb[0].mxu0
    %v324 = vadd.f32 %v248, %v323
    %v325 = vpop.f32.mrb[0].mxu0
    %326 = vdwg.mxu0
    %327 = vmatprep.subr.mxu0 0.0
    %v328 = vand.u32 %v173, 4294901760
    %v329 = vsub.f32 %v173, %v328
    %330 = vmatpush1.msra.mxu0 %v329
    %331 = vmatprep.subr.mxu0 0.0
    %332 = vmatpush1.msra.mxu0 0.0
    %333 = vmatprep.subr.mxu0 0.0
    %334 = vmatpush1.msra.mxu0 0.0
    %335 = vmatprep.subr.mxu0 0.0
    %336 = vmatpush1.msra.mxu0 0.0
    %337 = vmatprep.subr.mxu0 0.0
    %338 = vmatpush1.msra.mxu0 0.0
    %339 = vmatprep.subr.mxu0 0.0
    %340 = vmatpush1.msra.mxu0 0.0
    %341 = vmatprep.subr.mxu0 0.0
    %342 = vmatpush1.msra.mxu0 0.0
    %343 = vmatprep.subr.mxu0 0.0
    %344 = vmatpush1.msra.mxu0 0.0
    %345 = vmatprep.subr.mxu0 0.0
    %346 = vmatpush1.msra.mxu0 0.0
    %347 = vmatprep.subr.mxu0 0.0
    %348 = vmatpush1.msra.mxu0 0.0
    %349 = vmatprep.subr.mxu0 0.0
    %350 = vmatpush1.msra.mxu0 0.0
    %351 = vmatprep.subr.mxu0 0.0
    %352 = vmatpush1.msra.mxu0 0.0
    %353 = vmatprep.subr.mxu0 0.0
    %354 = vmatpush1.msra.mxu0 0.0
    %355 = vmatprep.subr.mxu0 0.0
    %356 = vmatpush1.msra.mxu0 0.0
    %357 = vmatprep.subr.mxu0 0.0
    %358 = vmatpush1.msra.mxu0 0.0
    %359 = vmatprep.subr.mxu0 0.0
    %360 = vmatpush1.msra.mxu0 0.0
    %361 = vmatprep.subr.mxu0 0.0
    %362 = vmatpush1.msra.mxu0 0.0
    %363 = vmatprep.subr.mxu0 0.0
    %364 = vmatpush1.msra.mxu0 0.0
    %365 = vmatprep.subr.mxu0 0.0
    %366 = vmatpush1.msra.mxu0 0.0
    %367 = vmatprep.subr.mxu0 0.0
    %368 = vmatpush1.msra.mxu0 0.0
    %369 = vmatprep.subr.mxu0 0.0
    %370 = vmatpush1.msra.mxu0 0.0
    %371 = vmatprep.subr.mxu0 0.0
    %372 = vmatpush1.msra.mxu0 0.0
    %373 = vmatprep.subr.mxu0 0.0
    %374 = vmatpush1.msra.mxu0 0.0
    %375 = vmatprep.subr.mxu0 0.0
    %376 = vmatpush1.msra.mxu0 0.0
    %377 = vmatprep.subr.mxu0 0.0
    %378 = vmatpush1.msra.mxu0 0.0
    %379 = vmatprep.subr.mxu0 0.0
    %380 = vmatpush1.msra.mxu0 0.0
    %381 = vmatprep.subr.mxu0 0.0
    %382 = vmatpush1.msra.mxu0 0.0
    %383 = vmatprep.subr.mxu0 0.0
    %384 = vmatpush1.msra.mxu0 0.0
    %385 = vmatprep.subr.mxu0 0.0
    %386 = vmatpush1.msra.mxu0 0.0
    %387 = vmatprep.subr.mxu0 0.0
    %388 = vmatpush1.msra.mxu0 0.0
    %389 = vmatprep.subr.mxu0 0.0
    %390 = vmatpush1.msra.mxu0 0.0
    %391 = vmatprep.subr.mxu0 0.0
    %392 = vmatpush1.msra.mxu0 0.0
    %393 = vmatprep.mubr.f32.mxu0 0.0
    %v394 = vand.u32 %v169, 4294901760
    %v395 = vsub.f32 %v169, %v394
    %396 = vmatmul.mubr.f32.gmra.mrb[0].mxu0 %v395
    %v397 = vpop.f32.mrb[0].mxu0
    %v398 = vadd.f32 %v324, %v397
    %v399 = vpop.f32.mrb[0].mxu0
    %400 = vdwg.mxu0
    %401 = vmatprep.subr.mxu0 0.0
    %v402 = vand.u32 %v173, 4294901760
    %403 = vmatpush1.msra.mxu0 %v402
    %404 = vmatprep.subr.mxu0 0.0
    %405 = vmatpush1.msra.mxu0 0.0
    %406 = vmatprep.subr.mxu0 0.0
    %407 = vmatpush1.msra.mxu0 0.0
    %408 = vmatprep.subr.mxu0 0.0
    %409 = vmatpush1.msra.mxu0 0.0
    %410 = vmatprep.subr.mxu0 0.0
    %411 = vmatpush1.msra.mxu0 0.0
    %412 = vmatprep.subr.mxu0 0.0
    %413 = vmatpush1.msra.mxu0 0.0
    %414 = vmatprep.subr.mxu0 0.0
    %415 = vmatpush1.msra.mxu0 0.0
    %416 = vmatprep.subr.mxu0 0.0
    %417 = vmatpush1.msra.mxu0 0.0
    %418 = vmatprep.subr.mxu0 0.0
    %419 = vmatpush1.msra.mxu0 0.0
    %420 = vmatprep.subr.mxu0 0.0
    %421 = vmatpush1.msra.mxu0 0.0
    %422 = vmatprep.subr.mxu0 0.0
    %423 = vmatpush1.msra.mxu0 0.0
    %424 = vmatprep.subr.mxu0 0.0
    %425 = vmatpush1.msra.mxu0 0.0
    %426 = vmatprep.subr.mxu0 0.0
    %427 = vmatpush1.msra.mxu0 0.0
    %428 = vmatprep.subr.mxu0 0.0
    %429 = vmatpush1.msra.mxu0 0.0
    %430 = vmatprep.subr.mxu0 0.0
    %431 = vmatpush1.msra.mxu0 0.0
    %432 = vmatprep.subr.mxu0 0.0
    %433 = vmatpush1.msra.mxu0 0.0
    %434 = vmatprep.subr.mxu0 0.0
    %435 = vmatpush1.msra.mxu0 0.0
    %436 = vmatprep.subr.mxu0 0.0
    %437 = vmatpush1.msra.mxu0 0.0
    %438 = vmatprep.subr.mxu0 0.0
    %439 = vmatpush1.msra.mxu0 0.0
    %440 = vmatprep.subr.mxu0 0.0
    %441 = vmatpush1.msra.mxu0 0.0
    %442 = vmatprep.subr.mxu0 0.0
    %443 = vmatpush1.msra.mxu0 0.0
    %444 = vmatprep.subr.mxu0 0.0
    %445 = vmatpush1.msra.mxu0 0.0
    %446 = vmatprep.subr.mxu0 0.0
    %447 = vmatpush1.msra.mxu0 0.0
    %448 = vmatprep.subr.mxu0 0.0
    %449 = vmatpush1.msra.mxu0 0.0
    %450 = vmatprep.subr.mxu0 0.0
    %451 = vmatpush1.msra.mxu0 0.0
    %452 = vmatprep.subr.mxu0 0.0
    %453 = vmatpush1.msra.mxu0 0.0
    %454 = vmatprep.subr.mxu0 0.0
    %455 = vmatpush1.msra.mxu0 0.0
    %456 = vmatprep.subr.mxu0 0.0
    %457 = vmatpush1.msra.mxu0 0.0
    %458 = vmatprep.subr.mxu0 0.0
    %459 = vmatpush1.msra.mxu0 0.0
    %460 = vmatprep.subr.mxu0 0.0
    %461 = vmatpush1.msra.mxu0 0.0
    %462 = vmatprep.subr.mxu0 0.0
    %463 = vmatpush1.msra.mxu0 0.0
    %464 = vmatprep.subr.mxu0 0.0
    %465 = vmatpush1.msra.mxu0 0.0
    %466 = vmatprep.mubr.f32.mxu0 0.0
    %v467 = vand.u32 %v169, 4294901760
    %v468 = vsub.f32 %v169, %v467
    %v469 = vand.u32 %v468, 4294901760
    %470 = vmatmul.mubr.f32.gmra.mrb[0].mxu0 %v469
    %v471 = vpop.f32.mrb[0].mxu0
    %v472 = vadd.f32 %v398, %v471
    %v473 = vpop.f32.mrb[0].mxu0
    %474 = vdwg.mxu0
    %475 = vmatprep.subr.mxu0 0.0
    %v476 = vand.u32 %v173, 4294901760
    %v477 = vsub.f32 %v173, %v476
    %v478 = vand.u32 %v477, 4294901760
    %479 = vmatpush1.msra.mxu0 %v478
    %480 = vmatprep.subr.mxu0 0.0
    %481 = vmatpush1.msra.mxu0 0.0
    %482 = vmatprep.subr.mxu0 0.0
    %483 = vmatpush1.msra.mxu0 0.0
    %484 = vmatprep.subr.mxu0 0.0
    %485 = vmatpush1.msra.mxu0 0.0
    %486 = vmatprep.subr.mxu0 0.0
    %487 = vmatpush1.msra.mxu0 0.0
    %488 = vmatprep.subr.mxu0 0.0
    %489 = vmatpush1.msra.mxu0 0.0
    %490 = vmatprep.subr.mxu0 0.0
    %491 = vmatpush1.msra.mxu0 0.0
    %492 = vmatprep.subr.mxu0 0.0
    %493 = vmatpush1.msra.mxu0 0.0
    %494 = vmatprep.subr.mxu0 0.0
    %495 = vmatpush1.msra.mxu0 0.0
    %496 = vmatprep.subr.mxu0 0.0
    %497 = vmatpush1.msra.mxu0 0.0
    %498 = vmatprep.subr.mxu0 0.0
    %499 = vmatpush1.msra.mxu0 0.0
    %500 = vmatprep.subr.mxu0 0.0
    %501 = vmatpush1.msra.mxu0 0.0
    %502 = vmatprep.subr.mxu0 0.0
    %503 = vmatpush1.msra.mxu0 0.0
    %504 = vmatprep.subr.mxu0 0.0
    %505 = vmatpush1.msra.mxu0 0.0
    %506 = vmatprep.subr.mxu0 0.0
    %507 = vmatpush1.msra.mxu0 0.0
    %508 = vmatprep.subr.mxu0 0.0
    %509 = vmatpush1.msra.mxu0 0.0
    %510 = vmatprep.subr.mxu0 0.0
    %511 = vmatpush1.msra.mxu0 0.0
    %512 = vmatprep.subr.mxu0 0.0
    %513 = vmatpush1.msra.mxu0 0.0
    %514 = vmatprep.subr.mxu0 0.0
    %515 = vmatpush1.msra.mxu0 0.0
    %516 = vmatprep.subr.mxu0 0.0
    %517 = vmatpush1.msra.mxu0 0.0
    %518 = vmatprep.subr.mxu0 0.0
    %519 = vmatpush1.msra.mxu0 0.0
    %520 = vmatprep.subr.mxu0 0.0
    %521 = vmatpush1.msra.mxu0 0.0
    %522 = vmatprep.subr.mxu0 0.0
    %523 = vmatpush1.msra.mxu0 0.0
    %524 = vmatprep.subr.mxu0 0.0
    %525 = vmatpush1.msra.mxu0 0.0
    %526 = vmatprep.subr.mxu0 0.0
    %527 = vmatpush1.msra.mxu0 0.0
    %528 = vmatprep.subr.mxu0 0.0
    %529 = vmatpush1.msra.mxu0 0.0
    %530 = vmatprep.subr.mxu0 0.0
    %531 = vmatpush1.msra.mxu0 0.0
    %532 = vmatprep.subr.mxu0 0.0
    %533 = vmatpush1.msra.mxu0 0.0
    %534 = vmatprep.subr.mxu0 0.0
    %535 = vmatpush1.msra.mxu0 0.0
    %536 = vmatprep.subr.mxu0 0.0
    %537 = vmatpush1.msra.mxu0 0.0
    %538 = vmatprep.subr.mxu0 0.0
    %539 = vmatpush1.msra.mxu0 0.0
    %540 = vmatprep.subr.mxu0 0.0
    %541 = vmatpush1.msra.mxu0 0.0
    %542 = vmatprep.mubr.f32.mxu0 0.0
    %v543 = vand.u32 %v169, 4294901760
    %544 = vmatmul.mubr.f32.gmra.mrb[0].mxu0 %v543
    %v545 = vpop.f32.mrb[0].mxu0
    %v546 = vadd.f32 %v472, %v545
    %v547 = vpop.f32.mrb[0].mxu0
    %548 = vdwg.mxu0
    %549 = vmatprep.subr.mxu0 0.0
    %v550 = vand.u32 %v173, 4294901760
    %551 = vmatpush1.msra.mxu0 %v550
    %552 = vmatprep.subr.mxu0 0.0
    %553 = vmatpush1.msra.mxu0 0.0
    %554 = vmatprep.subr.mxu0 0.0
    %555 = vmatpush1.msra.mxu0 0.0
    %556 = vmatprep.subr.mxu0 0.0
    %557 = vmatpush1.msra.mxu0 0.0
    %558 = vmatprep.subr.mxu0 0.0
    %559 = vmatpush1.msra.mxu0 0.0
    %560 = vmatprep.subr.mxu0 0.0
    %561 = vmatpush1.msra.mxu0 0.0
    %562 = vmatprep.subr.mxu0 0.0
    %563 = vmatpush1.msra.mxu0 0.0
    %564 = vmatprep.subr.mxu0 0.0
    %565 = vmatpush1.msra.mxu0 0.0
    %566 = vmatprep.subr.mxu0 0.0
    %567 = vmatpush1.msra.mxu0 0.0
    %568 = vmatprep.subr.mxu0 0.0
    %569 = vmatpush1.msra.mxu0 0.0
    %570 = vmatprep.subr.mxu0 0.0
    %571 = vmatpush1.msra.mxu0 0.0
    %572 = vmatprep.subr.mxu0 0.0
    %573 = vmatpush1.msra.mxu0 0.0
    %574 = vmatprep.subr.mxu0 0.0
    %575 = vmatpush1.msra.mxu0 0.0
    %576 = vmatprep.subr.mxu0 0.0
    %577 = vmatpush1.msra.mxu0 0.0
    %578 = vmatprep.subr.mxu0 0.0
    %579 = vmatpush1.msra.mxu0 0.0
    %580 = vmatprep.subr.mxu0 0.0
    %581 = vmatpush1.msra.mxu0 0.0
    %582 = vmatprep.subr.mxu0 0.0
    %583 = vmatpush1.msra.mxu0 0.0
    %584 = vmatprep.subr.mxu0 0.0
    %585 = vmatpush1.msra.mxu0 0.0
    %586 = vmatprep.subr.mxu0 0.0
    %587 = vmatpush1.msra.mxu0 0.0
    %588 = vmatprep.subr.mxu0 0.0
    %589 = vmatpush1.msra.mxu0 0.0
    %590 = vmatprep.subr.mxu0 0.0
    %591 = vmatpush1.msra.mxu0 0.0
    %592 = vmatprep.subr.mxu0 0.0
    %593 = vmatpush1.msra.mxu0 0.0
    %594 = vmatprep.subr.mxu0 0.0
    %595 = vmatpush1.msra.mxu0 0.0
    %596 = vmatprep.subr.mxu0 0.0
    %597 = vmatpush1.msra.mxu0 0.0
    %598 = vmatprep.subr.mxu0 0.0
    %599 = vmatpush1.msra.mxu0 0.0
    %600 = vmatprep.subr.mxu0 0.0
    %601 = vmatpush1.msra.mxu0 0.0
    %602 = vmatprep.subr.mxu0 0.0
    %603 = vmatpush1.msra.mxu0 0.0
    %604 = vmatprep.subr.mxu0 0.0
    %605 = vmatpush1.msra.mxu0 0.0
    %606 = vmatprep.subr.mxu0 0.0
    %607 = vmatpush1.msra.mxu0 0.0
    %608 = vmatprep.subr.mxu0 0.0
    %609 = vmatpush1.msra.mxu0 0.0
    %610 = vmatprep.subr.mxu0 0.0
    %611 = vmatpush1.msra.mxu0 0.0
    %612 = vmatprep.subr.mxu0 0.0
    %613 = vmatpush1.msra.mxu0 0.0
    %614 = vmatprep.mubr.f32.mxu0 0.0
    %v615 = vand.u32 %v169, 4294901760
    %616 = vmatmul.mubr.f32.gmra.mrb[0].mxu0 %v615
    %v617 = vpop.f32.mrb[0].mxu0
    %v618 = vadd.f32 %v546, %v617
    %v619 = vpop.f32.mrb[0].mxu0
    %620 = vdwg.mxu0
    %vm621 = vcmask 261120
    %v623 = vsel %vm621, %v159, 0
    %625 = vmatprep.subr.mxu0 0.0
    %v626 = vand.u32 %v91, 4294901760
    %627 = vmatpush1.msra.mxu0 %v626
    %628 = vmatprep.subr.mxu0 0.0
    %v629 = vand.u32 %v92, 4294901760
    %630 = vmatpush1.msra.mxu0 %v629
    %631 = vmatprep.subr.mxu0 0.0
    %v632 = vand.u32 %v93, 4294901760
    %633 = vmatpush1.msra.mxu0 %v632
    %634 = vmatprep.subr.mxu0 0.0
    %v635 = vand.u32 %v94, 4294901760
    %636 = vmatpush1.msra.mxu0 %v635
    %637 = vmatprep.subr.mxu0 0.0
    %638 = vmatpush1.msra.mxu0 0.0
    %639 = vmatprep.subr.mxu0 0.0
    %640 = vmatpush1.msra.mxu0 0.0
    %641 = vmatprep.subr.mxu0 0.0
    %642 = vmatpush1.msra.mxu0 0.0
    %643 = vmatprep.subr.mxu0 0.0
    %644 = vmatpush1.msra.mxu0 0.0
    %645 = vmatprep.subr.mxu0 0.0
    %646 = vmatpush1.msra.mxu0 0.0
    %647 = vmatprep.subr.mxu0 0.0
    %648 = vmatpush1.msra.mxu0 0.0
    %649 = vmatprep.subr.mxu0 0.0
    %650 = vmatpush1.msra.mxu0 0.0
    %651 = vmatprep.subr.mxu0 0.0
    %652 = vmatpush1.msra.mxu0 0.0
    %653 = vmatprep.subr.mxu0 0.0
    %654 = vmatpush1.msra.mxu0 0.0
    %655 = vmatprep.subr.mxu0 0.0
    %656 = vmatpush1.msra.mxu0 0.0
    %657 = vmatprep.subr.mxu0 0.0
    %658 = vmatpush1.msra.mxu0 0.0
    %659 = vmatprep.subr.mxu0 0.0
    %660 = vmatpush1.msra.mxu0 0.0
    %661 = vmatprep.subr.mxu0 0.0
    %662 = vmatpush1.msra.mxu0 0.0
    %663 = vmatprep.subr.mxu0 0.0
    %664 = vmatpush1.msra.mxu0 0.0
    %665 = vmatprep.subr.mxu0 0.0
    %666 = vmatpush1.msra.mxu0 0.0
    %667 = vmatprep.subr.mxu0 0.0
    %668 = vmatpush1.msra.mxu0 0.0
    %669 = vmatprep.subr.mxu0 0.0
    %670 = vmatpush1.msra.mxu0 0.0
    %671 = vmatprep.subr.mxu0 0.0
    %672 = vmatpush1.msra.mxu0 0.0
    %673 = vmatprep.subr.mxu0 0.0
    %674 = vmatpush1.msra.mxu0 0.0
    %675 = vmatprep.subr.mxu0 0.0
    %676 = vmatpush1.msra.mxu0 0.0
    %677 = vmatprep.subr.mxu0 0.0
    %678 = vmatpush1.msra.mxu0 0.0
    %679 = vmatprep.subr.mxu0 0.0
    %680 = vmatpush1.msra.mxu0 0.0
    %681 = vmatprep.subr.mxu0 0.0
    %682 = vmatpush1.msra.mxu0 0.0
    %683 = vmatprep.subr.mxu0 0.0
    %684 = vmatpush1.msra.mxu0 0.0
    %685 = vmatprep.subr.mxu0 0.0
    %686 = vmatpush1.msra.mxu0 0.0
    %687 = vmatprep.subr.mxu0 0.0
    %688 = vmatpush1.msra.mxu0 0.0
    %689 = vmatprep.subr.mxu0 0.0
    %690 = vmatpush1.msra.mxu0 0.0
    %691 = vmatprep.subr.mxu0 0.0
    %692 = vmatpush1.msra.mxu0 0.0
    %693 = vmatprep.mubr.f32.mxu0 0.0
    %v694 = vand.u32 %v623, 4294901760
    %v695 = vsub.f32 %v623, %v694
    %v696 = vand.u32 %v695, 4294901760
    %v697 = vsub.f32 %v695, %v696
    %v698 = vand.u32 %v697, 4294901760
    %699 = vmatmul.mubr.f32.gmra.mrb[0].mxu0 %v698
    %v700 = vpop.f32.mrb[0].mxu0
    %v701 = vadd.f32 %v618, %v700
    %v702 = vpop.f32.mrb[0].mxu0
    %703 = vdwg.mxu0
    %704 = vmatprep.subr.mxu0 0.0
    %v705 = vand.u32 %v91, 4294901760
    %v706 = vsub.f32 %v91, %v705
    %v707 = vand.u32 %v706, 4294901760
    %v708 = vsub.f32 %v706, %v707
    %v709 = vand.u32 %v708, 4294901760
    %710 = vmatpush1.msra.mxu0 %v709
    %711 = vmatprep.subr.mxu0 0.0
    %v712 = vand.u32 %v92, 4294901760
    %v713 = vsub.f32 %v92, %v712
    %v714 = vand.u32 %v713, 4294901760
    %v715 = vsub.f32 %v713, %v714
    %v716 = vand.u32 %v715, 4294901760
    %717 = vmatpush1.msra.mxu0 %v716
    %718 = vmatprep.subr.mxu0 0.0
    %v719 = vand.u32 %v93, 4294901760
    %v720 = vsub.f32 %v93, %v719
    %v721 = vand.u32 %v720, 4294901760
    %v722 = vsub.f32 %v720, %v721
    %v723 = vand.u32 %v722, 4294901760
    %724 = vmatpush1.msra.mxu0 %v723
    %725 = vmatprep.subr.mxu0 0.0
    %v726 = vand.u32 %v94, 4294901760
    %v727 = vsub.f32 %v94, %v726
    %v728 = vand.u32 %v727, 4294901760
    %v729 = vsub.f32 %v727, %v728
    %v730 = vand.u32 %v729, 4294901760
    %731 = vmatpush1.msra.mxu0 %v730
    %732 = vmatprep.subr.mxu0 0.0
    %733 = vmatpush1.msra.mxu0 0.0
    %734 = vmatprep.subr.mxu0 0.0
    %735 = vmatpush1.msra.mxu0 0.0
    %736 = vmatprep.subr.mxu0 0.0
    %737 = vmatpush1.msra.mxu0 0.0
    %738 = vmatprep.subr.mxu0 0.0
    %739 = vmatpush1.msra.mxu0 0.0
    %740 = vmatprep.subr.mxu0 0.0
    %741 = vmatpush1.msra.mxu0 0.0
    %742 = vmatprep.subr.mxu0 0.0
    %743 = vmatpush1.msra.mxu0 0.0
    %744 = vmatprep.subr.mxu0 0.0
    %745 = vmatpush1.msra.mxu0 0.0
    %746 = vmatprep.subr.mxu0 0.0
    %747 = vmatpush1.msra.mxu0 0.0
    %748 = vmatprep.subr.mxu0 0.0
    %749 = vmatpush1.msra.mxu0 0.0
    %750 = vmatprep.subr.mxu0 0.0
    %751 = vmatpush1.msra.mxu0 0.0
    %752 = vmatprep.subr.mxu0 0.0
    %753 = vmatpush1.msra.mxu0 0.0
    %754 = vmatprep.subr.mxu0 0.0
    %755 = vmatpush1.msra.mxu0 0.0
    %756 = vmatprep.subr.mxu0 0.0
    %757 = vmatpush1.msra.mxu0 0.0
    %758 = vmatprep.subr.mxu0 0.0
    %759 = vmatpush1.msra.mxu0 0.0
    %760 = vmatprep.subr.mxu0 0.0
    %761 = vmatpush1.msra.mxu0 0.0
    %762 = vmatprep.subr.mxu0 0.0
    %763 = vmatpush1.msra.mxu0 0.0
    %764 = vmatprep.subr.mxu0 0.0
    %765 = vmatpush1.msra.mxu0 0.0
    %766 = vmatprep.subr.mxu0 0.0
    %767 = vmatpush1.msra.mxu0 0.0
    %768 = vmatprep.subr.mxu0 0.0
    %769 = vmatpush1.msra.mxu0 0.0
    %770 = vmatprep.subr.mxu0 0.0
    %771 = vmatpush1.msra.mxu0 0.0
    %772 = vmatprep.subr.mxu0 0.0
    %773 = vmatpush1.msra.mxu0 0.0
    %774 = vmatprep.subr.mxu0 0.0
    %775 = vmatpush1.msra.mxu0 0.0
    %776 = vmatprep.subr.mxu0 0.0
    %777 = vmatpush1.msra.mxu0 0.0
    %778 = vmatprep.subr.mxu0 0.0
    %779 = vmatpush1.msra.mxu0 0.0
    %780 = vmatprep.subr.mxu0 0.0
    %781 = vmatpush1.msra.mxu0 0.0
    %782 = vmatprep.subr.mxu0 0.0
    %783 = vmatpush1.msra.mxu0 0.0
    %784 = vmatprep.subr.mxu0 0.0
    %785 = vmatpush1.msra.mxu0 0.0
    %786 = vmatprep.subr.mxu0 0.0
    %787 = vmatpush1.msra.mxu0 0.0
    %788 = vmatprep.mubr.f32.mxu0 0.0
    %v789 = vand.u32 %v623, 4294901760
    %790 = vmatmul.mubr.f32.gmra.mrb[0].mxu0 %v789
    %v791 = vpop.f32.mrb[0].mxu0
    %v792 = vadd.f32 %v701, %v791
    %v793 = vpop.f32.mrb[0].mxu0
    %794 = vdwg.mxu0
    %795 = vmatprep.subr.mxu0 0.0
    %v796 = vand.u32 %v91, 4294901760
    %v797 = vsub.f32 %v91, %v796
    %798 = vmatpush1.msra.mxu0 %v797
    %799 = vmatprep.subr.mxu0 0.0
    %v800 = vand.u32 %v92, 4294901760
    %v801 = vsub.f32 %v92, %v800
    %802 = vmatpush1.msra.mxu0 %v801
    %803 = vmatprep.subr.mxu0 0.0
    %v804 = vand.u32 %v93, 4294901760
    %v805 = vsub.f32 %v93, %v804
    %806 = vmatpush1.msra.mxu0 %v805
    %807 = vmatprep.subr.mxu0 0.0
    %v808 = vand.u32 %v94, 4294901760
    %v809 = vsub.f32 %v94, %v808
    %810 = vmatpush1.msra.mxu0 %v809
    %811 = vmatprep.subr.mxu0 0.0
    %812 = vmatpush1.msra.mxu0 0.0
    %813 = vmatprep.subr.mxu0 0.0
    %814 = vmatpush1.msra.mxu0 0.0
    %815 = vmatprep.subr.mxu0 0.0
    %816 = vmatpush1.msra.mxu0 0.0
    %817 = vmatprep.subr.mxu0 0.0
    %818 = vmatpush1.msra.mxu0 0.0
    %819 = vmatprep.subr.mxu0 0.0
    %820 = vmatpush1.msra.mxu0 0.0
    %821 = vmatprep.subr.mxu0 0.0
    %822 = vmatpush1.msra.mxu0 0.0
    %823 = vmatprep.subr.mxu0 0.0
    %824 = vmatpush1.msra.mxu0 0.0
    %825 = vmatprep.subr.mxu0 0.0
    %826 = vmatpush1.msra.mxu0 0.0
    %827 = vmatprep.subr.mxu0 0.0
    %828 = vmatpush1.msra.mxu0 0.0
    %829 = vmatprep.subr.mxu0 0.0
    %830 = vmatpush1.msra.mxu0 0.0
    %831 = vmatprep.subr.mxu0 0.0
    %832 = vmatpush1.msra.mxu0 0.0
    %833 = vmatprep.subr.mxu0 0.0
    %834 = vmatpush1.msra.mxu0 0.0
    %835 = vmatprep.subr.mxu0 0.0
    %836 = vmatpush1.msra.mxu0 0.0
    %837 = vmatprep.subr.mxu0 0.0
    %838 = vmatpush1.msra.mxu0 0.0
    %839 = vmatprep.subr.mxu0 0.0
    %840 = vmatpush1.msra.mxu0 0.0
    %841 = vmatprep.subr.mxu0 0.0
    %842 = vmatpush1.msra.mxu0 0.0
    %843 = vmatprep.subr.mxu0 0.0
    %844 = vmatpush1.msra.mxu0 0.0
    %845 = vmatprep.subr.mxu0 0.0
    %846 = vmatpush1.msra.mxu0 0.0
    %847 = vmatprep.subr.mxu0 0.0
    %848 = vmatpush1.msra.mxu0 0.0
    %849 = vmatprep.subr.mxu0 0.0
    %850 = vmatpush1.msra.mxu0 0.0
    %851 = vmatprep.subr.mxu0 0.0
    %852 = vmatpush1.msra.mxu0 0.0
    %853 = vmatprep.subr.mxu0 0.0
    %854 = vmatpush1.msra.mxu0 0.0
    %855 = vmatprep.subr.mxu0 0.0
    %856 = vmatpush1.msra.mxu0 0.0
    %857 = vmatprep.subr.mxu0 0.0
    %858 = vmatpush1.msra.mxu0 0.0
    %859 = vmatprep.subr.mxu0 0.0
    %860 = vmatpush1.msra.mxu0 0.0
    %861 = vmatprep.subr.mxu0 0.0
    %862 = vmatpush1.msra.mxu0 0.0
    %863 = vmatprep.subr.mxu0 0.0
    %864 = vmatpush1.msra.mxu0 0.0
    %865 = vmatprep.subr.mxu0 0.0
    %866 = vmatpush1.msra.mxu0 0.0
    %867 = vmatprep.mubr.f32.mxu0 0.0
    %v868 = vand.u32 %v623, 4294901760
    %v869 = vsub.f32 %v623, %v868
    %870 = vmatmul.mubr.f32.gmra.mrb[0].mxu0 %v869
    %v871 = vpop.f32.mrb[0].mxu0
    %v872 = vadd.f32 %v792, %v871
    %v873 = vpop.f32.mrb[0].mxu0
    %874 = vdwg.mxu0
    %875 = vmatprep.subr.mxu0 0.0
    %v876 = vand.u32 %v91, 4294901760
    %877 = vmatpush1.msra.mxu0 %v876
    %878 = vmatprep.subr.mxu0 0.0
    %v879 = vand.u32 %v92, 4294901760
    %880 = vmatpush1.msra.mxu0 %v879
    %881 = vmatprep.subr.mxu0 0.0
    %v882 = vand.u32 %v93, 4294901760
    %883 = vmatpush1.msra.mxu0 %v882
    %884 = vmatprep.subr.mxu0 0.0
    %v885 = vand.u32 %v94, 4294901760
    %886 = vmatpush1.msra.mxu0 %v885
    %887 = vmatprep.subr.mxu0 0.0
    %888 = vmatpush1.msra.mxu0 0.0
    %889 = vmatprep.subr.mxu0 0.0
    %890 = vmatpush1.msra.mxu0 0.0
    %891 = vmatprep.subr.mxu0 0.0
    %892 = vmatpush1.msra.mxu0 0.0
    %893 = vmatprep.subr.mxu0 0.0
    %894 = vmatpush1.msra.mxu0 0.0
    %895 = vmatprep.subr.mxu0 0.0
    %896 = vmatpush1.msra.mxu0 0.0
    %897 = vmatprep.subr.mxu0 0.0
    %898 = vmatpush1.msra.mxu0 0.0
    %899 = vmatprep.subr.mxu0 0.0
    %900 = vmatpush1.msra.mxu0 0.0
    %901 = vmatprep.subr.mxu0 0.0
    %902 = vmatpush1.msra.mxu0 0.0
    %903 = vmatprep.subr.mxu0 0.0
    %904 = vmatpush1.msra.mxu0 0.0
    %905 = vmatprep.subr.mxu0 0.0
    %906 = vmatpush1.msra.mxu0 0.0
    %907 = vmatprep.subr.mxu0 0.0
    %908 = vmatpush1.msra.mxu0 0.0
    %909 = vmatprep.subr.mxu0 0.0
    %910 = vmatpush1.msra.mxu0 0.0
    %911 = vmatprep.subr.mxu0 0.0
    %912 = vmatpush1.msra.mxu0 0.0
    %913 = vmatprep.subr.mxu0 0.0
    %914 = vmatpush1.msra.mxu0 0.0
    %915 = vmatprep.subr.mxu0 0.0
    %916 = vmatpush1.msra.mxu0 0.0
    %917 = vmatprep.subr.mxu0 0.0
    %918 = vmatpush1.msra.mxu0 0.0
    %919 = vmatprep.subr.mxu0 0.0
    %920 = vmatpush1.msra.mxu0 0.0
    %921 = vmatprep.subr.mxu0 0.0
    %922 = vmatpush1.msra.mxu0 0.0
    %923 = vmatprep.subr.mxu0 0.0
    %924 = vmatpush1.msra.mxu0 0.0
    %925 = vmatprep.subr.mxu0 0.0
    %926 = vmatpush1.msra.mxu0 0.0
    %927 = vmatprep.subr.mxu0 0.0
    %928 = vmatpush1.msra.mxu0 0.0
    %929 = vmatprep.subr.mxu0 0.0
    %930 = vmatpush1.msra.mxu0 0.0
    %931 = vmatprep.subr.mxu0 0.0
    %932 = vmatpush1.msra.mxu0 0.0
    %933 = vmatprep.subr.mxu0 0.0
    %934 = vmatpush1.msra.mxu0 0.0
    %935 = vmatprep.subr.mxu0 0.0
    %936 = vmatpush1.msra.mxu0 0.0
    %937 = vmatprep.subr.mxu0 0.0
    %938 = vmatpush1.msra.mxu0 0.0
    %939 = vmatprep.subr.mxu0 0.0
    %940 = vmatpush1.msra.mxu0 0.0
    %941 = vmatprep.subr.mxu0 0.0
    %942 = vmatpush1.msra.mxu0 0.0
    %943 = vmatprep.mubr.f32.mxu0 0.0
    %v944 = vand.u32 %v623, 4294901760
    %v945 = vsub.f32 %v623, %v944
    %v946 = vand.u32 %v945, 4294901760
    %947 = vmatmul.mubr.f32.gmra.mrb[0].mxu0 %v946
    %v948 = vpop.f32.mrb[0].mxu0
    %v949 = vadd.f32 %v872, %v948
    %v950 = vpop.f32.mrb[0].mxu0
    %951 = vdwg.mxu0
    %952 = vmatprep.subr.mxu0 0.0
    %v953 = vand.u32 %v91, 4294901760
    %v954 = vsub.f32 %v91, %v953
    %v955 = vand.u32 %v954, 4294901760
    %956 = vmatpush1.msra.mxu0 %v955
    %957 = vmatprep.subr.mxu0 0.0
    %v958 = vand.u32 %v92, 4294901760
    %v959 = vsub.f32 %v92, %v958
    %v960 = vand.u32 %v959, 4294901760
    %961 = vmatpush1.msra.mxu0 %v960
    %962 = vmatprep.subr.mxu0 0.0
    %v963 = vand.u32 %v93, 4294901760
    %v964 = vsub.f32 %v93, %v963
    %v965 = vand.u32 %v964, 4294901760
    %966 = vmatpush1.msra.mxu0 %v965
    %967 = vmatprep.subr.mxu0 0.0
    %v968 = vand.u32 %v94, 4294901760
    %v969 = vsub.f32 %v94, %v968
    %v970 = vand.u32 %v969, 4294901760
    %971 = vmatpush1.msra.mxu0 %v970
    %972 = vmatprep.subr.mxu0 0.0
    %973 = vmatpush1.msra.mxu0 0.0
    %974 = vmatprep.subr.mxu0 0.0
    %975 = vmatpush1.msra.mxu0 0.0
    %976 = vmatprep.subr.mxu0 0.0
    %977 = vmatpush1.msra.mxu0 0.0
    %978 = vmatprep.subr.mxu0 0.0
    %979 = vmatpush1.msra.mxu0 0.0
    %980 = vmatprep.subr.mxu0 0.0
    %981 = vmatpush1.msra.mxu0 0.0
    %982 = vmatprep.subr.mxu0 0.0
    %983 = vmatpush1.msra.mxu0 0.0
    %984 = vmatprep.subr.mxu0 0.0
    %985 = vmatpush1.msra.mxu0 0.0
    %986 = vmatprep.subr.mxu0 0.0
    %987 = vmatpush1.msra.mxu0 0.0
    %988 = vmatprep.subr.mxu0 0.0
    %989 = vmatpush1.msra.mxu0 0.0
    %990 = vmatprep.subr.mxu0 0.0
    %991 = vmatpush1.msra.mxu0 0.0
    %992 = vmatprep.subr.mxu0 0.0
    %993 = vmatpush1.msra.mxu0 0.0
    %994 = vmatprep.subr.mxu0 0.0
    %995 = vmatpush1.msra.mxu0 0.0
    %996 = vmatprep.subr.mxu0 0.0
    %997 = vmatpush1.msra.mxu0 0.0
    %998 = vmatprep.subr.mxu0 0.0
    %999 = vmatpush1.msra.mxu0 0.0
    %1000 = vmatprep.subr.mxu0 0.0
    %1001 = vmatpush1.msra.mxu0 0.0
    %1002 = vmatprep.subr.mxu0 0.0
    %1003 = vmatpush1.msra.mxu0 0.0
    %1004 = vmatprep.subr.mxu0 0.0
    %1005 = vmatpush1.msra.mxu0 0.0
    %1006 = vmatprep.subr.mxu0 0.0
    %1007 = vmatpush1.msra.mxu0 0.0
    %1008 = vmatprep.subr.mxu0 0.0
    %1009 = vmatpush1.msra.mxu0 0.0
    %1010 = vmatprep.subr.mxu0 0.0
    %1011 = vmatpush1.msra.mxu0 0.0
    %1012 = vmatprep.subr.mxu0 0.0
    %1013 = vmatpush1.msra.mxu0 0.0
    %1014 = vmatprep.subr.mxu0 0.0
    %1015 = vmatpush1.msra.mxu0 0.0
    %1016 = vmatprep.subr.mxu0 0.0
    %1017 = vmatpush1.msra.mxu0 0.0
    %1018 = vmatprep.subr.mxu0 0.0
    %1019 = vmatpush1.msra.mxu0 0.0
    %1020 = vmatprep.subr.mxu0 0.0
    %1021 = vmatpush1.msra.mxu0 0.0
    %1022 = vmatprep.subr.mxu0 0.0
    %1023 = vmatpush1.msra.mxu0 0.0
    %1024 = vmatprep.subr.mxu0 0.0
    %1025 = vmatpush1.msra.mxu0 0.0
    %1026 = vmatprep.subr.mxu0 0.0
    %1027 = vmatpush1.msra.mxu0 0.0
    %1028 = vmatprep.mubr.f32.mxu0 0.0
    %v1029 = vand.u32 %v623, 4294901760
    %1030 = vmatmul.mubr.f32.gmra.mrb[0].mxu0 %v1029
    %v1031 = vpop.f32.mrb[0].mxu0
    %v1032 = vadd.f32 %v949, %v1031
    %v1033 = vpop.f32.mrb[0].mxu0
    %1034 = vdwg.mxu0
    %1035 = vmatprep.subr.mxu0 0.0
    %v1036 = vand.u32 %v91, 4294901760
    %1037 = vmatpush1.msra.mxu0 %v1036
    %1038 = vmatprep.subr.mxu0 0.0
    %v1039 = vand.u32 %v92, 4294901760
    %1040 = vmatpush1.msra.mxu0 %v1039
    %1041 = vmatprep.subr.mxu0 0.0
    %v1042 = vand.u32 %v93, 4294901760
    %1043 = vmatpush1.msra.mxu0 %v1042
    %1044 = vmatprep.subr.mxu0 0.0
    %v1045 = vand.u32 %v94, 4294901760
    %1046 = vmatpush1.msra.mxu0 %v1045
    %1047 = vmatprep.subr.mxu0 0.0
    %1048 = vmatpush1.msra.mxu0 0.0
    %1049 = vmatprep.subr.mxu0 0.0
    %1050 = vmatpush1.msra.mxu0 0.0
    %1051 = vmatprep.subr.mxu0 0.0
    %1052 = vmatpush1.msra.mxu0 0.0
    %1053 = vmatprep.subr.mxu0 0.0
    %1054 = vmatpush1.msra.mxu0 0.0
    %1055 = vmatprep.subr.mxu0 0.0
    %1056 = vmatpush1.msra.mxu0 0.0
    %1057 = vmatprep.subr.mxu0 0.0
    %1058 = vmatpush1.msra.mxu0 0.0
    %1059 = vmatprep.subr.mxu0 0.0
    %1060 = vmatpush1.msra.mxu0 0.0
    %1061 = vmatprep.subr.mxu0 0.0
    %1062 = vmatpush1.msra.mxu0 0.0
    %1063 = vmatprep.subr.mxu0 0.0
    %1064 = vmatpush1.msra.mxu0 0.0
    %1065 = vmatprep.subr.mxu0 0.0
    %1066 = vmatpush1.msra.mxu0 0.0
    %1067 = vmatprep.subr.mxu0 0.0
    %1068 = vmatpush1.msra.mxu0 0.0
    %1069 = vmatprep.subr.mxu0 0.0
    %1070 = vmatpush1.msra.mxu0 0.0
    %1071 = vmatprep.subr.mxu0 0.0
    %1072 = vmatpush1.msra.mxu0 0.0
    %1073 = vmatprep.subr.mxu0 0.0
    %1074 = vmatpush1.msra.mxu0 0.0
    %1075 = vmatprep.subr.mxu0 0.0
    %1076 = vmatpush1.msra.mxu0 0.0
    %1077 = vmatprep.subr.mxu0 0.0
    %1078 = vmatpush1.msra.mxu0 0.0
    %1079 = vmatprep.subr.mxu0 0.0
    %1080 = vmatpush1.msra.mxu0 0.0
    %1081 = vmatprep.subr.mxu0 0.0
    %1082 = vmatpush1.msra.mxu0 0.0
    %1083 = vmatprep.subr.mxu0 0.0
    %1084 = vmatpush1.msra.mxu0 0.0
    %1085 = vmatprep.subr.mxu0 0.0
    %1086 = vmatpush1.msra.mxu0 0.0
    %1087 = vmatprep.subr.mxu0 0.0
    %1088 = vmatpush1.msra.mxu0 0.0
    %1089 = vmatprep.subr.mxu0 0.0
    %1090 = vmatpush1.msra.mxu0 0.0
    %1091 = vmatprep.subr.mxu0 0.0
    %1092 = vmatpush1.msra.mxu0 0.0
    %1093 = vmatprep.subr.mxu0 0.0
    %1094 = vmatpush1.msra.mxu0 0.0
    %1095 = vmatprep.subr.mxu0 0.0
    %1096 = vmatpush1.msra.mxu0 0.0
    %1097 = vmatprep.subr.mxu0 0.0
    %1098 = vmatpush1.msra.mxu0 0.0
    %1099 = vmatprep.subr.mxu0 0.0
    %1100 = vmatpush1.msra.mxu0 0.0
    %1101 = vmatprep.subr.mxu0 0.0
    %1102 = vmatpush1.msra.mxu0 0.0
    %1103 = vmatprep.mubr.f32.mxu0 0.0
    %v1104 = vand.u32 %v623, 4294901760
    %1105 = vmatmul.mubr.f32.gmra.mrb[0].mxu0 %v1104
    %v1106 = vpop.f32.mrb[0].mxu0
    %v1107 = vadd.f32 %v1032, %v1106
    %v1108 = vpop.f32.mrb[0].mxu0
    %1109 = vdwg.mxu0
    %v1111 = vsel %vm621, %v160, 0
    %1113 = vmatprep.subr.mxu0 0.0
    %v1114 = vand.u32 %v96, 4294901760
    %1115 = vmatpush1.msra.mxu0 %v1114
    %1116 = vmatprep.subr.mxu0 0.0
    %v1117 = vand.u32 %v97, 4294901760
    %1118 = vmatpush1.msra.mxu0 %v1117
    %1119 = vmatprep.subr.mxu0 0.0
    %v1120 = vand.u32 %v98, 4294901760
    %1121 = vmatpush1.msra.mxu0 %v1120
    %1122 = vmatprep.subr.mxu0 0.0
    %v1123 = vand.u32 %v99, 4294901760
    %1124 = vmatpush1.msra.mxu0 %v1123
    %1125 = vmatprep.subr.mxu0 0.0
    %1126 = vmatpush1.msra.mxu0 0.0
    %1127 = vmatprep.subr.mxu0 0.0
    %1128 = vmatpush1.msra.mxu0 0.0
    %1129 = vmatprep.subr.mxu0 0.0
    %1130 = vmatpush1.msra.mxu0 0.0
    %1131 = vmatprep.subr.mxu0 0.0
    %1132 = vmatpush1.msra.mxu0 0.0
    %1133 = vmatprep.subr.mxu0 0.0
    %1134 = vmatpush1.msra.mxu0 0.0
    %1135 = vmatprep.subr.mxu0 0.0
    %1136 = vmatpush1.msra.mxu0 0.0
    %1137 = vmatprep.subr.mxu0 0.0
    %1138 = vmatpush1.msra.mxu0 0.0
    %1139 = vmatprep.subr.mxu0 0.0
    %1140 = vmatpush1.msra.mxu0 0.0
    %1141 = vmatprep.subr.mxu0 0.0
    %1142 = vmatpush1.msra.mxu0 0.0
    %1143 = vmatprep.subr.mxu0 0.0
    %1144 = vmatpush1.msra.mxu0 0.0
    %1145 = vmatprep.subr.mxu0 0.0
    %1146 = vmatpush1.msra.mxu0 0.0
    %1147 = vmatprep.subr.mxu0 0.0
    %1148 = vmatpush1.msra.mxu0 0.0
    %1149 = vmatprep.subr.mxu0 0.0
    %1150 = vmatpush1.msra.mxu0 0.0
    %1151 = vmatprep.subr.mxu0 0.0
    %1152 = vmatpush1.msra.mxu0 0.0
    %1153 = vmatprep.subr.mxu0 0.0
    %1154 = vmatpush1.msra.mxu0 0.0
    %1155 = vmatprep.subr.mxu0 0.0
    %1156 = vmatpush1.msra.mxu0 0.0
    %1157 = vmatprep.subr.mxu0 0.0
    %1158 = vmatpush1.msra.mxu0 0.0
    %1159 = vmatprep.subr.mxu0 0.0
    %1160 = vmatpush1.msra.mxu0 0.0
    %1161 = vmatprep.subr.mxu0 0.0
    %1162 = vmatpush1.msra.mxu0 0.0
    %1163 = vmatprep.subr.mxu0 0.0
    %1164 = vmatpush1.msra.mxu0 0.0
    %1165 = vmatprep.subr.mxu0 0.0
    %1166 = vmatpush1.msra.mxu0 0.0
    %1167 = vmatprep.subr.mxu0 0.0
    %1168 = vmatpush1.msra.mxu0 0.0
    %1169 = vmatprep.subr.mxu0 0.0
    %1170 = vmatpush1.msra.mxu0 0.0
    %1171 = vmatprep.subr.mxu0 0.0
    %1172 = vmatpush1.msra.mxu0 0.0
    %1173 = vmatprep.subr.mxu0 0.0
    %1174 = vmatpush1.msra.mxu0 0.0
    %1175 = vmatprep.subr.mxu0 0.0
    %1176 = vmatpush1.msra.mxu0 0.0
    %1177 = vmatprep.subr.mxu0 0.0
    %1178 = vmatpush1.msra.mxu0 0.0
    %1179 = vmatprep.subr.mxu0 0.0
    %1180 = vmatpush1.msra.mxu0 0.0
    %1181 = vmatprep.mubr.f32.mxu0 0.0
    %v1182 = vand.u32 %v1111, 4294901760
    %v1183 = vsub.f32 %v1111, %v1182
    %v1184 = vand.u32 %v1183, 4294901760
    %v1185 = vsub.f32 %v1183, %v1184
    %v1186 = vand.u32 %v1185, 4294901760
    %1187 = vmatmul.mubr.f32.gmra.mrb[0].mxu0 %v1186
    %v1188 = vpop.f32.mrb[0].mxu0
    %v1189 = vadd.f32 0.0, %v1188
    %v1190 = vpop.f32.mrb[0].mxu0
    %1191 = vdwg.mxu0
    %1192 = vmatprep.subr.mxu0 0.0
    %v1193 = vand.u32 %v96, 4294901760
    %v1194 = vsub.f32 %v96, %v1193
    %v1195 = vand.u32 %v1194, 4294901760
    %v1196 = vsub.f32 %v1194, %v1195
    %v1197 = vand.u32 %v1196, 4294901760
    %1198 = vmatpush1.msra.mxu0 %v1197
    %1199 = vmatprep.subr.mxu0 0.0
    %v1200 = vand.u32 %v97, 4294901760
    %v1201 = vsub.f32 %v97, %v1200
    %v1202 = vand.u32 %v1201, 4294901760
    %v1203 = vsub.f32 %v1201, %v1202
    %v1204 = vand.u32 %v1203, 4294901760
    %1205 = vmatpush1.msra.mxu0 %v1204
    %1206 = vmatprep.subr.mxu0 0.0
    %v1207 = vand.u32 %v98, 4294901760
    %v1208 = vsub.f32 %v98, %v1207
    %v1209 = vand.u32 %v1208, 4294901760
    %v1210 = vsub.f32 %v1208, %v1209
    %v1211 = vand.u32 %v1210, 4294901760
    %1212 = vmatpush1.msra.mxu0 %v1211
    %1213 = vmatprep.subr.mxu0 0.0
    %v1214 = vand.u32 %v99, 4294901760
    %v1215 = vsub.f32 %v99, %v1214
    %v1216 = vand.u32 %v1215, 4294901760
    %v1217 = vsub.f32 %v1215, %v1216
    %v1218 = vand.u32 %v1217, 4294901760
    %1219 = vmatpush1.msra.mxu0 %v1218
    %1220 = vmatprep.subr.mxu0 0.0
    %1221 = vmatpush1.msra.mxu0 0.0
    %1222 = vmatprep.subr.mxu0 0.0
    %1223 = vmatpush1.msra.mxu0 0.0
    %1224 = vmatprep.subr.mxu0 0.0
    %1225 = vmatpush1.msra.mxu0 0.0
    %1226 = vmatprep.subr.mxu0 0.0
    %1227 = vmatpush1.msra.mxu0 0.0
    %1228 = vmatprep.subr.mxu0 0.0
    %1229 = vmatpush1.msra.mxu0 0.0
    %1230 = vmatprep.subr.mxu0 0.0
    %1231 = vmatpush1.msra.mxu0 0.0
    %1232 = vmatprep.subr.mxu0 0.0
    %1233 = vmatpush1.msra.mxu0 0.0
    %1234 = vmatprep.subr.mxu0 0.0
    %1235 = vmatpush1.msra.mxu0 0.0
    %1236 = vmatprep.subr.mxu0 0.0
    %1237 = vmatpush1.msra.mxu0 0.0
    %1238 = vmatprep.subr.mxu0 0.0
    %1239 = vmatpush1.msra.mxu0 0.0
    %1240 = vmatprep.subr.mxu0 0.0
    %1241 = vmatpush1.msra.mxu0 0.0
    %1242 = vmatprep.subr.mxu0 0.0
    %1243 = vmatpush1.msra.mxu0 0.0
    %1244 = vmatprep.subr.mxu0 0.0
    %1245 = vmatpush1.msra.mxu0 0.0
    %1246 = vmatprep.subr.mxu0 0.0
    %1247 = vmatpush1.msra.mxu0 0.0
    %1248 = vmatprep.subr.mxu0 0.0
    %1249 = vmatpush1.msra.mxu0 0.0
    %1250 = vmatprep.subr.mxu0 0.0
    %1251 = vmatpush1.msra.mxu0 0.0
    %1252 = vmatprep.subr.mxu0 0.0
    %1253 = vmatpush1.msra.mxu0 0.0
    %1254 = vmatprep.subr.mxu0 0.0
    %1255 = vmatpush1.msra.mxu0 0.0
    %1256 = vmatprep.subr.mxu0 0.0
    %1257 = vmatpush1.msra.mxu0 0.0
    %1258 = vmatprep.subr.mxu0 0.0
    %1259 = vmatpush1.msra.mxu0 0.0
    %1260 = vmatprep.subr.mxu0 0.0
    %1261 = vmatpush1.msra.mxu0 0.0
    %1262 = vmatprep.subr.mxu0 0.0
    %1263 = vmatpush1.msra.mxu0 0.0
    %1264 = vmatprep.subr.mxu0 0.0
    %1265 = vmatpush1.msra.mxu0 0.0
    %1266 = vmatprep.subr.mxu0 0.0
    %1267 = vmatpush1.msra.mxu0 0.0
    %1268 = vmatprep.subr.mxu0 0.0
    %1269 = vmatpush1.msra.mxu0 0.0
    %1270 = vmatprep.subr.mxu0 0.0
    %1271 = vmatpush1.msra.mxu0 0.0
    %1272 = vmatprep.subr.mxu0 0.0
    %1273 = vmatpush1.msra.mxu0 0.0
    %1274 = vmatprep.subr.mxu0 0.0
    %1275 = vmatpush1.msra.mxu0 0.0
    %1276 = vmatprep.mubr.f32.mxu0 0.0
    %v1277 = vand.u32 %v1111, 4294901760
    %1278 = vmatmul.mubr.f32.gmra.mrb[0].mxu0 %v1277
    %v1279 = vpop.f32.mrb[0].mxu0
    %v1280 = vadd.f32 %v1189, %v1279
    %v1281 = vpop.f32.mrb[0].mxu0
    %1282 = vdwg.mxu0
    %1283 = vmatprep.subr.mxu0 0.0
    %v1284 = vand.u32 %v96, 4294901760
    %v1285 = vsub.f32 %v96, %v1284
    %1286 = vmatpush1.msra.mxu0 %v1285
    %1287 = vmatprep.subr.mxu0 0.0
    %v1288 = vand.u32 %v97, 4294901760
    %v1289 = vsub.f32 %v97, %v1288
    %1290 = vmatpush1.msra.mxu0 %v1289
    %1291 = vmatprep.subr.mxu0 0.0
    %v1292 = vand.u32 %v98, 4294901760
    %v1293 = vsub.f32 %v98, %v1292
    %1294 = vmatpush1.msra.mxu0 %v1293
    %1295 = vmatprep.subr.mxu0 0.0
    %v1296 = vand.u32 %v99, 4294901760
    %v1297 = vsub.f32 %v99, %v1296
    %1298 = vmatpush1.msra.mxu0 %v1297
    %1299 = vmatprep.subr.mxu0 0.0
    %1300 = vmatpush1.msra.mxu0 0.0
    %1301 = vmatprep.subr.mxu0 0.0
    %1302 = vmatpush1.msra.mxu0 0.0
    %1303 = vmatprep.subr.mxu0 0.0
    %1304 = vmatpush1.msra.mxu0 0.0
    %1305 = vmatprep.subr.mxu0 0.0
    %1306 = vmatpush1.msra.mxu0 0.0
    %1307 = vmatprep.subr.mxu0 0.0
    %1308 = vmatpush1.msra.mxu0 0.0
    %1309 = vmatprep.subr.mxu0 0.0
    %1310 = vmatpush1.msra.mxu0 0.0
    %1311 = vmatprep.subr.mxu0 0.0
    %1312 = vmatpush1.msra.mxu0 0.0
    %1313 = vmatprep.subr.mxu0 0.0
    %1314 = vmatpush1.msra.mxu0 0.0
    %1315 = vmatprep.subr.mxu0 0.0
    %1316 = vmatpush1.msra.mxu0 0.0
    %1317 = vmatprep.subr.mxu0 0.0
    %1318 = vmatpush1.msra.mxu0 0.0
    %1319 = vmatprep.subr.mxu0 0.0
    %1320 = vmatpush1.msra.mxu0 0.0
    %1321 = vmatprep.subr.mxu0 0.0
    %1322 = vmatpush1.msra.mxu0 0.0
    %1323 = vmatprep.subr.mxu0 0.0
    %1324 = vmatpush1.msra.mxu0 0.0
    %1325 = vmatprep.subr.mxu0 0.0
    %1326 = vmatpush1.msra.mxu0 0.0
    %1327 = vmatprep.subr.mxu0 0.0
    %1328 = vmatpush1.msra.mxu0 0.0
    %1329 = vmatprep.subr.mxu0 0.0
    %1330 = vmatpush1.msra.mxu0 0.0
    %1331 = vmatprep.subr.mxu0 0.0
    %1332 = vmatpush1.msra.mxu0 0.0
    %1333 = vmatprep.subr.mxu0 0.0
    %1334 = vmatpush1.msra.mxu0 0.0
    %1335 = vmatprep.subr.mxu0 0.0
    %1336 = vmatpush1.msra.mxu0 0.0
    %1337 = vmatprep.subr.mxu0 0.0
    %1338 = vmatpush1.msra.mxu0 0.0
    %1339 = vmatprep.subr.mxu0 0.0
    %1340 = vmatpush1.msra.mxu0 0.0
    %1341 = vmatprep.subr.mxu0 0.0
    %1342 = vmatpush1.msra.mxu0 0.0
    %1343 = vmatprep.subr.mxu0 0.0
    %1344 = vmatpush1.msra.mxu0 0.0
    %1345 = vmatprep.subr.mxu0 0.0
    %1346 = vmatpush1.msra.mxu0 0.0
    %1347 = vmatprep.subr.mxu0 0.0
    %1348 = vmatpush1.msra.mxu0 0.0
    %1349 = vmatprep.subr.mxu0 0.0
    %1350 = vmatpush1.msra.mxu0 0.0
    %1351 = vmatprep.subr.mxu0 0.0
    %1352 = vmatpush1.msra.mxu0 0.0
    %1353 = vmatprep.subr.mxu0 0.0
    %1354 = vmatpush1.msra.mxu0 0.0
    %1355 = vmatprep.mubr.f32.mxu0 0.0
    %v1356 = vand.u32 %v1111, 4294901760
    %v1357 = vsub.f32 %v1111, %v1356
    %1358 = vmatmul.mubr.f32.gmra.mrb[0].mxu0 %v1357
    %v1359 = vpop.f32.mrb[0].mxu0
    %v1360 = vadd.f32 %v1280, %v1359
    %v1361 = vpop.f32.mrb[0].mxu0
    %1362 = vdwg.mxu0
    %1363 = vmatprep.subr.mxu0 0.0
    %v1364 = vand.u32 %v96, 4294901760
    %1365 = vmatpush1.msra.mxu0 %v1364
    %1366 = vmatprep.subr.mxu0 0.0
    %v1367 = vand.u32 %v97, 4294901760
    %1368 = vmatpush1.msra.mxu0 %v1367
    %1369 = vmatprep.subr.mxu0 0.0
    %v1370 = vand.u32 %v98, 4294901760
    %1371 = vmatpush1.msra.mxu0 %v1370
    %1372 = vmatprep.subr.mxu0 0.0
    %v1373 = vand.u32 %v99, 4294901760
    %1374 = vmatpush1.msra.mxu0 %v1373
    %1375 = vmatprep.subr.mxu0 0.0
    %1376 = vmatpush1.msra.mxu0 0.0
    %1377 = vmatprep.subr.mxu0 0.0
    %1378 = vmatpush1.msra.mxu0 0.0
    %1379 = vmatprep.subr.mxu0 0.0
    %1380 = vmatpush1.msra.mxu0 0.0
    %1381 = vmatprep.subr.mxu0 0.0
    %1382 = vmatpush1.msra.mxu0 0.0
    %1383 = vmatprep.subr.mxu0 0.0
    %1384 = vmatpush1.msra.mxu0 0.0
    %1385 = vmatprep.subr.mxu0 0.0
    %1386 = vmatpush1.msra.mxu0 0.0
    %1387 = vmatprep.subr.mxu0 0.0
    %1388 = vmatpush1.msra.mxu0 0.0
    %1389 = vmatprep.subr.mxu0 0.0
    %1390 = vmatpush1.msra.mxu0 0.0
    %1391 = vmatprep.subr.mxu0 0.0
    %1392 = vmatpush1.msra.mxu0 0.0
    %1393 = vmatprep.subr.mxu0 0.0
    %1394 = vmatpush1.msra.mxu0 0.0
    %1395 = vmatprep.subr.mxu0 0.0
    %1396 = vmatpush1.msra.mxu0 0.0
    %1397 = vmatprep.subr.mxu0 0.0
    %1398 = vmatpush1.msra.mxu0 0.0
    %1399 = vmatprep.subr.mxu0 0.0
    %1400 = vmatpush1.msra.mxu0 0.0
    %1401 = vmatprep.subr.mxu0 0.0
    %1402 = vmatpush1.msra.mxu0 0.0
    %1403 = vmatprep.subr.mxu0 0.0
    %1404 = vmatpush1.msra.mxu0 0.0
    %1405 = vmatprep.subr.mxu0 0.0
    %1406 = vmatpush1.msra.mxu0 0.0
    %1407 = vmatprep.subr.mxu0 0.0
    %1408 = vmatpush1.msra.mxu0 0.0
    %1409 = vmatprep.subr.mxu0 0.0
    %1410 = vmatpush1.msra.mxu0 0.0
    %1411 = vmatprep.subr.mxu0 0.0
    %1412 = vmatpush1.msra.mxu0 0.0
    %1413 = vmatprep.subr.mxu0 0.0
    %1414 = vmatpush1.msra.mxu0 0.0
    %1415 = vmatprep.subr.mxu0 0.0
    %1416 = vmatpush1.msra.mxu0 0.0
    %1417 = vmatprep.subr.mxu0 0.0
    %1418 = vmatpush1.msra.mxu0 0.0
    %1419 = vmatprep.subr.mxu0 0.0
    %1420 = vmatpush1.msra.mxu0 0.0
    %1421 = vmatprep.subr.mxu0 0.0
    %1422 = vmatpush1.msra.mxu0 0.0
    %1423 = vmatprep.subr.mxu0 0.0
    %1424 = vmatpush1.msra.mxu0 0.0
    %1425 = vmatprep.subr.mxu0 0.0
    %1426 = vmatpush1.msra.mxu0 0.0
    %1427 = vmatprep.subr.mxu0 0.0
    %1428 = vmatpush1.msra.mxu0 0.0
    %1429 = vmatprep.subr.mxu0 0.0
    %1430 = vmatpush1.msra.mxu0 0.0
    %1431 = vmatprep.mubr.f32.mxu0 0.0
    %v1432 = vand.u32 %v1111, 4294901760
    %v1433 = vsub.f32 %v1111, %v1432
    %v1434 = vand.u32 %v1433, 4294901760
    %1435 = vmatmul.mubr.f32.gmra.mrb[0].mxu0 %v1434
    %v1436 = vpop.f32.mrb[0].mxu0
    %v1437 = vadd.f32 %v1360, %v1436
    %v1438 = vpop.f32.mrb[0].mxu0
    %1439 = vdwg.mxu0
    %1440 = vmatprep.subr.mxu0 0.0
    %v1441 = vand.u32 %v96, 4294901760
    %v1442 = vsub.f32 %v96, %v1441
    %v1443 = vand.u32 %v1442, 4294901760
    %1444 = vmatpush1.msra.mxu0 %v1443
    %1445 = vmatprep.subr.mxu0 0.0
    %v1446 = vand.u32 %v97, 4294901760
    %v1447 = vsub.f32 %v97, %v1446
    %v1448 = vand.u32 %v1447, 4294901760
    %1449 = vmatpush1.msra.mxu0 %v1448
    %1450 = vmatprep.subr.mxu0 0.0
    %v1451 = vand.u32 %v98, 4294901760
    %v1452 = vsub.f32 %v98, %v1451
    %v1453 = vand.u32 %v1452, 4294901760
    %1454 = vmatpush1.msra.mxu0 %v1453
    %1455 = vmatprep.subr.mxu0 0.0
    %v1456 = vand.u32 %v99, 4294901760
    %v1457 = vsub.f32 %v99, %v1456
    %v1458 = vand.u32 %v1457, 4294901760
    %1459 = vmatpush1.msra.mxu0 %v1458
    %1460 = vmatprep.subr.mxu0 0.0
    %1461 = vmatpush1.msra.mxu0 0.0
    %1462 = vmatprep.subr.mxu0 0.0
    %1463 = vmatpush1.msra.mxu0 0.0
    %1464 = vmatprep.subr.mxu0 0.0
    %1465 = vmatpush1.msra.mxu0 0.0
    %1466 = vmatprep.subr.mxu0 0.0
    %1467 = vmatpush1.msra.mxu0 0.0
    %1468 = vmatprep.subr.mxu0 0.0
    %1469 = vmatpush1.msra.mxu0 0.0
    %1470 = vmatprep.subr.mxu0 0.0
    %1471 = vmatpush1.msra.mxu0 0.0
    %1472 = vmatprep.subr.mxu0 0.0
    %1473 = vmatpush1.msra.mxu0 0.0
    %1474 = vmatprep.subr.mxu0 0.0
    %1475 = vmatpush1.msra.mxu0 0.0
    %1476 = vmatprep.subr.mxu0 0.0
    %1477 = vmatpush1.msra.mxu0 0.0
    %1478 = vmatprep.subr.mxu0 0.0
    %1479 = vmatpush1.msra.mxu0 0.0
    %1480 = vmatprep.subr.mxu0 0.0
    %1481 = vmatpush1.msra.mxu0 0.0
    %1482 = vmatprep.subr.mxu0 0.0
    %1483 = vmatpush1.msra.mxu0 0.0
    %1484 = vmatprep.subr.mxu0 0.0
    %1485 = vmatpush1.msra.mxu0 0.0
    %1486 = vmatprep.subr.mxu0 0.0
    %1487 = vmatpush1.msra.mxu0 0.0
    %1488 = vmatprep.subr.mxu0 0.0
    %1489 = vmatpush1.msra.mxu0 0.0
    %1490 = vmatprep.subr.mxu0 0.0
    %1491 = vmatpush1.msra.mxu0 0.0
    %1492 = vmatprep.subr.mxu0 0.0
    %1493 = vmatpush1.msra.mxu0 0.0
    %1494 = vmatprep.subr.mxu0 0.0
    %1495 = vmatpush1.msra.mxu0 0.0
    %1496 = vmatprep.subr.mxu0 0.0
    %1497 = vmatpush1.msra.mxu0 0.0
    %1498 = vmatprep.subr.mxu0 0.0
    %1499 = vmatpush1.msra.mxu0 0.0
    %1500 = vmatprep.subr.mxu0 0.0
    %1501 = vmatpush1.msra.mxu0 0.0
    %1502 = vmatprep.subr.mxu0 0.0
    %1503 = vmatpush1.msra.mxu0 0.0
    %1504 = vmatprep.subr.mxu0 0.0
    %1505 = vmatpush1.msra.mxu0 0.0
    %1506 = vmatprep.subr.mxu0 0.0
    %1507 = vmatpush1.msra.mxu0 0.0
    %1508 = vmatprep.subr.mxu0 0.0
    %1509 = vmatpush1.msra.mxu0 0.0
    %1510 = vmatprep.subr.mxu0 0.0
    %1511 = vmatpush1.msra.mxu0 0.0
    %1512 = vmatprep.subr.mxu0 0.0
    %1513 = vmatpush1.msra.mxu0 0.0
    %1514 = vmatprep.subr.mxu0 0.0
    %1515 = vmatpush1.msra.mxu0 0.0
    %1516 = vmatprep.mubr.f32.mxu0 0.0
    %v1517 = vand.u32 %v1111, 4294901760
    %1518 = vmatmul.mubr.f32.gmra.mrb[0].mxu0 %v1517
    %v1519 = vpop.f32.mrb[0].mxu0
    %v1520 = vadd.f32 %v1437, %v1519
    %v1521 = vpop.f32.mrb[0].mxu0
    %1522 = vdwg.mxu0
    %1523 = vmatprep.subr.mxu0 0.0
    %v1524 = vand.u32 %v96, 4294901760
    %1525 = vmatpush1.msra.mxu0 %v1524
    %1526 = vmatprep.subr.mxu0 0.0
    %v1527 = vand.u32 %v97, 4294901760
    %1528 = vmatpush1.msra.mxu0 %v1527
    %1529 = vmatprep.subr.mxu0 0.0
    %v1530 = vand.u32 %v98, 4294901760
    %1531 = vmatpush1.msra.mxu0 %v1530
    %1532 = vmatprep.subr.mxu0 0.0
    %v1533 = vand.u32 %v99, 4294901760
    %1534 = vmatpush1.msra.mxu0 %v1533
    %1535 = vmatprep.subr.mxu0 0.0
    %1536 = vmatpush1.msra.mxu0 0.0
    %1537 = vmatprep.subr.mxu0 0.0
    %1538 = vmatpush1.msra.mxu0 0.0
    %1539 = vmatprep.subr.mxu0 0.0
    %1540 = vmatpush1.msra.mxu0 0.0
    %1541 = vmatprep.subr.mxu0 0.0
    %1542 = vmatpush1.msra.mxu0 0.0
    %1543 = vmatprep.subr.mxu0 0.0
    %1544 = vmatpush1.msra.mxu0 0.0
    %1545 = vmatprep.subr.mxu0 0.0
    %1546 = vmatpush1.msra.mxu0 0.0
    %1547 = vmatprep.subr.mxu0 0.0
    %1548 = vmatpush1.msra.mxu0 0.0
    %1549 = vmatprep.subr.mxu0 0.0
    %1550 = vmatpush1.msra.mxu0 0.0
    %1551 = vmatprep.subr.mxu0 0.0
    %1552 = vmatpush1.msra.mxu0 0.0
    %1553 = vmatprep.subr.mxu0 0.0
    %1554 = vmatpush1.msra.mxu0 0.0
    %1555 = vmatprep.subr.mxu0 0.0
    %1556 = vmatpush1.msra.mxu0 0.0
    %1557 = vmatprep.subr.mxu0 0.0
    %1558 = vmatpush1.msra.mxu0 0.0
    %1559 = vmatprep.subr.mxu0 0.0
    %1560 = vmatpush1.msra.mxu0 0.0
    %1561 = vmatprep.subr.mxu0 0.0
    %1562 = vmatpush1.msra.mxu0 0.0
    %1563 = vmatprep.subr.mxu0 0.0
    %1564 = vmatpush1.msra.mxu0 0.0
    %1565 = vmatprep.subr.mxu0 0.0
    %1566 = vmatpush1.msra.mxu0 0.0
    %1567 = vmatprep.subr.mxu0 0.0
    %1568 = vmatpush1.msra.mxu0 0.0
    %1569 = vmatprep.subr.mxu0 0.0
    %1570 = vmatpush1.msra.mxu0 0.0
    %1571 = vmatprep.subr.mxu0 0.0
    %1572 = vmatpush1.msra.mxu0 0.0
    %1573 = vmatprep.subr.mxu0 0.0
    %1574 = vmatpush1.msra.mxu0 0.0
    %1575 = vmatprep.subr.mxu0 0.0
    %1576 = vmatpush1.msra.mxu0 0.0
    %1577 = vmatprep.subr.mxu0 0.0
    %1578 = vmatpush1.msra.mxu0 0.0
    %1579 = vmatprep.subr.mxu0 0.0
    %1580 = vmatpush1.msra.mxu0 0.0
    %1581 = vmatprep.subr.mxu0 0.0
    %1582 = vmatpush1.msra.mxu0 0.0
    %1583 = vmatprep.subr.mxu0 0.0
    %1584 = vmatpush1.msra.mxu0 0.0
    %1585 = vmatprep.subr.mxu0 0.0
    %1586 = vmatpush1.msra.mxu0 0.0
    %1587 = vmatprep.subr.mxu0 0.0
    %1588 = vmatpush1.msra.mxu0 0.0
    %1589 = vmatprep.subr.mxu0 0.0
    %1590 = vmatpush1.msra.mxu0 0.0
    %1591 = vmatprep.mubr.f32.mxu0 0.0
    %v1592 = vand.u32 %v1111, 4294901760
    %1593 = vmatmul.mubr.f32.gmra.mrb[0].mxu0 %v1592
    %v1594 = vpop.f32.mrb[0].mxu0
    %v1595 = vadd.f32 %v1520, %v1594
    %v1596 = vpop.f32.mrb[0].mxu0
    %1597 = vdwg.mxu0
    %v1598 = vadd.f32 %v1107, %v1595
    %v1599 = vadd.f32 %v1598, %v105
    %v1600 = vxor.u32 %v1599, 2147483648
    %v1601 = vmul.f32 %v1600, 1.442695
    %v1602 = vpow.pop %v1601
    %v1603 = vadd.f32 %v1602, 1.0
    %v1604 = vrcp.pop %v1603
    %v1605 = vmul.f32 1.0, %v1604
    %v1606 = vtanh.pop %v1599
    %1608 = vrot.lane.b32.xlu0 %v161, 32
    %v1609 = vpop.permute.xlu0 %1608
    %v1611 = vmul.f32 %v1605, %v1609
    %1613 = vrot.lane.b32.xlu0 %v1606, 64
    %v1614 = vpop.permute.xlu0 %1613
    %v1616 = vmul.f32 %v1605, %v1614
    %1618 = vrot.lane.b32.xlu0 %v1616, 32
    %v1619 = vpop.permute.xlu0 %1618
    %v1621 = vadd.f32 %v1611, %v1619
    %v1622 = vtanh.pop %v1621
    %1624 = vrot.lane.b32.xlu0 %v1622, 64
    %v1625 = vpop.permute.xlu0 %1624
    %v1627 = vmul.f32 %v1605, %v1625
    %v1629 = vsel %vm171, %v111, 0
    %1631 = vmatprep.subr.mxu0 0.0
    %v1632 = vand.u32 %v1629, 4294901760
    %1633 = vmatpush1.msra.mxu0 %v1632
    %1634 = vmatprep.subr.mxu0 0.0
    %1635 = vmatpush1.msra.mxu0 0.0
    %1636 = vmatprep.subr.mxu0 0.0
    %1637 = vmatpush1.msra.mxu0 0.0
    %1638 = vmatprep.subr.mxu0 0.0
    %1639 = vmatpush1.msra.mxu0 0.0
    %1640 = vmatprep.subr.mxu0 0.0
    %1641 = vmatpush1.msra.mxu0 0.0
    %1642 = vmatprep.subr.mxu0 0.0
    %1643 = vmatpush1.msra.mxu0 0.0
    %1644 = vmatprep.subr.mxu0 0.0
    %1645 = vmatpush1.msra.mxu0 0.0
    %1646 = vmatprep.subr.mxu0 0.0
    %1647 = vmatpush1.msra.mxu0 0.0
    %1648 = vmatprep.subr.mxu0 0.0
    %1649 = vmatpush1.msra.mxu0 0.0
    %1650 = vmatprep.subr.mxu0 0.0
    %1651 = vmatpush1.msra.mxu0 0.0
    %1652 = vmatprep.subr.mxu0 0.0
    %1653 = vmatpush1.msra.mxu0 0.0
    %1654 = vmatprep.subr.mxu0 0.0
    %1655 = vmatpush1.msra.mxu0 0.0
    %1656 = vmatprep.subr.mxu0 0.0
    %1657 = vmatpush1.msra.mxu0 0.0
    %1658 = vmatprep.subr.mxu0 0.0
    %1659 = vmatpush1.msra.mxu0 0.0
    %1660 = vmatprep.subr.mxu0 0.0
    %1661 = vmatpush1.msra.mxu0 0.0
    %1662 = vmatprep.subr.mxu0 0.0
    %1663 = vmatpush1.msra.mxu0 0.0
    %1664 = vmatprep.subr.mxu0 0.0
    %1665 = vmatpush1.msra.mxu0 0.0
    %1666 = vmatprep.subr.mxu0 0.0
    %1667 = vmatpush1.msra.mxu0 0.0
    %1668 = vmatprep.subr.mxu0 0.0
    %1669 = vmatpush1.msra.mxu0 0.0
    %1670 = vmatprep.subr.mxu0 0.0
    %1671 = vmatpush1.msra.mxu0 0.0
    %1672 = vmatprep.subr.mxu0 0.0
    %1673 = vmatpush1.msra.mxu0 0.0
    %1674 = vmatprep.subr.mxu0 0.0
    %1675 = vmatpush1.msra.mxu0 0.0
    %1676 = vmatprep.subr.mxu0 0.0
    %1677 = vmatpush1.msra.mxu0 0.0
    %1678 = vmatprep.subr.mxu0 0.0
    %1679 = vmatpush1.msra.mxu0 0.0
    %1680 = vmatprep.subr.mxu0 0.0
    %1681 = vmatpush1.msra.mxu0 0.0
    %1682 = vmatprep.subr.mxu0 0.0
    %1683 = vmatpush1.msra.mxu0 0.0
    %1684 = vmatprep.subr.mxu0 0.0
    %1685 = vmatpush1.msra.mxu0 0.0
    %1686 = vmatprep.subr.mxu0 0.0
    %1687 = vmatpush1.msra.mxu0 0.0
    %1688 = vmatprep.subr.mxu0 0.0
    %1689 = vmatpush1.msra.mxu0 0.0
    %1690 = vmatprep.subr.mxu0 0.0
    %1691 = vmatpush1.msra.mxu0 0.0
    %1692 = vmatprep.subr.mxu0 0.0
    %1693 = vmatpush1.msra.mxu0 0.0
    %1694 = vmatprep.subr.mxu0 0.0
    %1695 = vmatpush1.msra.mxu0 0.0
    %1696 = vmatprep.mubr.f32.mxu0 0.0
    %v1697 = vand.u32 %v169, 4294901760
    %v1698 = vsub.f32 %v169, %v1697
    %v1699 = vand.u32 %v1698, 4294901760
    %v1700 = vsub.f32 %v1698, %v1699
    %v1701 = vand.u32 %v1700, 4294901760
    %1702 = vmatmul.mubr.f32.gmra.mrb[0].mxu0 %v1701
    %v1703 = vpop.f32.mrb[0].mxu0
    %v1704 = vadd.f32 0.0, %v1703
    %v1705 = vpop.f32.mrb[0].mxu0
    %1706 = vdwg.mxu0
    %1707 = vmatprep.subr.mxu0 0.0
    %v1708 = vand.u32 %v1629, 4294901760
    %v1709 = vsub.f32 %v1629, %v1708
    %v1710 = vand.u32 %v1709, 4294901760
    %v1711 = vsub.f32 %v1709, %v1710
    %v1712 = vand.u32 %v1711, 4294901760
    %1713 = vmatpush1.msra.mxu0 %v1712
    %1714 = vmatprep.subr.mxu0 0.0
    %1715 = vmatpush1.msra.mxu0 0.0
    %1716 = vmatprep.subr.mxu0 0.0
    %1717 = vmatpush1.msra.mxu0 0.0
    %1718 = vmatprep.subr.mxu0 0.0
    %1719 = vmatpush1.msra.mxu0 0.0
    %1720 = vmatprep.subr.mxu0 0.0
    %1721 = vmatpush1.msra.mxu0 0.0
    %1722 = vmatprep.subr.mxu0 0.0
    %1723 = vmatpush1.msra.mxu0 0.0
    %1724 = vmatprep.subr.mxu0 0.0
    %1725 = vmatpush1.msra.mxu0 0.0
    %1726 = vmatprep.subr.mxu0 0.0
    %1727 = vmatpush1.msra.mxu0 0.0
    %1728 = vmatprep.subr.mxu0 0.0
    %1729 = vmatpush1.msra.mxu0 0.0
    %1730 = vmatprep.subr.mxu0 0.0
    %1731 = vmatpush1.msra.mxu0 0.0
    %1732 = vmatprep.subr.mxu0 0.0
    %1733 = vmatpush1.msra.mxu0 0.0
    %1734 = vmatprep.subr.mxu0 0.0
    %1735 = vmatpush1.msra.mxu0 0.0
    %1736 = vmatprep.subr.mxu0 0.0
    %1737 = vmatpush1.msra.mxu0 0.0
    %1738 = vmatprep.subr.mxu0 0.0
    %1739 = vmatpush1.msra.mxu0 0.0
    %1740 = vmatprep.subr.mxu0 0.0
    %1741 = vmatpush1.msra.mxu0 0.0
    %1742 = vmatprep.subr.mxu0 0.0
    %1743 = vmatpush1.msra.mxu0 0.0
    %1744 = vmatprep.subr.mxu0 0.0
    %1745 = vmatpush1.msra.mxu0 0.0
    %1746 = vmatprep.subr.mxu0 0.0
    %1747 = vmatpush1.msra.mxu0 0.0
    %1748 = vmatprep.subr.mxu0 0.0
    %1749 = vmatpush1.msra.mxu0 0.0
    %1750 = vmatprep.subr.mxu0 0.0
    %1751 = vmatpush1.msra.mxu0 0.0
    %1752 = vmatprep.subr.mxu0 0.0
    %1753 = vmatpush1.msra.mxu0 0.0
    %1754 = vmatprep.subr.mxu0 0.0
    %1755 = vmatpush1.msra.mxu0 0.0
    %1756 = vmatprep.subr.mxu0 0.0
    %1757 = vmatpush1.msra.mxu0 0.0
    %1758 = vmatprep.subr.mxu0 0.0
    %1759 = vmatpush1.msra.mxu0 0.0
    %1760 = vmatprep.subr.mxu0 0.0
    %1761 = vmatpush1.msra.mxu0 0.0
    %1762 = vmatprep.subr.mxu0 0.0
    %1763 = vmatpush1.msra.mxu0 0.0
    %1764 = vmatprep.subr.mxu0 0.0
    %1765 = vmatpush1.msra.mxu0 0.0
    %1766 = vmatprep.subr.mxu0 0.0
    %1767 = vmatpush1.msra.mxu0 0.0
    %1768 = vmatprep.subr.mxu0 0.0
    %1769 = vmatpush1.msra.mxu0 0.0
    %1770 = vmatprep.subr.mxu0 0.0
    %1771 = vmatpush1.msra.mxu0 0.0
    %1772 = vmatprep.subr.mxu0 0.0
    %1773 = vmatpush1.msra.mxu0 0.0
    %1774 = vmatprep.subr.mxu0 0.0
    %1775 = vmatpush1.msra.mxu0 0.0
    %1776 = vmatprep.mubr.f32.mxu0 0.0
    %v1777 = vand.u32 %v169, 4294901760
    %1778 = vmatmul.mubr.f32.gmra.mrb[0].mxu0 %v1777
    %v1779 = vpop.f32.mrb[0].mxu0
    %v1780 = vadd.f32 %v1704, %v1779
    %v1781 = vpop.f32.mrb[0].mxu0
    %1782 = vdwg.mxu0
    %1783 = vmatprep.subr.mxu0 0.0
    %v1784 = vand.u32 %v1629, 4294901760
    %v1785 = vsub.f32 %v1629, %v1784
    %1786 = vmatpush1.msra.mxu0 %v1785
    %1787 = vmatprep.subr.mxu0 0.0
    %1788 = vmatpush1.msra.mxu0 0.0
    %1789 = vmatprep.subr.mxu0 0.0
    %1790 = vmatpush1.msra.mxu0 0.0
    %1791 = vmatprep.subr.mxu0 0.0
    %1792 = vmatpush1.msra.mxu0 0.0
    %1793 = vmatprep.subr.mxu0 0.0
    %1794 = vmatpush1.msra.mxu0 0.0
    %1795 = vmatprep.subr.mxu0 0.0
    %1796 = vmatpush1.msra.mxu0 0.0
    %1797 = vmatprep.subr.mxu0 0.0
    %1798 = vmatpush1.msra.mxu0 0.0
    %1799 = vmatprep.subr.mxu0 0.0
    %1800 = vmatpush1.msra.mxu0 0.0
    %1801 = vmatprep.subr.mxu0 0.0
    %1802 = vmatpush1.msra.mxu0 0.0
    %1803 = vmatprep.subr.mxu0 0.0
    %1804 = vmatpush1.msra.mxu0 0.0
    %1805 = vmatprep.subr.mxu0 0.0
    %1806 = vmatpush1.msra.mxu0 0.0
    %1807 = vmatprep.subr.mxu0 0.0
    %1808 = vmatpush1.msra.mxu0 0.0
    %1809 = vmatprep.subr.mxu0 0.0
    %1810 = vmatpush1.msra.mxu0 0.0
    %1811 = vmatprep.subr.mxu0 0.0
    %1812 = vmatpush1.msra.mxu0 0.0
    %1813 = vmatprep.subr.mxu0 0.0
    %1814 = vmatpush1.msra.mxu0 0.0
    %1815 = vmatprep.subr.mxu0 0.0
    %1816 = vmatpush1.msra.mxu0 0.0
    %1817 = vmatprep.subr.mxu0 0.0
    %1818 = vmatpush1.msra.mxu0 0.0
    %1819 = vmatprep.subr.mxu0 0.0
    %1820 = vmatpush1.msra.mxu0 0.0
    %1821 = vmatprep.subr.mxu0 0.0
    %1822 = vmatpush1.msra.mxu0 0.0
    %1823 = vmatprep.subr.mxu0 0.0
    %1824 = vmatpush1.msra.mxu0 0.0
    %1825 = vmatprep.subr.mxu0 0.0
    %1826 = vmatpush1.msra.mxu0 0.0
    %1827 = vmatprep.subr.mxu0 0.0
    %1828 = vmatpush1.msra.mxu0 0.0
    %1829 = vmatprep.subr.mxu0 0.0
    %1830 = vmatpush1.msra.mxu0 0.0
    %1831 = vmatprep.subr.mxu0 0.0
    %1832 = vmatpush1.msra.mxu0 0.0
    %1833 = vmatprep.subr.mxu0 0.0
    %1834 = vmatpush1.msra.mxu0 0.0
    %1835 = vmatprep.subr.mxu0 0.0
    %1836 = vmatpush1.msra.mxu0 0.0
    %1837 = vmatprep.subr.mxu0 0.0
    %1838 = vmatpush1.msra.mxu0 0.0
    %1839 = vmatprep.subr.mxu0 0.0
    %1840 = vmatpush1.msra.mxu0 0.0
    %1841 = vmatprep.subr.mxu0 0.0
    %1842 = vmatpush1.msra.mxu0 0.0
    %1843 = vmatprep.subr.mxu0 0.0
    %1844 = vmatpush1.msra.mxu0 0.0
    %1845 = vmatprep.subr.mxu0 0.0
    %1846 = vmatpush1.msra.mxu0 0.0
    %1847 = vmatprep.subr.mxu0 0.0
    %1848 = vmatpush1.msra.mxu0 0.0
    %1849 = vmatprep.mubr.f32.mxu0 0.0
    %v1850 = vand.u32 %v169, 4294901760
    %v1851 = vsub.f32 %v169, %v1850
    %1852 = vmatmul.mubr.f32.gmra.mrb[0].mxu0 %v1851
    %v1853 = vpop.f32.mrb[0].mxu0
    %v1854 = vadd.f32 %v1780, %v1853
    %v1855 = vpop.f32.mrb[0].mxu0
    %1856 = vdwg.mxu0
    %1857 = vmatprep.subr.mxu0 0.0
    %v1858 = vand.u32 %v1629, 4294901760
    %1859 = vmatpush1.msra.mxu0 %v1858
    %1860 = vmatprep.subr.mxu0 0.0
    %1861 = vmatpush1.msra.mxu0 0.0
    %1862 = vmatprep.subr.mxu0 0.0
    %1863 = vmatpush1.msra.mxu0 0.0
    %1864 = vmatprep.subr.mxu0 0.0
    %1865 = vmatpush1.msra.mxu0 0.0
    %1866 = vmatprep.subr.mxu0 0.0
    %1867 = vmatpush1.msra.mxu0 0.0
    %1868 = vmatprep.subr.mxu0 0.0
    %1869 = vmatpush1.msra.mxu0 0.0
    %1870 = vmatprep.subr.mxu0 0.0
    %1871 = vmatpush1.msra.mxu0 0.0
    %1872 = vmatprep.subr.mxu0 0.0
    %1873 = vmatpush1.msra.mxu0 0.0
    %1874 = vmatprep.subr.mxu0 0.0
    %1875 = vmatpush1.msra.mxu0 0.0
    %1876 = vmatprep.subr.mxu0 0.0
    %1877 = vmatpush1.msra.mxu0 0.0
    %1878 = vmatprep.subr.mxu0 0.0
    %1879 = vmatpush1.msra.mxu0 0.0
    %1880 = vmatprep.subr.mxu0 0.0
    %1881 = vmatpush1.msra.mxu0 0.0
    %1882 = vmatprep.subr.mxu0 0.0
    %1883 = vmatpush1.msra.mxu0 0.0
    %1884 = vmatprep.subr.mxu0 0.0
    %1885 = vmatpush1.msra.mxu0 0.0
    %1886 = vmatprep.subr.mxu0 0.0
    %1887 = vmatpush1.msra.mxu0 0.0
    %1888 = vmatprep.subr.mxu0 0.0
    %1889 = vmatpush1.msra.mxu0 0.0
    %1890 = vmatprep.subr.mxu0 0.0
    %1891 = vmatpush1.msra.mxu0 0.0
    %1892 = vmatprep.subr.mxu0 0.0
    %1893 = vmatpush1.msra.mxu0 0.0
    %1894 = vmatprep.subr.mxu0 0.0
    %1895 = vmatpush1.msra.mxu0 0.0
    %1896 = vmatprep.subr.mxu0 0.0
    %1897 = vmatpush1.msra.mxu0 0.0
    %1898 = vmatprep.subr.mxu0 0.0
    %1899 = vmatpush1.msra.mxu0 0.0
    %1900 = vmatprep.subr.mxu0 0.0
    %1901 = vmatpush1.msra.mxu0 0.0
    %1902 = vmatprep.subr.mxu0 0.0
    %1903 = vmatpush1.msra.mxu0 0.0
    %1904 = vmatprep.subr.mxu0 0.0
    %1905 = vmatpush1.msra.mxu0 0.0
    %1906 = vmatprep.subr.mxu0 0.0
    %1907 = vmatpush1.msra.mxu0 0.0
    %1908 = vmatprep.subr.mxu0 0.0
    %1909 = vmatpush1.msra.mxu0 0.0
    %1910 = vmatprep.subr.mxu0 0.0
    %1911 = vmatpush1.msra.mxu0 0.0
    %1912 = vmatprep.subr.mxu0 0.0
    %1913 = vmatpush1.msra.mxu0 0.0
    %1914 = vmatprep.subr.mxu0 0.0
    %1915 = vmatpush1.msra.mxu0 0.0
    %1916 = vmatprep.subr.mxu0 0.0
    %1917 = vmatpush1.msra.mxu0 0.0
    %1918 = vmatprep.subr.mxu0 0.0
    %1919 = vmatpush1.msra.mxu0 0.0
    %1920 = vmatprep.subr.mxu0 0.0
    %1921 = vmatpush1.msra.mxu0 0.0
    %1922 = vmatprep.mubr.f32.mxu0 0.0
    %v1923 = vand.u32 %v169, 4294901760
    %v1924 = vsub.f32 %v169, %v1923
    %v1925 = vand.u32 %v1924, 4294901760
    %1926 = vmatmul.mubr.f32.gmra.mrb[0].mxu0 %v1925
    %v1927 = vpop.f32.mrb[0].mxu0
    %v1928 = vadd.f32 %v1854, %v1927
    %v1929 = vpop.f32.mrb[0].mxu0
    %1930 = vdwg.mxu0
    %1931 = vmatprep.subr.mxu0 0.0
    %v1932 = vand.u32 %v1629, 4294901760
    %v1933 = vsub.f32 %v1629, %v1932
    %v1934 = vand.u32 %v1933, 4294901760
    %1935 = vmatpush1.msra.mxu0 %v1934
    %1936 = vmatprep.subr.mxu0 0.0
    %1937 = vmatpush1.msra.mxu0 0.0
    %1938 = vmatprep.subr.mxu0 0.0
    %1939 = vmatpush1.msra.mxu0 0.0
    %1940 = vmatprep.subr.mxu0 0.0
    %1941 = vmatpush1.msra.mxu0 0.0
    %1942 = vmatprep.subr.mxu0 0.0
    %1943 = vmatpush1.msra.mxu0 0.0
    %1944 = vmatprep.subr.mxu0 0.0
    %1945 = vmatpush1.msra.mxu0 0.0
    %1946 = vmatprep.subr.mxu0 0.0
    %1947 = vmatpush1.msra.mxu0 0.0
    %1948 = vmatprep.subr.mxu0 0.0
    %1949 = vmatpush1.msra.mxu0 0.0
    %1950 = vmatprep.subr.mxu0 0.0
    %1951 = vmatpush1.msra.mxu0 0.0
    %1952 = vmatprep.subr.mxu0 0.0
    %1953 = vmatpush1.msra.mxu0 0.0
    %1954 = vmatprep.subr.mxu0 0.0
    %1955 = vmatpush1.msra.mxu0 0.0
    %1956 = vmatprep.subr.mxu0 0.0
    %1957 = vmatpush1.msra.mxu0 0.0
    %1958 = vmatprep.subr.mxu0 0.0
    %1959 = vmatpush1.msra.mxu0 0.0
    %1960 = vmatprep.subr.mxu0 0.0
    %1961 = vmatpush1.msra.mxu0 0.0
    %1962 = vmatprep.subr.mxu0 0.0
    %1963 = vmatpush1.msra.mxu0 0.0
    %1964 = vmatprep.subr.mxu0 0.0
    %1965 = vmatpush1.msra.mxu0 0.0
    %1966 = vmatprep.subr.mxu0 0.0
    %1967 = vmatpush1.msra.mxu0 0.0
    %1968 = vmatprep.subr.mxu0 0.0
    %1969 = vmatpush1.msra.mxu0 0.0
    %1970 = vmatprep.subr.mxu0 0.0
    %1971 = vmatpush1.msra.mxu0 0.0
    %1972 = vmatprep.subr.mxu0 0.0
    %1973 = vmatpush1.msra.mxu0 0.0
    %1974 = vmatprep.subr.mxu0 0.0
    %1975 = vmatpush1.msra.mxu0 0.0
    %1976 = vmatprep.subr.mxu0 0.0
    %1977 = vmatpush1.msra.mxu0 0.0
    %1978 = vmatprep.subr.mxu0 0.0
    %1979 = vmatpush1.msra.mxu0 0.0
    %1980 = vmatprep.subr.mxu0 0.0
    %1981 = vmatpush1.msra.mxu0 0.0
    %1982 = vmatprep.subr.mxu0 0.0
    %1983 = vmatpush1.msra.mxu0 0.0
    %1984 = vmatprep.subr.mxu0 0.0
    %1985 = vmatpush1.msra.mxu0 0.0
    %1986 = vmatprep.subr.mxu0 0.0
    %1987 = vmatpush1.msra.mxu0 0.0
    %1988 = vmatprep.subr.mxu0 0.0
    %1989 = vmatpush1.msra.mxu0 0.0
    %1990 = vmatprep.subr.mxu0 0.0
    %1991 = vmatpush1.msra.mxu0 0.0
    %1992 = vmatprep.subr.mxu0 0.0
    %1993 = vmatpush1.msra.mxu0 0.0
    %1994 = vmatprep.subr.mxu0 0.0
    %1995 = vmatpush1.msra.mxu0 0.0
    %1996 = vmatprep.subr.mxu0 0.0
    %1997 = vmatpush1.msra.mxu0 0.0
    %1998 = vmatprep.mubr.f32.mxu0 0.0
    %v1999 = vand.u32 %v169, 4294901760
    %2000 = vmatmul.mubr.f32.gmra.mrb[0].mxu0 %v1999
    %v2001 = vpop.f32.mrb[0].mxu0
    %v2002 = vadd.f32 %v1928, %v2001
    %v2003 = vpop.f32.mrb[0].mxu0
    %2004 = vdwg.mxu0
    %2005 = vmatprep.subr.mxu0 0.0
    %v2006 = vand.u32 %v1629, 4294901760
    %2007 = vmatpush1.msra.mxu0 %v2006
    %2008 = vmatprep.subr.mxu0 0.0
    %2009 = vmatpush1.msra.mxu0 0.0
    %2010 = vmatprep.subr.mxu0 0.0
    %2011 = vmatpush1.msra.mxu0 0.0
    %2012 = vmatprep.subr.mxu0 0.0
    %2013 = vmatpush1.msra.mxu0 0.0
    %2014 = vmatprep.subr.mxu0 0.0
    %2015 = vmatpush1.msra.mxu0 0.0
    %2016 = vmatprep.subr.mxu0 0.0
    %2017 = vmatpush1.msra.mxu0 0.0
    %2018 = vmatprep.subr.mxu0 0.0
    %2019 = vmatpush1.msra.mxu0 0.0
    %2020 = vmatprep.subr.mxu0 0.0
    %2021 = vmatpush1.msra.mxu0 0.0
    %2022 = vmatprep.subr.mxu0 0.0
    %2023 = vmatpush1.msra.mxu0 0.0
    %2024 = vmatprep.subr.mxu0 0.0
    %2025 = vmatpush1.msra.mxu0 0.0
    %2026 = vmatprep.subr.mxu0 0.0
    %2027 = vmatpush1.msra.mxu0 0.0
    %2028 = vmatprep.subr.mxu0 0.0
    %2029 = vmatpush1.msra.mxu0 0.0
    %2030 = vmatprep.subr.mxu0 0.0
    %2031 = vmatpush1.msra.mxu0 0.0
    %2032 = vmatprep.subr.mxu0 0.0
    %2033 = vmatpush1.msra.mxu0 0.0
    %2034 = vmatprep.subr.mxu0 0.0
    %2035 = vmatpush1.msra.mxu0 0.0
    %2036 = vmatprep.subr.mxu0 0.0
    %2037 = vmatpush1.msra.mxu0 0.0
    %2038 = vmatprep.subr.mxu0 0.0
    %2039 = vmatpush1.msra.mxu0 0.0
    %2040 = vmatprep.subr.mxu0 0.0
    %2041 = vmatpush1.msra.mxu0 0.0
    %2042 = vmatprep.subr.mxu0 0.0
    %2043 = vmatpush1.msra.mxu0 0.0
    %2044 = vmatprep.subr.mxu0 0.0
    %2045 = vmatpush1.msra.mxu0 0.0
    %2046 = vmatprep.subr.mxu0 0.0
    %2047 = vmatpush1.msra.mxu0 0.0
    %2048 = vmatprep.subr.mxu0 0.0
    %2049 = vmatpush1.msra.mxu0 0.0
    %2050 = vmatprep.subr.mxu0 0.0
    %2051 = vmatpush1.msra.mxu0 0.0
    %2052 = vmatprep.subr.mxu0 0.0
    %2053 = vmatpush1.msra.mxu0 0.0
    %2054 = vmatprep.subr.mxu0 0.0
    %2055 = vmatpush1.msra.mxu0 0.0
    %2056 = vmatprep.subr.mxu0 0.0
    %2057 = vmatpush1.msra.mxu0 0.0
    %2058 = vmatprep.subr.mxu0 0.0
    %2059 = vmatpush1.msra.mxu0 0.0
    %2060 = vmatprep.subr.mxu0 0.0
    %2061 = vmatpush1.msra.mxu0 0.0
    %2062 = vmatprep.subr.mxu0 0.0
    %2063 = vmatpush1.msra.mxu0 0.0
    %2064 = vmatprep.subr.mxu0 0.0
    %2065 = vmatpush1.msra.mxu0 0.0
    %2066 = vmatprep.subr.mxu0 0.0
    %2067 = vmatpush1.msra.mxu0 0.0
    %2068 = vmatprep.subr.mxu0 0.0
    %2069 = vmatpush1.msra.mxu0 0.0
    %2070 = vmatprep.mubr.f32.mxu0 0.0
    %v2071 = vand.u32 %v169, 4294901760
    %2072 = vmatmul.mubr.f32.gmra.mrb[0].mxu0 %v2071
    %v2073 = vpop.f32.mrb[0].mxu0
    %v2074 = vadd.f32 %v2002, %v2073
    %v2075 = vpop.f32.mrb[0].mxu0
    %2076 = vdwg.mxu0
    %2078 = vrot.lane.b32.xlu0 %v1627, 32
    %v2079 = vpop.permute.xlu0 %2078
    %v2080 = vsel %vm621, %v2079, 0
    %2082 = vmatprep.subr.mxu0 0.0
    %v2083 = vand.u32 %v107, 4294901760
    %2084 = vmatpush1.msra.mxu0 %v2083
    %2085 = vmatprep.subr.mxu0 0.0
    %v2086 = vand.u32 %v108, 4294901760
    %2087 = vmatpush1.msra.mxu0 %v2086
    %2088 = vmatprep.subr.mxu0 0.0
    %v2089 = vand.u32 %v109, 4294901760
    %2090 = vmatpush1.msra.mxu0 %v2089
    %2091 = vmatprep.subr.mxu0 0.0
    %v2092 = vand.u32 %v110, 4294901760
    %2093 = vmatpush1.msra.mxu0 %v2092
    %2094 = vmatprep.subr.mxu0 0.0
    %2095 = vmatpush1.msra.mxu0 0.0
    %2096 = vmatprep.subr.mxu0 0.0
    %2097 = vmatpush1.msra.mxu0 0.0
    %2098 = vmatprep.subr.mxu0 0.0
    %2099 = vmatpush1.msra.mxu0 0.0
    %2100 = vmatprep.subr.mxu0 0.0
    %2101 = vmatpush1.msra.mxu0 0.0
    %2102 = vmatprep.subr.mxu0 0.0
    %2103 = vmatpush1.msra.mxu0 0.0
    %2104 = vmatprep.subr.mxu0 0.0
    %2105 = vmatpush1.msra.mxu0 0.0
    %2106 = vmatprep.subr.mxu0 0.0
    %2107 = vmatpush1.msra.mxu0 0.0
    %2108 = vmatprep.subr.mxu0 0.0
    %2109 = vmatpush1.msra.mxu0 0.0
    %2110 = vmatprep.subr.mxu0 0.0
    %2111 = vmatpush1.msra.mxu0 0.0
    %2112 = vmatprep.subr.mxu0 0.0
    %2113 = vmatpush1.msra.mxu0 0.0
    %2114 = vmatprep.subr.mxu0 0.0
    %2115 = vmatpush1.msra.mxu0 0.0
    %2116 = vmatprep.subr.mxu0 0.0
    %2117 = vmatpush1.msra.mxu0 0.0
    %2118 = vmatprep.subr.mxu0 0.0
    %2119 = vmatpush1.msra.mxu0 0.0
    %2120 = vmatprep.subr.mxu0 0.0
    %2121 = vmatpush1.msra.mxu0 0.0
    %2122 = vmatprep.subr.mxu0 0.0
    %2123 = vmatpush1.msra.mxu0 0.0
    %2124 = vmatprep.subr.mxu0 0.0
    %2125 = vmatpush1.msra.mxu0 0.0
    %2126 = vmatprep.subr.mxu0 0.0
    %2127 = vmatpush1.msra.mxu0 0.0
    %2128 = vmatprep.subr.mxu0 0.0
    %2129 = vmatpush1.msra.mxu0 0.0
    %2130 = vmatprep.subr.mxu0 0.0
    %2131 = vmatpush1.msra.mxu0 0.0
    %2132 = vmatprep.subr.mxu0 0.0
    %2133 = vmatpush1.msra.mxu0 0.0
    %2134 = vmatprep.subr.mxu0 0.0
    %2135 = vmatpush1.msra.mxu0 0.0
    %2136 = vmatprep.subr.mxu0 0.0
    %2137 = vmatpush1.msra.mxu0 0.0
    %2138 = vmatprep.subr.mxu0 0.0
    %2139 = vmatpush1.msra.mxu0 0.0
    %2140 = vmatprep.subr.mxu0 0.0
    %2141 = vmatpush1.msra.mxu0 0.0
    %2142 = vmatprep.subr.mxu0 0.0
    %2143 = vmatpush1.msra.mxu0 0.0
    %2144 = vmatprep.subr.mxu0 0.0
    %2145 = vmatpush1.msra.mxu0 0.0
    %2146 = vmatprep.subr.mxu0 0.0
    %2147 = vmatpush1.msra.mxu0 0.0
    %2148 = vmatprep.subr.mxu0 0.0
    %2149 = vmatpush1.msra.mxu0 0.0
    %2150 = vmatprep.mubr.f32.mxu0 0.0
    %v2151 = vand.u32 %v2080, 4294901760
    %v2152 = vsub.f32 %v2080, %v2151
    %v2153 = vand.u32 %v2152, 4294901760
    %v2154 = vsub.f32 %v2152, %v2153
    %v2155 = vand.u32 %v2154, 4294901760
    %2156 = vmatmul.mubr.f32.gmra.mrb[0].mxu0 %v2155
    %v2157 = vpop.f32.mrb[0].mxu0
    %v2158 = vadd.f32 %v2074, %v2157
    %v2159 = vpop.f32.mrb[0].mxu0
    %2160 = vdwg.mxu0
    %2161 = vmatprep.subr.mxu0 0.0
    %v2162 = vand.u32 %v107, 4294901760
    %v2163 = vsub.f32 %v107, %v2162
    %v2164 = vand.u32 %v2163, 4294901760
    %v2165 = vsub.f32 %v2163, %v2164
    %v2166 = vand.u32 %v2165, 4294901760
    %2167 = vmatpush1.msra.mxu0 %v2166
    %2168 = vmatprep.subr.mxu0 0.0
    %v2169 = vand.u32 %v108, 4294901760
    %v2170 = vsub.f32 %v108, %v2169
    %v2171 = vand.u32 %v2170, 4294901760
    %v2172 = vsub.f32 %v2170, %v2171
    %v2173 = vand.u32 %v2172, 4294901760
    %2174 = vmatpush1.msra.mxu0 %v2173
    %2175 = vmatprep.subr.mxu0 0.0
    %v2176 = vand.u32 %v109, 4294901760
    %v2177 = vsub.f32 %v109, %v2176
    %v2178 = vand.u32 %v2177, 4294901760
    %v2179 = vsub.f32 %v2177, %v2178
    %v2180 = vand.u32 %v2179, 4294901760
    %2181 = vmatpush1.msra.mxu0 %v2180
    %2182 = vmatprep.subr.mxu0 0.0
    %v2183 = vand.u32 %v110, 4294901760
    %v2184 = vsub.f32 %v110, %v2183
    %v2185 = vand.u32 %v2184, 4294901760
    %v2186 = vsub.f32 %v2184, %v2185
    %v2187 = vand.u32 %v2186, 4294901760
    %2188 = vmatpush1.msra.mxu0 %v2187
    %2189 = vmatprep.subr.mxu0 0.0
    %2190 = vmatpush1.msra.mxu0 0.0
    %2191 = vmatprep.subr.mxu0 0.0
    %2192 = vmatpush1.msra.mxu0 0.0
    %2193 = vmatprep.subr.mxu0 0.0
    %2194 = vmatpush1.msra.mxu0 0.0
    %2195 = vmatprep.subr.mxu0 0.0
    %2196 = vmatpush1.msra.mxu0 0.0
    %2197 = vmatprep.subr.mxu0 0.0
    %2198 = vmatpush1.msra.mxu0 0.0
    %2199 = vmatprep.subr.mxu0 0.0
    %2200 = vmatpush1.msra.mxu0 0.0
    %2201 = vmatprep.subr.mxu0 0.0
    %2202 = vmatpush1.msra.mxu0 0.0
    %2203 = vmatprep.subr.mxu0 0.0
    %2204 = vmatpush1.msra.mxu0 0.0
    %2205 = vmatprep.subr.mxu0 0.0
    %2206 = vmatpush1.msra.mxu0 0.0
    %2207 = vmatprep.subr.mxu0 0.0
    %2208 = vmatpush1.msra.mxu0 0.0
    %2209 = vmatprep.subr.mxu0 0.0
    %2210 = vmatpush1.msra.mxu0 0.0
    %2211 = vmatprep.subr.mxu0 0.0
    %2212 = vmatpush1.msra.mxu0 0.0
    %2213 = vmatprep.subr.mxu0 0.0
    %2214 = vmatpush1.msra.mxu0 0.0
    %2215 = vmatprep.subr.mxu0 0.0
    %2216 = vmatpush1.msra.mxu0 0.0
    %2217 = vmatprep.subr.mxu0 0.0
    %2218 = vmatpush1.msra.mxu0 0.0
    %2219 = vmatprep.subr.mxu0 0.0
    %2220 = vmatpush1.msra.mxu0 0.0
    %2221 = vmatprep.subr.mxu0 0.0
    %2222 = vmatpush1.msra.mxu0 0.0
    %2223 = vmatprep.subr.mxu0 0.0
    %2224 = vmatpush1.msra.mxu0 0.0
    %2225 = vmatprep.subr.mxu0 0.0
    %2226 = vmatpush1.msra.mxu0 0.0
    %2227 = vmatprep.subr.mxu0 0.0
    %2228 = vmatpush1.msra.mxu0 0.0
    %2229 = vmatprep.subr.mxu0 0.0
    %2230 = vmatpush1.msra.mxu0 0.0
    %2231 = vmatprep.subr.mxu0 0.0
    %2232 = vmatpush1.msra.mxu0 0.0
    %2233 = vmatprep.subr.mxu0 0.0
    %2234 = vmatpush1.msra.mxu0 0.0
    %2235 = vmatprep.subr.mxu0 0.0
    %2236 = vmatpush1.msra.mxu0 0.0
    %2237 = vmatprep.subr.mxu0 0.0
    %2238 = vmatpush1.msra.mxu0 0.0
    %2239 = vmatprep.subr.mxu0 0.0
    %2240 = vmatpush1.msra.mxu0 0.0
    %2241 = vmatprep.subr.mxu0 0.0
    %2242 = vmatpush1.msra.mxu0 0.0
    %2243 = vmatprep.subr.mxu0 0.0
    %2244 = vmatpush1.msra.mxu0 0.0
    %2245 = vmatprep.mubr.f32.mxu0 0.0
    %v2246 = vand.u32 %v2080, 4294901760
    %2247 = vmatmul.mubr.f32.gmra.mrb[0].mxu0 %v2246
    %v2248 = vpop.f32.mrb[0].mxu0
    %v2249 = vadd.f32 %v2158, %v2248
    %v2250 = vpop.f32.mrb[0].mxu0
    %2251 = vdwg.mxu0
    %2252 = vmatprep.subr.mxu0 0.0
    %v2253 = vand.u32 %v107, 4294901760
    %v2254 = vsub.f32 %v107, %v2253
    %2255 = vmatpush1.msra.mxu0 %v2254
    %2256 = vmatprep.subr.mxu0 0.0
    %v2257 = vand.u32 %v108, 4294901760
    %v2258 = vsub.f32 %v108, %v2257
    %2259 = vmatpush1.msra.mxu0 %v2258
    %2260 = vmatprep.subr.mxu0 0.0
    %v2261 = vand.u32 %v109, 4294901760
    %v2262 = vsub.f32 %v109, %v2261
    %2263 = vmatpush1.msra.mxu0 %v2262
    %2264 = vmatprep.subr.mxu0 0.0
    %v2265 = vand.u32 %v110, 4294901760
    %v2266 = vsub.f32 %v110, %v2265
    %2267 = vmatpush1.msra.mxu0 %v2266
    %2268 = vmatprep.subr.mxu0 0.0
    %2269 = vmatpush1.msra.mxu0 0.0
    %2270 = vmatprep.subr.mxu0 0.0
    %2271 = vmatpush1.msra.mxu0 0.0
    %2272 = vmatprep.subr.mxu0 0.0
    %2273 = vmatpush1.msra.mxu0 0.0
    %2274 = vmatprep.subr.mxu0 0.0
    %2275 = vmatpush1.msra.mxu0 0.0
    %2276 = vmatprep.subr.mxu0 0.0
    %2277 = vmatpush1.msra.mxu0 0.0
    %2278 = vmatprep.subr.mxu0 0.0
    %2279 = vmatpush1.msra.mxu0 0.0
    %2280 = vmatprep.subr.mxu0 0.0
    %2281 = vmatpush1.msra.mxu0 0.0
    %2282 = vmatprep.subr.mxu0 0.0
    %2283 = vmatpush1.msra.mxu0 0.0
    %2284 = vmatprep.subr.mxu0 0.0
    %2285 = vmatpush1.msra.mxu0 0.0
    %2286 = vmatprep.subr.mxu0 0.0
    %2287 = vmatpush1.msra.mxu0 0.0
    %2288 = vmatprep.subr.mxu0 0.0
    %2289 = vmatpush1.msra.mxu0 0.0
    %2290 = vmatprep.subr.mxu0 0.0
    %2291 = vmatpush1.msra.mxu0 0.0
    %2292 = vmatprep.subr.mxu0 0.0
    %2293 = vmatpush1.msra.mxu0 0.0
    %2294 = vmatprep.subr.mxu0 0.0
    %2295 = vmatpush1.msra.mxu0 0.0
    %2296 = vmatprep.subr.mxu0 0.0
    %2297 = vmatpush1.msra.mxu0 0.0
    %2298 = vmatprep.subr.mxu0 0.0
    %2299 = vmatpush1.msra.mxu0 0.0
    %2300 = vmatprep.subr.mxu0 0.0
    %2301 = vmatpush1.msra.mxu0 0.0
    %2302 = vmatprep.subr.mxu0 0.0
    %2303 = vmatpush1.msra.mxu0 0.0
    %2304 = vmatprep.subr.mxu0 0.0
    %2305 = vmatpush1.msra.mxu0 0.0
    %2306 = vmatprep.subr.mxu0 0.0
    %2307 = vmatpush1.msra.mxu0 0.0
    %2308 = vmatprep.subr.mxu0 0.0
    %2309 = vmatpush1.msra.mxu0 0.0
    %2310 = vmatprep.subr.mxu0 0.0
    %2311 = vmatpush1.msra.mxu0 0.0
    %2312 = vmatprep.subr.mxu0 0.0
    %2313 = vmatpush1.msra.mxu0 0.0
    %2314 = vmatprep.subr.mxu0 0.0
    %2315 = vmatpush1.msra.mxu0 0.0
    %2316 = vmatprep.subr.mxu0 0.0
    %2317 = vmatpush1.msra.mxu0 0.0
    %2318 = vmatprep.subr.mxu0 0.0
    %2319 = vmatpush1.msra.mxu0 0.0
    %2320 = vmatprep.subr.mxu0 0.0
    %2321 = vmatpush1.msra.mxu0 0.0
    %2322 = vmatprep.subr.mxu0 0.0
    %2323 = vmatpush1.msra.mxu0 0.0
    %2324 = vmatprep.mubr.f32.mxu0 0.0
    %v2325 = vand.u32 %v2080, 4294901760
    %v2326 = vsub.f32 %v2080, %v2325
    %2327 = vmatmul.mubr.f32.gmra.mrb[0].mxu0 %v2326
    %v2328 = vpop.f32.mrb[0].mxu0
    %v2329 = vadd.f32 %v2249, %v2328
    %v2330 = vpop.f32.mrb[0].mxu0
    %2331 = vdwg.mxu0
    %2332 = vmatprep.subr.mxu0 0.0
    %v2333 = vand.u32 %v107, 4294901760
    %2334 = vmatpush1.msra.mxu0 %v2333
    %2335 = vmatprep.subr.mxu0 0.0
    %v2336 = vand.u32 %v108, 4294901760
    %2337 = vmatpush1.msra.mxu0 %v2336
    %2338 = vmatprep.subr.mxu0 0.0
    %v2339 = vand.u32 %v109, 4294901760
    %2340 = vmatpush1.msra.mxu0 %v2339
    %2341 = vmatprep.subr.mxu0 0.0
    %v2342 = vand.u32 %v110, 4294901760
    %2343 = vmatpush1.msra.mxu0 %v2342
    %2344 = vmatprep.subr.mxu0 0.0
    %2345 = vmatpush1.msra.mxu0 0.0
    %2346 = vmatprep.subr.mxu0 0.0
    %2347 = vmatpush1.msra.mxu0 0.0
    %2348 = vmatprep.subr.mxu0 0.0
    %2349 = vmatpush1.msra.mxu0 0.0
    %2350 = vmatprep.subr.mxu0 0.0
    %2351 = vmatpush1.msra.mxu0 0.0
    %2352 = vmatprep.subr.mxu0 0.0
    %2353 = vmatpush1.msra.mxu0 0.0
    %2354 = vmatprep.subr.mxu0 0.0
    %2355 = vmatpush1.msra.mxu0 0.0
    %2356 = vmatprep.subr.mxu0 0.0
    %2357 = vmatpush1.msra.mxu0 0.0
    %2358 = vmatprep.subr.mxu0 0.0
    %2359 = vmatpush1.msra.mxu0 0.0
    %2360 = vmatprep.subr.mxu0 0.0
    %2361 = vmatpush1.msra.mxu0 0.0
    %2362 = vmatprep.subr.mxu0 0.0
    %2363 = vmatpush1.msra.mxu0 0.0
    %2364 = vmatprep.subr.mxu0 0.0
    %2365 = vmatpush1.msra.mxu0 0.0
    %2366 = vmatprep.subr.mxu0 0.0
    %2367 = vmatpush1.msra.mxu0 0.0
    %2368 = vmatprep.subr.mxu0 0.0
    %2369 = vmatpush1.msra.mxu0 0.0
    %2370 = vmatprep.subr.mxu0 0.0
    %2371 = vmatpush1.msra.mxu0 0.0
    %2372 = vmatprep.subr.mxu0 0.0
    %2373 = vmatpush1.msra.mxu0 0.0
    %2374 = vmatprep.subr.mxu0 0.0
    %2375 = vmatpush1.msra.mxu0 0.0
    %2376 = vmatprep.subr.mxu0 0.0
    %2377 = vmatpush1.msra.mxu0 0.0
    %2378 = vmatprep.subr.mxu0 0.0
    %2379 = vmatpush1.msra.mxu0 0.0
    %2380 = vmatprep.subr.mxu0 0.0
    %2381 = vmatpush1.msra.mxu0 0.0
    %2382 = vmatprep.subr.mxu0 0.0
    %2383 = vmatpush1.msra.mxu0 0.0
    %2384 = vmatprep.subr.mxu0 0.0
    %2385 = vmatpush1.msra.mxu0 0.0
    %2386 = vmatprep.subr.mxu0 0.0
    %2387 = vmatpush1.msra.mxu0 0.0
    %2388 = vmatprep.subr.mxu0 0.0
    %2389 = vmatpush1.msra.mxu0 0.0
    %2390 = vmatprep.subr.mxu0 0.0
    %2391 = vmatpush1.msra.mxu0 0.0
    %2392 = vmatprep.subr.mxu0 0.0
    %2393 = vmatpush1.msra.mxu0 0.0
    %2394 = vmatprep.subr.mxu0 0.0
    %2395 = vmatpush1.msra.mxu0 0.0
    %2396 = vmatprep.subr.mxu0 0.0
    %2397 = vmatpush1.msra.mxu0 0.0
    %2398 = vmatprep.subr.mxu0 0.0
    %2399 = vmatpush1.msra.mxu0 0.0
    %2400 = vmatprep.mubr.f32.mxu0 0.0
    %v2401 = vand.u32 %v2080, 4294901760
    %v2402 = vsub.f32 %v2080, %v2401
    %v2403 = vand.u32 %v2402, 4294901760
    %2404 = vmatmul.mubr.f32.gmra.mrb[0].mxu0 %v2403
    %v2405 = vpop.f32.mrb[0].mxu0
    %v2406 = vadd.f32 %v2329, %v2405
    %v2407 = vpop.f32.mrb[0].mxu0
    %2408 = vdwg.mxu0
    %2409 = vmatprep.subr.mxu0 0.0
    %v2410 = vand.u32 %v107, 4294901760
    %v2411 = vsub.f32 %v107, %v2410
    %v2412 = vand.u32 %v2411, 4294901760
    %2413 = vmatpush1.msra.mxu0 %v2412
    %2414 = vmatprep.subr.mxu0 0.0
    %v2415 = vand.u32 %v108, 4294901760
    %v2416 = vsub.f32 %v108, %v2415
    %v2417 = vand.u32 %v2416, 4294901760
    %2418 = vmatpush1.msra.mxu0 %v2417
    %2419 = vmatprep.subr.mxu0 0.0
    %v2420 = vand.u32 %v109, 4294901760
    %v2421 = vsub.f32 %v109, %v2420
    %v2422 = vand.u32 %v2421, 4294901760
    %2423 = vmatpush1.msra.mxu0 %v2422
    %2424 = vmatprep.subr.mxu0 0.0
    %v2425 = vand.u32 %v110, 4294901760
    %v2426 = vsub.f32 %v110, %v2425
    %v2427 = vand.u32 %v2426, 4294901760
    %2428 = vmatpush1.msra.mxu0 %v2427
    %2429 = vmatprep.subr.mxu0 0.0
    %2430 = vmatpush1.msra.mxu0 0.0
    %2431 = vmatprep.subr.mxu0 0.0
    %2432 = vmatpush1.msra.mxu0 0.0
    %2433 = vmatprep.subr.mxu0 0.0
    %2434 = vmatpush1.msra.mxu0 0.0
    %2435 = vmatprep.subr.mxu0 0.0
    %2436 = vmatpush1.msra.mxu0 0.0
    %2437 = vmatprep.subr.mxu0 0.0
    %2438 = vmatpush1.msra.mxu0 0.0
    %2439 = vmatprep.subr.mxu0 0.0
    %2440 = vmatpush1.msra.mxu0 0.0
    %2441 = vmatprep.subr.mxu0 0.0
    %2442 = vmatpush1.msra.mxu0 0.0
    %2443 = vmatprep.subr.mxu0 0.0
    %2444 = vmatpush1.msra.mxu0 0.0
    %2445 = vmatprep.subr.mxu0 0.0
    %2446 = vmatpush1.msra.mxu0 0.0
    %2447 = vmatprep.subr.mxu0 0.0
    %2448 = vmatpush1.msra.mxu0 0.0
    %2449 = vmatprep.subr.mxu0 0.0
    %2450 = vmatpush1.msra.mxu0 0.0
    %2451 = vmatprep.subr.mxu0 0.0
    %2452 = vmatpush1.msra.mxu0 0.0
    %2453 = vmatprep.subr.mxu0 0.0
    %2454 = vmatpush1.msra.mxu0 0.0
    %2455 = vmatprep.subr.mxu0 0.0
    %2456 = vmatpush1.msra.mxu0 0.0
    %2457 = vmatprep.subr.mxu0 0.0
    %2458 = vmatpush1.msra.mxu0 0.0
    %2459 = vmatprep.subr.mxu0 0.0
    %2460 = vmatpush1.msra.mxu0 0.0
    %2461 = vmatprep.subr.mxu0 0.0
    %2462 = vmatpush1.msra.mxu0 0.0
    %2463 = vmatprep.subr.mxu0 0.0
    %2464 = vmatpush1.msra.mxu0 0.0
    %2465 = vmatprep.subr.mxu0 0.0
    %2466 = vmatpush1.msra.mxu0 0.0
    %2467 = vmatprep.subr.mxu0 0.0
    %2468 = vmatpush1.msra.mxu0 0.0
    %2469 = vmatprep.subr.mxu0 0.0
    %2470 = vmatpush1.msra.mxu0 0.0
    %2471 = vmatprep.subr.mxu0 0.0
    %2472 = vmatpush1.msra.mxu0 0.0
    %2473 = vmatprep.subr.mxu0 0.0
    %2474 = vmatpush1.msra.mxu0 0.0
    %2475 = vmatprep.subr.mxu0 0.0
    %2476 = vmatpush1.msra.mxu0 0.0
    %2477 = vmatprep.subr.mxu0 0.0
    %2478 = vmatpush1.msra.mxu0 0.0
    %2479 = vmatprep.subr.mxu0 0.0
    %2480 = vmatpush1.msra.mxu0 0.0
    %2481 = vmatprep.subr.mxu0 0.0
    %2482 = vmatpush1.msra.mxu0 0.0
    %2483 = vmatprep.subr.mxu0 0.0
    %2484 = vmatpush1.msra.mxu0 0.0
    %2485 = vmatprep.mubr.f32.mxu0 0.0
    %v2486 = vand.u32 %v2080, 4294901760
    %2487 = vmatmul.mubr.f32.gmra.mrb[0].mxu0 %v2486
    %v2488 = vpop.f32.mrb[0].mxu0
    %v2489 = vadd.f32 %v2406, %v2488
    %v2490 = vpop.f32.mrb[0].mxu0
    %2491 = vdwg.mxu0
    %2492 = vmatprep.subr.mxu0 0.0
    %v2493 = vand.u32 %v107, 4294901760
    %2494 = vmatpush1.msra.mxu0 %v2493
    %2495 = vmatprep.subr.mxu0 0.0
    %v2496 = vand.u32 %v108, 4294901760
    %2497 = vmatpush1.msra.mxu0 %v2496
    %2498 = vmatprep.subr.mxu0 0.0
    %v2499 = vand.u32 %v109, 4294901760
    %2500 = vmatpush1.msra.mxu0 %v2499
    %2501 = vmatprep.subr.mxu0 0.0
    %v2502 = vand.u32 %v110, 4294901760
    %2503 = vmatpush1.msra.mxu0 %v2502
    %2504 = vmatprep.subr.mxu0 0.0
    %2505 = vmatpush1.msra.mxu0 0.0
    %2506 = vmatprep.subr.mxu0 0.0
    %2507 = vmatpush1.msra.mxu0 0.0
    %2508 = vmatprep.subr.mxu0 0.0
    %2509 = vmatpush1.msra.mxu0 0.0
    %2510 = vmatprep.subr.mxu0 0.0
    %2511 = vmatpush1.msra.mxu0 0.0
    %2512 = vmatprep.subr.mxu0 0.0
    %2513 = vmatpush1.msra.mxu0 0.0
    %2514 = vmatprep.subr.mxu0 0.0
    %2515 = vmatpush1.msra.mxu0 0.0
    %2516 = vmatprep.subr.mxu0 0.0
    %2517 = vmatpush1.msra.mxu0 0.0
    %2518 = vmatprep.subr.mxu0 0.0
    %2519 = vmatpush1.msra.mxu0 0.0
    %2520 = vmatprep.subr.mxu0 0.0
    %2521 = vmatpush1.msra.mxu0 0.0
    %2522 = vmatprep.subr.mxu0 0.0
    %2523 = vmatpush1.msra.mxu0 0.0
    %2524 = vmatprep.subr.mxu0 0.0
    %2525 = vmatpush1.msra.mxu0 0.0
    %2526 = vmatprep.subr.mxu0 0.0
    %2527 = vmatpush1.msra.mxu0 0.0
    %2528 = vmatprep.subr.mxu0 0.0
    %2529 = vmatpush1.msra.mxu0 0.0
    %2530 = vmatprep.subr.mxu0 0.0
    %2531 = vmatpush1.msra.mxu0 0.0
    %2532 = vmatprep.subr.mxu0 0.0
    %2533 = vmatpush1.msra.mxu0 0.0
    %2534 = vmatprep.subr.mxu0 0.0
    %2535 = vmatpush1.msra.mxu0 0.0
    %2536 = vmatprep.subr.mxu0 0.0
    %2537 = vmatpush1.msra.mxu0 0.0
    %2538 = vmatprep.subr.mxu0 0.0
    %2539 = vmatpush1.msra.mxu0 0.0
    %2540 = vmatprep.subr.mxu0 0.0
    %2541 = vmatpush1.msra.mxu0 0.0
    %2542 = vmatprep.subr.mxu0 0.0
    %2543 = vmatpush1.msra.mxu0 0.0
    %2544 = vmatprep.subr.mxu0 0.0
    %2545 = vmatpush1.msra.mxu0 0.0
    %2546 = vmatprep.subr.mxu0 0.0
    %2547 = vmatpush1.msra.mxu0 0.0
    %2548 = vmatprep.subr.mxu0 0.0
    %2549 = vmatpush1.msra.mxu0 0.0
    %2550 = vmatprep.subr.mxu0 0.0
    %2551 = vmatpush1.msra.mxu0 0.0
    %2552 = vmatprep.subr.mxu0 0.0
    %2553 = vmatpush1.msra.mxu0 0.0
    %2554 = vmatprep.subr.mxu0 0.0
    %2555 = vmatpush1.msra.mxu0 0.0
    %2556 = vmatprep.subr.mxu0 0.0
    %2557 = vmatpush1.msra.mxu0 0.0
    %2558 = vmatprep.subr.mxu0 0.0
    %2559 = vmatpush1.msra.mxu0 0.0
    %2560 = vmatprep.mubr.f32.mxu0 0.0
    %v2561 = vand.u32 %v2080, 4294901760
    %2562 = vmatmul.mubr.f32.gmra.mrb[0].mxu0 %v2561
    %v2563 = vpop.f32.mrb[0].mxu0
    %v2564 = vadd.f32 %v2489, %v2563
    %v2565 = vpop.f32.mrb[0].mxu0
    %2566 = vdwg.mxu0
    %vm2567 = vcmask 15360
    %v2569 = vsel %vm2567, %v166, 0
    %vm2571 = vcmask 1041408
    %v2573 = vsel %vm2571, %v112, 0
    %2575 = vmatprep.subr.mxu0 0.0
    %v2576 = vand.u32 %v2573, 4294901760
    %2577 = vmatpush1.msra.mxu0 %v2576
    %2578 = vmatprep.subr.mxu0 0.0
    %2579 = vmatpush1.msra.mxu0 0.0
    %2580 = vmatprep.subr.mxu0 0.0
    %2581 = vmatpush1.msra.mxu0 0.0
    %2582 = vmatprep.subr.mxu0 0.0
    %2583 = vmatpush1.msra.mxu0 0.0
    %2584 = vmatprep.subr.mxu0 0.0
    %2585 = vmatpush1.msra.mxu0 0.0
    %2586 = vmatprep.subr.mxu0 0.0
    %2587 = vmatpush1.msra.mxu0 0.0
    %2588 = vmatprep.subr.mxu0 0.0
    %2589 = vmatpush1.msra.mxu0 0.0
    %2590 = vmatprep.subr.mxu0 0.0
    %2591 = vmatpush1.msra.mxu0 0.0
    %2592 = vmatprep.subr.mxu0 0.0
    %2593 = vmatpush1.msra.mxu0 0.0
    %2594 = vmatprep.subr.mxu0 0.0
    %2595 = vmatpush1.msra.mxu0 0.0
    %2596 = vmatprep.subr.mxu0 0.0
    %2597 = vmatpush1.msra.mxu0 0.0
    %2598 = vmatprep.subr.mxu0 0.0
    %2599 = vmatpush1.msra.mxu0 0.0
    %2600 = vmatprep.subr.mxu0 0.0
    %2601 = vmatpush1.msra.mxu0 0.0
    %2602 = vmatprep.subr.mxu0 0.0
    %2603 = vmatpush1.msra.mxu0 0.0
    %2604 = vmatprep.subr.mxu0 0.0
    %2605 = vmatpush1.msra.mxu0 0.0
    %2606 = vmatprep.subr.mxu0 0.0
    %2607 = vmatpush1.msra.mxu0 0.0
    %2608 = vmatprep.subr.mxu0 0.0
    %2609 = vmatpush1.msra.mxu0 0.0
    %2610 = vmatprep.subr.mxu0 0.0
    %2611 = vmatpush1.msra.mxu0 0.0
    %2612 = vmatprep.subr.mxu0 0.0
    %2613 = vmatpush1.msra.mxu0 0.0
    %2614 = vmatprep.subr.mxu0 0.0
    %2615 = vmatpush1.msra.mxu0 0.0
    %2616 = vmatprep.subr.mxu0 0.0
    %2617 = vmatpush1.msra.mxu0 0.0
    %2618 = vmatprep.subr.mxu0 0.0
    %2619 = vmatpush1.msra.mxu0 0.0
    %2620 = vmatprep.subr.mxu0 0.0
    %2621 = vmatpush1.msra.mxu0 0.0
    %2622 = vmatprep.subr.mxu0 0.0
    %2623 = vmatpush1.msra.mxu0 0.0
    %2624 = vmatprep.subr.mxu0 0.0
    %2625 = vmatpush1.msra.mxu0 0.0
    %2626 = vmatprep.subr.mxu0 0.0
    %2627 = vmatpush1.msra.mxu0 0.0
    %2628 = vmatprep.subr.mxu0 0.0
    %2629 = vmatpush1.msra.mxu0 0.0
    %2630 = vmatprep.subr.mxu0 0.0
    %2631 = vmatpush1.msra.mxu0 0.0
    %2632 = vmatprep.subr.mxu0 0.0
    %2633 = vmatpush1.msra.mxu0 0.0
    %2634 = vmatprep.subr.mxu0 0.0
    %2635 = vmatpush1.msra.mxu0 0.0
    %2636 = vmatprep.subr.mxu0 0.0
    %2637 = vmatpush1.msra.mxu0 0.0
    %2638 = vmatprep.subr.mxu0 0.0
    %2639 = vmatpush1.msra.mxu0 0.0
    %2640 = vmatprep.mubr.f32.mxu0 0.0
    %v2641 = vand.u32 %v2569, 4294901760
    %v2642 = vsub.f32 %v2569, %v2641
    %v2643 = vand.u32 %v2642, 4294901760
    %v2644 = vsub.f32 %v2642, %v2643
    %v2645 = vand.u32 %v2644, 4294901760
    %2646 = vmatmul.mubr.f32.gmra.mrb[0].mxu0 %v2645
    %v2647 = vpop.f32.mrb[0].mxu0
    %v2648 = vadd.f32 0.0, %v2647
    %v2649 = vpop.f32.mrb[0].mxu0
    %2650 = vdwg.mxu0
    %2651 = vmatprep.subr.mxu0 0.0
    %v2652 = vand.u32 %v2573, 4294901760
    %v2653 = vsub.f32 %v2573, %v2652
    %v2654 = vand.u32 %v2653, 4294901760
    %v2655 = vsub.f32 %v2653, %v2654
    %v2656 = vand.u32 %v2655, 4294901760
    %2657 = vmatpush1.msra.mxu0 %v2656
    %2658 = vmatprep.subr.mxu0 0.0
    %2659 = vmatpush1.msra.mxu0 0.0
    %2660 = vmatprep.subr.mxu0 0.0
    %2661 = vmatpush1.msra.mxu0 0.0
    %2662 = vmatprep.subr.mxu0 0.0
    %2663 = vmatpush1.msra.mxu0 0.0
    %2664 = vmatprep.subr.mxu0 0.0
    %2665 = vmatpush1.msra.mxu0 0.0
    %2666 = vmatprep.subr.mxu0 0.0
    %2667 = vmatpush1.msra.mxu0 0.0
    %2668 = vmatprep.subr.mxu0 0.0
    %2669 = vmatpush1.msra.mxu0 0.0
    %2670 = vmatprep.subr.mxu0 0.0
    %2671 = vmatpush1.msra.mxu0 0.0
    %2672 = vmatprep.subr.mxu0 0.0
    %2673 = vmatpush1.msra.mxu0 0.0
    %2674 = vmatprep.subr.mxu0 0.0
    %2675 = vmatpush1.msra.mxu0 0.0
    %2676 = vmatprep.subr.mxu0 0.0
    %2677 = vmatpush1.msra.mxu0 0.0
    %2678 = vmatprep.subr.mxu0 0.0
    %2679 = vmatpush1.msra.mxu0 0.0
    %2680 = vmatprep.subr.mxu0 0.0
    %2681 = vmatpush1.msra.mxu0 0.0
    %2682 = vmatprep.subr.mxu0 0.0
    %2683 = vmatpush1.msra.mxu0 0.0
    %2684 = vmatprep.subr.mxu0 0.0
    %2685 = vmatpush1.msra.mxu0 0.0
    %2686 = vmatprep.subr.mxu0 0.0
    %2687 = vmatpush1.msra.mxu0 0.0
    %2688 = vmatprep.subr.mxu0 0.0
    %2689 = vmatpush1.msra.mxu0 0.0
    %2690 = vmatprep.subr.mxu0 0.0
    %2691 = vmatpush1.msra.mxu0 0.0
    %2692 = vmatprep.subr.mxu0 0.0
    %2693 = vmatpush1.msra.mxu0 0.0
    %2694 = vmatprep.subr.mxu0 0.0
    %2695 = vmatpush1.msra.mxu0 0.0
    %2696 = vmatprep.subr.mxu0 0.0
    %2697 = vmatpush1.msra.mxu0 0.0
    %2698 = vmatprep.subr.mxu0 0.0
    %2699 = vmatpush1.msra.mxu0 0.0
    %2700 = vmatprep.subr.mxu0 0.0
    %2701 = vmatpush1.msra.mxu0 0.0
    %2702 = vmatprep.subr.mxu0 0.0
    %2703 = vmatpush1.msra.mxu0 0.0
    %2704 = vmatprep.subr.mxu0 0.0
    %2705 = vmatpush1.msra.mxu0 0.0
    %2706 = vmatprep.subr.mxu0 0.0
    %2707 = vmatpush1.msra.mxu0 0.0
    %2708 = vmatprep.subr.mxu0 0.0
    %2709 = vmatpush1.msra.mxu0 0.0
    %2710 = vmatprep.subr.mxu0 0.0
    %2711 = vmatpush1.msra.mxu0 0.0
    %2712 = vmatprep.subr.mxu0 0.0
    %2713 = vmatpush1.msra.mxu0 0.0
    %2714 = vmatprep.subr.mxu0 0.0
    %2715 = vmatpush1.msra.mxu0 0.0
    %2716 = vmatprep.subr.mxu0 0.0
    %2717 = vmatpush1.msra.mxu0 0.0
    %2718 = vmatprep.subr.mxu0 0.0
    %2719 = vmatpush1.msra.mxu0 0.0
    %2720 = vmatprep.mubr.f32.mxu0 0.0
    %v2721 = vand.u32 %v2569, 4294901760
    %2722 = vmatmul.mubr.f32.gmra.mrb[0].mxu0 %v2721
    %v2723 = vpop.f32.mrb[0].mxu0
    %v2724 = vadd.f32 %v2648, %v2723
    %v2725 = vpop.f32.mrb[0].mxu0
    %2726 = vdwg.mxu0
    %2727 = vmatprep.subr.mxu0 0.0
    %v2728 = vand.u32 %v2573, 4294901760
    %v2729 = vsub.f32 %v2573, %v2728
    %2730 = vmatpush1.msra.mxu0 %v2729
    %2731 = vmatprep.subr.mxu0 0.0
    %2732 = vmatpush1.msra.mxu0 0.0
    %2733 = vmatprep.subr.mxu0 0.0
    %2734 = vmatpush1.msra.mxu0 0.0
    %2735 = vmatprep.subr.mxu0 0.0
    %2736 = vmatpush1.msra.mxu0 0.0
    %2737 = vmatprep.subr.mxu0 0.0
    %2738 = vmatpush1.msra.mxu0 0.0
    %2739 = vmatprep.subr.mxu0 0.0
    %2740 = vmatpush1.msra.mxu0 0.0
    %2741 = vmatprep.subr.mxu0 0.0
    %2742 = vmatpush1.msra.mxu0 0.0
    %2743 = vmatprep.subr.mxu0 0.0
    %2744 = vmatpush1.msra.mxu0 0.0
    %2745 = vmatprep.subr.mxu0 0.0
    %2746 = vmatpush1.msra.mxu0 0.0
    %2747 = vmatprep.subr.mxu0 0.0
    %2748 = vmatpush1.msra.mxu0 0.0
    %2749 = vmatprep.subr.mxu0 0.0
    %2750 = vmatpush1.msra.mxu0 0.0
    %2751 = vmatprep.subr.mxu0 0.0
    %2752 = vmatpush1.msra.mxu0 0.0
    %2753 = vmatprep.subr.mxu0 0.0
    %2754 = vmatpush1.msra.mxu0 0.0
    %2755 = vmatprep.subr.mxu0 0.0
    %2756 = vmatpush1.msra.mxu0 0.0
    %2757 = vmatprep.subr.mxu0 0.0
    %2758 = vmatpush1.msra.mxu0 0.0
    %2759 = vmatprep.subr.mxu0 0.0
    %2760 = vmatpush1.msra.mxu0 0.0
    %2761 = vmatprep.subr.mxu0 0.0
    %2762 = vmatpush1.msra.mxu0 0.0
    %2763 = vmatprep.subr.mxu0 0.0
    %2764 = vmatpush1.msra.mxu0 0.0
    %2765 = vmatprep.subr.mxu0 0.0
    %2766 = vmatpush1.msra.mxu0 0.0
    %2767 = vmatprep.subr.mxu0 0.0
    %2768 = vmatpush1.msra.mxu0 0.0
    %2769 = vmatprep.subr.mxu0 0.0
    %2770 = vmatpush1.msra.mxu0 0.0
    %2771 = vmatprep.subr.mxu0 0.0
    %2772 = vmatpush1.msra.mxu0 0.0
    %2773 = vmatprep.subr.mxu0 0.0
    %2774 = vmatpush1.msra.mxu0 0.0
    %2775 = vmatprep.subr.mxu0 0.0
    %2776 = vmatpush1.msra.mxu0 0.0
    %2777 = vmatprep.subr.mxu0 0.0
    %2778 = vmatpush1.msra.mxu0 0.0
    %2779 = vmatprep.subr.mxu0 0.0
    %2780 = vmatpush1.msra.mxu0 0.0
    %2781 = vmatprep.subr.mxu0 0.0
    %2782 = vmatpush1.msra.mxu0 0.0
    %2783 = vmatprep.subr.mxu0 0.0
    %2784 = vmatpush1.msra.mxu0 0.0
    %2785 = vmatprep.subr.mxu0 0.0
    %2786 = vmatpush1.msra.mxu0 0.0
    %2787 = vmatprep.subr.mxu0 0.0
    %2788 = vmatpush1.msra.mxu0 0.0
    %2789 = vmatprep.subr.mxu0 0.0
    %2790 = vmatpush1.msra.mxu0 0.0
    %2791 = vmatprep.subr.mxu0 0.0
    %2792 = vmatpush1.msra.mxu0 0.0
    %2793 = vmatprep.mubr.f32.mxu0 0.0
    %v2794 = vand.u32 %v2569, 4294901760
    %v2795 = vsub.f32 %v2569, %v2794
    %2796 = vmatmul.mubr.f32.gmra.mrb[0].mxu0 %v2795
    %v2797 = vpop.f32.mrb[0].mxu0
    %v2798 = vadd.f32 %v2724, %v2797
    %v2799 = vpop.f32.mrb[0].mxu0
    %2800 = vdwg.mxu0
    %2801 = vmatprep.subr.mxu0 0.0
    %v2802 = vand.u32 %v2573, 4294901760
    %2803 = vmatpush1.msra.mxu0 %v2802
    %2804 = vmatprep.subr.mxu0 0.0
    %2805 = vmatpush1.msra.mxu0 0.0
    %2806 = vmatprep.subr.mxu0 0.0
    %2807 = vmatpush1.msra.mxu0 0.0
    %2808 = vmatprep.subr.mxu0 0.0
    %2809 = vmatpush1.msra.mxu0 0.0
    %2810 = vmatprep.subr.mxu0 0.0
    %2811 = vmatpush1.msra.mxu0 0.0
    %2812 = vmatprep.subr.mxu0 0.0
    %2813 = vmatpush1.msra.mxu0 0.0
    %2814 = vmatprep.subr.mxu0 0.0
    %2815 = vmatpush1.msra.mxu0 0.0
    %2816 = vmatprep.subr.mxu0 0.0
    %2817 = vmatpush1.msra.mxu0 0.0
    %2818 = vmatprep.subr.mxu0 0.0
    %2819 = vmatpush1.msra.mxu0 0.0
    %2820 = vmatprep.subr.mxu0 0.0
    %2821 = vmatpush1.msra.mxu0 0.0
    %2822 = vmatprep.subr.mxu0 0.0
    %2823 = vmatpush1.msra.mxu0 0.0
    %2824 = vmatprep.subr.mxu0 0.0
    %2825 = vmatpush1.msra.mxu0 0.0
    %2826 = vmatprep.subr.mxu0 0.0
    %2827 = vmatpush1.msra.mxu0 0.0
    %2828 = vmatprep.subr.mxu0 0.0
    %2829 = vmatpush1.msra.mxu0 0.0
    %2830 = vmatprep.subr.mxu0 0.0
    %2831 = vmatpush1.msra.mxu0 0.0
    %2832 = vmatprep.subr.mxu0 0.0
    %2833 = vmatpush1.msra.mxu0 0.0
    %2834 = vmatprep.subr.mxu0 0.0
    %2835 = vmatpush1.msra.mxu0 0.0
    %2836 = vmatprep.subr.mxu0 0.0
    %2837 = vmatpush1.msra.mxu0 0.0
    %2838 = vmatprep.subr.mxu0 0.0
    %2839 = vmatpush1.msra.mxu0 0.0
    %2840 = vmatprep.subr.mxu0 0.0
    %2841 = vmatpush1.msra.mxu0 0.0
    %2842 = vmatprep.subr.mxu0 0.0
    %2843 = vmatpush1.msra.mxu0 0.0
    %2844 = vmatprep.subr.mxu0 0.0
    %2845 = vmatpush1.msra.mxu0 0.0
    %2846 = vmatprep.subr.mxu0 0.0
    %2847 = vmatpush1.msra.mxu0 0.0
    %2848 = vmatprep.subr.mxu0 0.0
    %2849 = vmatpush1.msra.mxu0 0.0
    %2850 = vmatprep.subr.mxu0 0.0
    %2851 = vmatpush1.msra.mxu0 0.0
    %2852 = vmatprep.subr.mxu0 0.0
    %2853 = vmatpush1.msra.mxu0 0.0
    %2854 = vmatprep.subr.mxu0 0.0
    %2855 = vmatpush1.msra.mxu0 0.0
    %2856 = vmatprep.subr.mxu0 0.0
    %2857 = vmatpush1.msra.mxu0 0.0
    %2858 = vmatprep.subr.mxu0 0.0
    %2859 = vmatpush1.msra.mxu0 0.0
    %2860 = vmatprep.subr.mxu0 0.0
    %2861 = vmatpush1.msra.mxu0 0.0
    %2862 = vmatprep.subr.mxu0 0.0
    %2863 = vmatpush1.msra.mxu0 0.0
    %2864 = vmatprep.subr.mxu0 0.0
    %2865 = vmatpush1.msra.mxu0 0.0
    %2866 = vmatprep.mubr.f32.mxu0 0.0
    %v2867 = vand.u32 %v2569, 4294901760
    %v2868 = vsub.f32 %v2569, %v2867
    %v2869 = vand.u32 %v2868, 4294901760
    %2870 = vmatmul.mubr.f32.gmra.mrb[0].mxu0 %v2869
    %v2871 = vpop.f32.mrb[0].mxu0
    %v2872 = vadd.f32 %v2798, %v2871
    %v2873 = vpop.f32.mrb[0].mxu0
    %2874 = vdwg.mxu0
    %2875 = vmatprep.subr.mxu0 0.0
    %v2876 = vand.u32 %v2573, 4294901760
    %v2877 = vsub.f32 %v2573, %v2876
    %v2878 = vand.u32 %v2877, 4294901760
    %2879 = vmatpush1.msra.mxu0 %v2878
    %2880 = vmatprep.subr.mxu0 0.0
    %2881 = vmatpush1.msra.mxu0 0.0
    %2882 = vmatprep.subr.mxu0 0.0
    %2883 = vmatpush1.msra.mxu0 0.0
    %2884 = vmatprep.subr.mxu0 0.0
    %2885 = vmatpush1.msra.mxu0 0.0
    %2886 = vmatprep.subr.mxu0 0.0
    %2887 = vmatpush1.msra.mxu0 0.0
    %2888 = vmatprep.subr.mxu0 0.0
    %2889 = vmatpush1.msra.mxu0 0.0
    %2890 = vmatprep.subr.mxu0 0.0
    %2891 = vmatpush1.msra.mxu0 0.0
    %2892 = vmatprep.subr.mxu0 0.0
    %2893 = vmatpush1.msra.mxu0 0.0
    %2894 = vmatprep.subr.mxu0 0.0
    %2895 = vmatpush1.msra.mxu0 0.0
    %2896 = vmatprep.subr.mxu0 0.0
    %2897 = vmatpush1.msra.mxu0 0.0
    %2898 = vmatprep.subr.mxu0 0.0
    %2899 = vmatpush1.msra.mxu0 0.0
    %2900 = vmatprep.subr.mxu0 0.0
    %2901 = vmatpush1.msra.mxu0 0.0
    %2902 = vmatprep.subr.mxu0 0.0
    %2903 = vmatpush1.msra.mxu0 0.0
    %2904 = vmatprep.subr.mxu0 0.0
    %2905 = vmatpush1.msra.mxu0 0.0
    %2906 = vmatprep.subr.mxu0 0.0
    %2907 = vmatpush1.msra.mxu0 0.0
    %2908 = vmatprep.subr.mxu0 0.0
    %2909 = vmatpush1.msra.mxu0 0.0
    %2910 = vmatprep.subr.mxu0 0.0
    %2911 = vmatpush1.msra.mxu0 0.0
    %2912 = vmatprep.subr.mxu0 0.0
    %2913 = vmatpush1.msra.mxu0 0.0
    %2914 = vmatprep.subr.mxu0 0.0
    %2915 = vmatpush1.msra.mxu0 0.0
    %2916 = vmatprep.subr.mxu0 0.0
    %2917 = vmatpush1.msra.mxu0 0.0
    %2918 = vmatprep.subr.mxu0 0.0
    %2919 = vmatpush1.msra.mxu0 0.0
    %2920 = vmatprep.subr.mxu0 0.0
    %2921 = vmatpush1.msra.mxu0 0.0
    %2922 = vmatprep.subr.mxu0 0.0
    %2923 = vmatpush1.msra.mxu0 0.0
    %2924 = vmatprep.subr.mxu0 0.0
    %2925 = vmatpush1.msra.mxu0 0.0
    %2926 = vmatprep.subr.mxu0 0.0
    %2927 = vmatpush1.msra.mxu0 0.0
    %2928 = vmatprep.subr.mxu0 0.0
    %2929 = vmatpush1.msra.mxu0 0.0
    %2930 = vmatprep.subr.mxu0 0.0
    %2931 = vmatpush1.msra.mxu0 0.0
    %2932 = vmatprep.subr.mxu0 0.0
    %2933 = vmatpush1.msra.mxu0 0.0
    %2934 = vmatprep.subr.mxu0 0.0
    %2935 = vmatpush1.msra.mxu0 0.0
    %2936 = vmatprep.subr.mxu0 0.0
    %2937 = vmatpush1.msra.mxu0 0.0
    %2938 = vmatprep.subr.mxu0 0.0
    %2939 = vmatpush1.msra.mxu0 0.0
    %2940 = vmatprep.subr.mxu0 0.0
    %2941 = vmatpush1.msra.mxu0 0.0
    %2942 = vmatprep.mubr.f32.mxu0 0.0
    %v2943 = vand.u32 %v2569, 4294901760
    %2944 = vmatmul.mubr.f32.gmra.mrb[0].mxu0 %v2943
    %v2945 = vpop.f32.mrb[0].mxu0
    %v2946 = vadd.f32 %v2872, %v2945
    %v2947 = vpop.f32.mrb[0].mxu0
    %2948 = vdwg.mxu0
    %2949 = vmatprep.subr.mxu0 0.0
    %v2950 = vand.u32 %v2573, 4294901760
    %2951 = vmatpush1.msra.mxu0 %v2950
    %2952 = vmatprep.subr.mxu0 0.0
    %2953 = vmatpush1.msra.mxu0 0.0
    %2954 = vmatprep.subr.mxu0 0.0
    %2955 = vmatpush1.msra.mxu0 0.0
    %2956 = vmatprep.subr.mxu0 0.0
    %2957 = vmatpush1.msra.mxu0 0.0
    %2958 = vmatprep.subr.mxu0 0.0
    %2959 = vmatpush1.msra.mxu0 0.0
    %2960 = vmatprep.subr.mxu0 0.0
    %2961 = vmatpush1.msra.mxu0 0.0
    %2962 = vmatprep.subr.mxu0 0.0
    %2963 = vmatpush1.msra.mxu0 0.0
    %2964 = vmatprep.subr.mxu0 0.0
    %2965 = vmatpush1.msra.mxu0 0.0
    %2966 = vmatprep.subr.mxu0 0.0
    %2967 = vmatpush1.msra.mxu0 0.0
    %2968 = vmatprep.subr.mxu0 0.0
    %2969 = vmatpush1.msra.mxu0 0.0
    %2970 = vmatprep.subr.mxu0 0.0
    %2971 = vmatpush1.msra.mxu0 0.0
    %2972 = vmatprep.subr.mxu0 0.0
    %2973 = vmatpush1.msra.mxu0 0.0
    %2974 = vmatprep.subr.mxu0 0.0
    %2975 = vmatpush1.msra.mxu0 0.0
    %2976 = vmatprep.subr.mxu0 0.0
    %2977 = vmatpush1.msra.mxu0 0.0
    %2978 = vmatprep.subr.mxu0 0.0
    %2979 = vmatpush1.msra.mxu0 0.0
    %2980 = vmatprep.subr.mxu0 0.0
    %2981 = vmatpush1.msra.mxu0 0.0
    %2982 = vmatprep.subr.mxu0 0.0
    %2983 = vmatpush1.msra.mxu0 0.0
    %2984 = vmatprep.subr.mxu0 0.0
    %2985 = vmatpush1.msra.mxu0 0.0
    %2986 = vmatprep.subr.mxu0 0.0
    %2987 = vmatpush1.msra.mxu0 0.0
    %2988 = vmatprep.subr.mxu0 0.0
    %2989 = vmatpush1.msra.mxu0 0.0
    %2990 = vmatprep.subr.mxu0 0.0
    %2991 = vmatpush1.msra.mxu0 0.0
    %2992 = vmatprep.subr.mxu0 0.0
    %2993 = vmatpush1.msra.mxu0 0.0
    %2994 = vmatprep.subr.mxu0 0.0
    %2995 = vmatpush1.msra.mxu0 0.0
    %2996 = vmatprep.subr.mxu0 0.0
    %2997 = vmatpush1.msra.mxu0 0.0
    %2998 = vmatprep.subr.mxu0 0.0
    %2999 = vmatpush1.msra.mxu0 0.0
    %3000 = vmatprep.subr.mxu0 0.0
    %3001 = vmatpush1.msra.mxu0 0.0
    %3002 = vmatprep.subr.mxu0 0.0
    %3003 = vmatpush1.msra.mxu0 0.0
    %3004 = vmatprep.subr.mxu0 0.0
    %3005 = vmatpush1.msra.mxu0 0.0
    %3006 = vmatprep.subr.mxu0 0.0
    %3007 = vmatpush1.msra.mxu0 0.0
    %3008 = vmatprep.subr.mxu0 0.0
    %3009 = vmatpush1.msra.mxu0 0.0
    %3010 = vmatprep.subr.mxu0 0.0
    %3011 = vmatpush1.msra.mxu0 0.0
    %3012 = vmatprep.subr.mxu0 0.0
    %3013 = vmatpush1.msra.mxu0 0.0
    %3014 = vmatprep.mubr.f32.mxu0 0.0
    %v3015 = vand.u32 %v2569, 4294901760
    %3016 = vmatmul.mubr.f32.gmra.mrb[0].mxu0 %v3015
    %v3017 = vpop.f32.mrb[0].mxu0
    %v3018 = vadd.f32 %v2946, %v3017
    %v3019 = vpop.f32.mrb[0].mxu0
    %3020 = vdwg.mxu0
    %v3021 = vadd.f32 %v2564, %v3018
    %v3022 = vadd.f32 %v3021, %v118
    %v3023 = vtanh.pop %v3022
    %vm3024 = vcmask 785408
    %v3026 = vsel %vm3024, %v3023, 0
    %3028 = vmatprep.subr.mxu0 0.0
    %v3029 = vand.u32 %v120, 4294901760
    %3030 = vmatpush1.msra.mxu0 %v3029
    %3031 = vmatprep.subr.mxu0 0.0
    %v3032 = vand.u32 %v121, 4294901760
    %3033 = vmatpush1.msra.mxu0 %v3032
    %3034 = vmatprep.subr.mxu0 0.0
    %v3035 = vand.u32 %v122, 4294901760
    %3036 = vmatpush1.msra.mxu0 %v3035
    %3037 = vmatprep.subr.mxu0 0.0
    %v3038 = vand.u32 %v123, 4294901760
    %3039 = vmatpush1.msra.mxu0 %v3038
    %3040 = vmatprep.subr.mxu0 0.0
    %v3041 = vand.u32 %v124, 4294901760
    %3042 = vmatpush1.msra.mxu0 %v3041
    %3043 = vmatprep.subr.mxu0 0.0
    %v3044 = vand.u32 %v125, 4294901760
    %3045 = vmatpush1.msra.mxu0 %v3044
    %3046 = vmatprep.subr.mxu0 0.0
    %v3047 = vand.u32 %v126, 4294901760
    %3048 = vmatpush1.msra.mxu0 %v3047
    %3049 = vmatprep.subr.mxu0 0.0
    %v3050 = vand.u32 %v127, 4294901760
    %3051 = vmatpush1.msra.mxu0 %v3050
    %3052 = vmatprep.subr.mxu0 0.0
    %v3053 = vand.u32 %v128, 4294901760
    %3054 = vmatpush1.msra.mxu0 %v3053
    %3055 = vmatprep.subr.mxu0 0.0
    %v3056 = vand.u32 %v129, 4294901760
    %3057 = vmatpush1.msra.mxu0 %v3056
    %3058 = vmatprep.subr.mxu0 0.0
    %v3059 = vand.u32 %v130, 4294901760
    %3060 = vmatpush1.msra.mxu0 %v3059
    %3061 = vmatprep.subr.mxu0 0.0
    %v3062 = vand.u32 %v131, 4294901760
    %3063 = vmatpush1.msra.mxu0 %v3062
    %3064 = vmatprep.subr.mxu0 0.0
    %3065 = vmatpush1.msra.mxu0 0.0
    %3066 = vmatprep.subr.mxu0 0.0
    %3067 = vmatpush1.msra.mxu0 0.0
    %3068 = vmatprep.subr.mxu0 0.0
    %3069 = vmatpush1.msra.mxu0 0.0
    %3070 = vmatprep.subr.mxu0 0.0
    %3071 = vmatpush1.msra.mxu0 0.0
    %3072 = vmatprep.subr.mxu0 0.0
    %3073 = vmatpush1.msra.mxu0 0.0
    %3074 = vmatprep.subr.mxu0 0.0
    %3075 = vmatpush1.msra.mxu0 0.0
    %3076 = vmatprep.subr.mxu0 0.0
    %3077 = vmatpush1.msra.mxu0 0.0
    %3078 = vmatprep.subr.mxu0 0.0
    %3079 = vmatpush1.msra.mxu0 0.0
    %3080 = vmatprep.subr.mxu0 0.0
    %3081 = vmatpush1.msra.mxu0 0.0
    %3082 = vmatprep.subr.mxu0 0.0
    %3083 = vmatpush1.msra.mxu0 0.0
    %3084 = vmatprep.subr.mxu0 0.0
    %3085 = vmatpush1.msra.mxu0 0.0
    %3086 = vmatprep.subr.mxu0 0.0
    %3087 = vmatpush1.msra.mxu0 0.0
    %3088 = vmatprep.subr.mxu0 0.0
    %3089 = vmatpush1.msra.mxu0 0.0
    %3090 = vmatprep.subr.mxu0 0.0
    %3091 = vmatpush1.msra.mxu0 0.0
    %3092 = vmatprep.subr.mxu0 0.0
    %3093 = vmatpush1.msra.mxu0 0.0
    %3094 = vmatprep.subr.mxu0 0.0
    %3095 = vmatpush1.msra.mxu0 0.0
    %3096 = vmatprep.subr.mxu0 0.0
    %3097 = vmatpush1.msra.mxu0 0.0
    %3098 = vmatprep.subr.mxu0 0.0
    %3099 = vmatpush1.msra.mxu0 0.0
    %3100 = vmatprep.subr.mxu0 0.0
    %3101 = vmatpush1.msra.mxu0 0.0
    %3102 = vmatprep.subr.mxu0 0.0
    %3103 = vmatpush1.msra.mxu0 0.0
    %3104 = vmatprep.mubr.f32.mxu0 0.0
    %v3105 = vand.u32 %v3026, 4294901760
    %v3106 = vsub.f32 %v3026, %v3105
    %v3107 = vand.u32 %v3106, 4294901760
    %v3108 = vsub.f32 %v3106, %v3107
    %v3109 = vand.u32 %v3108, 4294901760
    %3110 = vmatmul.mubr.f32.gmra.mrb[0].mxu0 %v3109
    %v3111 = vpop.f32.mrb[0].mxu0
    %v3112 = vadd.f32 %v137, %v3111
    %v3113 = vpop.f32.mrb[0].mxu0
    %3114 = vdwg.mxu0
    %3115 = vmatprep.subr.mxu0 0.0
    %v3116 = vand.u32 %v120, 4294901760
    %v3117 = vsub.f32 %v120, %v3116
    %v3118 = vand.u32 %v3117, 4294901760
    %v3119 = vsub.f32 %v3117, %v3118
    %v3120 = vand.u32 %v3119, 4294901760
    %3121 = vmatpush1.msra.mxu0 %v3120
    %3122 = vmatprep.subr.mxu0 0.0
    %v3123 = vand.u32 %v121, 4294901760
    %v3124 = vsub.f32 %v121, %v3123
    %v3125 = vand.u32 %v3124, 4294901760
    %v3126 = vsub.f32 %v3124, %v3125
    %v3127 = vand.u32 %v3126, 4294901760
    %3128 = vmatpush1.msra.mxu0 %v3127
    %3129 = vmatprep.subr.mxu0 0.0
    %v3130 = vand.u32 %v122, 4294901760
    %v3131 = vsub.f32 %v122, %v3130
    %v3132 = vand.u32 %v3131, 4294901760
    %v3133 = vsub.f32 %v3131, %v3132
    %v3134 = vand.u32 %v3133, 4294901760
    %3135 = vmatpush1.msra.mxu0 %v3134
    %3136 = vmatprep.subr.mxu0 0.0
    %v3137 = vand.u32 %v123, 4294901760
    %v3138 = vsub.f32 %v123, %v3137
    %v3139 = vand.u32 %v3138, 4294901760
    %v3140 = vsub.f32 %v3138, %v3139
    %v3141 = vand.u32 %v3140, 4294901760
    %3142 = vmatpush1.msra.mxu0 %v3141
    %3143 = vmatprep.subr.mxu0 0.0
    %v3144 = vand.u32 %v124, 4294901760
    %v3145 = vsub.f32 %v124, %v3144
    %v3146 = vand.u32 %v3145, 4294901760
    %v3147 = vsub.f32 %v3145, %v3146
    %v3148 = vand.u32 %v3147, 4294901760
    %3149 = vmatpush1.msra.mxu0 %v3148
    %3150 = vmatprep.subr.mxu0 0.0
    %v3151 = vand.u32 %v125, 4294901760
    %v3152 = vsub.f32 %v125, %v3151
    %v3153 = vand.u32 %v3152, 4294901760
    %v3154 = vsub.f32 %v3152, %v3153
    %v3155 = vand.u32 %v3154, 4294901760
    %3156 = vmatpush1.msra.mxu0 %v3155
    %3157 = vmatprep.subr.mxu0 0.0
    %v3158 = vand.u32 %v126, 4294901760
    %v3159 = vsub.f32 %v126, %v3158
    %v3160 = vand.u32 %v3159, 4294901760
    %v3161 = vsub.f32 %v3159, %v3160
    %v3162 = vand.u32 %v3161, 4294901760
    %3163 = vmatpush1.msra.mxu0 %v3162
    %3164 = vmatprep.subr.mxu0 0.0
    %v3165 = vand.u32 %v127, 4294901760
    %v3166 = vsub.f32 %v127, %v3165
    %v3167 = vand.u32 %v3166, 4294901760
    %v3168 = vsub.f32 %v3166, %v3167
    %v3169 = vand.u32 %v3168, 4294901760
    %3170 = vmatpush1.msra.mxu0 %v3169
    %3171 = vmatprep.subr.mxu0 0.0
    %v3172 = vand.u32 %v128, 4294901760
    %v3173 = vsub.f32 %v128, %v3172
    %v3174 = vand.u32 %v3173, 4294901760
    %v3175 = vsub.f32 %v3173, %v3174
    %v3176 = vand.u32 %v3175, 4294901760
    %3177 = vmatpush1.msra.mxu0 %v3176
    %3178 = vmatprep.subr.mxu0 0.0
    %v3179 = vand.u32 %v129, 4294901760
    %v3180 = vsub.f32 %v129, %v3179
    %v3181 = vand.u32 %v3180, 4294901760
    %v3182 = vsub.f32 %v3180, %v3181
    %v3183 = vand.u32 %v3182, 4294901760
    %3184 = vmatpush1.msra.mxu0 %v3183
    %3185 = vmatprep.subr.mxu0 0.0
    %v3186 = vand.u32 %v130, 4294901760
    %v3187 = vsub.f32 %v130, %v3186
    %v3188 = vand.u32 %v3187, 4294901760
    %v3189 = vsub.f32 %v3187, %v3188
    %v3190 = vand.u32 %v3189, 4294901760
    %3191 = vmatpush1.msra.mxu0 %v3190
    %3192 = vmatprep.subr.mxu0 0.0
    %v3193 = vand.u32 %v131, 4294901760
    %v3194 = vsub.f32 %v131, %v3193
    %v3195 = vand.u32 %v3194, 4294901760
    %v3196 = vsub.f32 %v3194, %v3195
    %v3197 = vand.u32 %v3196, 4294901760
    %3198 = vmatpush1.msra.mxu0 %v3197
    %3199 = vmatprep.subr.mxu0 0.0
    %3200 = vmatpush1.msra.mxu0 0.0
    %3201 = vmatprep.subr.mxu0 0.0
    %3202 = vmatpush1.msra.mxu0 0.0
    %3203 = vmatprep.subr.mxu0 0.0
    %3204 = vmatpush1.msra.mxu0 0.0
    %3205 = vmatprep.subr.mxu0 0.0
    %3206 = vmatpush1.msra.mxu0 0.0
    %3207 = vmatprep.subr.mxu0 0.0
    %3208 = vmatpush1.msra.mxu0 0.0
    %3209 = vmatprep.subr.mxu0 0.0
    %3210 = vmatpush1.msra.mxu0 0.0
    %3211 = vmatprep.subr.mxu0 0.0
    %3212 = vmatpush1.msra.mxu0 0.0
    %3213 = vmatprep.subr.mxu0 0.0
    %3214 = vmatpush1.msra.mxu0 0.0
    %3215 = vmatprep.subr.mxu0 0.0
    %3216 = vmatpush1.msra.mxu0 0.0
    %3217 = vmatprep.subr.mxu0 0.0
    %3218 = vmatpush1.msra.mxu0 0.0
    %3219 = vmatprep.subr.mxu0 0.0
    %3220 = vmatpush1.msra.mxu0 0.0
    %3221 = vmatprep.subr.mxu0 0.0
    %3222 = vmatpush1.msra.mxu0 0.0
    %3223 = vmatprep.subr.mxu0 0.0
    %3224 = vmatpush1.msra.mxu0 0.0
    %3225 = vmatprep.subr.mxu0 0.0
    %3226 = vmatpush1.msra.mxu0 0.0
    %3227 = vmatprep.subr.mxu0 0.0
    %3228 = vmatpush1.msra.mxu0 0.0
    %3229 = vmatprep.subr.mxu0 0.0
    %3230 = vmatpush1.msra.mxu0 0.0
    %3231 = vmatprep.subr.mxu0 0.0
    %3232 = vmatpush1.msra.mxu0 0.0
    %3233 = vmatprep.subr.mxu0 0.0
    %3234 = vmatpush1.msra.mxu0 0.0
    %3235 = vmatprep.subr.mxu0 0.0
    %3236 = vmatpush1.msra.mxu0 0.0
    %3237 = vmatprep.subr.mxu0 0.0
    %3238 = vmatpush1.msra.mxu0 0.0
    %3239 = vmatprep.mubr.f32.mxu0 0.0
    %v3240 = vand.u32 %v3026, 4294901760
    %3241 = vmatmul.mubr.f32.gmra.mrb[0].mxu0 %v3240
    %v3242 = vpop.f32.mrb[0].mxu0
    %v3243 = vadd.f32 %v3112, %v3242
    %v3244 = vpop.f32.mrb[0].mxu0
    %3245 = vdwg.mxu0
    %3246 = vmatprep.subr.mxu0 0.0
    %v3247 = vand.u32 %v120, 4294901760
    %v3248 = vsub.f32 %v120, %v3247
    %3249 = vmatpush1.msra.mxu0 %v3248
    %3250 = vmatprep.subr.mxu0 0.0
    %v3251 = vand.u32 %v121, 4294901760
    %v3252 = vsub.f32 %v121, %v3251
    %3253 = vmatpush1.msra.mxu0 %v3252
    %3254 = vmatprep.subr.mxu0 0.0
    %v3255 = vand.u32 %v122, 4294901760
    %v3256 = vsub.f32 %v122, %v3255
    %3257 = vmatpush1.msra.mxu0 %v3256
    %3258 = vmatprep.subr.mxu0 0.0
    %v3259 = vand.u32 %v123, 4294901760
    %v3260 = vsub.f32 %v123, %v3259
    %3261 = vmatpush1.msra.mxu0 %v3260
    %3262 = vmatprep.subr.mxu0 0.0
    %v3263 = vand.u32 %v124, 4294901760
    %v3264 = vsub.f32 %v124, %v3263
    %3265 = vmatpush1.msra.mxu0 %v3264
    %3266 = vmatprep.subr.mxu0 0.0
    %v3267 = vand.u32 %v125, 4294901760
    %v3268 = vsub.f32 %v125, %v3267
    %3269 = vmatpush1.msra.mxu0 %v3268
    %3270 = vmatprep.subr.mxu0 0.0
    %v3271 = vand.u32 %v126, 4294901760
    %v3272 = vsub.f32 %v126, %v3271
    %3273 = vmatpush1.msra.mxu0 %v3272
    %3274 = vmatprep.subr.mxu0 0.0
    %v3275 = vand.u32 %v127, 4294901760
    %v3276 = vsub.f32 %v127, %v3275
    %3277 = vmatpush1.msra.mxu0 %v3276
    %3278 = vmatprep.subr.mxu0 0.0
    %v3279 = vand.u32 %v128, 4294901760
    %v3280 = vsub.f32 %v128, %v3279
    %3281 = vmatpush1.msra.mxu0 %v3280
    %3282 = vmatprep.subr.mxu0 0.0
    %v3283 = vand.u32 %v129, 4294901760
    %v3284 = vsub.f32 %v129, %v3283
    %3285 = vmatpush1.msra.mxu0 %v3284
    %3286 = vmatprep.subr.mxu0 0.0
    %v3287 = vand.u32 %v130, 4294901760
    %v3288 = vsub.f32 %v130, %v3287
    %3289 = vmatpush1.msra.mxu0 %v3288
    %3290 = vmatprep.subr.mxu0 0.0
    %v3291 = vand.u32 %v131, 4294901760
    %v3292 = vsub.f32 %v131, %v3291
    %3293 = vmatpush1.msra.mxu0 %v3292
    %3294 = vmatprep.subr.mxu0 0.0
    %3295 = vmatpush1.msra.mxu0 0.0
    %3296 = vmatprep.subr.mxu0 0.0
    %3297 = vmatpush1.msra.mxu0 0.0
    %3298 = vmatprep.subr.mxu0 0.0
    %3299 = vmatpush1.msra.mxu0 0.0
    %3300 = vmatprep.subr.mxu0 0.0
    %3301 = vmatpush1.msra.mxu0 0.0
    %3302 = vmatprep.subr.mxu0 0.0
    %3303 = vmatpush1.msra.mxu0 0.0
    %3304 = vmatprep.subr.mxu0 0.0
    %3305 = vmatpush1.msra.mxu0 0.0
    %3306 = vmatprep.subr.mxu0 0.0
    %3307 = vmatpush1.msra.mxu0 0.0
    %3308 = vmatprep.subr.mxu0 0.0
    %3309 = vmatpush1.msra.mxu0 0.0
    %3310 = vmatprep.subr.mxu0 0.0
    %3311 = vmatpush1.msra.mxu0 0.0
    %3312 = vmatprep.subr.mxu0 0.0
    %3313 = vmatpush1.msra.mxu0 0.0
    %3314 = vmatprep.subr.mxu0 0.0
    %3315 = vmatpush1.msra.mxu0 0.0
    %3316 = vmatprep.subr.mxu0 0.0
    %3317 = vmatpush1.msra.mxu0 0.0
    %3318 = vmatprep.subr.mxu0 0.0
    %3319 = vmatpush1.msra.mxu0 0.0
    %3320 = vmatprep.subr.mxu0 0.0
    %3321 = vmatpush1.msra.mxu0 0.0
    %3322 = vmatprep.subr.mxu0 0.0
    %3323 = vmatpush1.msra.mxu0 0.0
    %3324 = vmatprep.subr.mxu0 0.0
    %3325 = vmatpush1.msra.mxu0 0.0
    %3326 = vmatprep.subr.mxu0 0.0
    %3327 = vmatpush1.msra.mxu0 0.0
    %3328 = vmatprep.subr.mxu0 0.0
    %3329 = vmatpush1.msra.mxu0 0.0
    %3330 = vmatprep.subr.mxu0 0.0
    %3331 = vmatpush1.msra.mxu0 0.0
    %3332 = vmatprep.subr.mxu0 0.0
    %3333 = vmatpush1.msra.mxu0 0.0
    %3334 = vmatprep.mubr.f32.mxu0 0.0
    %v3335 = vand.u32 %v3026, 4294901760
    %v3336 = vsub.f32 %v3026, %v3335
    %3337 = vmatmul.mubr.f32.gmra.mrb[0].mxu0 %v3336
    %v3338 = vpop.f32.mrb[0].mxu0
    %v3339 = vadd.f32 %v3243, %v3338
    %v3340 = vpop.f32.mrb[0].mxu0
    %3341 = vdwg.mxu0
    %3342 = vmatprep.subr.mxu0 0.0
    %v3343 = vand.u32 %v120, 4294901760
    %3344 = vmatpush1.msra.mxu0 %v3343
    %3345 = vmatprep.subr.mxu0 0.0
    %v3346 = vand.u32 %v121, 4294901760
    %3347 = vmatpush1.msra.mxu0 %v3346
    %3348 = vmatprep.subr.mxu0 0.0
    %v3349 = vand.u32 %v122, 4294901760
    %3350 = vmatpush1.msra.mxu0 %v3349
    %3351 = vmatprep.subr.mxu0 0.0
    %v3352 = vand.u32 %v123, 4294901760
    %3353 = vmatpush1.msra.mxu0 %v3352
    %3354 = vmatprep.subr.mxu0 0.0
    %v3355 = vand.u32 %v124, 4294901760
    %3356 = vmatpush1.msra.mxu0 %v3355
    %3357 = vmatprep.subr.mxu0 0.0
    %v3358 = vand.u32 %v125, 4294901760
    %3359 = vmatpush1.msra.mxu0 %v3358
    %3360 = vmatprep.subr.mxu0 0.0
    %v3361 = vand.u32 %v126, 4294901760
    %3362 = vmatpush1.msra.mxu0 %v3361
    %3363 = vmatprep.subr.mxu0 0.0
    %v3364 = vand.u32 %v127, 4294901760
    %3365 = vmatpush1.msra.mxu0 %v3364
    %3366 = vmatprep.subr.mxu0 0.0
    %v3367 = vand.u32 %v128, 4294901760
    %3368 = vmatpush1.msra.mxu0 %v3367
    %3369 = vmatprep.subr.mxu0 0.0
    %v3370 = vand.u32 %v129, 4294901760
    %3371 = vmatpush1.msra.mxu0 %v3370
    %3372 = vmatprep.subr.mxu0 0.0
    %v3373 = vand.u32 %v130, 4294901760
    %3374 = vmatpush1.msra.mxu0 %v3373
    %3375 = vmatprep.subr.mxu0 0.0
    %v3376 = vand.u32 %v131, 4294901760
    %3377 = vmatpush1.msra.mxu0 %v3376
    %3378 = vmatprep.subr.mxu0 0.0
    %3379 = vmatpush1.msra.mxu0 0.0
    %3380 = vmatprep.subr.mxu0 0.0
    %3381 = vmatpush1.msra.mxu0 0.0
    %3382 = vmatprep.subr.mxu0 0.0
    %3383 = vmatpush1.msra.mxu0 0.0
    %3384 = vmatprep.subr.mxu0 0.0
    %3385 = vmatpush1.msra.mxu0 0.0
    %3386 = vmatprep.subr.mxu0 0.0
    %3387 = vmatpush1.msra.mxu0 0.0
    %3388 = vmatprep.subr.mxu0 0.0
    %3389 = vmatpush1.msra.mxu0 0.0
    %3390 = vmatprep.subr.mxu0 0.0
    %3391 = vmatpush1.msra.mxu0 0.0
    %3392 = vmatprep.subr.mxu0 0.0
    %3393 = vmatpush1.msra.mxu0 0.0
    %3394 = vmatprep.subr.mxu0 0.0
    %3395 = vmatpush1.msra.mxu0 0.0
    %3396 = vmatprep.subr.mxu0 0.0
    %3397 = vmatpush1.msra.mxu0 0.0
    %3398 = vmatprep.subr.mxu0 0.0
    %3399 = vmatpush1.msra.mxu0 0.0
    %3400 = vmatprep.subr.mxu0 0.0
    %3401 = vmatpush1.msra.mxu0 0.0
    %3402 = vmatprep.subr.mxu0 0.0
    %3403 = vmatpush1.msra.mxu0 0.0
    %3404 = vmatprep.subr.mxu0 0.0
    %3405 = vmatpush1.msra.mxu0 0.0
    %3406 = vmatprep.subr.mxu0 0.0
    %3407 = vmatpush1.msra.mxu0 0.0
    %3408 = vmatprep.subr.mxu0 0.0
    %3409 = vmatpush1.msra.mxu0 0.0
    %3410 = vmatprep.subr.mxu0 0.0
    %3411 = vmatpush1.msra.mxu0 0.0
    %3412 = vmatprep.subr.mxu0 0.0
    %3413 = vmatpush1.msra.mxu0 0.0
    %3414 = vmatprep.subr.mxu0 0.0
    %3415 = vmatpush1.msra.mxu0 0.0
    %3416 = vmatprep.subr.mxu0 0.0
    %3417 = vmatpush1.msra.mxu0 0.0
    %3418 = vmatprep.mubr.f32.mxu0 0.0
    %v3419 = vand.u32 %v3026, 4294901760
    %v3420 = vsub.f32 %v3026, %v3419
    %v3421 = vand.u32 %v3420, 4294901760
    %3422 = vmatmul.mubr.f32.gmra.mrb[0].mxu0 %v3421
    %v3423 = vpop.f32.mrb[0].mxu0
    %v3424 = vadd.f32 %v3339, %v3423
    %v3425 = vpop.f32.mrb[0].mxu0
    %3426 = vdwg.mxu0
    %3427 = vmatprep.subr.mxu0 0.0
    %v3428 = vand.u32 %v120, 4294901760
    %v3429 = vsub.f32 %v120, %v3428
    %v3430 = vand.u32 %v3429, 4294901760
    %3431 = vmatpush1.msra.mxu0 %v3430
    %3432 = vmatprep.subr.mxu0 0.0
    %v3433 = vand.u32 %v121, 4294901760
    %v3434 = vsub.f32 %v121, %v3433
    %v3435 = vand.u32 %v3434, 4294901760
    %3436 = vmatpush1.msra.mxu0 %v3435
    %3437 = vmatprep.subr.mxu0 0.0
    %v3438 = vand.u32 %v122, 4294901760
    %v3439 = vsub.f32 %v122, %v3438
    %v3440 = vand.u32 %v3439, 4294901760
    %3441 = vmatpush1.msra.mxu0 %v3440
    %3442 = vmatprep.subr.mxu0 0.0
    %v3443 = vand.u32 %v123, 4294901760
    %v3444 = vsub.f32 %v123, %v3443
    %v3445 = vand.u32 %v3444, 4294901760
    %3446 = vmatpush1.msra.mxu0 %v3445
    %3447 = vmatprep.subr.mxu0 0.0
    %v3448 = vand.u32 %v124, 4294901760
    %v3449 = vsub.f32 %v124, %v3448
    %v3450 = vand.u32 %v3449, 4294901760
    %3451 = vmatpush1.msra.mxu0 %v3450
    %3452 = vmatprep.subr.mxu0 0.0
    %v3453 = vand.u32 %v125, 4294901760
    %v3454 = vsub.f32 %v125, %v3453
    %v3455 = vand.u32 %v3454, 4294901760
    %3456 = vmatpush1.msra.mxu0 %v3455
    %3457 = vmatprep.subr.mxu0 0.0
    %v3458 = vand.u32 %v126, 4294901760
    %v3459 = vsub.f32 %v126, %v3458
    %v3460 = vand.u32 %v3459, 4294901760
    %3461 = vmatpush1.msra.mxu0 %v3460
    %3462 = vmatprep.subr.mxu0 0.0
    %v3463 = vand.u32 %v127, 4294901760
    %v3464 = vsub.f32 %v127, %v3463
    %v3465 = vand.u32 %v3464, 4294901760
    %3466 = vmatpush1.msra.mxu0 %v3465
    %3467 = vmatprep.subr.mxu0 0.0
    %v3468 = vand.u32 %v128, 4294901760
    %v3469 = vsub.f32 %v128, %v3468
    %v3470 = vand.u32 %v3469, 4294901760
    %3471 = vmatpush1.msra.mxu0 %v3470
    %3472 = vmatprep.subr.mxu0 0.0
    %v3473 = vand.u32 %v129, 4294901760
    %v3474 = vsub.f32 %v129, %v3473
    %v3475 = vand.u32 %v3474, 4294901760
    %3476 = vmatpush1.msra.mxu0 %v3475
    %3477 = vmatprep.subr.mxu0 0.0
    %v3478 = vand.u32 %v130, 4294901760
    %v3479 = vsub.f32 %v130, %v3478
    %v3480 = vand.u32 %v3479, 4294901760
    %3481 = vmatpush1.msra.mxu0 %v3480
    %3482 = vmatprep.subr.mxu0 0.0
    %v3483 = vand.u32 %v131, 4294901760
    %v3484 = vsub.f32 %v131, %v3483
    %v3485 = vand.u32 %v3484, 4294901760
    %3486 = vmatpush1.msra.mxu0 %v3485
    %3487 = vmatprep.subr.mxu0 0.0
    %3488 = vmatpush1.msra.mxu0 0.0
    %3489 = vmatprep.subr.mxu0 0.0
    %3490 = vmatpush1.msra.mxu0 0.0
    %3491 = vmatprep.subr.mxu0 0.0
    %3492 = vmatpush1.msra.mxu0 0.0
    %3493 = vmatprep.subr.mxu0 0.0
    %3494 = vmatpush1.msra.mxu0 0.0
    %3495 = vmatprep.subr.mxu0 0.0
    %3496 = vmatpush1.msra.mxu0 0.0
    %3497 = vmatprep.subr.mxu0 0.0
    %3498 = vmatpush1.msra.mxu0 0.0
    %3499 = vmatprep.subr.mxu0 0.0
    %3500 = vmatpush1.msra.mxu0 0.0
    %3501 = vmatprep.subr.mxu0 0.0
    %3502 = vmatpush1.msra.mxu0 0.0
    %3503 = vmatprep.subr.mxu0 0.0
    %3504 = vmatpush1.msra.mxu0 0.0
    %3505 = vmatprep.subr.mxu0 0.0
    %3506 = vmatpush1.msra.mxu0 0.0
    %3507 = vmatprep.subr.mxu0 0.0
    %3508 = vmatpush1.msra.mxu0 0.0
    %3509 = vmatprep.subr.mxu0 0.0
    %3510 = vmatpush1.msra.mxu0 0.0
    %3511 = vmatprep.subr.mxu0 0.0
    %3512 = vmatpush1.msra.mxu0 0.0
    %3513 = vmatprep.subr.mxu0 0.0
    %3514 = vmatpush1.msra.mxu0 0.0
    %3515 = vmatprep.subr.mxu0 0.0
    %3516 = vmatpush1.msra.mxu0 0.0
    %3517 = vmatprep.subr.mxu0 0.0
    %3518 = vmatpush1.msra.mxu0 0.0
    %3519 = vmatprep.subr.mxu0 0.0
    %3520 = vmatpush1.msra.mxu0 0.0
    %3521 = vmatprep.subr.mxu0 0.0
    %3522 = vmatpush1.msra.mxu0 0.0
    %3523 = vmatprep.subr.mxu0 0.0
    %3524 = vmatpush1.msra.mxu0 0.0
    %3525 = vmatprep.subr.mxu0 0.0
    %3526 = vmatpush1.msra.mxu0 0.0
    %3527 = vmatprep.mubr.f32.mxu0 0.0
    %v3528 = vand.u32 %v3026, 4294901760
    %3529 = vmatmul.mubr.f32.gmra.mrb[0].mxu0 %v3528
    %v3530 = vpop.f32.mrb[0].mxu0
    %v3531 = vadd.f32 %v3424, %v3530
    %v3532 = vpop.f32.mrb[0].mxu0
    %3533 = vdwg.mxu0
    %3534 = vmatprep.subr.mxu0 0.0
    %v3535 = vand.u32 %v120, 4294901760
    %3536 = vmatpush1.msra.mxu0 %v3535
    %3537 = vmatprep.subr.mxu0 0.0
    %v3538 = vand.u32 %v121, 4294901760
    %3539 = vmatpush1.msra.mxu0 %v3538
    %3540 = vmatprep.subr.mxu0 0.0
    %v3541 = vand.u32 %v122, 4294901760
    %3542 = vmatpush1.msra.mxu0 %v3541
    %3543 = vmatprep.subr.mxu0 0.0
    %v3544 = vand.u32 %v123, 4294901760
    %3545 = vmatpush1.msra.mxu0 %v3544
    %3546 = vmatprep.subr.mxu0 0.0
    %v3547 = vand.u32 %v124, 4294901760
    %3548 = vmatpush1.msra.mxu0 %v3547
    %3549 = vmatprep.subr.mxu0 0.0
    %v3550 = vand.u32 %v125, 4294901760
    %3551 = vmatpush1.msra.mxu0 %v3550
    %3552 = vmatprep.subr.mxu0 0.0
    %v3553 = vand.u32 %v126, 4294901760
    %3554 = vmatpush1.msra.mxu0 %v3553
    %3555 = vmatprep.subr.mxu0 0.0
    %v3556 = vand.u32 %v127, 4294901760
    %3557 = vmatpush1.msra.mxu0 %v3556
    %3558 = vmatprep.subr.mxu0 0.0
    %v3559 = vand.u32 %v128, 4294901760
    %3560 = vmatpush1.msra.mxu0 %v3559
    %3561 = vmatprep.subr.mxu0 0.0
    %v3562 = vand.u32 %v129, 4294901760
    %3563 = vmatpush1.msra.mxu0 %v3562
    %3564 = vmatprep.subr.mxu0 0.0
    %v3565 = vand.u32 %v130, 4294901760
    %3566 = vmatpush1.msra.mxu0 %v3565
    %3567 = vmatprep.subr.mxu0 0.0
    %v3568 = vand.u32 %v131, 4294901760
    %3569 = vmatpush1.msra.mxu0 %v3568
    %3570 = vmatprep.subr.mxu0 0.0
    %3571 = vmatpush1.msra.mxu0 0.0
    %3572 = vmatprep.subr.mxu0 0.0
    %3573 = vmatpush1.msra.mxu0 0.0
    %3574 = vmatprep.subr.mxu0 0.0
    %3575 = vmatpush1.msra.mxu0 0.0
    %3576 = vmatprep.subr.mxu0 0.0
    %3577 = vmatpush1.msra.mxu0 0.0
    %3578 = vmatprep.subr.mxu0 0.0
    %3579 = vmatpush1.msra.mxu0 0.0
    %3580 = vmatprep.subr.mxu0 0.0
    %3581 = vmatpush1.msra.mxu0 0.0
    %3582 = vmatprep.subr.mxu0 0.0
    %3583 = vmatpush1.msra.mxu0 0.0
    %3584 = vmatprep.subr.mxu0 0.0
    %3585 = vmatpush1.msra.mxu0 0.0
    %3586 = vmatprep.subr.mxu0 0.0
    %3587 = vmatpush1.msra.mxu0 0.0
    %3588 = vmatprep.subr.mxu0 0.0
    %3589 = vmatpush1.msra.mxu0 0.0
    %3590 = vmatprep.subr.mxu0 0.0
    %3591 = vmatpush1.msra.mxu0 0.0
    %3592 = vmatprep.subr.mxu0 0.0
    %3593 = vmatpush1.msra.mxu0 0.0
    %3594 = vmatprep.subr.mxu0 0.0
    %3595 = vmatpush1.msra.mxu0 0.0
    %3596 = vmatprep.subr.mxu0 0.0
    %3597 = vmatpush1.msra.mxu0 0.0
    %3598 = vmatprep.subr.mxu0 0.0
    %3599 = vmatpush1.msra.mxu0 0.0
    %3600 = vmatprep.subr.mxu0 0.0
    %3601 = vmatpush1.msra.mxu0 0.0
    %3602 = vmatprep.subr.mxu0 0.0
    %3603 = vmatpush1.msra.mxu0 0.0
    %3604 = vmatprep.subr.mxu0 0.0
    %3605 = vmatpush1.msra.mxu0 0.0
    %3606 = vmatprep.subr.mxu0 0.0
    %3607 = vmatpush1.msra.mxu0 0.0
    %3608 = vmatprep.subr.mxu0 0.0
    %3609 = vmatpush1.msra.mxu0 0.0
    %3610 = vmatprep.mubr.f32.mxu0 0.0
    %v3611 = vand.u32 %v3026, 4294901760
    %3612 = vmatmul.mubr.f32.gmra.mrb[0].mxu0 %v3611
    %v3613 = vpop.f32.mrb[0].mxu0
    %v3614 = vadd.f32 %v3531, %v3613
    %v3615 = vpop.f32.mrb[0].mxu0
    %3616 = vdwg.mxu0
    %3618 = vrot.lane.b32.xlu0 %v3614, 112
    %v3619 = vpop.permute.xlu0 %3618
    %v3621 = vmul.f32 %v3614, %v3619
    %3622 = vrot.lane.b32.xlu0 %v3614, 124
    %v3623 = vpop.permute.xlu0 %3622
    %v3625 = vmul.f32 %v3614, %v3623
    %v3627 = vsel %vm171, %v139, 0
    %3629 = vmatprep.subr.mxu0 0.0
    %v3630 = vand.u32 %v3627, 4294901760
    %3631 = vmatpush1.msra.mxu0 %v3630
    %3632 = vmatprep.subr.mxu0 0.0
    %3633 = vmatpush1.msra.mxu0 0.0
    %3634 = vmatprep.subr.mxu0 0.0
    %3635 = vmatpush1.msra.mxu0 0.0
    %3636 = vmatprep.subr.mxu0 0.0
    %3637 = vmatpush1.msra.mxu0 0.0
    %3638 = vmatprep.subr.mxu0 0.0
    %3639 = vmatpush1.msra.mxu0 0.0
    %3640 = vmatprep.subr.mxu0 0.0
    %3641 = vmatpush1.msra.mxu0 0.0
    %3642 = vmatprep.subr.mxu0 0.0
    %3643 = vmatpush1.msra.mxu0 0.0
    %3644 = vmatprep.subr.mxu0 0.0
    %3645 = vmatpush1.msra.mxu0 0.0
    %3646 = vmatprep.subr.mxu0 0.0
    %3647 = vmatpush1.msra.mxu0 0.0
    %3648 = vmatprep.subr.mxu0 0.0
    %3649 = vmatpush1.msra.mxu0 0.0
    %3650 = vmatprep.subr.mxu0 0.0
    %3651 = vmatpush1.msra.mxu0 0.0
    %3652 = vmatprep.subr.mxu0 0.0
    %3653 = vmatpush1.msra.mxu0 0.0
    %3654 = vmatprep.subr.mxu0 0.0
    %3655 = vmatpush1.msra.mxu0 0.0
    %3656 = vmatprep.subr.mxu0 0.0
    %3657 = vmatpush1.msra.mxu0 0.0
    %3658 = vmatprep.subr.mxu0 0.0
    %3659 = vmatpush1.msra.mxu0 0.0
    %3660 = vmatprep.subr.mxu0 0.0
    %3661 = vmatpush1.msra.mxu0 0.0
    %3662 = vmatprep.subr.mxu0 0.0
    %3663 = vmatpush1.msra.mxu0 0.0
    %3664 = vmatprep.subr.mxu0 0.0
    %3665 = vmatpush1.msra.mxu0 0.0
    %3666 = vmatprep.subr.mxu0 0.0
    %3667 = vmatpush1.msra.mxu0 0.0
    %3668 = vmatprep.subr.mxu0 0.0
    %3669 = vmatpush1.msra.mxu0 0.0
    %3670 = vmatprep.subr.mxu0 0.0
    %3671 = vmatpush1.msra.mxu0 0.0
    %3672 = vmatprep.subr.mxu0 0.0
    %3673 = vmatpush1.msra.mxu0 0.0
    %3674 = vmatprep.subr.mxu0 0.0
    %3675 = vmatpush1.msra.mxu0 0.0
    %3676 = vmatprep.subr.mxu0 0.0
    %3677 = vmatpush1.msra.mxu0 0.0
    %3678 = vmatprep.subr.mxu0 0.0
    %3679 = vmatpush1.msra.mxu0 0.0
    %3680 = vmatprep.subr.mxu0 0.0
    %3681 = vmatpush1.msra.mxu0 0.0
    %3682 = vmatprep.subr.mxu0 0.0
    %3683 = vmatpush1.msra.mxu0 0.0
    %3684 = vmatprep.subr.mxu0 0.0
    %3685 = vmatpush1.msra.mxu0 0.0
    %3686 = vmatprep.subr.mxu0 0.0
    %3687 = vmatpush1.msra.mxu0 0.0
    %3688 = vmatprep.subr.mxu0 0.0
    %3689 = vmatpush1.msra.mxu0 0.0
    %3690 = vmatprep.subr.mxu0 0.0
    %3691 = vmatpush1.msra.mxu0 0.0
    %3692 = vmatprep.subr.mxu0 0.0
    %3693 = vmatpush1.msra.mxu0 0.0
    %3694 = vmatprep.mubr.f32.mxu0 0.0
    %v3695 = vand.u32 %v169, 4294901760
    %v3696 = vsub.f32 %v169, %v3695
    %v3697 = vand.u32 %v3696, 4294901760
    %v3698 = vsub.f32 %v3696, %v3697
    %v3699 = vand.u32 %v3698, 4294901760
    %3700 = vmatmul.mubr.f32.gmra.mrb[0].mxu0 %v3699
    %v3701 = vpop.f32.mrb[0].mxu0
    %v3702 = vadd.f32 %v3614, %v3701
    %v3703 = vpop.f32.mrb[0].mxu0
    %3704 = vdwg.mxu0
    %3705 = vmatprep.subr.mxu0 0.0
    %v3706 = vand.u32 %v3627, 4294901760
    %v3707 = vsub.f32 %v3627, %v3706
    %v3708 = vand.u32 %v3707, 4294901760
    %v3709 = vsub.f32 %v3707, %v3708
    %v3710 = vand.u32 %v3709, 4294901760
    %3711 = vmatpush1.msra.mxu0 %v3710
    %3712 = vmatprep.subr.mxu0 0.0
    %3713 = vmatpush1.msra.mxu0 0.0
    %3714 = vmatprep.subr.mxu0 0.0
    %3715 = vmatpush1.msra.mxu0 0.0
    %3716 = vmatprep.subr.mxu0 0.0
    %3717 = vmatpush1.msra.mxu0 0.0
    %3718 = vmatprep.subr.mxu0 0.0
    %3719 = vmatpush1.msra.mxu0 0.0
    %3720 = vmatprep.subr.mxu0 0.0
    %3721 = vmatpush1.msra.mxu0 0.0
    %3722 = vmatprep.subr.mxu0 0.0
    %3723 = vmatpush1.msra.mxu0 0.0
    %3724 = vmatprep.subr.mxu0 0.0
    %3725 = vmatpush1.msra.mxu0 0.0
    %3726 = vmatprep.subr.mxu0 0.0
    %3727 = vmatpush1.msra.mxu0 0.0
    %3728 = vmatprep.subr.mxu0 0.0
    %3729 = vmatpush1.msra.mxu0 0.0
    %3730 = vmatprep.subr.mxu0 0.0
    %3731 = vmatpush1.msra.mxu0 0.0
    %3732 = vmatprep.subr.mxu0 0.0
    %3733 = vmatpush1.msra.mxu0 0.0
    %3734 = vmatprep.subr.mxu0 0.0
    %3735 = vmatpush1.msra.mxu0 0.0
    %3736 = vmatprep.subr.mxu0 0.0
    %3737 = vmatpush1.msra.mxu0 0.0
    %3738 = vmatprep.subr.mxu0 0.0
    %3739 = vmatpush1.msra.mxu0 0.0
    %3740 = vmatprep.subr.mxu0 0.0
    %3741 = vmatpush1.msra.mxu0 0.0
    %3742 = vmatprep.subr.mxu0 0.0
    %3743 = vmatpush1.msra.mxu0 0.0
    %3744 = vmatprep.subr.mxu0 0.0
    %3745 = vmatpush1.msra.mxu0 0.0
    %3746 = vmatprep.subr.mxu0 0.0
    %3747 = vmatpush1.msra.mxu0 0.0
    %3748 = vmatprep.subr.mxu0 0.0
    %3749 = vmatpush1.msra.mxu0 0.0
    %3750 = vmatprep.subr.mxu0 0.0
    %3751 = vmatpush1.msra.mxu0 0.0
    %3752 = vmatprep.subr.mxu0 0.0
    %3753 = vmatpush1.msra.mxu0 0.0
    %3754 = vmatprep.subr.mxu0 0.0
    %3755 = vmatpush1.msra.mxu0 0.0
    %3756 = vmatprep.subr.mxu0 0.0
    %3757 = vmatpush1.msra.mxu0 0.0
    %3758 = vmatprep.subr.mxu0 0.0
    %3759 = vmatpush1.msra.mxu0 0.0
    %3760 = vmatprep.subr.mxu0 0.0
    %3761 = vmatpush1.msra.mxu0 0.0
    %3762 = vmatprep.subr.mxu0 0.0
    %3763 = vmatpush1.msra.mxu0 0.0
    %3764 = vmatprep.subr.mxu0 0.0
    %3765 = vmatpush1.msra.mxu0 0.0
    %3766 = vmatprep.subr.mxu0 0.0
    %3767 = vmatpush1.msra.mxu0 0.0
    %3768 = vmatprep.subr.mxu0 0.0
    %3769 = vmatpush1.msra.mxu0 0.0
    %3770 = vmatprep.subr.mxu0 0.0
    %3771 = vmatpush1.msra.mxu0 0.0
    %3772 = vmatprep.subr.mxu0 0.0
    %3773 = vmatpush1.msra.mxu0 0.0
    %3774 = vmatprep.mubr.f32.mxu0 0.0
    %v3775 = vand.u32 %v169, 4294901760
    %3776 = vmatmul.mubr.f32.gmra.mrb[0].mxu0 %v3775
    %v3777 = vpop.f32.mrb[0].mxu0
    %v3778 = vadd.f32 %v3702, %v3777
    %v3779 = vpop.f32.mrb[0].mxu0
    %3780 = vdwg.mxu0
    %3781 = vmatprep.subr.mxu0 0.0
    %v3782 = vand.u32 %v3627, 4294901760
    %v3783 = vsub.f32 %v3627, %v3782
    %3784 = vmatpush1.msra.mxu0 %v3783
    %3785 = vmatprep.subr.mxu0 0.0
    %3786 = vmatpush1.msra.mxu0 0.0
    %3787 = vmatprep.subr.mxu0 0.0
    %3788 = vmatpush1.msra.mxu0 0.0
    %3789 = vmatprep.subr.mxu0 0.0
    %3790 = vmatpush1.msra.mxu0 0.0
    %3791 = vmatprep.subr.mxu0 0.0
    %3792 = vmatpush1.msra.mxu0 0.0
    %3793 = vmatprep.subr.mxu0 0.0
    %3794 = vmatpush1.msra.mxu0 0.0
    %3795 = vmatprep.subr.mxu0 0.0
    %3796 = vmatpush1.msra.mxu0 0.0
    %3797 = vmatprep.subr.mxu0 0.0
    %3798 = vmatpush1.msra.mxu0 0.0
    %3799 = vmatprep.subr.mxu0 0.0
    %3800 = vmatpush1.msra.mxu0 0.0
    %3801 = vmatprep.subr.mxu0 0.0
    %3802 = vmatpush1.msra.mxu0 0.0
    %3803 = vmatprep.subr.mxu0 0.0
    %3804 = vmatpush1.msra.mxu0 0.0
    %3805 = vmatprep.subr.mxu0 0.0
    %3806 = vmatpush1.msra.mxu0 0.0
    %3807 = vmatprep.subr.mxu0 0.0
    %3808 = vmatpush1.msra.mxu0 0.0
    %3809 = vmatprep.subr.mxu0 0.0
    %3810 = vmatpush1.msra.mxu0 0.0
    %3811 = vmatprep.subr.mxu0 0.0
    %3812 = vmatpush1.msra.mxu0 0.0
    %3813 = vmatprep.subr.mxu0 0.0
    %3814 = vmatpush1.msra.mxu0 0.0
    %3815 = vmatprep.subr.mxu0 0.0
    %3816 = vmatpush1.msra.mxu0 0.0
    %3817 = vmatprep.subr.mxu0 0.0
    %3818 = vmatpush1.msra.mxu0 0.0
    %3819 = vmatprep.subr.mxu0 0.0
    %3820 = vmatpush1.msra.mxu0 0.0
    %3821 = vmatprep.subr.mxu0 0.0
    %3822 = vmatpush1.msra.mxu0 0.0
    %3823 = vmatprep.subr.mxu0 0.0
    %3824 = vmatpush1.msra.mxu0 0.0
    %3825 = vmatprep.subr.mxu0 0.0
    %3826 = vmatpush1.msra.mxu0 0.0
    %3827 = vmatprep.subr.mxu0 0.0
    %3828 = vmatpush1.msra.mxu0 0.0
    %3829 = vmatprep.subr.mxu0 0.0
    %3830 = vmatpush1.msra.mxu0 0.0
    %3831 = vmatprep.subr.mxu0 0.0
    %3832 = vmatpush1.msra.mxu0 0.0
    %3833 = vmatprep.subr.mxu0 0.0
    %3834 = vmatpush1.msra.mxu0 0.0
    %3835 = vmatprep.subr.mxu0 0.0
    %3836 = vmatpush1.msra.mxu0 0.0
    %3837 = vmatprep.subr.mxu0 0.0
    %3838 = vmatpush1.msra.mxu0 0.0
    %3839 = vmatprep.subr.mxu0 0.0
    %3840 = vmatpush1.msra.mxu0 0.0
    %3841 = vmatprep.subr.mxu0 0.0
    %3842 = vmatpush1.msra.mxu0 0.0
    %3843 = vmatprep.subr.mxu0 0.0
    %3844 = vmatpush1.msra.mxu0 0.0
    %3845 = vmatprep.subr.mxu0 0.0
    %3846 = vmatpush1.msra.mxu0 0.0
    %3847 = vmatprep.mubr.f32.mxu0 0.0
    %v3848 = vand.u32 %v169, 4294901760
    %v3849 = vsub.f32 %v169, %v3848
    %3850 = vmatmul.mubr.f32.gmra.mrb[0].mxu0 %v3849
    %v3851 = vpop.f32.mrb[0].mxu0
    %v3852 = vadd.f32 %v3778, %v3851
    %v3853 = vpop.f32.mrb[0].mxu0
    %3854 = vdwg.mxu0
    %3855 = vmatprep.subr.mxu0 0.0
    %v3856 = vand.u32 %v3627, 4294901760
    %3857 = vmatpush1.msra.mxu0 %v3856
    %3858 = vmatprep.subr.mxu0 0.0
    %3859 = vmatpush1.msra.mxu0 0.0
    %3860 = vmatprep.subr.mxu0 0.0
    %3861 = vmatpush1.msra.mxu0 0.0
    %3862 = vmatprep.subr.mxu0 0.0
    %3863 = vmatpush1.msra.mxu0 0.0
    %3864 = vmatprep.subr.mxu0 0.0
    %3865 = vmatpush1.msra.mxu0 0.0
    %3866 = vmatprep.subr.mxu0 0.0
    %3867 = vmatpush1.msra.mxu0 0.0
    %3868 = vmatprep.subr.mxu0 0.0
    %3869 = vmatpush1.msra.mxu0 0.0
    %3870 = vmatprep.subr.mxu0 0.0
    %3871 = vmatpush1.msra.mxu0 0.0
    %3872 = vmatprep.subr.mxu0 0.0
    %3873 = vmatpush1.msra.mxu0 0.0
    %3874 = vmatprep.subr.mxu0 0.0
    %3875 = vmatpush1.msra.mxu0 0.0
    %3876 = vmatprep.subr.mxu0 0.0
    %3877 = vmatpush1.msra.mxu0 0.0
    %3878 = vmatprep.subr.mxu0 0.0
    %3879 = vmatpush1.msra.mxu0 0.0
    %3880 = vmatprep.subr.mxu0 0.0
    %3881 = vmatpush1.msra.mxu0 0.0
    %3882 = vmatprep.subr.mxu0 0.0
    %3883 = vmatpush1.msra.mxu0 0.0
    %3884 = vmatprep.subr.mxu0 0.0
    %3885 = vmatpush1.msra.mxu0 0.0
    %3886 = vmatprep.subr.mxu0 0.0
    %3887 = vmatpush1.msra.mxu0 0.0
    %3888 = vmatprep.subr.mxu0 0.0
    %3889 = vmatpush1.msra.mxu0 0.0
    %3890 = vmatprep.subr.mxu0 0.0
    %3891 = vmatpush1.msra.mxu0 0.0
    %3892 = vmatprep.subr.mxu0 0.0
    %3893 = vmatpush1.msra.mxu0 0.0
    %3894 = vmatprep.subr.mxu0 0.0
    %3895 = vmatpush1.msra.mxu0 0.0
    %3896 = vmatprep.subr.mxu0 0.0
    %3897 = vmatpush1.msra.mxu0 0.0
    %3898 = vmatprep.subr.mxu0 0.0
    %3899 = vmatpush1.msra.mxu0 0.0
    %3900 = vmatprep.subr.mxu0 0.0
    %3901 = vmatpush1.msra.mxu0 0.0
    %3902 = vmatprep.subr.mxu0 0.0
    %3903 = vmatpush1.msra.mxu0 0.0
    %3904 = vmatprep.subr.mxu0 0.0
    %3905 = vmatpush1.msra.mxu0 0.0
    %3906 = vmatprep.subr.mxu0 0.0
    %3907 = vmatpush1.msra.mxu0 0.0
    %3908 = vmatprep.subr.mxu0 0.0
    %3909 = vmatpush1.msra.mxu0 0.0
    %3910 = vmatprep.subr.mxu0 0.0
    %3911 = vmatpush1.msra.mxu0 0.0
    %3912 = vmatprep.subr.mxu0 0.0
    %3913 = vmatpush1.msra.mxu0 0.0
    %3914 = vmatprep.subr.mxu0 0.0
    %3915 = vmatpush1.msra.mxu0 0.0
    %3916 = vmatprep.subr.mxu0 0.0
    %3917 = vmatpush1.msra.mxu0 0.0
    %3918 = vmatprep.subr.mxu0 0.0
    %3919 = vmatpush1.msra.mxu0 0.0
    %3920 = vmatprep.mubr.f32.mxu0 0.0
    %v3921 = vand.u32 %v169, 4294901760
    %v3922 = vsub.f32 %v169, %v3921
    %v3923 = vand.u32 %v3922, 4294901760
    %3924 = vmatmul.mubr.f32.gmra.mrb[0].mxu0 %v3923
    %v3925 = vpop.f32.mrb[0].mxu0
    %v3926 = vadd.f32 %v3852, %v3925
    %v3927 = vpop.f32.mrb[0].mxu0
    %3928 = vdwg.mxu0
    %3929 = vmatprep.subr.mxu0 0.0
    %v3930 = vand.u32 %v3627, 4294901760
    %v3931 = vsub.f32 %v3627, %v3930
    %v3932 = vand.u32 %v3931, 4294901760
    %3933 = vmatpush1.msra.mxu0 %v3932
    %3934 = vmatprep.subr.mxu0 0.0
    %3935 = vmatpush1.msra.mxu0 0.0
    %3936 = vmatprep.subr.mxu0 0.0
    %3937 = vmatpush1.msra.mxu0 0.0
    %3938 = vmatprep.subr.mxu0 0.0
    %3939 = vmatpush1.msra.mxu0 0.0
    %3940 = vmatprep.subr.mxu0 0.0
    %3941 = vmatpush1.msra.mxu0 0.0
    %3942 = vmatprep.subr.mxu0 0.0
    %3943 = vmatpush1.msra.mxu0 0.0
    %3944 = vmatprep.subr.mxu0 0.0
    %3945 = vmatpush1.msra.mxu0 0.0
    %3946 = vmatprep.subr.mxu0 0.0
    %3947 = vmatpush1.msra.mxu0 0.0
    %3948 = vmatprep.subr.mxu0 0.0
    %3949 = vmatpush1.msra.mxu0 0.0
    %3950 = vmatprep.subr.mxu0 0.0
    %3951 = vmatpush1.msra.mxu0 0.0
    %3952 = vmatprep.subr.mxu0 0.0
    %3953 = vmatpush1.msra.mxu0 0.0
    %3954 = vmatprep.subr.mxu0 0.0
    %3955 = vmatpush1.msra.mxu0 0.0
    %3956 = vmatprep.subr.mxu0 0.0
    %3957 = vmatpush1.msra.mxu0 0.0
    %3958 = vmatprep.subr.mxu0 0.0
    %3959 = vmatpush1.msra.mxu0 0.0
    %3960 = vmatprep.subr.mxu0 0.0
    %3961 = vmatpush1.msra.mxu0 0.0
    %3962 = vmatprep.subr.mxu0 0.0
    %3963 = vmatpush1.msra.mxu0 0.0
    %3964 = vmatprep.subr.mxu0 0.0
    %3965 = vmatpush1.msra.mxu0 0.0
    %3966 = vmatprep.subr.mxu0 0.0
    %3967 = vmatpush1.msra.mxu0 0.0
    %3968 = vmatprep.subr.mxu0 0.0
    %3969 = vmatpush1.msra.mxu0 0.0
    %3970 = vmatprep.subr.mxu0 0.0
    %3971 = vmatpush1.msra.mxu0 0.0
    %3972 = vmatprep.subr.mxu0 0.0
    %3973 = vmatpush1.msra.mxu0 0.0
    %3974 = vmatprep.subr.mxu0 0.0
    %3975 = vmatpush1.msra.mxu0 0.0
    %3976 = vmatprep.subr.mxu0 0.0
    %3977 = vmatpush1.msra.mxu0 0.0
    %3978 = vmatprep.subr.mxu0 0.0
    %3979 = vmatpush1.msra.mxu0 0.0
    %3980 = vmatprep.subr.mxu0 0.0
    %3981 = vmatpush1.msra.mxu0 0.0
    %3982 = vmatprep.subr.mxu0 0.0
    %3983 = vmatpush1.msra.mxu0 0.0
    %3984 = vmatprep.subr.mxu0 0.0
    %3985 = vmatpush1.msra.mxu0 0.0
    %3986 = vmatprep.subr.mxu0 0.0
    %3987 = vmatpush1.msra.mxu0 0.0
    %3988 = vmatprep.subr.mxu0 0.0
    %3989 = vmatpush1.msra.mxu0 0.0
    %3990 = vmatprep.subr.mxu0 0.0
    %3991 = vmatpush1.msra.mxu0 0.0
    %3992 = vmatprep.subr.mxu0 0.0
    %3993 = vmatpush1.msra.mxu0 0.0
    %3994 = vmatprep.subr.mxu0 0.0
    %3995 = vmatpush1.msra.mxu0 0.0
    %3996 = vmatprep.mubr.f32.mxu0 0.0
    %v3997 = vand.u32 %v169, 4294901760
    %3998 = vmatmul.mubr.f32.gmra.mrb[0].mxu0 %v3997
    %v3999 = vpop.f32.mrb[0].mxu0
    %v4000 = vadd.f32 %v3926, %v3999
    %v4001 = vpop.f32.mrb[0].mxu0
    %4002 = vdwg.mxu0
    %4003 = vmatprep.subr.mxu0 0.0
    %v4004 = vand.u32 %v3627, 4294901760
    %4005 = vmatpush1.msra.mxu0 %v4004
    %4006 = vmatprep.subr.mxu0 0.0
    %4007 = vmatpush1.msra.mxu0 0.0
    %4008 = vmatprep.subr.mxu0 0.0
    %4009 = vmatpush1.msra.mxu0 0.0
    %4010 = vmatprep.subr.mxu0 0.0
    %4011 = vmatpush1.msra.mxu0 0.0
    %4012 = vmatprep.subr.mxu0 0.0
    %4013 = vmatpush1.msra.mxu0 0.0
    %4014 = vmatprep.subr.mxu0 0.0
    %4015 = vmatpush1.msra.mxu0 0.0
    %4016 = vmatprep.subr.mxu0 0.0
    %4017 = vmatpush1.msra.mxu0 0.0
    %4018 = vmatprep.subr.mxu0 0.0
    %4019 = vmatpush1.msra.mxu0 0.0
    %4020 = vmatprep.subr.mxu0 0.0
    %4021 = vmatpush1.msra.mxu0 0.0
    %4022 = vmatprep.subr.mxu0 0.0
    %4023 = vmatpush1.msra.mxu0 0.0
    %4024 = vmatprep.subr.mxu0 0.0
    %4025 = vmatpush1.msra.mxu0 0.0
    %4026 = vmatprep.subr.mxu0 0.0
    %4027 = vmatpush1.msra.mxu0 0.0
    %4028 = vmatprep.subr.mxu0 0.0
    %4029 = vmatpush1.msra.mxu0 0.0
    %4030 = vmatprep.subr.mxu0 0.0
    %4031 = vmatpush1.msra.mxu0 0.0
    %4032 = vmatprep.subr.mxu0 0.0
    %4033 = vmatpush1.msra.mxu0 0.0
    %4034 = vmatprep.subr.mxu0 0.0
    %4035 = vmatpush1.msra.mxu0 0.0
    %4036 = vmatprep.subr.mxu0 0.0
    %4037 = vmatpush1.msra.mxu0 0.0
    %4038 = vmatprep.subr.mxu0 0.0
    %4039 = vmatpush1.msra.mxu0 0.0
    %4040 = vmatprep.subr.mxu0 0.0
    %4041 = vmatpush1.msra.mxu0 0.0
    %4042 = vmatprep.subr.mxu0 0.0
    %4043 = vmatpush1.msra.mxu0 0.0
    %4044 = vmatprep.subr.mxu0 0.0
    %4045 = vmatpush1.msra.mxu0 0.0
    %4046 = vmatprep.subr.mxu0 0.0
    %4047 = vmatpush1.msra.mxu0 0.0
    %4048 = vmatprep.subr.mxu0 0.0
    %4049 = vmatpush1.msra.mxu0 0.0
    %4050 = vmatprep.subr.mxu0 0.0
    %4051 = vmatpush1.msra.mxu0 0.0
    %4052 = vmatprep.subr.mxu0 0.0
    %4053 = vmatpush1.msra.mxu0 0.0
    %4054 = vmatprep.subr.mxu0 0.0
    %4055 = vmatpush1.msra.mxu0 0.0
    %4056 = vmatprep.subr.mxu0 0.0
    %4057 = vmatpush1.msra.mxu0 0.0
    %4058 = vmatprep.subr.mxu0 0.0
    %4059 = vmatpush1.msra.mxu0 0.0
    %4060 = vmatprep.subr.mxu0 0.0
    %4061 = vmatpush1.msra.mxu0 0.0
    %4062 = vmatprep.subr.mxu0 0.0
    %4063 = vmatpush1.msra.mxu0 0.0
    %4064 = vmatprep.subr.mxu0 0.0
    %4065 = vmatpush1.msra.mxu0 0.0
    %4066 = vmatprep.subr.mxu0 0.0
    %4067 = vmatpush1.msra.mxu0 0.0
    %4068 = vmatprep.mubr.f32.mxu0 0.0
    %v4069 = vand.u32 %v169, 4294901760
    %4070 = vmatmul.mubr.f32.gmra.mrb[0].mxu0 %v4069
    %v4071 = vpop.f32.mrb[0].mxu0
    %v4072 = vadd.f32 %v4000, %v4071
    %v4073 = vpop.f32.mrb[0].mxu0
    %4074 = vdwg.mxu0
    %4076 = vrot.lane.b32.xlu0 %v3621, 124
    %v4077 = vpop.permute.xlu0 %4076
    %vm4079 = vcmask 130048
    %v4081 = vsel %vm4079, %v163, 0
    %4083 = vmatprep.subr.mxu0 0.0
    %v4084 = vand.u32 %v141, 4294901760
    %4085 = vmatpush1.msra.mxu0 %v4084
    %4086 = vmatprep.subr.mxu0 0.0
    %v4087 = vand.u32 %v142, 4294901760
    %4088 = vmatpush1.msra.mxu0 %v4087
    %4089 = vmatprep.subr.mxu0 0.0
    %4090 = vmatpush1.msra.mxu0 0.0
    %4091 = vmatprep.subr.mxu0 0.0
    %4092 = vmatpush1.msra.mxu0 0.0
    %4093 = vmatprep.subr.mxu0 0.0
    %4094 = vmatpush1.msra.mxu0 0.0
    %4095 = vmatprep.subr.mxu0 0.0
    %4096 = vmatpush1.msra.mxu0 0.0
    %4097 = vmatprep.subr.mxu0 0.0
    %4098 = vmatpush1.msra.mxu0 0.0
    %4099 = vmatprep.subr.mxu0 0.0
    %4100 = vmatpush1.msra.mxu0 0.0
    %4101 = vmatprep.subr.mxu0 0.0
    %4102 = vmatpush1.msra.mxu0 0.0
    %4103 = vmatprep.subr.mxu0 0.0
    %4104 = vmatpush1.msra.mxu0 0.0
    %4105 = vmatprep.subr.mxu0 0.0
    %4106 = vmatpush1.msra.mxu0 0.0
    %4107 = vmatprep.subr.mxu0 0.0
    %4108 = vmatpush1.msra.mxu0 0.0
    %4109 = vmatprep.subr.mxu0 0.0
    %4110 = vmatpush1.msra.mxu0 0.0
    %4111 = vmatprep.subr.mxu0 0.0
    %4112 = vmatpush1.msra.mxu0 0.0
    %4113 = vmatprep.subr.mxu0 0.0
    %4114 = vmatpush1.msra.mxu0 0.0
    %4115 = vmatprep.subr.mxu0 0.0
    %4116 = vmatpush1.msra.mxu0 0.0
    %4117 = vmatprep.subr.mxu0 0.0
    %4118 = vmatpush1.msra.mxu0 0.0
    %4119 = vmatprep.subr.mxu0 0.0
    %4120 = vmatpush1.msra.mxu0 0.0
    %4121 = vmatprep.subr.mxu0 0.0
    %4122 = vmatpush1.msra.mxu0 0.0
    %4123 = vmatprep.subr.mxu0 0.0
    %4124 = vmatpush1.msra.mxu0 0.0
    %4125 = vmatprep.subr.mxu0 0.0
    %4126 = vmatpush1.msra.mxu0 0.0
    %4127 = vmatprep.subr.mxu0 0.0
    %4128 = vmatpush1.msra.mxu0 0.0
    %4129 = vmatprep.subr.mxu0 0.0
    %4130 = vmatpush1.msra.mxu0 0.0
    %4131 = vmatprep.subr.mxu0 0.0
    %4132 = vmatpush1.msra.mxu0 0.0
    %4133 = vmatprep.subr.mxu0 0.0
    %4134 = vmatpush1.msra.mxu0 0.0
    %4135 = vmatprep.subr.mxu0 0.0
    %4136 = vmatpush1.msra.mxu0 0.0
    %4137 = vmatprep.subr.mxu0 0.0
    %4138 = vmatpush1.msra.mxu0 0.0
    %4139 = vmatprep.subr.mxu0 0.0
    %4140 = vmatpush1.msra.mxu0 0.0
    %4141 = vmatprep.subr.mxu0 0.0
    %4142 = vmatpush1.msra.mxu0 0.0
    %4143 = vmatprep.subr.mxu0 0.0
    %4144 = vmatpush1.msra.mxu0 0.0
    %4145 = vmatprep.subr.mxu0 0.0
    %4146 = vmatpush1.msra.mxu0 0.0
    %4147 = vmatprep.subr.mxu0 0.0
    %4148 = vmatpush1.msra.mxu0 0.0
    %4149 = vmatprep.mubr.f32.mxu0 0.0
    %v4150 = vand.u32 %v4081, 4294901760
    %v4151 = vsub.f32 %v4081, %v4150
    %v4152 = vand.u32 %v4151, 4294901760
    %v4153 = vsub.f32 %v4151, %v4152
    %v4154 = vand.u32 %v4153, 4294901760
    %4155 = vmatmul.mubr.f32.gmra.mrb[0].mxu0 %v4154
    %v4156 = vpop.f32.mrb[0].mxu0
    %v4157 = vadd.f32 %v4077, %v4156
    %v4158 = vpop.f32.mrb[0].mxu0
    %4159 = vdwg.mxu0
    %4160 = vmatprep.subr.mxu0 0.0
    %v4161 = vand.u32 %v141, 4294901760
    %v4162 = vsub.f32 %v141, %v4161
    %v4163 = vand.u32 %v4162, 4294901760
    %v4164 = vsub.f32 %v4162, %v4163
    %v4165 = vand.u32 %v4164, 4294901760
    %4166 = vmatpush1.msra.mxu0 %v4165
    %4167 = vmatprep.subr.mxu0 0.0
    %v4168 = vand.u32 %v142, 4294901760
    %v4169 = vsub.f32 %v142, %v4168
    %v4170 = vand.u32 %v4169, 4294901760
    %v4171 = vsub.f32 %v4169, %v4170
    %v4172 = vand.u32 %v4171, 4294901760
    %4173 = vmatpush1.msra.mxu0 %v4172
    %4174 = vmatprep.subr.mxu0 0.0
    %4175 = vmatpush1.msra.mxu0 0.0
    %4176 = vmatprep.subr.mxu0 0.0
    %4177 = vmatpush1.msra.mxu0 0.0
    %4178 = vmatprep.subr.mxu0 0.0
    %4179 = vmatpush1.msra.mxu0 0.0
    %4180 = vmatprep.subr.mxu0 0.0
    %4181 = vmatpush1.msra.mxu0 0.0
    %4182 = vmatprep.subr.mxu0 0.0
    %4183 = vmatpush1.msra.mxu0 0.0
    %4184 = vmatprep.subr.mxu0 0.0
    %4185 = vmatpush1.msra.mxu0 0.0
    %4186 = vmatprep.subr.mxu0 0.0
    %4187 = vmatpush1.msra.mxu0 0.0
    %4188 = vmatprep.subr.mxu0 0.0
    %4189 = vmatpush1.msra.mxu0 0.0
    %4190 = vmatprep.subr.mxu0 0.0
    %4191 = vmatpush1.msra.mxu0 0.0
    %4192 = vmatprep.subr.mxu0 0.0
    %4193 = vmatpush1.msra.mxu0 0.0
    %4194 = vmatprep.subr.mxu0 0.0
    %4195 = vmatpush1.msra.mxu0 0.0
    %4196 = vmatprep.subr.mxu0 0.0
    %4197 = vmatpush1.msra.mxu0 0.0
    %4198 = vmatprep.subr.mxu0 0.0
    %4199 = vmatpush1.msra.mxu0 0.0
    %4200 = vmatprep.subr.mxu0 0.0
    %4201 = vmatpush1.msra.mxu0 0.0
    %4202 = vmatprep.subr.mxu0 0.0
    %4203 = vmatpush1.msra.mxu0 0.0
    %4204 = vmatprep.subr.mxu0 0.0
    %4205 = vmatpush1.msra.mxu0 0.0
    %4206 = vmatprep.subr.mxu0 0.0
    %4207 = vmatpush1.msra.mxu0 0.0
    %4208 = vmatprep.subr.mxu0 0.0
    %4209 = vmatpush1.msra.mxu0 0.0
    %4210 = vmatprep.subr.mxu0 0.0
    %4211 = vmatpush1.msra.mxu0 0.0
    %4212 = vmatprep.subr.mxu0 0.0
    %4213 = vmatpush1.msra.mxu0 0.0
    %4214 = vmatprep.subr.mxu0 0.0
    %4215 = vmatpush1.msra.mxu0 0.0
    %4216 = vmatprep.subr.mxu0 0.0
    %4217 = vmatpush1.msra.mxu0 0.0
    %4218 = vmatprep.subr.mxu0 0.0
    %4219 = vmatpush1.msra.mxu0 0.0
    %4220 = vmatprep.subr.mxu0 0.0
    %4221 = vmatpush1.msra.mxu0 0.0
    %4222 = vmatprep.subr.mxu0 0.0
    %4223 = vmatpush1.msra.mxu0 0.0
    %4224 = vmatprep.subr.mxu0 0.0
    %4225 = vmatpush1.msra.mxu0 0.0
    %4226 = vmatprep.subr.mxu0 0.0
    %4227 = vmatpush1.msra.mxu0 0.0
    %4228 = vmatprep.subr.mxu0 0.0
    %4229 = vmatpush1.msra.mxu0 0.0
    %4230 = vmatprep.subr.mxu0 0.0
    %4231 = vmatpush1.msra.mxu0 0.0
    %4232 = vmatprep.subr.mxu0 0.0
    %4233 = vmatpush1.msra.mxu0 0.0
    %4234 = vmatprep.mubr.f32.mxu0 0.0
    %v4235 = vand.u32 %v4081, 4294901760
    %4236 = vmatmul.mubr.f32.gmra.mrb[0].mxu0 %v4235
    %v4237 = vpop.f32.mrb[0].mxu0
    %v4238 = vadd.f32 %v4157, %v4237
    %v4239 = vpop.f32.mrb[0].mxu0
    %4240 = vdwg.mxu0
    %4241 = vmatprep.subr.mxu0 0.0
    %v4242 = vand.u32 %v141, 4294901760
    %v4243 = vsub.f32 %v141, %v4242
    %4244 = vmatpush1.msra.mxu0 %v4243
    %4245 = vmatprep.subr.mxu0 0.0
    %v4246 = vand.u32 %v142, 4294901760
    %v4247 = vsub.f32 %v142, %v4246
    %4248 = vmatpush1.msra.mxu0 %v4247
    %4249 = vmatprep.subr.mxu0 0.0
    %4250 = vmatpush1.msra.mxu0 0.0
    %4251 = vmatprep.subr.mxu0 0.0
    %4252 = vmatpush1.msra.mxu0 0.0
    %4253 = vmatprep.subr.mxu0 0.0
    %4254 = vmatpush1.msra.mxu0 0.0
    %4255 = vmatprep.subr.mxu0 0.0
    %4256 = vmatpush1.msra.mxu0 0.0
    %4257 = vmatprep.subr.mxu0 0.0
    %4258 = vmatpush1.msra.mxu0 0.0
    %4259 = vmatprep.subr.mxu0 0.0
    %4260 = vmatpush1.msra.mxu0 0.0
    %4261 = vmatprep.subr.mxu0 0.0
    %4262 = vmatpush1.msra.mxu0 0.0
    %4263 = vmatprep.subr.mxu0 0.0
    %4264 = vmatpush1.msra.mxu0 0.0
    %4265 = vmatprep.subr.mxu0 0.0
    %4266 = vmatpush1.msra.mxu0 0.0
    %4267 = vmatprep.subr.mxu0 0.0
    %4268 = vmatpush1.msra.mxu0 0.0
    %4269 = vmatprep.subr.mxu0 0.0
    %4270 = vmatpush1.msra.mxu0 0.0
    %4271 = vmatprep.subr.mxu0 0.0
    %4272 = vmatpush1.msra.mxu0 0.0
    %4273 = vmatprep.subr.mxu0 0.0
    %4274 = vmatpush1.msra.mxu0 0.0
    %4275 = vmatprep.subr.mxu0 0.0
    %4276 = vmatpush1.msra.mxu0 0.0
    %4277 = vmatprep.subr.mxu0 0.0
    %4278 = vmatpush1.msra.mxu0 0.0
    %4279 = vmatprep.subr.mxu0 0.0
    %4280 = vmatpush1.msra.mxu0 0.0
    %4281 = vmatprep.subr.mxu0 0.0
    %4282 = vmatpush1.msra.mxu0 0.0
    %4283 = vmatprep.subr.mxu0 0.0
    %4284 = vmatpush1.msra.mxu0 0.0
    %4285 = vmatprep.subr.mxu0 0.0
    %4286 = vmatpush1.msra.mxu0 0.0
    %4287 = vmatprep.subr.mxu0 0.0
    %4288 = vmatpush1.msra.mxu0 0.0
    %4289 = vmatprep.subr.mxu0 0.0
    %4290 = vmatpush1.msra.mxu0 0.0
    %4291 = vmatprep.subr.mxu0 0.0
    %4292 = vmatpush1.msra.mxu0 0.0
    %4293 = vmatprep.subr.mxu0 0.0
    %4294 = vmatpush1.msra.mxu0 0.0
    %4295 = vmatprep.subr.mxu0 0.0
    %4296 = vmatpush1.msra.mxu0 0.0
    %4297 = vmatprep.subr.mxu0 0.0
    %4298 = vmatpush1.msra.mxu0 0.0
    %4299 = vmatprep.subr.mxu0 0.0
    %4300 = vmatpush1.msra.mxu0 0.0
    %4301 = vmatprep.subr.mxu0 0.0
    %4302 = vmatpush1.msra.mxu0 0.0
    %4303 = vmatprep.subr.mxu0 0.0
    %4304 = vmatpush1.msra.mxu0 0.0
    %4305 = vmatprep.subr.mxu0 0.0
    %4306 = vmatpush1.msra.mxu0 0.0
    %4307 = vmatprep.subr.mxu0 0.0
    %4308 = vmatpush1.msra.mxu0 0.0
    %4309 = vmatprep.mubr.f32.mxu0 0.0
    %v4310 = vand.u32 %v4081, 4294901760
    %v4311 = vsub.f32 %v4081, %v4310
    %4312 = vmatmul.mubr.f32.gmra.mrb[0].mxu0 %v4311
    %v4313 = vpop.f32.mrb[0].mxu0
    %v4314 = vadd.f32 %v4238, %v4313
    %v4315 = vpop.f32.mrb[0].mxu0
    %4316 = vdwg.mxu0
    %4317 = vmatprep.subr.mxu0 0.0
    %v4318 = vand.u32 %v141, 4294901760
    %4319 = vmatpush1.msra.mxu0 %v4318
    %4320 = vmatprep.subr.mxu0 0.0
    %v4321 = vand.u32 %v142, 4294901760
    %4322 = vmatpush1.msra.mxu0 %v4321
    %4323 = vmatprep.subr.mxu0 0.0
    %4324 = vmatpush1.msra.mxu0 0.0
    %4325 = vmatprep.subr.mxu0 0.0
    %4326 = vmatpush1.msra.mxu0 0.0
    %4327 = vmatprep.subr.mxu0 0.0
    %4328 = vmatpush1.msra.mxu0 0.0
    %4329 = vmatprep.subr.mxu0 0.0
    %4330 = vmatpush1.msra.mxu0 0.0
    %4331 = vmatprep.subr.mxu0 0.0
    %4332 = vmatpush1.msra.mxu0 0.0
    %4333 = vmatprep.subr.mxu0 0.0
    %4334 = vmatpush1.msra.mxu0 0.0
    %4335 = vmatprep.subr.mxu0 0.0
    %4336 = vmatpush1.msra.mxu0 0.0
    %4337 = vmatprep.subr.mxu0 0.0
    %4338 = vmatpush1.msra.mxu0 0.0
    %4339 = vmatprep.subr.mxu0 0.0
    %4340 = vmatpush1.msra.mxu0 0.0
    %4341 = vmatprep.subr.mxu0 0.0
    %4342 = vmatpush1.msra.mxu0 0.0
    %4343 = vmatprep.subr.mxu0 0.0
    %4344 = vmatpush1.msra.mxu0 0.0
    %4345 = vmatprep.subr.mxu0 0.0
    %4346 = vmatpush1.msra.mxu0 0.0
    %4347 = vmatprep.subr.mxu0 0.0
    %4348 = vmatpush1.msra.mxu0 0.0
    %4349 = vmatprep.subr.mxu0 0.0
    %4350 = vmatpush1.msra.mxu0 0.0
    %4351 = vmatprep.subr.mxu0 0.0
    %4352 = vmatpush1.msra.mxu0 0.0
    %4353 = vmatprep.subr.mxu0 0.0
    %4354 = vmatpush1.msra.mxu0 0.0
    %4355 = vmatprep.subr.mxu0 0.0
    %4356 = vmatpush1.msra.mxu0 0.0
    %4357 = vmatprep.subr.mxu0 0.0
    %4358 = vmatpush1.msra.mxu0 0.0
    %4359 = vmatprep.subr.mxu0 0.0
    %4360 = vmatpush1.msra.mxu0 0.0
    %4361 = vmatprep.subr.mxu0 0.0
    %4362 = vmatpush1.msra.mxu0 0.0
    %4363 = vmatprep.subr.mxu0 0.0
    %4364 = vmatpush1.msra.mxu0 0.0
    %4365 = vmatprep.subr.mxu0 0.0
    %4366 = vmatpush1.msra.mxu0 0.0
    %4367 = vmatprep.subr.mxu0 0.0
    %4368 = vmatpush1.msra.mxu0 0.0
    %4369 = vmatprep.subr.mxu0 0.0
    %4370 = vmatpush1.msra.mxu0 0.0
    %4371 = vmatprep.subr.mxu0 0.0
    %4372 = vmatpush1.msra.mxu0 0.0
    %4373 = vmatprep.subr.mxu0 0.0
    %4374 = vmatpush1.msra.mxu0 0.0
    %4375 = vmatprep.subr.mxu0 0.0
    %4376 = vmatpush1.msra.mxu0 0.0
    %4377 = vmatprep.subr.mxu0 0.0
    %4378 = vmatpush1.msra.mxu0 0.0
    %4379 = vmatprep.subr.mxu0 0.0
    %4380 = vmatpush1.msra.mxu0 0.0
    %4381 = vmatprep.subr.mxu0 0.0
    %4382 = vmatpush1.msra.mxu0 0.0
    %4383 = vmatprep.mubr.f32.mxu0 0.0
    %v4384 = vand.u32 %v4081, 4294901760
    %v4385 = vsub.f32 %v4081, %v4384
    %v4386 = vand.u32 %v4385, 4294901760
    %4387 = vmatmul.mubr.f32.gmra.mrb[0].mxu0 %v4386
    %v4388 = vpop.f32.mrb[0].mxu0
    %v4389 = vadd.f32 %v4314, %v4388
    %v4390 = vpop.f32.mrb[0].mxu0
    %4391 = vdwg.mxu0
    %4392 = vmatprep.subr.mxu0 0.0
    %v4393 = vand.u32 %v141, 4294901760
    %v4394 = vsub.f32 %v141, %v4393
    %v4395 = vand.u32 %v4394, 4294901760
    %4396 = vmatpush1.msra.mxu0 %v4395
    %4397 = vmatprep.subr.mxu0 0.0
    %v4398 = vand.u32 %v142, 4294901760
    %v4399 = vsub.f32 %v142, %v4398
    %v4400 = vand.u32 %v4399, 4294901760
    %4401 = vmatpush1.msra.mxu0 %v4400
    %4402 = vmatprep.subr.mxu0 0.0
    %4403 = vmatpush1.msra.mxu0 0.0
    %4404 = vmatprep.subr.mxu0 0.0
    %4405 = vmatpush1.msra.mxu0 0.0
    %4406 = vmatprep.subr.mxu0 0.0
    %4407 = vmatpush1.msra.mxu0 0.0
    %4408 = vmatprep.subr.mxu0 0.0
    %4409 = vmatpush1.msra.mxu0 0.0
    %4410 = vmatprep.subr.mxu0 0.0
    %4411 = vmatpush1.msra.mxu0 0.0
    %4412 = vmatprep.subr.mxu0 0.0
    %4413 = vmatpush1.msra.mxu0 0.0
    %4414 = vmatprep.subr.mxu0 0.0
    %4415 = vmatpush1.msra.mxu0 0.0
    %4416 = vmatprep.subr.mxu0 0.0
    %4417 = vmatpush1.msra.mxu0 0.0
    %4418 = vmatprep.subr.mxu0 0.0
    %4419 = vmatpush1.msra.mxu0 0.0
    %4420 = vmatprep.subr.mxu0 0.0
    %4421 = vmatpush1.msra.mxu0 0.0
    %4422 = vmatprep.subr.mxu0 0.0
    %4423 = vmatpush1.msra.mxu0 0.0
    %4424 = vmatprep.subr.mxu0 0.0
    %4425 = vmatpush1.msra.mxu0 0.0
    %4426 = vmatprep.subr.mxu0 0.0
    %4427 = vmatpush1.msra.mxu0 0.0
    %4428 = vmatprep.subr.mxu0 0.0
    %4429 = vmatpush1.msra.mxu0 0.0
    %4430 = vmatprep.subr.mxu0 0.0
    %4431 = vmatpush1.msra.mxu0 0.0
    %4432 = vmatprep.subr.mxu0 0.0
    %4433 = vmatpush1.msra.mxu0 0.0
    %4434 = vmatprep.subr.mxu0 0.0
    %4435 = vmatpush1.msra.mxu0 0.0
    %4436 = vmatprep.subr.mxu0 0.0
    %4437 = vmatpush1.msra.mxu0 0.0
    %4438 = vmatprep.subr.mxu0 0.0
    %4439 = vmatpush1.msra.mxu0 0.0
    %4440 = vmatprep.subr.mxu0 0.0
    %4441 = vmatpush1.msra.mxu0 0.0
    %4442 = vmatprep.subr.mxu0 0.0
    %4443 = vmatpush1.msra.mxu0 0.0
    %4444 = vmatprep.subr.mxu0 0.0
    %4445 = vmatpush1.msra.mxu0 0.0
    %4446 = vmatprep.subr.mxu0 0.0
    %4447 = vmatpush1.msra.mxu0 0.0
    %4448 = vmatprep.subr.mxu0 0.0
    %4449 = vmatpush1.msra.mxu0 0.0
    %4450 = vmatprep.subr.mxu0 0.0
    %4451 = vmatpush1.msra.mxu0 0.0
    %4452 = vmatprep.subr.mxu0 0.0
    %4453 = vmatpush1.msra.mxu0 0.0
    %4454 = vmatprep.subr.mxu0 0.0
    %4455 = vmatpush1.msra.mxu0 0.0
    %4456 = vmatprep.subr.mxu0 0.0
    %4457 = vmatpush1.msra.mxu0 0.0
    %4458 = vmatprep.subr.mxu0 0.0
    %4459 = vmatpush1.msra.mxu0 0.0
    %4460 = vmatprep.subr.mxu0 0.0
    %4461 = vmatpush1.msra.mxu0 0.0
    %4462 = vmatprep.mubr.f32.mxu0 0.0
    %v4463 = vand.u32 %v4081, 4294901760
    %4464 = vmatmul.mubr.f32.gmra.mrb[0].mxu0 %v4463
    %v4465 = vpop.f32.mrb[0].mxu0
    %v4466 = vadd.f32 %v4389, %v4465
    %v4467 = vpop.f32.mrb[0].mxu0
    %4468 = vdwg.mxu0
    %4469 = vmatprep.subr.mxu0 0.0
    %v4470 = vand.u32 %v141, 4294901760
    %4471 = vmatpush1.msra.mxu0 %v4470
    %4472 = vmatprep.subr.mxu0 0.0
    %v4473 = vand.u32 %v142, 4294901760
    %4474 = vmatpush1.msra.mxu0 %v4473
    %4475 = vmatprep.subr.mxu0 0.0
    %4476 = vmatpush1.msra.mxu0 0.0
    %4477 = vmatprep.subr.mxu0 0.0
    %4478 = vmatpush1.msra.mxu0 0.0
    %4479 = vmatprep.subr.mxu0 0.0
    %4480 = vmatpush1.msra.mxu0 0.0
    %4481 = vmatprep.subr.mxu0 0.0
    %4482 = vmatpush1.msra.mxu0 0.0
    %4483 = vmatprep.subr.mxu0 0.0
    %4484 = vmatpush1.msra.mxu0 0.0
    %4485 = vmatprep.subr.mxu0 0.0
    %4486 = vmatpush1.msra.mxu0 0.0
    %4487 = vmatprep.subr.mxu0 0.0
    %4488 = vmatpush1.msra.mxu0 0.0
    %4489 = vmatprep.subr.mxu0 0.0
    %4490 = vmatpush1.msra.mxu0 0.0
    %4491 = vmatprep.subr.mxu0 0.0
    %4492 = vmatpush1.msra.mxu0 0.0
    %4493 = vmatprep.subr.mxu0 0.0
    %4494 = vmatpush1.msra.mxu0 0.0
    %4495 = vmatprep.subr.mxu0 0.0
    %4496 = vmatpush1.msra.mxu0 0.0
    %4497 = vmatprep.subr.mxu0 0.0
    %4498 = vmatpush1.msra.mxu0 0.0
    %4499 = vmatprep.subr.mxu0 0.0
    %4500 = vmatpush1.msra.mxu0 0.0
    %4501 = vmatprep.subr.mxu0 0.0
    %4502 = vmatpush1.msra.mxu0 0.0
    %4503 = vmatprep.subr.mxu0 0.0
    %4504 = vmatpush1.msra.mxu0 0.0
    %4505 = vmatprep.subr.mxu0 0.0
    %4506 = vmatpush1.msra.mxu0 0.0
    %4507 = vmatprep.subr.mxu0 0.0
    %4508 = vmatpush1.msra.mxu0 0.0
    %4509 = vmatprep.subr.mxu0 0.0
    %4510 = vmatpush1.msra.mxu0 0.0
    %4511 = vmatprep.subr.mxu0 0.0
    %4512 = vmatpush1.msra.mxu0 0.0
    %4513 = vmatprep.subr.mxu0 0.0
    %4514 = vmatpush1.msra.mxu0 0.0
    %4515 = vmatprep.subr.mxu0 0.0
    %4516 = vmatpush1.msra.mxu0 0.0
    %4517 = vmatprep.subr.mxu0 0.0
    %4518 = vmatpush1.msra.mxu0 0.0
    %4519 = vmatprep.subr.mxu0 0.0
    %4520 = vmatpush1.msra.mxu0 0.0
    %4521 = vmatprep.subr.mxu0 0.0
    %4522 = vmatpush1.msra.mxu0 0.0
    %4523 = vmatprep.subr.mxu0 0.0
    %4524 = vmatpush1.msra.mxu0 0.0
    %4525 = vmatprep.subr.mxu0 0.0
    %4526 = vmatpush1.msra.mxu0 0.0
    %4527 = vmatprep.subr.mxu0 0.0
    %4528 = vmatpush1.msra.mxu0 0.0
    %4529 = vmatprep.subr.mxu0 0.0
    %4530 = vmatpush1.msra.mxu0 0.0
    %4531 = vmatprep.subr.mxu0 0.0
    %4532 = vmatpush1.msra.mxu0 0.0
    %4533 = vmatprep.subr.mxu0 0.0
    %4534 = vmatpush1.msra.mxu0 0.0
    %4535 = vmatprep.mubr.f32.mxu0 0.0
    %v4536 = vand.u32 %v4081, 4294901760
    %4537 = vmatmul.mubr.f32.gmra.mrb[0].mxu0 %v4536
    %v4538 = vpop.f32.mrb[0].mxu0
    %v4539 = vadd.f32 %v4466, %v4538
    %v4540 = vpop.f32.mrb[0].mxu0
    %4541 = vdwg.mxu0
    %v4542 = vadd.f32 %v4539, %v151
    %v4544 = vsel %vm167, %v4072, 0
    %v4547 = vsel %vm171, %v140, 0
    %4549 = vmatprep.subr.mxu0 0.0
    %v4550 = vand.u32 %v4547, 4294901760
    %4551 = vmatpush1.msra.mxu0 %v4550
    %4552 = vmatprep.subr.mxu0 0.0
    %4553 = vmatpush1.msra.mxu0 0.0
    %4554 = vmatprep.subr.mxu0 0.0
    %4555 = vmatpush1.msra.mxu0 0.0
    %4556 = vmatprep.subr.mxu0 0.0
    %4557 = vmatpush1.msra.mxu0 0.0
    %4558 = vmatprep.subr.mxu0 0.0
    %4559 = vmatpush1.msra.mxu0 0.0
    %4560 = vmatprep.subr.mxu0 0.0
    %4561 = vmatpush1.msra.mxu0 0.0
    %4562 = vmatprep.subr.mxu0 0.0
    %4563 = vmatpush1.msra.mxu0 0.0
    %4564 = vmatprep.subr.mxu0 0.0
    %4565 = vmatpush1.msra.mxu0 0.0
    %4566 = vmatprep.subr.mxu0 0.0
    %4567 = vmatpush1.msra.mxu0 0.0
    %4568 = vmatprep.subr.mxu0 0.0
    %4569 = vmatpush1.msra.mxu0 0.0
    %4570 = vmatprep.subr.mxu0 0.0
    %4571 = vmatpush1.msra.mxu0 0.0
    %4572 = vmatprep.subr.mxu0 0.0
    %4573 = vmatpush1.msra.mxu0 0.0
    %4574 = vmatprep.subr.mxu0 0.0
    %4575 = vmatpush1.msra.mxu0 0.0
    %4576 = vmatprep.subr.mxu0 0.0
    %4577 = vmatpush1.msra.mxu0 0.0
    %4578 = vmatprep.subr.mxu0 0.0
    %4579 = vmatpush1.msra.mxu0 0.0
    %4580 = vmatprep.subr.mxu0 0.0
    %4581 = vmatpush1.msra.mxu0 0.0
    %4582 = vmatprep.subr.mxu0 0.0
    %4583 = vmatpush1.msra.mxu0 0.0
    %4584 = vmatprep.subr.mxu0 0.0
    %4585 = vmatpush1.msra.mxu0 0.0
    %4586 = vmatprep.subr.mxu0 0.0
    %4587 = vmatpush1.msra.mxu0 0.0
    %4588 = vmatprep.subr.mxu0 0.0
    %4589 = vmatpush1.msra.mxu0 0.0
    %4590 = vmatprep.subr.mxu0 0.0
    %4591 = vmatpush1.msra.mxu0 0.0
    %4592 = vmatprep.subr.mxu0 0.0
    %4593 = vmatpush1.msra.mxu0 0.0
    %4594 = vmatprep.subr.mxu0 0.0
    %4595 = vmatpush1.msra.mxu0 0.0
    %4596 = vmatprep.subr.mxu0 0.0
    %4597 = vmatpush1.msra.mxu0 0.0
    %4598 = vmatprep.subr.mxu0 0.0
    %4599 = vmatpush1.msra.mxu0 0.0
    %4600 = vmatprep.subr.mxu0 0.0
    %4601 = vmatpush1.msra.mxu0 0.0
    %4602 = vmatprep.subr.mxu0 0.0
    %4603 = vmatpush1.msra.mxu0 0.0
    %4604 = vmatprep.subr.mxu0 0.0
    %4605 = vmatpush1.msra.mxu0 0.0
    %4606 = vmatprep.subr.mxu0 0.0
    %4607 = vmatpush1.msra.mxu0 0.0
    %4608 = vmatprep.subr.mxu0 0.0
    %4609 = vmatpush1.msra.mxu0 0.0
    %4610 = vmatprep.subr.mxu0 0.0
    %4611 = vmatpush1.msra.mxu0 0.0
    %4612 = vmatprep.subr.mxu0 0.0
    %4613 = vmatpush1.msra.mxu0 0.0
    %4614 = vmatprep.mubr.f32.mxu0 0.0
    %v4615 = vand.u32 %v4544, 4294901760
    %v4616 = vsub.f32 %v4544, %v4615
    %v4617 = vand.u32 %v4616, 4294901760
    %v4618 = vsub.f32 %v4616, %v4617
    %v4619 = vand.u32 %v4618, 4294901760
    %4620 = vmatmul.mubr.f32.gmra.mrb[0].mxu0 %v4619
    %v4621 = vpop.f32.mrb[0].mxu0
    %v4622 = vadd.f32 0.0, %v4621
    %v4623 = vpop.f32.mrb[0].mxu0
    %4624 = vdwg.mxu0
    %4625 = vmatprep.subr.mxu0 0.0
    %v4626 = vand.u32 %v4547, 4294901760
    %v4627 = vsub.f32 %v4547, %v4626
    %v4628 = vand.u32 %v4627, 4294901760
    %v4629 = vsub.f32 %v4627, %v4628
    %v4630 = vand.u32 %v4629, 4294901760
    %4631 = vmatpush1.msra.mxu0 %v4630
    %4632 = vmatprep.subr.mxu0 0.0
    %4633 = vmatpush1.msra.mxu0 0.0
    %4634 = vmatprep.subr.mxu0 0.0
    %4635 = vmatpush1.msra.mxu0 0.0
    %4636 = vmatprep.subr.mxu0 0.0
    %4637 = vmatpush1.msra.mxu0 0.0
    %4638 = vmatprep.subr.mxu0 0.0
    %4639 = vmatpush1.msra.mxu0 0.0
    %4640 = vmatprep.subr.mxu0 0.0
    %4641 = vmatpush1.msra.mxu0 0.0
    %4642 = vmatprep.subr.mxu0 0.0
    %4643 = vmatpush1.msra.mxu0 0.0
    %4644 = vmatprep.subr.mxu0 0.0
    %4645 = vmatpush1.msra.mxu0 0.0
    %4646 = vmatprep.subr.mxu0 0.0
    %4647 = vmatpush1.msra.mxu0 0.0
    %4648 = vmatprep.subr.mxu0 0.0
    %4649 = vmatpush1.msra.mxu0 0.0
    %4650 = vmatprep.subr.mxu0 0.0
    %4651 = vmatpush1.msra.mxu0 0.0
    %4652 = vmatprep.subr.mxu0 0.0
    %4653 = vmatpush1.msra.mxu0 0.0
    %4654 = vmatprep.subr.mxu0 0.0
    %4655 = vmatpush1.msra.mxu0 0.0
    %4656 = vmatprep.subr.mxu0 0.0
    %4657 = vmatpush1.msra.mxu0 0.0
    %4658 = vmatprep.subr.mxu0 0.0
    %4659 = vmatpush1.msra.mxu0 0.0
    %4660 = vmatprep.subr.mxu0 0.0
    %4661 = vmatpush1.msra.mxu0 0.0
    %4662 = vmatprep.subr.mxu0 0.0
    %4663 = vmatpush1.msra.mxu0 0.0
    %4664 = vmatprep.subr.mxu0 0.0
    %4665 = vmatpush1.msra.mxu0 0.0
    %4666 = vmatprep.subr.mxu0 0.0
    %4667 = vmatpush1.msra.mxu0 0.0
    %4668 = vmatprep.subr.mxu0 0.0
    %4669 = vmatpush1.msra.mxu0 0.0
    %4670 = vmatprep.subr.mxu0 0.0
    %4671 = vmatpush1.msra.mxu0 0.0
    %4672 = vmatprep.subr.mxu0 0.0
    %4673 = vmatpush1.msra.mxu0 0.0
    %4674 = vmatprep.subr.mxu0 0.0
    %4675 = vmatpush1.msra.mxu0 0.0
    %4676 = vmatprep.subr.mxu0 0.0
    %4677 = vmatpush1.msra.mxu0 0.0
    %4678 = vmatprep.subr.mxu0 0.0
    %4679 = vmatpush1.msra.mxu0 0.0
    %4680 = vmatprep.subr.mxu0 0.0
    %4681 = vmatpush1.msra.mxu0 0.0
    %4682 = vmatprep.subr.mxu0 0.0
    %4683 = vmatpush1.msra.mxu0 0.0
    %4684 = vmatprep.subr.mxu0 0.0
    %4685 = vmatpush1.msra.mxu0 0.0
    %4686 = vmatprep.subr.mxu0 0.0
    %4687 = vmatpush1.msra.mxu0 0.0
    %4688 = vmatprep.subr.mxu0 0.0
    %4689 = vmatpush1.msra.mxu0 0.0
    %4690 = vmatprep.subr.mxu0 0.0
    %4691 = vmatpush1.msra.mxu0 0.0
    %4692 = vmatprep.subr.mxu0 0.0
    %4693 = vmatpush1.msra.mxu0 0.0
    %4694 = vmatprep.mubr.f32.mxu0 0.0
    %v4695 = vand.u32 %v4544, 4294901760
    %4696 = vmatmul.mubr.f32.gmra.mrb[0].mxu0 %v4695
    %v4697 = vpop.f32.mrb[0].mxu0
    %v4698 = vadd.f32 %v4622, %v4697
    %v4699 = vpop.f32.mrb[0].mxu0
    %4700 = vdwg.mxu0
    %4701 = vmatprep.subr.mxu0 0.0
    %v4702 = vand.u32 %v4547, 4294901760
    %v4703 = vsub.f32 %v4547, %v4702
    %4704 = vmatpush1.msra.mxu0 %v4703
    %4705 = vmatprep.subr.mxu0 0.0
    %4706 = vmatpush1.msra.mxu0 0.0
    %4707 = vmatprep.subr.mxu0 0.0
    %4708 = vmatpush1.msra.mxu0 0.0
    %4709 = vmatprep.subr.mxu0 0.0
    %4710 = vmatpush1.msra.mxu0 0.0
    %4711 = vmatprep.subr.mxu0 0.0
    %4712 = vmatpush1.msra.mxu0 0.0
    %4713 = vmatprep.subr.mxu0 0.0
    %4714 = vmatpush1.msra.mxu0 0.0
    %4715 = vmatprep.subr.mxu0 0.0
    %4716 = vmatpush1.msra.mxu0 0.0
    %4717 = vmatprep.subr.mxu0 0.0
    %4718 = vmatpush1.msra.mxu0 0.0
    %4719 = vmatprep.subr.mxu0 0.0
    %4720 = vmatpush1.msra.mxu0 0.0
    %4721 = vmatprep.subr.mxu0 0.0
    %4722 = vmatpush1.msra.mxu0 0.0
    %4723 = vmatprep.subr.mxu0 0.0
    %4724 = vmatpush1.msra.mxu0 0.0
    %4725 = vmatprep.subr.mxu0 0.0
    %4726 = vmatpush1.msra.mxu0 0.0
    %4727 = vmatprep.subr.mxu0 0.0
    %4728 = vmatpush1.msra.mxu0 0.0
    %4729 = vmatprep.subr.mxu0 0.0
    %4730 = vmatpush1.msra.mxu0 0.0
    %4731 = vmatprep.subr.mxu0 0.0
    %4732 = vmatpush1.msra.mxu0 0.0
    %4733 = vmatprep.subr.mxu0 0.0
    %4734 = vmatpush1.msra.mxu0 0.0
    %4735 = vmatprep.subr.mxu0 0.0
    %4736 = vmatpush1.msra.mxu0 0.0
    %4737 = vmatprep.subr.mxu0 0.0
    %4738 = vmatpush1.msra.mxu0 0.0
    %4739 = vmatprep.subr.mxu0 0.0
    %4740 = vmatpush1.msra.mxu0 0.0
    %4741 = vmatprep.subr.mxu0 0.0
    %4742 = vmatpush1.msra.mxu0 0.0
    %4743 = vmatprep.subr.mxu0 0.0
    %4744 = vmatpush1.msra.mxu0 0.0
    %4745 = vmatprep.subr.mxu0 0.0
    %4746 = vmatpush1.msra.mxu0 0.0
    %4747 = vmatprep.subr.mxu0 0.0
    %4748 = vmatpush1.msra.mxu0 0.0
    %4749 = vmatprep.subr.mxu0 0.0
    %4750 = vmatpush1.msra.mxu0 0.0
    %4751 = vmatprep.subr.mxu0 0.0
    %4752 = vmatpush1.msra.mxu0 0.0
    %4753 = vmatprep.subr.mxu0 0.0
    %4754 = vmatpush1.msra.mxu0 0.0
    %4755 = vmatprep.subr.mxu0 0.0
    %4756 = vmatpush1.msra.mxu0 0.0
    %4757 = vmatprep.subr.mxu0 0.0
    %4758 = vmatpush1.msra.mxu0 0.0
    %4759 = vmatprep.subr.mxu0 0.0
    %4760 = vmatpush1.msra.mxu0 0.0
    %4761 = vmatprep.subr.mxu0 0.0
    %4762 = vmatpush1.msra.mxu0 0.0
    %4763 = vmatprep.subr.mxu0 0.0
    %4764 = vmatpush1.msra.mxu0 0.0
    %4765 = vmatprep.subr.mxu0 0.0
    %4766 = vmatpush1.msra.mxu0 0.0
    %4767 = vmatprep.mubr.f32.mxu0 0.0
    %v4768 = vand.u32 %v4544, 4294901760
    %v4769 = vsub.f32 %v4544, %v4768
    %4770 = vmatmul.mubr.f32.gmra.mrb[0].mxu0 %v4769
    %v4771 = vpop.f32.mrb[0].mxu0
    %v4772 = vadd.f32 %v4698, %v4771
    %v4773 = vpop.f32.mrb[0].mxu0
    %4774 = vdwg.mxu0
    %4775 = vmatprep.subr.mxu0 0.0
    %v4776 = vand.u32 %v4547, 4294901760
    %4777 = vmatpush1.msra.mxu0 %v4776
    %4778 = vmatprep.subr.mxu0 0.0
    %4779 = vmatpush1.msra.mxu0 0.0
    %4780 = vmatprep.subr.mxu0 0.0
    %4781 = vmatpush1.msra.mxu0 0.0
    %4782 = vmatprep.subr.mxu0 0.0
    %4783 = vmatpush1.msra.mxu0 0.0
    %4784 = vmatprep.subr.mxu0 0.0
    %4785 = vmatpush1.msra.mxu0 0.0
    %4786 = vmatprep.subr.mxu0 0.0
    %4787 = vmatpush1.msra.mxu0 0.0
    %4788 = vmatprep.subr.mxu0 0.0
    %4789 = vmatpush1.msra.mxu0 0.0
    %4790 = vmatprep.subr.mxu0 0.0
    %4791 = vmatpush1.msra.mxu0 0.0
    %4792 = vmatprep.subr.mxu0 0.0
    %4793 = vmatpush1.msra.mxu0 0.0
    %4794 = vmatprep.subr.mxu0 0.0
    %4795 = vmatpush1.msra.mxu0 0.0
    %4796 = vmatprep.subr.mxu0 0.0
    %4797 = vmatpush1.msra.mxu0 0.0
    %4798 = vmatprep.subr.mxu0 0.0
    %4799 = vmatpush1.msra.mxu0 0.0
    %4800 = vmatprep.subr.mxu0 0.0
    %4801 = vmatpush1.msra.mxu0 0.0
    %4802 = vmatprep.subr.mxu0 0.0
    %4803 = vmatpush1.msra.mxu0 0.0
    %4804 = vmatprep.subr.mxu0 0.0
    %4805 = vmatpush1.msra.mxu0 0.0
    %4806 = vmatprep.subr.mxu0 0.0
    %4807 = vmatpush1.msra.mxu0 0.0
    %4808 = vmatprep.subr.mxu0 0.0
    %4809 = vmatpush1.msra.mxu0 0.0
    %4810 = vmatprep.subr.mxu0 0.0
    %4811 = vmatpush1.msra.mxu0 0.0
    %4812 = vmatprep.subr.mxu0 0.0
    %4813 = vmatpush1.msra.mxu0 0.0
    %4814 = vmatprep.subr.mxu0 0.0
    %4815 = vmatpush1.msra.mxu0 0.0
    %4816 = vmatprep.subr.mxu0 0.0
    %4817 = vmatpush1.msra.mxu0 0.0
    %4818 = vmatprep.subr.mxu0 0.0
    %4819 = vmatpush1.msra.mxu0 0.0
    %4820 = vmatprep.subr.mxu0 0.0
    %4821 = vmatpush1.msra.mxu0 0.0
    %4822 = vmatprep.subr.mxu0 0.0
    %4823 = vmatpush1.msra.mxu0 0.0
    %4824 = vmatprep.subr.mxu0 0.0
    %4825 = vmatpush1.msra.mxu0 0.0
    %4826 = vmatprep.subr.mxu0 0.0
    %4827 = vmatpush1.msra.mxu0 0.0
    %4828 = vmatprep.subr.mxu0 0.0
    %4829 = vmatpush1.msra.mxu0 0.0
    %4830 = vmatprep.subr.mxu0 0.0
    %4831 = vmatpush1.msra.mxu0 0.0
    %4832 = vmatprep.subr.mxu0 0.0
    %4833 = vmatpush1.msra.mxu0 0.0
    %4834 = vmatprep.subr.mxu0 0.0
    %4835 = vmatpush1.msra.mxu0 0.0
    %4836 = vmatprep.subr.mxu0 0.0
    %4837 = vmatpush1.msra.mxu0 0.0
    %4838 = vmatprep.subr.mxu0 0.0
    %4839 = vmatpush1.msra.mxu0 0.0
    %4840 = vmatprep.mubr.f32.mxu0 0.0
    %v4841 = vand.u32 %v4544, 4294901760
    %v4842 = vsub.f32 %v4544, %v4841
    %v4843 = vand.u32 %v4842, 4294901760
    %4844 = vmatmul.mubr.f32.gmra.mrb[0].mxu0 %v4843
    %v4845 = vpop.f32.mrb[0].mxu0
    %v4846 = vadd.f32 %v4772, %v4845
    %v4847 = vpop.f32.mrb[0].mxu0
    %4848 = vdwg.mxu0
    %4849 = vmatprep.subr.mxu0 0.0
    %v4850 = vand.u32 %v4547, 4294901760
    %v4851 = vsub.f32 %v4547, %v4850
    %v4852 = vand.u32 %v4851, 4294901760
    %4853 = vmatpush1.msra.mxu0 %v4852
    %4854 = vmatprep.subr.mxu0 0.0
    %4855 = vmatpush1.msra.mxu0 0.0
    %4856 = vmatprep.subr.mxu0 0.0
    %4857 = vmatpush1.msra.mxu0 0.0
    %4858 = vmatprep.subr.mxu0 0.0
    %4859 = vmatpush1.msra.mxu0 0.0
    %4860 = vmatprep.subr.mxu0 0.0
    %4861 = vmatpush1.msra.mxu0 0.0
    %4862 = vmatprep.subr.mxu0 0.0
    %4863 = vmatpush1.msra.mxu0 0.0
    %4864 = vmatprep.subr.mxu0 0.0
    %4865 = vmatpush1.msra.mxu0 0.0
    %4866 = vmatprep.subr.mxu0 0.0
    %4867 = vmatpush1.msra.mxu0 0.0
    %4868 = vmatprep.subr.mxu0 0.0
    %4869 = vmatpush1.msra.mxu0 0.0
    %4870 = vmatprep.subr.mxu0 0.0
    %4871 = vmatpush1.msra.mxu0 0.0
    %4872 = vmatprep.subr.mxu0 0.0
    %4873 = vmatpush1.msra.mxu0 0.0
    %4874 = vmatprep.subr.mxu0 0.0
    %4875 = vmatpush1.msra.mxu0 0.0
    %4876 = vmatprep.subr.mxu0 0.0
    %4877 = vmatpush1.msra.mxu0 0.0
    %4878 = vmatprep.subr.mxu0 0.0
    %4879 = vmatpush1.msra.mxu0 0.0
    %4880 = vmatprep.subr.mxu0 0.0
    %4881 = vmatpush1.msra.mxu0 0.0
    %4882 = vmatprep.subr.mxu0 0.0
    %4883 = vmatpush1.msra.mxu0 0.0
    %4884 = vmatprep.subr.mxu0 0.0
    %4885 = vmatpush1.msra.mxu0 0.0
    %4886 = vmatprep.subr.mxu0 0.0
    %4887 = vmatpush1.msra.mxu0 0.0
    %4888 = vmatprep.subr.mxu0 0.0
    %4889 = vmatpush1.msra.mxu0 0.0
    %4890 = vmatprep.subr.mxu0 0.0
    %4891 = vmatpush1.msra.mxu0 0.0
    %4892 = vmatprep.subr.mxu0 0.0
    %4893 = vmatpush1.msra.mxu0 0.0
    %4894 = vmatprep.subr.mxu0 0.0
    %4895 = vmatpush1.msra.mxu0 0.0
    %4896 = vmatprep.subr.mxu0 0.0
    %4897 = vmatpush1.msra.mxu0 0.0
    %4898 = vmatprep.subr.mxu0 0.0
    %4899 = vmatpush1.msra.mxu0 0.0
    %4900 = vmatprep.subr.mxu0 0.0
    %4901 = vmatpush1.msra.mxu0 0.0
    %4902 = vmatprep.subr.mxu0 0.0
    %4903 = vmatpush1.msra.mxu0 0.0
    %4904 = vmatprep.subr.mxu0 0.0
    %4905 = vmatpush1.msra.mxu0 0.0
    %4906 = vmatprep.subr.mxu0 0.0
    %4907 = vmatpush1.msra.mxu0 0.0
    %4908 = vmatprep.subr.mxu0 0.0
    %4909 = vmatpush1.msra.mxu0 0.0
    %4910 = vmatprep.subr.mxu0 0.0
    %4911 = vmatpush1.msra.mxu0 0.0
    %4912 = vmatprep.subr.mxu0 0.0
    %4913 = vmatpush1.msra.mxu0 0.0
    %4914 = vmatprep.subr.mxu0 0.0
    %4915 = vmatpush1.msra.mxu0 0.0
    %4916 = vmatprep.mubr.f32.mxu0 0.0
    %v4917 = vand.u32 %v4544, 4294901760
    %4918 = vmatmul.mubr.f32.gmra.mrb[0].mxu0 %v4917
    %v4919 = vpop.f32.mrb[0].mxu0
    %v4920 = vadd.f32 %v4846, %v4919
    %v4921 = vpop.f32.mrb[0].mxu0
    %4922 = vdwg.mxu0
    %4923 = vmatprep.subr.mxu0 0.0
    %v4924 = vand.u32 %v4547, 4294901760
    %4925 = vmatpush1.msra.mxu0 %v4924
    %4926 = vmatprep.subr.mxu0 0.0
    %4927 = vmatpush1.msra.mxu0 0.0
    %4928 = vmatprep.subr.mxu0 0.0
    %4929 = vmatpush1.msra.mxu0 0.0
    %4930 = vmatprep.subr.mxu0 0.0
    %4931 = vmatpush1.msra.mxu0 0.0
    %4932 = vmatprep.subr.mxu0 0.0
    %4933 = vmatpush1.msra.mxu0 0.0
    %4934 = vmatprep.subr.mxu0 0.0
    %4935 = vmatpush1.msra.mxu0 0.0
    %4936 = vmatprep.subr.mxu0 0.0
    %4937 = vmatpush1.msra.mxu0 0.0
    %4938 = vmatprep.subr.mxu0 0.0
    %4939 = vmatpush1.msra.mxu0 0.0
    %4940 = vmatprep.subr.mxu0 0.0
    %4941 = vmatpush1.msra.mxu0 0.0
    %4942 = vmatprep.subr.mxu0 0.0
    %4943 = vmatpush1.msra.mxu0 0.0
    %4944 = vmatprep.subr.mxu0 0.0
    %4945 = vmatpush1.msra.mxu0 0.0
    %4946 = vmatprep.subr.mxu0 0.0
    %4947 = vmatpush1.msra.mxu0 0.0
    %4948 = vmatprep.subr.mxu0 0.0
    %4949 = vmatpush1.msra.mxu0 0.0
    %4950 = vmatprep.subr.mxu0 0.0
    %4951 = vmatpush1.msra.mxu0 0.0
    %4952 = vmatprep.subr.mxu0 0.0
    %4953 = vmatpush1.msra.mxu0 0.0
    %4954 = vmatprep.subr.mxu0 0.0
    %4955 = vmatpush1.msra.mxu0 0.0
    %4956 = vmatprep.subr.mxu0 0.0
    %4957 = vmatpush1.msra.mxu0 0.0
    %4958 = vmatprep.subr.mxu0 0.0
    %4959 = vmatpush1.msra.mxu0 0.0
    %4960 = vmatprep.subr.mxu0 0.0
    %4961 = vmatpush1.msra.mxu0 0.0
    %4962 = vmatprep.subr.mxu0 0.0
    %4963 = vmatpush1.msra.mxu0 0.0
    %4964 = vmatprep.subr.mxu0 0.0
    %4965 = vmatpush1.msra.mxu0 0.0
    %4966 = vmatprep.subr.mxu0 0.0
    %4967 = vmatpush1.msra.mxu0 0.0
    %4968 = vmatprep.subr.mxu0 0.0
    %4969 = vmatpush1.msra.mxu0 0.0
    %4970 = vmatprep.subr.mxu0 0.0
    %4971 = vmatpush1.msra.mxu0 0.0
    %4972 = vmatprep.subr.mxu0 0.0
    %4973 = vmatpush1.msra.mxu0 0.0
    %4974 = vmatprep.subr.mxu0 0.0
    %4975 = vmatpush1.msra.mxu0 0.0
    %4976 = vmatprep.subr.mxu0 0.0
    %4977 = vmatpush1.msra.mxu0 0.0
    %4978 = vmatprep.subr.mxu0 0.0
    %4979 = vmatpush1.msra.mxu0 0.0
    %4980 = vmatprep.subr.mxu0 0.0
    %4981 = vmatpush1.msra.mxu0 0.0
    %4982 = vmatprep.subr.mxu0 0.0
    %4983 = vmatpush1.msra.mxu0 0.0
    %4984 = vmatprep.subr.mxu0 0.0
    %4985 = vmatpush1.msra.mxu0 0.0
    %4986 = vmatprep.subr.mxu0 0.0
    %4987 = vmatpush1.msra.mxu0 0.0
    %4988 = vmatprep.mubr.f32.mxu0 0.0
    %v4989 = vand.u32 %v4544, 4294901760
    %4990 = vmatmul.mubr.f32.gmra.mrb[0].mxu0 %v4989
    %v4991 = vpop.f32.mrb[0].mxu0
    %v4992 = vadd.f32 %v4920, %v4991
    %v4993 = vpop.f32.mrb[0].mxu0
    %4994 = vdwg.mxu0
    %v4995 = vsub.f32 %v166, %v4992
    %v4997 = vsel %vm4079, %v4542, 0
    %4999 = vmatprep.subr.mxu0 0.0
    %v5000 = vand.u32 %v143, 4294901760
    %5001 = vmatpush1.msra.mxu0 %v5000
    %5002 = vmatprep.subr.mxu0 0.0
    %v5003 = vand.u32 %v144, 4294901760
    %5004 = vmatpush1.msra.mxu0 %v5003
    %5005 = vmatprep.subr.mxu0 0.0
    %5006 = vmatpush1.msra.mxu0 0.0
    %5007 = vmatprep.subr.mxu0 0.0
    %5008 = vmatpush1.msra.mxu0 0.0
    %5009 = vmatprep.subr.mxu0 0.0
    %5010 = vmatpush1.msra.mxu0 0.0
    %5011 = vmatprep.subr.mxu0 0.0
    %5012 = vmatpush1.msra.mxu0 0.0
    %5013 = vmatprep.subr.mxu0 0.0
    %5014 = vmatpush1.msra.mxu0 0.0
    %5015 = vmatprep.subr.mxu0 0.0
    %5016 = vmatpush1.msra.mxu0 0.0
    %5017 = vmatprep.subr.mxu0 0.0
    %5018 = vmatpush1.msra.mxu0 0.0
    %5019 = vmatprep.subr.mxu0 0.0
    %5020 = vmatpush1.msra.mxu0 0.0
    %5021 = vmatprep.subr.mxu0 0.0
    %5022 = vmatpush1.msra.mxu0 0.0
    %5023 = vmatprep.subr.mxu0 0.0
    %5024 = vmatpush1.msra.mxu0 0.0
    %5025 = vmatprep.subr.mxu0 0.0
    %5026 = vmatpush1.msra.mxu0 0.0
    %5027 = vmatprep.subr.mxu0 0.0
    %5028 = vmatpush1.msra.mxu0 0.0
    %5029 = vmatprep.subr.mxu0 0.0
    %5030 = vmatpush1.msra.mxu0 0.0
    %5031 = vmatprep.subr.mxu0 0.0
    %5032 = vmatpush1.msra.mxu0 0.0
    %5033 = vmatprep.subr.mxu0 0.0
    %5034 = vmatpush1.msra.mxu0 0.0
    %5035 = vmatprep.subr.mxu0 0.0
    %5036 = vmatpush1.msra.mxu0 0.0
    %5037 = vmatprep.subr.mxu0 0.0
    %5038 = vmatpush1.msra.mxu0 0.0
    %5039 = vmatprep.subr.mxu0 0.0
    %5040 = vmatpush1.msra.mxu0 0.0
    %5041 = vmatprep.subr.mxu0 0.0
    %5042 = vmatpush1.msra.mxu0 0.0
    %5043 = vmatprep.subr.mxu0 0.0
    %5044 = vmatpush1.msra.mxu0 0.0
    %5045 = vmatprep.subr.mxu0 0.0
    %5046 = vmatpush1.msra.mxu0 0.0
    %5047 = vmatprep.subr.mxu0 0.0
    %5048 = vmatpush1.msra.mxu0 0.0
    %5049 = vmatprep.subr.mxu0 0.0
    %5050 = vmatpush1.msra.mxu0 0.0
    %5051 = vmatprep.subr.mxu0 0.0
    %5052 = vmatpush1.msra.mxu0 0.0
    %5053 = vmatprep.subr.mxu0 0.0
    %5054 = vmatpush1.msra.mxu0 0.0
    %5055 = vmatprep.subr.mxu0 0.0
    %5056 = vmatpush1.msra.mxu0 0.0
    %5057 = vmatprep.subr.mxu0 0.0
    %5058 = vmatpush1.msra.mxu0 0.0
    %5059 = vmatprep.subr.mxu0 0.0
    %5060 = vmatpush1.msra.mxu0 0.0
    %5061 = vmatprep.subr.mxu0 0.0
    %5062 = vmatpush1.msra.mxu0 0.0
    %5063 = vmatprep.subr.mxu0 0.0
    %5064 = vmatpush1.msra.mxu0 0.0
    %5065 = vmatprep.mubr.f32.mxu0 0.0
    %v5066 = vand.u32 %v4997, 4294901760
    %v5067 = vsub.f32 %v4997, %v5066
    %v5068 = vand.u32 %v5067, 4294901760
    %v5069 = vsub.f32 %v5067, %v5068
    %v5070 = vand.u32 %v5069, 4294901760
    %5071 = vmatmul.mubr.f32.gmra.mrb[0].mxu0 %v5070
    %v5072 = vpop.f32.mrb[0].mxu0
    %v5073 = vadd.f32 0.0, %v5072
    %v5074 = vpop.f32.mrb[0].mxu0
    %5075 = vdwg.mxu0
    %5076 = vmatprep.subr.mxu0 0.0
    %v5077 = vand.u32 %v143, 4294901760
    %v5078 = vsub.f32 %v143, %v5077
    %v5079 = vand.u32 %v5078, 4294901760
    %v5080 = vsub.f32 %v5078, %v5079
    %v5081 = vand.u32 %v5080, 4294901760
    %5082 = vmatpush1.msra.mxu0 %v5081
    %5083 = vmatprep.subr.mxu0 0.0
    %v5084 = vand.u32 %v144, 4294901760
    %v5085 = vsub.f32 %v144, %v5084
    %v5086 = vand.u32 %v5085, 4294901760
    %v5087 = vsub.f32 %v5085, %v5086
    %v5088 = vand.u32 %v5087, 4294901760
    %5089 = vmatpush1.msra.mxu0 %v5088
    %5090 = vmatprep.subr.mxu0 0.0
    %5091 = vmatpush1.msra.mxu0 0.0
    %5092 = vmatprep.subr.mxu0 0.0
    %5093 = vmatpush1.msra.mxu0 0.0
    %5094 = vmatprep.subr.mxu0 0.0
    %5095 = vmatpush1.msra.mxu0 0.0
    %5096 = vmatprep.subr.mxu0 0.0
    %5097 = vmatpush1.msra.mxu0 0.0
    %5098 = vmatprep.subr.mxu0 0.0
    %5099 = vmatpush1.msra.mxu0 0.0
    %5100 = vmatprep.subr.mxu0 0.0
    %5101 = vmatpush1.msra.mxu0 0.0
    %5102 = vmatprep.subr.mxu0 0.0
    %5103 = vmatpush1.msra.mxu0 0.0
    %5104 = vmatprep.subr.mxu0 0.0
    %5105 = vmatpush1.msra.mxu0 0.0
    %5106 = vmatprep.subr.mxu0 0.0
    %5107 = vmatpush1.msra.mxu0 0.0
    %5108 = vmatprep.subr.mxu0 0.0
    %5109 = vmatpush1.msra.mxu0 0.0
    %5110 = vmatprep.subr.mxu0 0.0
    %5111 = vmatpush1.msra.mxu0 0.0
    %5112 = vmatprep.subr.mxu0 0.0
    %5113 = vmatpush1.msra.mxu0 0.0
    %5114 = vmatprep.subr.mxu0 0.0
    %5115 = vmatpush1.msra.mxu0 0.0
    %5116 = vmatprep.subr.mxu0 0.0
    %5117 = vmatpush1.msra.mxu0 0.0
    %5118 = vmatprep.subr.mxu0 0.0
    %5119 = vmatpush1.msra.mxu0 0.0
    %5120 = vmatprep.subr.mxu0 0.0
    %5121 = vmatpush1.msra.mxu0 0.0
    %5122 = vmatprep.subr.mxu0 0.0
    %5123 = vmatpush1.msra.mxu0 0.0
    %5124 = vmatprep.subr.mxu0 0.0
    %5125 = vmatpush1.msra.mxu0 0.0
    %5126 = vmatprep.subr.mxu0 0.0
    %5127 = vmatpush1.msra.mxu0 0.0
    %5128 = vmatprep.subr.mxu0 0.0
    %5129 = vmatpush1.msra.mxu0 0.0
    %5130 = vmatprep.subr.mxu0 0.0
    %5131 = vmatpush1.msra.mxu0 0.0
    %5132 = vmatprep.subr.mxu0 0.0
    %5133 = vmatpush1.msra.mxu0 0.0
    %5134 = vmatprep.subr.mxu0 0.0
    %5135 = vmatpush1.msra.mxu0 0.0
    %5136 = vmatprep.subr.mxu0 0.0
    %5137 = vmatpush1.msra.mxu0 0.0
    %5138 = vmatprep.subr.mxu0 0.0
    %5139 = vmatpush1.msra.mxu0 0.0
    %5140 = vmatprep.subr.mxu0 0.0
    %5141 = vmatpush1.msra.mxu0 0.0
    %5142 = vmatprep.subr.mxu0 0.0
    %5143 = vmatpush1.msra.mxu0 0.0
    %5144 = vmatprep.subr.mxu0 0.0
    %5145 = vmatpush1.msra.mxu0 0.0
    %5146 = vmatprep.subr.mxu0 0.0
    %5147 = vmatpush1.msra.mxu0 0.0
    %5148 = vmatprep.subr.mxu0 0.0
    %5149 = vmatpush1.msra.mxu0 0.0
    %5150 = vmatprep.mubr.f32.mxu0 0.0
    %v5151 = vand.u32 %v4997, 4294901760
    %5152 = vmatmul.mubr.f32.gmra.mrb[0].mxu0 %v5151
    %v5153 = vpop.f32.mrb[0].mxu0
    %v5154 = vadd.f32 %v5073, %v5153
    %v5155 = vpop.f32.mrb[0].mxu0
    %5156 = vdwg.mxu0
    %5157 = vmatprep.subr.mxu0 0.0
    %v5158 = vand.u32 %v143, 4294901760
    %v5159 = vsub.f32 %v143, %v5158
    %5160 = vmatpush1.msra.mxu0 %v5159
    %5161 = vmatprep.subr.mxu0 0.0
    %v5162 = vand.u32 %v144, 4294901760
    %v5163 = vsub.f32 %v144, %v5162
    %5164 = vmatpush1.msra.mxu0 %v5163
    %5165 = vmatprep.subr.mxu0 0.0
    %5166 = vmatpush1.msra.mxu0 0.0
    %5167 = vmatprep.subr.mxu0 0.0
    %5168 = vmatpush1.msra.mxu0 0.0
    %5169 = vmatprep.subr.mxu0 0.0
    %5170 = vmatpush1.msra.mxu0 0.0
    %5171 = vmatprep.subr.mxu0 0.0
    %5172 = vmatpush1.msra.mxu0 0.0
    %5173 = vmatprep.subr.mxu0 0.0
    %5174 = vmatpush1.msra.mxu0 0.0
    %5175 = vmatprep.subr.mxu0 0.0
    %5176 = vmatpush1.msra.mxu0 0.0
    %5177 = vmatprep.subr.mxu0 0.0
    %5178 = vmatpush1.msra.mxu0 0.0
    %5179 = vmatprep.subr.mxu0 0.0
    %5180 = vmatpush1.msra.mxu0 0.0
    %5181 = vmatprep.subr.mxu0 0.0
    %5182 = vmatpush1.msra.mxu0 0.0
    %5183 = vmatprep.subr.mxu0 0.0
    %5184 = vmatpush1.msra.mxu0 0.0
    %5185 = vmatprep.subr.mxu0 0.0
    %5186 = vmatpush1.msra.mxu0 0.0
    %5187 = vmatprep.subr.mxu0 0.0
    %5188 = vmatpush1.msra.mxu0 0.0
    %5189 = vmatprep.subr.mxu0 0.0
    %5190 = vmatpush1.msra.mxu0 0.0
    %5191 = vmatprep.subr.mxu0 0.0
    %5192 = vmatpush1.msra.mxu0 0.0
    %5193 = vmatprep.subr.mxu0 0.0
    %5194 = vmatpush1.msra.mxu0 0.0
    %5195 = vmatprep.subr.mxu0 0.0
    %5196 = vmatpush1.msra.mxu0 0.0
    %5197 = vmatprep.subr.mxu0 0.0
    %5198 = vmatpush1.msra.mxu0 0.0
    %5199 = vmatprep.subr.mxu0 0.0
    %5200 = vmatpush1.msra.mxu0 0.0
    %5201 = vmatprep.subr.mxu0 0.0
    %5202 = vmatpush1.msra.mxu0 0.0
    %5203 = vmatprep.subr.mxu0 0.0
    %5204 = vmatpush1.msra.mxu0 0.0
    %5205 = vmatprep.subr.mxu0 0.0
    %5206 = vmatpush1.msra.mxu0 0.0
    %5207 = vmatprep.subr.mxu0 0.0
    %5208 = vmatpush1.msra.mxu0 0.0
    %5209 = vmatprep.subr.mxu0 0.0
    %5210 = vmatpush1.msra.mxu0 0.0
    %5211 = vmatprep.subr.mxu0 0.0
    %5212 = vmatpush1.msra.mxu0 0.0
    %5213 = vmatprep.subr.mxu0 0.0
    %5214 = vmatpush1.msra.mxu0 0.0
    %5215 = vmatprep.subr.mxu0 0.0
    %5216 = vmatpush1.msra.mxu0 0.0
    %5217 = vmatprep.subr.mxu0 0.0
    %5218 = vmatpush1.msra.mxu0 0.0
    %5219 = vmatprep.subr.mxu0 0.0
    %5220 = vmatpush1.msra.mxu0 0.0
    %5221 = vmatprep.subr.mxu0 0.0
    %5222 = vmatpush1.msra.mxu0 0.0
    %5223 = vmatprep.subr.mxu0 0.0
    %5224 = vmatpush1.msra.mxu0 0.0
    %5225 = vmatprep.mubr.f32.mxu0 0.0
    %v5226 = vand.u32 %v4997, 4294901760
    %v5227 = vsub.f32 %v4997, %v5226
    %5228 = vmatmul.mubr.f32.gmra.mrb[0].mxu0 %v5227
    %v5229 = vpop.f32.mrb[0].mxu0
    %v5230 = vadd.f32 %v5154, %v5229
    %v5231 = vpop.f32.mrb[0].mxu0
    %5232 = vdwg.mxu0
    %5233 = vmatprep.subr.mxu0 0.0
    %v5234 = vand.u32 %v143, 4294901760
    %5235 = vmatpush1.msra.mxu0 %v5234
    %5236 = vmatprep.subr.mxu0 0.0
    %v5237 = vand.u32 %v144, 4294901760
    %5238 = vmatpush1.msra.mxu0 %v5237
    %5239 = vmatprep.subr.mxu0 0.0
    %5240 = vmatpush1.msra.mxu0 0.0
    %5241 = vmatprep.subr.mxu0 0.0
    %5242 = vmatpush1.msra.mxu0 0.0
    %5243 = vmatprep.subr.mxu0 0.0
    %5244 = vmatpush1.msra.mxu0 0.0
    %5245 = vmatprep.subr.mxu0 0.0
    %5246 = vmatpush1.msra.mxu0 0.0
    %5247 = vmatprep.subr.mxu0 0.0
    %5248 = vmatpush1.msra.mxu0 0.0
    %5249 = vmatprep.subr.mxu0 0.0
    %5250 = vmatpush1.msra.mxu0 0.0
    %5251 = vmatprep.subr.mxu0 0.0
    %5252 = vmatpush1.msra.mxu0 0.0
    %5253 = vmatprep.subr.mxu0 0.0
    %5254 = vmatpush1.msra.mxu0 0.0
    %5255 = vmatprep.subr.mxu0 0.0
    %5256 = vmatpush1.msra.mxu0 0.0
    %5257 = vmatprep.subr.mxu0 0.0
    %5258 = vmatpush1.msra.mxu0 0.0
    %5259 = vmatprep.subr.mxu0 0.0
    %5260 = vmatpush1.msra.mxu0 0.0
    %5261 = vmatprep.subr.mxu0 0.0
    %5262 = vmatpush1.msra.mxu0 0.0
    %5263 = vmatprep.subr.mxu0 0.0
    %5264 = vmatpush1.msra.mxu0 0.0
    %5265 = vmatprep.subr.mxu0 0.0
    %5266 = vmatpush1.msra.mxu0 0.0
    %5267 = vmatprep.subr.mxu0 0.0
    %5268 = vmatpush1.msra.mxu0 0.0
    %5269 = vmatprep.subr.mxu0 0.0
    %5270 = vmatpush1.msra.mxu0 0.0
    %5271 = vmatprep.subr.mxu0 0.0
    %5272 = vmatpush1.msra.mxu0 0.0
    %5273 = vmatprep.subr.mxu0 0.0
    %5274 = vmatpush1.msra.mxu0 0.0
    %5275 = vmatprep.subr.mxu0 0.0
    %5276 = vmatpush1.msra.mxu0 0.0
    %5277 = vmatprep.subr.mxu0 0.0
    %5278 = vmatpush1.msra.mxu0 0.0
    %5279 = vmatprep.subr.mxu0 0.0
    %5280 = vmatpush1.msra.mxu0 0.0
    %5281 = vmatprep.subr.mxu0 0.0
    %5282 = vmatpush1.msra.mxu0 0.0
    %5283 = vmatprep.subr.mxu0 0.0
    %5284 = vmatpush1.msra.mxu0 0.0
    %5285 = vmatprep.subr.mxu0 0.0
    %5286 = vmatpush1.msra.mxu0 0.0
    %5287 = vmatprep.subr.mxu0 0.0
    %5288 = vmatpush1.msra.mxu0 0.0
    %5289 = vmatprep.subr.mxu0 0.0
    %5290 = vmatpush1.msra.mxu0 0.0
    %5291 = vmatprep.subr.mxu0 0.0
    %5292 = vmatpush1.msra.mxu0 0.0
    %5293 = vmatprep.subr.mxu0 0.0
    %5294 = vmatpush1.msra.mxu0 0.0
    %5295 = vmatprep.subr.mxu0 0.0
    %5296 = vmatpush1.msra.mxu0 0.0
    %5297 = vmatprep.subr.mxu0 0.0
    %5298 = vmatpush1.msra.mxu0 0.0
    %5299 = vmatprep.mubr.f32.mxu0 0.0
    %v5300 = vand.u32 %v4997, 4294901760
    %v5301 = vsub.f32 %v4997, %v5300
    %v5302 = vand.u32 %v5301, 4294901760
    %5303 = vmatmul.mubr.f32.gmra.mrb[0].mxu0 %v5302
    %v5304 = vpop.f32.mrb[0].mxu0
    %v5305 = vadd.f32 %v5230, %v5304
    %v5306 = vpop.f32.mrb[0].mxu0
    %5307 = vdwg.mxu0
    %5308 = vmatprep.subr.mxu0 0.0
    %v5309 = vand.u32 %v143, 4294901760
    %v5310 = vsub.f32 %v143, %v5309
    %v5311 = vand.u32 %v5310, 4294901760
    %5312 = vmatpush1.msra.mxu0 %v5311
    %5313 = vmatprep.subr.mxu0 0.0
    %v5314 = vand.u32 %v144, 4294901760
    %v5315 = vsub.f32 %v144, %v5314
    %v5316 = vand.u32 %v5315, 4294901760
    %5317 = vmatpush1.msra.mxu0 %v5316
    %5318 = vmatprep.subr.mxu0 0.0
    %5319 = vmatpush1.msra.mxu0 0.0
    %5320 = vmatprep.subr.mxu0 0.0
    %5321 = vmatpush1.msra.mxu0 0.0
    %5322 = vmatprep.subr.mxu0 0.0
    %5323 = vmatpush1.msra.mxu0 0.0
    %5324 = vmatprep.subr.mxu0 0.0
    %5325 = vmatpush1.msra.mxu0 0.0
    %5326 = vmatprep.subr.mxu0 0.0
    %5327 = vmatpush1.msra.mxu0 0.0
    %5328 = vmatprep.subr.mxu0 0.0
    %5329 = vmatpush1.msra.mxu0 0.0
    %5330 = vmatprep.subr.mxu0 0.0
    %5331 = vmatpush1.msra.mxu0 0.0
    %5332 = vmatprep.subr.mxu0 0.0
    %5333 = vmatpush1.msra.mxu0 0.0
    %5334 = vmatprep.subr.mxu0 0.0
    %5335 = vmatpush1.msra.mxu0 0.0
    %5336 = vmatprep.subr.mxu0 0.0
    %5337 = vmatpush1.msra.mxu0 0.0
    %5338 = vmatprep.subr.mxu0 0.0
    %5339 = vmatpush1.msra.mxu0 0.0
    %5340 = vmatprep.subr.mxu0 0.0
    %5341 = vmatpush1.msra.mxu0 0.0
    %5342 = vmatprep.subr.mxu0 0.0
    %5343 = vmatpush1.msra.mxu0 0.0
    %5344 = vmatprep.subr.mxu0 0.0
    %5345 = vmatpush1.msra.mxu0 0.0
    %5346 = vmatprep.subr.mxu0 0.0
    %5347 = vmatpush1.msra.mxu0 0.0
    %5348 = vmatprep.subr.mxu0 0.0
    %5349 = vmatpush1.msra.mxu0 0.0
    %5350 = vmatprep.subr.mxu0 0.0
    %5351 = vmatpush1.msra.mxu0 0.0
    %5352 = vmatprep.subr.mxu0 0.0
    %5353 = vmatpush1.msra.mxu0 0.0
    %5354 = vmatprep.subr.mxu0 0.0
    %5355 = vmatpush1.msra.mxu0 0.0
    %5356 = vmatprep.subr.mxu0 0.0
    %5357 = vmatpush1.msra.mxu0 0.0
    %5358 = vmatprep.subr.mxu0 0.0
    %5359 = vmatpush1.msra.mxu0 0.0
    %5360 = vmatprep.subr.mxu0 0.0
    %5361 = vmatpush1.msra.mxu0 0.0
    %5362 = vmatprep.subr.mxu0 0.0
    %5363 = vmatpush1.msra.mxu0 0.0
    %5364 = vmatprep.subr.mxu0 0.0
    %5365 = vmatpush1.msra.mxu0 0.0
    %5366 = vmatprep.subr.mxu0 0.0
    %5367 = vmatpush1.msra.mxu0 0.0
    %5368 = vmatprep.subr.mxu0 0.0
    %5369 = vmatpush1.msra.mxu0 0.0
    %5370 = vmatprep.subr.mxu0 0.0
    %5371 = vmatpush1.msra.mxu0 0.0
    %5372 = vmatprep.subr.mxu0 0.0
    %5373 = vmatpush1.msra.mxu0 0.0
    %5374 = vmatprep.subr.mxu0 0.0
    %5375 = vmatpush1.msra.mxu0 0.0
    %5376 = vmatprep.subr.mxu0 0.0
    %5377 = vmatpush1.msra.mxu0 0.0
    %5378 = vmatprep.mubr.f32.mxu0 0.0
    %v5379 = vand.u32 %v4997, 4294901760
    %5380 = vmatmul.mubr.f32.gmra.mrb[0].mxu0 %v5379
    %v5381 = vpop.f32.mrb[0].mxu0
    %v5382 = vadd.f32 %v5305, %v5381
    %v5383 = vpop.f32.mrb[0].mxu0
    %5384 = vdwg.mxu0
    %5385 = vmatprep.subr.mxu0 0.0
    %v5386 = vand.u32 %v143, 4294901760
    %5387 = vmatpush1.msra.mxu0 %v5386
    %5388 = vmatprep.subr.mxu0 0.0
    %v5389 = vand.u32 %v144, 4294901760
    %5390 = vmatpush1.msra.mxu0 %v5389
    %5391 = vmatprep.subr.mxu0 0.0
    %5392 = vmatpush1.msra.mxu0 0.0
    %5393 = vmatprep.subr.mxu0 0.0
    %5394 = vmatpush1.msra.mxu0 0.0
    %5395 = vmatprep.subr.mxu0 0.0
    %5396 = vmatpush1.msra.mxu0 0.0
    %5397 = vmatprep.subr.mxu0 0.0
    %5398 = vmatpush1.msra.mxu0 0.0
    %5399 = vmatprep.subr.mxu0 0.0
    %5400 = vmatpush1.msra.mxu0 0.0
    %5401 = vmatprep.subr.mxu0 0.0
    %5402 = vmatpush1.msra.mxu0 0.0
    %5403 = vmatprep.subr.mxu0 0.0
    %5404 = vmatpush1.msra.mxu0 0.0
    %5405 = vmatprep.subr.mxu0 0.0
    %5406 = vmatpush1.msra.mxu0 0.0
    %5407 = vmatprep.subr.mxu0 0.0
    %5408 = vmatpush1.msra.mxu0 0.0
    %5409 = vmatprep.subr.mxu0 0.0
    %5410 = vmatpush1.msra.mxu0 0.0
    %5411 = vmatprep.subr.mxu0 0.0
    %5412 = vmatpush1.msra.mxu0 0.0
    %5413 = vmatprep.subr.mxu0 0.0
    %5414 = vmatpush1.msra.mxu0 0.0
    %5415 = vmatprep.subr.mxu0 0.0
    %5416 = vmatpush1.msra.mxu0 0.0
    %5417 = vmatprep.subr.mxu0 0.0
    %5418 = vmatpush1.msra.mxu0 0.0
    %5419 = vmatprep.subr.mxu0 0.0
    %5420 = vmatpush1.msra.mxu0 0.0
    %5421 = vmatprep.subr.mxu0 0.0
    %5422 = vmatpush1.msra.mxu0 0.0
    %5423 = vmatprep.subr.mxu0 0.0
    %5424 = vmatpush1.msra.mxu0 0.0
    %5425 = vmatprep.subr.mxu0 0.0
    %5426 = vmatpush1.msra.mxu0 0.0
    %5427 = vmatprep.subr.mxu0 0.0
    %5428 = vmatpush1.msra.mxu0 0.0
    %5429 = vmatprep.subr.mxu0 0.0
    %5430 = vmatpush1.msra.mxu0 0.0
    %5431 = vmatprep.subr.mxu0 0.0
    %5432 = vmatpush1.msra.mxu0 0.0
    %5433 = vmatprep.subr.mxu0 0.0
    %5434 = vmatpush1.msra.mxu0 0.0
    %5435 = vmatprep.subr.mxu0 0.0
    %5436 = vmatpush1.msra.mxu0 0.0
    %5437 = vmatprep.subr.mxu0 0.0
    %5438 = vmatpush1.msra.mxu0 0.0
    %5439 = vmatprep.subr.mxu0 0.0
    %5440 = vmatpush1.msra.mxu0 0.0
    %5441 = vmatprep.subr.mxu0 0.0
    %5442 = vmatpush1.msra.mxu0 0.0
    %5443 = vmatprep.subr.mxu0 0.0
    %5444 = vmatpush1.msra.mxu0 0.0
    %5445 = vmatprep.subr.mxu0 0.0
    %5446 = vmatpush1.msra.mxu0 0.0
    %5447 = vmatprep.subr.mxu0 0.0
    %5448 = vmatpush1.msra.mxu0 0.0
    %5449 = vmatprep.subr.mxu0 0.0
    %5450 = vmatpush1.msra.mxu0 0.0
    %5451 = vmatprep.mubr.f32.mxu0 0.0
    %v5452 = vand.u32 %v4997, 4294901760
    %5453 = vmatmul.mubr.f32.gmra.mrb[0].mxu0 %v5452
    %v5454 = vpop.f32.mrb[0].mxu0
    %v5455 = vadd.f32 %v5382, %v5454
    %v5456 = vpop.f32.mrb[0].mxu0
    %5457 = vdwg.mxu0
    %5459 = vrot.lane.b32.xlu0 %v3625, 100
    %v5460 = vpop.permute.xlu0 %5459
    %v5462 = vadd.f32 %v5455, %v5460
    %5463 = vrot.lane.b32.xlu0 %v151, 120
    %v5464 = vpop.permute.xlu0 %5463
    %v5466 = vadd.f32 %v5462, %v5464
    %5468 = vrot.lane.b32.xlu0 %v5466, 125
    %v5469 = vpop.permute.xlu0 %5468
    %v5471 = vmul.f32 %v5466, %v5469
    %5472 = vrot.lane.b32.xlu0 %v5466, 127
    %v5473 = vpop.permute.xlu0 %5472
    %v5475 = vmul.f32 %v5466, %v5473
    %5477 = vrot.lane.b32.xlu0 %v5475, 127
    %v5478 = vpop.permute.xlu0 %5477
    %v5480 = vsub.f32 %v5471, %v5478
    %v5481 = vrcp.pop %v5480
    %v5482 = vmul.f32 1.0, %v5481
    %5484 = vrot.lane.b32.xlu0 %v5482, 3
    %v5485 = vpop.permute.xlu0 %5484
    %v5487 = vmul.f32 %v5466, %v5485
    %v5488 = vsub.f32 0.0, %v5466
    %5489 = vrot.lane.b32.xlu0 %v5482, 1
    %v5490 = vpop.permute.xlu0 %5489
    %v5492 = vmul.f32 %v5488, %v5490
    %5493 = vrot.lane.b32.xlu0 %v5482, 2
    %v5494 = vpop.permute.xlu0 %5493
    %v5496 = vmul.f32 %v5488, %v5494
    %v5497 = vmul.f32 %v5466, %v5482
    %5499 = vset.pattern.permute.xlu0 11
    %5500 = vperm.xlu0 %5499, %v5487
    %v5501 = vpop.permute.xlu0 %5500
    %v5503 = vmul.f32 %v5455, %v5501
    %5505 = vset.pattern.permute.xlu0 10
    %5506 = vperm.xlu0 %5505, %v5496
    %v5507 = vpop.permute.xlu0 %5506
    %v5509 = vmul.f32 %v5455, %v5507
    %5511 = vrot.lane.b32.xlu0 %v5509, 124
    %v5512 = vpop.permute.xlu0 %5511
    %v5514 = vadd.f32 %v5503, %v5512
    %5516 = vset.pattern.permute.xlu0 9
    %5517 = vperm.xlu0 %5516, %v5492
    %v5518 = vpop.permute.xlu0 %5517
    %v5520 = vmul.f32 %v5455, %v5518
    %5522 = vset.pattern.permute.xlu0 8
    %5523 = vperm.xlu0 %5522, %v5497
    %v5524 = vpop.permute.xlu0 %5523
    %v5526 = vmul.f32 %v5455, %v5524
    %5528 = vrot.lane.b32.xlu0 %v5526, 124
    %v5529 = vpop.permute.xlu0 %5528
    %v5531 = vadd.f32 %v5520, %v5529
    %5533 = vset.pattern.permute.xlu0 0
    %5534 = vperm.xlu0 %5533, %v4995
    %v5535 = vpop.permute.xlu0 %5534
    %v5537 = vmul.f32 %v5514, %v5535
    %5538 = vset.pattern.permute.xlu0 1
    %5539 = vperm.xlu0 %5538, %v4995
    %v5540 = vpop.permute.xlu0 %5539
    %v5542 = vmul.f32 %v5531, %v5540
    %v5543 = vadd.f32 %v5537, %v5542
    %v5544 = vadd.f32 %v4072, %v5543
    %5545 = vset.pattern.permute.xlu0 8
    %5546 = vperm.xlu0 %5545, %v5466
    %v5547 = vpop.permute.xlu0 %5546
    %v5549 = vmul.f32 %v5514, %v5547
    %5550 = vset.pattern.permute.xlu0 10
    %5551 = vperm.xlu0 %5550, %v5466
    %v5552 = vpop.permute.xlu0 %5551
    %v5554 = vmul.f32 %v5531, %v5552
    %v5555 = vadd.f32 %v5549, %v5554
    %5556 = vset.pattern.permute.xlu0 9
    %5557 = vperm.xlu0 %5556, %v5466
    %v5558 = vpop.permute.xlu0 %5557
    %v5560 = vmul.f32 %v5514, %v5558
    %5561 = vset.pattern.permute.xlu0 11
    %5562 = vperm.xlu0 %5561, %v5466
    %v5563 = vpop.permute.xlu0 %5562
    %v5565 = vmul.f32 %v5531, %v5563
    %v5566 = vadd.f32 %v5560, %v5565
    %v5568 = vsel %vm167, %v5555, 0
    %v5571 = vsel %vm171, %v145, 0
    %5573 = vmatprep.subr.mxu0 0.0
    %v5574 = vand.u32 %v5571, 4294901760
    %5575 = vmatpush1.msra.mxu0 %v5574
    %5576 = vmatprep.subr.mxu0 0.0
    %5577 = vmatpush1.msra.mxu0 0.0
    %5578 = vmatprep.subr.mxu0 0.0
    %5579 = vmatpush1.msra.mxu0 0.0
    %5580 = vmatprep.subr.mxu0 0.0
    %5581 = vmatpush1.msra.mxu0 0.0
    %5582 = vmatprep.subr.mxu0 0.0
    %5583 = vmatpush1.msra.mxu0 0.0
    %5584 = vmatprep.subr.mxu0 0.0
    %5585 = vmatpush1.msra.mxu0 0.0
    %5586 = vmatprep.subr.mxu0 0.0
    %5587 = vmatpush1.msra.mxu0 0.0
    %5588 = vmatprep.subr.mxu0 0.0
    %5589 = vmatpush1.msra.mxu0 0.0
    %5590 = vmatprep.subr.mxu0 0.0
    %5591 = vmatpush1.msra.mxu0 0.0
    %5592 = vmatprep.subr.mxu0 0.0
    %5593 = vmatpush1.msra.mxu0 0.0
    %5594 = vmatprep.subr.mxu0 0.0
    %5595 = vmatpush1.msra.mxu0 0.0
    %5596 = vmatprep.subr.mxu0 0.0
    %5597 = vmatpush1.msra.mxu0 0.0
    %5598 = vmatprep.subr.mxu0 0.0
    %5599 = vmatpush1.msra.mxu0 0.0
    %5600 = vmatprep.subr.mxu0 0.0
    %5601 = vmatpush1.msra.mxu0 0.0
    %5602 = vmatprep.subr.mxu0 0.0
    %5603 = vmatpush1.msra.mxu0 0.0
    %5604 = vmatprep.subr.mxu0 0.0
    %5605 = vmatpush1.msra.mxu0 0.0
    %5606 = vmatprep.subr.mxu0 0.0
    %5607 = vmatpush1.msra.mxu0 0.0
    %5608 = vmatprep.subr.mxu0 0.0
    %5609 = vmatpush1.msra.mxu0 0.0
    %5610 = vmatprep.subr.mxu0 0.0
    %5611 = vmatpush1.msra.mxu0 0.0
    %5612 = vmatprep.subr.mxu0 0.0
    %5613 = vmatpush1.msra.mxu0 0.0
    %5614 = vmatprep.subr.mxu0 0.0
    %5615 = vmatpush1.msra.mxu0 0.0
    %5616 = vmatprep.subr.mxu0 0.0
    %5617 = vmatpush1.msra.mxu0 0.0
    %5618 = vmatprep.subr.mxu0 0.0
    %5619 = vmatpush1.msra.mxu0 0.0
    %5620 = vmatprep.subr.mxu0 0.0
    %5621 = vmatpush1.msra.mxu0 0.0
    %5622 = vmatprep.subr.mxu0 0.0
    %5623 = vmatpush1.msra.mxu0 0.0
    %5624 = vmatprep.subr.mxu0 0.0
    %5625 = vmatpush1.msra.mxu0 0.0
    %5626 = vmatprep.subr.mxu0 0.0
    %5627 = vmatpush1.msra.mxu0 0.0
    %5628 = vmatprep.subr.mxu0 0.0
    %5629 = vmatpush1.msra.mxu0 0.0
    %5630 = vmatprep.subr.mxu0 0.0
    %5631 = vmatpush1.msra.mxu0 0.0
    %5632 = vmatprep.subr.mxu0 0.0
    %5633 = vmatpush1.msra.mxu0 0.0
    %5634 = vmatprep.subr.mxu0 0.0
    %5635 = vmatpush1.msra.mxu0 0.0
    %5636 = vmatprep.subr.mxu0 0.0
    %5637 = vmatpush1.msra.mxu0 0.0
    %5638 = vmatprep.mubr.f32.mxu0 0.0
    %v5639 = vand.u32 %v5568, 4294901760
    %v5640 = vsub.f32 %v5568, %v5639
    %v5641 = vand.u32 %v5640, 4294901760
    %v5642 = vsub.f32 %v5640, %v5641
    %v5643 = vand.u32 %v5642, 4294901760
    %5644 = vmatmul.mubr.f32.gmra.mrb[0].mxu0 %v5643
    %v5645 = vpop.f32.mrb[0].mxu0
    %v5646 = vadd.f32 0.0, %v5645
    %v5647 = vpop.f32.mrb[0].mxu0
    %5648 = vdwg.mxu0
    %5649 = vmatprep.subr.mxu0 0.0
    %v5650 = vand.u32 %v5571, 4294901760
    %v5651 = vsub.f32 %v5571, %v5650
    %v5652 = vand.u32 %v5651, 4294901760
    %v5653 = vsub.f32 %v5651, %v5652
    %v5654 = vand.u32 %v5653, 4294901760
    %5655 = vmatpush1.msra.mxu0 %v5654
    %5656 = vmatprep.subr.mxu0 0.0
    %5657 = vmatpush1.msra.mxu0 0.0
    %5658 = vmatprep.subr.mxu0 0.0
    %5659 = vmatpush1.msra.mxu0 0.0
    %5660 = vmatprep.subr.mxu0 0.0
    %5661 = vmatpush1.msra.mxu0 0.0
    %5662 = vmatprep.subr.mxu0 0.0
    %5663 = vmatpush1.msra.mxu0 0.0
    %5664 = vmatprep.subr.mxu0 0.0
    %5665 = vmatpush1.msra.mxu0 0.0
    %5666 = vmatprep.subr.mxu0 0.0
    %5667 = vmatpush1.msra.mxu0 0.0
    %5668 = vmatprep.subr.mxu0 0.0
    %5669 = vmatpush1.msra.mxu0 0.0
    %5670 = vmatprep.subr.mxu0 0.0
    %5671 = vmatpush1.msra.mxu0 0.0
    %5672 = vmatprep.subr.mxu0 0.0
    %5673 = vmatpush1.msra.mxu0 0.0
    %5674 = vmatprep.subr.mxu0 0.0
    %5675 = vmatpush1.msra.mxu0 0.0
    %5676 = vmatprep.subr.mxu0 0.0
    %5677 = vmatpush1.msra.mxu0 0.0
    %5678 = vmatprep.subr.mxu0 0.0
    %5679 = vmatpush1.msra.mxu0 0.0
    %5680 = vmatprep.subr.mxu0 0.0
    %5681 = vmatpush1.msra.mxu0 0.0
    %5682 = vmatprep.subr.mxu0 0.0
    %5683 = vmatpush1.msra.mxu0 0.0
    %5684 = vmatprep.subr.mxu0 0.0
    %5685 = vmatpush1.msra.mxu0 0.0
    %5686 = vmatprep.subr.mxu0 0.0
    %5687 = vmatpush1.msra.mxu0 0.0
    %5688 = vmatprep.subr.mxu0 0.0
    %5689 = vmatpush1.msra.mxu0 0.0
    %5690 = vmatprep.subr.mxu0 0.0
    %5691 = vmatpush1.msra.mxu0 0.0
    %5692 = vmatprep.subr.mxu0 0.0
    %5693 = vmatpush1.msra.mxu0 0.0
    %5694 = vmatprep.subr.mxu0 0.0
    %5695 = vmatpush1.msra.mxu0 0.0
    %5696 = vmatprep.subr.mxu0 0.0
    %5697 = vmatpush1.msra.mxu0 0.0
    %5698 = vmatprep.subr.mxu0 0.0
    %5699 = vmatpush1.msra.mxu0 0.0
    %5700 = vmatprep.subr.mxu0 0.0
    %5701 = vmatpush1.msra.mxu0 0.0
    %5702 = vmatprep.subr.mxu0 0.0
    %5703 = vmatpush1.msra.mxu0 0.0
    %5704 = vmatprep.subr.mxu0 0.0
    %5705 = vmatpush1.msra.mxu0 0.0
    %5706 = vmatprep.subr.mxu0 0.0
    %5707 = vmatpush1.msra.mxu0 0.0
    %5708 = vmatprep.subr.mxu0 0.0
    %5709 = vmatpush1.msra.mxu0 0.0
    %5710 = vmatprep.subr.mxu0 0.0
    %5711 = vmatpush1.msra.mxu0 0.0
    %5712 = vmatprep.subr.mxu0 0.0
    %5713 = vmatpush1.msra.mxu0 0.0
    %5714 = vmatprep.subr.mxu0 0.0
    %5715 = vmatpush1.msra.mxu0 0.0
    %5716 = vmatprep.subr.mxu0 0.0
    %5717 = vmatpush1.msra.mxu0 0.0
    %5718 = vmatprep.mubr.f32.mxu0 0.0
    %v5719 = vand.u32 %v5568, 4294901760
    %5720 = vmatmul.mubr.f32.gmra.mrb[0].mxu0 %v5719
    %v5721 = vpop.f32.mrb[0].mxu0
    %v5722 = vadd.f32 %v5646, %v5721
    %v5723 = vpop.f32.mrb[0].mxu0
    %5724 = vdwg.mxu0
    %5725 = vmatprep.subr.mxu0 0.0
    %v5726 = vand.u32 %v5571, 4294901760
    %v5727 = vsub.f32 %v5571, %v5726
    %5728 = vmatpush1.msra.mxu0 %v5727
    %5729 = vmatprep.subr.mxu0 0.0
    %5730 = vmatpush1.msra.mxu0 0.0
    %5731 = vmatprep.subr.mxu0 0.0
    %5732 = vmatpush1.msra.mxu0 0.0
    %5733 = vmatprep.subr.mxu0 0.0
    %5734 = vmatpush1.msra.mxu0 0.0
    %5735 = vmatprep.subr.mxu0 0.0
    %5736 = vmatpush1.msra.mxu0 0.0
    %5737 = vmatprep.subr.mxu0 0.0
    %5738 = vmatpush1.msra.mxu0 0.0
    %5739 = vmatprep.subr.mxu0 0.0
    %5740 = vmatpush1.msra.mxu0 0.0
    %5741 = vmatprep.subr.mxu0 0.0
    %5742 = vmatpush1.msra.mxu0 0.0
    %5743 = vmatprep.subr.mxu0 0.0
    %5744 = vmatpush1.msra.mxu0 0.0
    %5745 = vmatprep.subr.mxu0 0.0
    %5746 = vmatpush1.msra.mxu0 0.0
    %5747 = vmatprep.subr.mxu0 0.0
    %5748 = vmatpush1.msra.mxu0 0.0
    %5749 = vmatprep.subr.mxu0 0.0
    %5750 = vmatpush1.msra.mxu0 0.0
    %5751 = vmatprep.subr.mxu0 0.0
    %5752 = vmatpush1.msra.mxu0 0.0
    %5753 = vmatprep.subr.mxu0 0.0
    %5754 = vmatpush1.msra.mxu0 0.0
    %5755 = vmatprep.subr.mxu0 0.0
    %5756 = vmatpush1.msra.mxu0 0.0
    %5757 = vmatprep.subr.mxu0 0.0
    %5758 = vmatpush1.msra.mxu0 0.0
    %5759 = vmatprep.subr.mxu0 0.0
    %5760 = vmatpush1.msra.mxu0 0.0
    %5761 = vmatprep.subr.mxu0 0.0
    %5762 = vmatpush1.msra.mxu0 0.0
    %5763 = vmatprep.subr.mxu0 0.0
    %5764 = vmatpush1.msra.mxu0 0.0
    %5765 = vmatprep.subr.mxu0 0.0
    %5766 = vmatpush1.msra.mxu0 0.0
    %5767 = vmatprep.subr.mxu0 0.0
    %5768 = vmatpush1.msra.mxu0 0.0
    %5769 = vmatprep.subr.mxu0 0.0
    %5770 = vmatpush1.msra.mxu0 0.0
    %5771 = vmatprep.subr.mxu0 0.0
    %5772 = vmatpush1.msra.mxu0 0.0
    %5773 = vmatprep.subr.mxu0 0.0
    %5774 = vmatpush1.msra.mxu0 0.0
    %5775 = vmatprep.subr.mxu0 0.0
    %5776 = vmatpush1.msra.mxu0 0.0
    %5777 = vmatprep.subr.mxu0 0.0
    %5778 = vmatpush1.msra.mxu0 0.0
    %5779 = vmatprep.subr.mxu0 0.0
    %5780 = vmatpush1.msra.mxu0 0.0
    %5781 = vmatprep.subr.mxu0 0.0
    %5782 = vmatpush1.msra.mxu0 0.0
    %5783 = vmatprep.subr.mxu0 0.0
    %5784 = vmatpush1.msra.mxu0 0.0
    %5785 = vmatprep.subr.mxu0 0.0
    %5786 = vmatpush1.msra.mxu0 0.0
    %5787 = vmatprep.subr.mxu0 0.0
    %5788 = vmatpush1.msra.mxu0 0.0
    %5789 = vmatprep.subr.mxu0 0.0
    %5790 = vmatpush1.msra.mxu0 0.0
    %5791 = vmatprep.mubr.f32.mxu0 0.0
    %v5792 = vand.u32 %v5568, 4294901760
    %v5793 = vsub.f32 %v5568, %v5792
    %5794 = vmatmul.mubr.f32.gmra.mrb[0].mxu0 %v5793
    %v5795 = vpop.f32.mrb[0].mxu0
    %v5796 = vadd.f32 %v5722, %v5795
    %v5797 = vpop.f32.mrb[0].mxu0
    %5798 = vdwg.mxu0
    %5799 = vmatprep.subr.mxu0 0.0
    %v5800 = vand.u32 %v5571, 4294901760
    %5801 = vmatpush1.msra.mxu0 %v5800
    %5802 = vmatprep.subr.mxu0 0.0
    %5803 = vmatpush1.msra.mxu0 0.0
    %5804 = vmatprep.subr.mxu0 0.0
    %5805 = vmatpush1.msra.mxu0 0.0
    %5806 = vmatprep.subr.mxu0 0.0
    %5807 = vmatpush1.msra.mxu0 0.0
    %5808 = vmatprep.subr.mxu0 0.0
    %5809 = vmatpush1.msra.mxu0 0.0
    %5810 = vmatprep.subr.mxu0 0.0
    %5811 = vmatpush1.msra.mxu0 0.0
    %5812 = vmatprep.subr.mxu0 0.0
    %5813 = vmatpush1.msra.mxu0 0.0
    %5814 = vmatprep.subr.mxu0 0.0
    %5815 = vmatpush1.msra.mxu0 0.0
    %5816 = vmatprep.subr.mxu0 0.0
    %5817 = vmatpush1.msra.mxu0 0.0
    %5818 = vmatprep.subr.mxu0 0.0
    %5819 = vmatpush1.msra.mxu0 0.0
    %5820 = vmatprep.subr.mxu0 0.0
    %5821 = vmatpush1.msra.mxu0 0.0
    %5822 = vmatprep.subr.mxu0 0.0
    %5823 = vmatpush1.msra.mxu0 0.0
    %5824 = vmatprep.subr.mxu0 0.0
    %5825 = vmatpush1.msra.mxu0 0.0
    %5826 = vmatprep.subr.mxu0 0.0
    %5827 = vmatpush1.msra.mxu0 0.0
    %5828 = vmatprep.subr.mxu0 0.0
    %5829 = vmatpush1.msra.mxu0 0.0
    %5830 = vmatprep.subr.mxu0 0.0
    %5831 = vmatpush1.msra.mxu0 0.0
    %5832 = vmatprep.subr.mxu0 0.0
    %5833 = vmatpush1.msra.mxu0 0.0
    %5834 = vmatprep.subr.mxu0 0.0
    %5835 = vmatpush1.msra.mxu0 0.0
    %5836 = vmatprep.subr.mxu0 0.0
    %5837 = vmatpush1.msra.mxu0 0.0
    %5838 = vmatprep.subr.mxu0 0.0
    %5839 = vmatpush1.msra.mxu0 0.0
    %5840 = vmatprep.subr.mxu0 0.0
    %5841 = vmatpush1.msra.mxu0 0.0
    %5842 = vmatprep.subr.mxu0 0.0
    %5843 = vmatpush1.msra.mxu0 0.0
    %5844 = vmatprep.subr.mxu0 0.0
    %5845 = vmatpush1.msra.mxu0 0.0
    %5846 = vmatprep.subr.mxu0 0.0
    %5847 = vmatpush1.msra.mxu0 0.0
    %5848 = vmatprep.subr.mxu0 0.0
    %5849 = vmatpush1.msra.mxu0 0.0
    %5850 = vmatprep.subr.mxu0 0.0
    %5851 = vmatpush1.msra.mxu0 0.0
    %5852 = vmatprep.subr.mxu0 0.0
    %5853 = vmatpush1.msra.mxu0 0.0
    %5854 = vmatprep.subr.mxu0 0.0
    %5855 = vmatpush1.msra.mxu0 0.0
    %5856 = vmatprep.subr.mxu0 0.0
    %5857 = vmatpush1.msra.mxu0 0.0
    %5858 = vmatprep.subr.mxu0 0.0
    %5859 = vmatpush1.msra.mxu0 0.0
    %5860 = vmatprep.subr.mxu0 0.0
    %5861 = vmatpush1.msra.mxu0 0.0
    %5862 = vmatprep.subr.mxu0 0.0
    %5863 = vmatpush1.msra.mxu0 0.0
    %5864 = vmatprep.mubr.f32.mxu0 0.0
    %v5865 = vand.u32 %v5568, 4294901760
    %v5866 = vsub.f32 %v5568, %v5865
    %v5867 = vand.u32 %v5866, 4294901760
    %5868 = vmatmul.mubr.f32.gmra.mrb[0].mxu0 %v5867
    %v5869 = vpop.f32.mrb[0].mxu0
    %v5870 = vadd.f32 %v5796, %v5869
    %v5871 = vpop.f32.mrb[0].mxu0
    %5872 = vdwg.mxu0
    %5873 = vmatprep.subr.mxu0 0.0
    %v5874 = vand.u32 %v5571, 4294901760
    %v5875 = vsub.f32 %v5571, %v5874
    %v5876 = vand.u32 %v5875, 4294901760
    %5877 = vmatpush1.msra.mxu0 %v5876
    %5878 = vmatprep.subr.mxu0 0.0
    %5879 = vmatpush1.msra.mxu0 0.0
    %5880 = vmatprep.subr.mxu0 0.0
    %5881 = vmatpush1.msra.mxu0 0.0
    %5882 = vmatprep.subr.mxu0 0.0
    %5883 = vmatpush1.msra.mxu0 0.0
    %5884 = vmatprep.subr.mxu0 0.0
    %5885 = vmatpush1.msra.mxu0 0.0
    %5886 = vmatprep.subr.mxu0 0.0
    %5887 = vmatpush1.msra.mxu0 0.0
    %5888 = vmatprep.subr.mxu0 0.0
    %5889 = vmatpush1.msra.mxu0 0.0
    %5890 = vmatprep.subr.mxu0 0.0
    %5891 = vmatpush1.msra.mxu0 0.0
    %5892 = vmatprep.subr.mxu0 0.0
    %5893 = vmatpush1.msra.mxu0 0.0
    %5894 = vmatprep.subr.mxu0 0.0
    %5895 = vmatpush1.msra.mxu0 0.0
    %5896 = vmatprep.subr.mxu0 0.0
    %5897 = vmatpush1.msra.mxu0 0.0
    %5898 = vmatprep.subr.mxu0 0.0
    %5899 = vmatpush1.msra.mxu0 0.0
    %5900 = vmatprep.subr.mxu0 0.0
    %5901 = vmatpush1.msra.mxu0 0.0
    %5902 = vmatprep.subr.mxu0 0.0
    %5903 = vmatpush1.msra.mxu0 0.0
    %5904 = vmatprep.subr.mxu0 0.0
    %5905 = vmatpush1.msra.mxu0 0.0
    %5906 = vmatprep.subr.mxu0 0.0
    %5907 = vmatpush1.msra.mxu0 0.0
    %5908 = vmatprep.subr.mxu0 0.0
    %5909 = vmatpush1.msra.mxu0 0.0
    %5910 = vmatprep.subr.mxu0 0.0
    %5911 = vmatpush1.msra.mxu0 0.0
    %5912 = vmatprep.subr.mxu0 0.0
    %5913 = vmatpush1.msra.mxu0 0.0
    %5914 = vmatprep.subr.mxu0 0.0
    %5915 = vmatpush1.msra.mxu0 0.0
    %5916 = vmatprep.subr.mxu0 0.0
    %5917 = vmatpush1.msra.mxu0 0.0
    %5918 = vmatprep.subr.mxu0 0.0
    %5919 = vmatpush1.msra.mxu0 0.0
    %5920 = vmatprep.subr.mxu0 0.0
    %5921 = vmatpush1.msra.mxu0 0.0
    %5922 = vmatprep.subr.mxu0 0.0
    %5923 = vmatpush1.msra.mxu0 0.0
    %5924 = vmatprep.subr.mxu0 0.0
    %5925 = vmatpush1.msra.mxu0 0.0
    %5926 = vmatprep.subr.mxu0 0.0
    %5927 = vmatpush1.msra.mxu0 0.0
    %5928 = vmatprep.subr.mxu0 0.0
    %5929 = vmatpush1.msra.mxu0 0.0
    %5930 = vmatprep.subr.mxu0 0.0
    %5931 = vmatpush1.msra.mxu0 0.0
    %5932 = vmatprep.subr.mxu0 0.0
    %5933 = vmatpush1.msra.mxu0 0.0
    %5934 = vmatprep.subr.mxu0 0.0
    %5935 = vmatpush1.msra.mxu0 0.0
    %5936 = vmatprep.subr.mxu0 0.0
    %5937 = vmatpush1.msra.mxu0 0.0
    %5938 = vmatprep.subr.mxu0 0.0
    %5939 = vmatpush1.msra.mxu0 0.0
    %5940 = vmatprep.mubr.f32.mxu0 0.0
    %v5941 = vand.u32 %v5568, 4294901760
    %5942 = vmatmul.mubr.f32.gmra.mrb[0].mxu0 %v5941
    %v5943 = vpop.f32.mrb[0].mxu0
    %v5944 = vadd.f32 %v5870, %v5943
    %v5945 = vpop.f32.mrb[0].mxu0
    %5946 = vdwg.mxu0
    %5947 = vmatprep.subr.mxu0 0.0
    %v5948 = vand.u32 %v5571, 4294901760
    %5949 = vmatpush1.msra.mxu0 %v5948
    %5950 = vmatprep.subr.mxu0 0.0
    %5951 = vmatpush1.msra.mxu0 0.0
    %5952 = vmatprep.subr.mxu0 0.0
    %5953 = vmatpush1.msra.mxu0 0.0
    %5954 = vmatprep.subr.mxu0 0.0
    %5955 = vmatpush1.msra.mxu0 0.0
    %5956 = vmatprep.subr.mxu0 0.0
    %5957 = vmatpush1.msra.mxu0 0.0
    %5958 = vmatprep.subr.mxu0 0.0
    %5959 = vmatpush1.msra.mxu0 0.0
    %5960 = vmatprep.subr.mxu0 0.0
    %5961 = vmatpush1.msra.mxu0 0.0
    %5962 = vmatprep.subr.mxu0 0.0
    %5963 = vmatpush1.msra.mxu0 0.0
    %5964 = vmatprep.subr.mxu0 0.0
    %5965 = vmatpush1.msra.mxu0 0.0
    %5966 = vmatprep.subr.mxu0 0.0
    %5967 = vmatpush1.msra.mxu0 0.0
    %5968 = vmatprep.subr.mxu0 0.0
    %5969 = vmatpush1.msra.mxu0 0.0
    %5970 = vmatprep.subr.mxu0 0.0
    %5971 = vmatpush1.msra.mxu0 0.0
    %5972 = vmatprep.subr.mxu0 0.0
    %5973 = vmatpush1.msra.mxu0 0.0
    %5974 = vmatprep.subr.mxu0 0.0
    %5975 = vmatpush1.msra.mxu0 0.0
    %5976 = vmatprep.subr.mxu0 0.0
    %5977 = vmatpush1.msra.mxu0 0.0
    %5978 = vmatprep.subr.mxu0 0.0
    %5979 = vmatpush1.msra.mxu0 0.0
    %5980 = vmatprep.subr.mxu0 0.0
    %5981 = vmatpush1.msra.mxu0 0.0
    %5982 = vmatprep.subr.mxu0 0.0
    %5983 = vmatpush1.msra.mxu0 0.0
    %5984 = vmatprep.subr.mxu0 0.0
    %5985 = vmatpush1.msra.mxu0 0.0
    %5986 = vmatprep.subr.mxu0 0.0
    %5987 = vmatpush1.msra.mxu0 0.0
    %5988 = vmatprep.subr.mxu0 0.0
    %5989 = vmatpush1.msra.mxu0 0.0
    %5990 = vmatprep.subr.mxu0 0.0
    %5991 = vmatpush1.msra.mxu0 0.0
    %5992 = vmatprep.subr.mxu0 0.0
    %5993 = vmatpush1.msra.mxu0 0.0
    %5994 = vmatprep.subr.mxu0 0.0
    %5995 = vmatpush1.msra.mxu0 0.0
    %5996 = vmatprep.subr.mxu0 0.0
    %5997 = vmatpush1.msra.mxu0 0.0
    %5998 = vmatprep.subr.mxu0 0.0
    %5999 = vmatpush1.msra.mxu0 0.0
    %6000 = vmatprep.subr.mxu0 0.0
    %6001 = vmatpush1.msra.mxu0 0.0
    %6002 = vmatprep.subr.mxu0 0.0
    %6003 = vmatpush1.msra.mxu0 0.0
    %6004 = vmatprep.subr.mxu0 0.0
    %6005 = vmatpush1.msra.mxu0 0.0
    %6006 = vmatprep.subr.mxu0 0.0
    %6007 = vmatpush1.msra.mxu0 0.0
    %6008 = vmatprep.subr.mxu0 0.0
    %6009 = vmatpush1.msra.mxu0 0.0
    %6010 = vmatprep.subr.mxu0 0.0
    %6011 = vmatpush1.msra.mxu0 0.0
    %6012 = vmatprep.mubr.f32.mxu0 0.0
    %v6013 = vand.u32 %v5568, 4294901760
    %6014 = vmatmul.mubr.f32.gmra.mrb[0].mxu0 %v6013
    %v6015 = vpop.f32.mrb[0].mxu0
    %v6016 = vadd.f32 %v5944, %v6015
    %v6017 = vpop.f32.mrb[0].mxu0
    %6018 = vdwg.mxu0
    %6019 = vrot.lane.b32.xlu0 %v145, 112
    %v6020 = vpop.permute.xlu0 %6019
    %v6022 = vsel %vm167, %v5514, 0
    %v6024 = vsel %vm171, %v6020, 0
    %6026 = vmatprep.subr.mxu0 0.0
    %v6027 = vand.u32 %v6024, 4294901760
    %6028 = vmatpush1.msra.mxu0 %v6027
    %6029 = vmatprep.subr.mxu0 0.0
    %6030 = vmatpush1.msra.mxu0 0.0
    %6031 = vmatprep.subr.mxu0 0.0
    %6032 = vmatpush1.msra.mxu0 0.0
    %6033 = vmatprep.subr.mxu0 0.0
    %6034 = vmatpush1.msra.mxu0 0.0
    %6035 = vmatprep.subr.mxu0 0.0
    %6036 = vmatpush1.msra.mxu0 0.0
    %6037 = vmatprep.subr.mxu0 0.0
    %6038 = vmatpush1.msra.mxu0 0.0
    %6039 = vmatprep.subr.mxu0 0.0
    %6040 = vmatpush1.msra.mxu0 0.0
    %6041 = vmatprep.subr.mxu0 0.0
    %6042 = vmatpush1.msra.mxu0 0.0
    %6043 = vmatprep.subr.mxu0 0.0
    %6044 = vmatpush1.msra.mxu0 0.0
    %6045 = vmatprep.subr.mxu0 0.0
    %6046 = vmatpush1.msra.mxu0 0.0
    %6047 = vmatprep.subr.mxu0 0.0
    %6048 = vmatpush1.msra.mxu0 0.0
    %6049 = vmatprep.subr.mxu0 0.0
    %6050 = vmatpush1.msra.mxu0 0.0
    %6051 = vmatprep.subr.mxu0 0.0
    %6052 = vmatpush1.msra.mxu0 0.0
    %6053 = vmatprep.subr.mxu0 0.0
    %6054 = vmatpush1.msra.mxu0 0.0
    %6055 = vmatprep.subr.mxu0 0.0
    %6056 = vmatpush1.msra.mxu0 0.0
    %6057 = vmatprep.subr.mxu0 0.0
    %6058 = vmatpush1.msra.mxu0 0.0
    %6059 = vmatprep.subr.mxu0 0.0
    %6060 = vmatpush1.msra.mxu0 0.0
    %6061 = vmatprep.subr.mxu0 0.0
    %6062 = vmatpush1.msra.mxu0 0.0
    %6063 = vmatprep.subr.mxu0 0.0
    %6064 = vmatpush1.msra.mxu0 0.0
    %6065 = vmatprep.subr.mxu0 0.0
    %6066 = vmatpush1.msra.mxu0 0.0
    %6067 = vmatprep.subr.mxu0 0.0
    %6068 = vmatpush1.msra.mxu0 0.0
    %6069 = vmatprep.subr.mxu0 0.0
    %6070 = vmatpush1.msra.mxu0 0.0
    %6071 = vmatprep.subr.mxu0 0.0
    %6072 = vmatpush1.msra.mxu0 0.0
    %6073 = vmatprep.subr.mxu0 0.0
    %6074 = vmatpush1.msra.mxu0 0.0
    %6075 = vmatprep.subr.mxu0 0.0
    %6076 = vmatpush1.msra.mxu0 0.0
    %6077 = vmatprep.subr.mxu0 0.0
    %6078 = vmatpush1.msra.mxu0 0.0
    %6079 = vmatprep.subr.mxu0 0.0
    %6080 = vmatpush1.msra.mxu0 0.0
    %6081 = vmatprep.subr.mxu0 0.0
    %6082 = vmatpush1.msra.mxu0 0.0
    %6083 = vmatprep.subr.mxu0 0.0
    %6084 = vmatpush1.msra.mxu0 0.0
    %6085 = vmatprep.subr.mxu0 0.0
    %6086 = vmatpush1.msra.mxu0 0.0
    %6087 = vmatprep.subr.mxu0 0.0
    %6088 = vmatpush1.msra.mxu0 0.0
    %6089 = vmatprep.subr.mxu0 0.0
    %6090 = vmatpush1.msra.mxu0 0.0
    %6091 = vmatprep.mubr.f32.mxu0 0.0
    %v6092 = vand.u32 %v6022, 4294901760
    %v6093 = vsub.f32 %v6022, %v6092
    %v6094 = vand.u32 %v6093, 4294901760
    %v6095 = vsub.f32 %v6093, %v6094
    %v6096 = vand.u32 %v6095, 4294901760
    %6097 = vmatmul.mubr.f32.gmra.mrb[0].mxu0 %v6096
    %v6098 = vpop.f32.mrb[0].mxu0
    %v6099 = vadd.f32 0.0, %v6098
    %v6100 = vpop.f32.mrb[0].mxu0
    %6101 = vdwg.mxu0
    %6102 = vmatprep.subr.mxu0 0.0
    %v6103 = vand.u32 %v6024, 4294901760
    %v6104 = vsub.f32 %v6024, %v6103
    %v6105 = vand.u32 %v6104, 4294901760
    %v6106 = vsub.f32 %v6104, %v6105
    %v6107 = vand.u32 %v6106, 4294901760
    %6108 = vmatpush1.msra.mxu0 %v6107
    %6109 = vmatprep.subr.mxu0 0.0
    %6110 = vmatpush1.msra.mxu0 0.0
    %6111 = vmatprep.subr.mxu0 0.0
    %6112 = vmatpush1.msra.mxu0 0.0
    %6113 = vmatprep.subr.mxu0 0.0
    %6114 = vmatpush1.msra.mxu0 0.0
    %6115 = vmatprep.subr.mxu0 0.0
    %6116 = vmatpush1.msra.mxu0 0.0
    %6117 = vmatprep.subr.mxu0 0.0
    %6118 = vmatpush1.msra.mxu0 0.0
    %6119 = vmatprep.subr.mxu0 0.0
    %6120 = vmatpush1.msra.mxu0 0.0
    %6121 = vmatprep.subr.mxu0 0.0
    %6122 = vmatpush1.msra.mxu0 0.0
    %6123 = vmatprep.subr.mxu0 0.0
    %6124 = vmatpush1.msra.mxu0 0.0
    %6125 = vmatprep.subr.mxu0 0.0
    %6126 = vmatpush1.msra.mxu0 0.0
    %6127 = vmatprep.subr.mxu0 0.0
    %6128 = vmatpush1.msra.mxu0 0.0
    %6129 = vmatprep.subr.mxu0 0.0
    %6130 = vmatpush1.msra.mxu0 0.0
    %6131 = vmatprep.subr.mxu0 0.0
    %6132 = vmatpush1.msra.mxu0 0.0
    %6133 = vmatprep.subr.mxu0 0.0
    %6134 = vmatpush1.msra.mxu0 0.0
    %6135 = vmatprep.subr.mxu0 0.0
    %6136 = vmatpush1.msra.mxu0 0.0
    %6137 = vmatprep.subr.mxu0 0.0
    %6138 = vmatpush1.msra.mxu0 0.0
    %6139 = vmatprep.subr.mxu0 0.0
    %6140 = vmatpush1.msra.mxu0 0.0
    %6141 = vmatprep.subr.mxu0 0.0
    %6142 = vmatpush1.msra.mxu0 0.0
    %6143 = vmatprep.subr.mxu0 0.0
    %6144 = vmatpush1.msra.mxu0 0.0
    %6145 = vmatprep.subr.mxu0 0.0
    %6146 = vmatpush1.msra.mxu0 0.0
    %6147 = vmatprep.subr.mxu0 0.0
    %6148 = vmatpush1.msra.mxu0 0.0
    %6149 = vmatprep.subr.mxu0 0.0
    %6150 = vmatpush1.msra.mxu0 0.0
    %6151 = vmatprep.subr.mxu0 0.0
    %6152 = vmatpush1.msra.mxu0 0.0
    %6153 = vmatprep.subr.mxu0 0.0
    %6154 = vmatpush1.msra.mxu0 0.0
    %6155 = vmatprep.subr.mxu0 0.0
    %6156 = vmatpush1.msra.mxu0 0.0
    %6157 = vmatprep.subr.mxu0 0.0
    %6158 = vmatpush1.msra.mxu0 0.0
    %6159 = vmatprep.subr.mxu0 0.0
    %6160 = vmatpush1.msra.mxu0 0.0
    %6161 = vmatprep.subr.mxu0 0.0
    %6162 = vmatpush1.msra.mxu0 0.0
    %6163 = vmatprep.subr.mxu0 0.0
    %6164 = vmatpush1.msra.mxu0 0.0
    %6165 = vmatprep.subr.mxu0 0.0
    %6166 = vmatpush1.msra.mxu0 0.0
    %6167 = vmatprep.subr.mxu0 0.0
    %6168 = vmatpush1.msra.mxu0 0.0
    %6169 = vmatprep.subr.mxu0 0.0
    %6170 = vmatpush1.msra.mxu0 0.0
    %6171 = vmatprep.mubr.f32.mxu0 0.0
    %v6172 = vand.u32 %v6022, 4294901760
    %6173 = vmatmul.mubr.f32.gmra.mrb[0].mxu0 %v6172
    %v6174 = vpop.f32.mrb[0].mxu0
    %v6175 = vadd.f32 %v6099, %v6174
    %v6176 = vpop.f32.mrb[0].mxu0
    %6177 = vdwg.mxu0
    %6178 = vmatprep.subr.mxu0 0.0
    %v6179 = vand.u32 %v6024, 4294901760
    %v6180 = vsub.f32 %v6024, %v6179
    %6181 = vmatpush1.msra.mxu0 %v6180
    %6182 = vmatprep.subr.mxu0 0.0
    %6183 = vmatpush1.msra.mxu0 0.0
    %6184 = vmatprep.subr.mxu0 0.0
    %6185 = vmatpush1.msra.mxu0 0.0
    %6186 = vmatprep.subr.mxu0 0.0
    %6187 = vmatpush1.msra.mxu0 0.0
    %6188 = vmatprep.subr.mxu0 0.0
    %6189 = vmatpush1.msra.mxu0 0.0
    %6190 = vmatprep.subr.mxu0 0.0
    %6191 = vmatpush1.msra.mxu0 0.0
    %6192 = vmatprep.subr.mxu0 0.0
    %6193 = vmatpush1.msra.mxu0 0.0
    %6194 = vmatprep.subr.mxu0 0.0
    %6195 = vmatpush1.msra.mxu0 0.0
    %6196 = vmatprep.subr.mxu0 0.0
    %6197 = vmatpush1.msra.mxu0 0.0
    %6198 = vmatprep.subr.mxu0 0.0
    %6199 = vmatpush1.msra.mxu0 0.0
    %6200 = vmatprep.subr.mxu0 0.0
    %6201 = vmatpush1.msra.mxu0 0.0
    %6202 = vmatprep.subr.mxu0 0.0
    %6203 = vmatpush1.msra.mxu0 0.0
    %6204 = vmatprep.subr.mxu0 0.0
    %6205 = vmatpush1.msra.mxu0 0.0
    %6206 = vmatprep.subr.mxu0 0.0
    %6207 = vmatpush1.msra.mxu0 0.0
    %6208 = vmatprep.subr.mxu0 0.0
    %6209 = vmatpush1.msra.mxu0 0.0
    %6210 = vmatprep.subr.mxu0 0.0
    %6211 = vmatpush1.msra.mxu0 0.0
    %6212 = vmatprep.subr.mxu0 0.0
    %6213 = vmatpush1.msra.mxu0 0.0
    %6214 = vmatprep.subr.mxu0 0.0
    %6215 = vmatpush1.msra.mxu0 0.0
    %6216 = vmatprep.subr.mxu0 0.0
    %6217 = vmatpush1.msra.mxu0 0.0
    %6218 = vmatprep.subr.mxu0 0.0
    %6219 = vmatpush1.msra.mxu0 0.0
    %6220 = vmatprep.subr.mxu0 0.0
    %6221 = vmatpush1.msra.mxu0 0.0
    %6222 = vmatprep.subr.mxu0 0.0
    %6223 = vmatpush1.msra.mxu0 0.0
    %6224 = vmatprep.subr.mxu0 0.0
    %6225 = vmatpush1.msra.mxu0 0.0
    %6226 = vmatprep.subr.mxu0 0.0
    %6227 = vmatpush1.msra.mxu0 0.0
    %6228 = vmatprep.subr.mxu0 0.0
    %6229 = vmatpush1.msra.mxu0 0.0
    %6230 = vmatprep.subr.mxu0 0.0
    %6231 = vmatpush1.msra.mxu0 0.0
    %6232 = vmatprep.subr.mxu0 0.0
    %6233 = vmatpush1.msra.mxu0 0.0
    %6234 = vmatprep.subr.mxu0 0.0
    %6235 = vmatpush1.msra.mxu0 0.0
    %6236 = vmatprep.subr.mxu0 0.0
    %6237 = vmatpush1.msra.mxu0 0.0
    %6238 = vmatprep.subr.mxu0 0.0
    %6239 = vmatpush1.msra.mxu0 0.0
    %6240 = vmatprep.subr.mxu0 0.0
    %6241 = vmatpush1.msra.mxu0 0.0
    %6242 = vmatprep.subr.mxu0 0.0
    %6243 = vmatpush1.msra.mxu0 0.0
    %6244 = vmatprep.mubr.f32.mxu0 0.0
    %v6245 = vand.u32 %v6022, 4294901760
    %v6246 = vsub.f32 %v6022, %v6245
    %6247 = vmatmul.mubr.f32.gmra.mrb[0].mxu0 %v6246
    %v6248 = vpop.f32.mrb[0].mxu0
    %v6249 = vadd.f32 %v6175, %v6248
    %v6250 = vpop.f32.mrb[0].mxu0
    %6251 = vdwg.mxu0
    %6252 = vmatprep.subr.mxu0 0.0
    %v6253 = vand.u32 %v6024, 4294901760
    %6254 = vmatpush1.msra.mxu0 %v6253
    %6255 = vmatprep.subr.mxu0 0.0
    %6256 = vmatpush1.msra.mxu0 0.0
    %6257 = vmatprep.subr.mxu0 0.0
    %6258 = vmatpush1.msra.mxu0 0.0
    %6259 = vmatprep.subr.mxu0 0.0
    %6260 = vmatpush1.msra.mxu0 0.0
    %6261 = vmatprep.subr.mxu0 0.0
    %6262 = vmatpush1.msra.mxu0 0.0
    %6263 = vmatprep.subr.mxu0 0.0
    %6264 = vmatpush1.msra.mxu0 0.0
    %6265 = vmatprep.subr.mxu0 0.0
    %6266 = vmatpush1.msra.mxu0 0.0
    %6267 = vmatprep.subr.mxu0 0.0
    %6268 = vmatpush1.msra.mxu0 0.0
    %6269 = vmatprep.subr.mxu0 0.0
    %6270 = vmatpush1.msra.mxu0 0.0
    %6271 = vmatprep.subr.mxu0 0.0
    %6272 = vmatpush1.msra.mxu0 0.0
    %6273 = vmatprep.subr.mxu0 0.0
    %6274 = vmatpush1.msra.mxu0 0.0
    %6275 = vmatprep.subr.mxu0 0.0
    %6276 = vmatpush1.msra.mxu0 0.0
    %6277 = vmatprep.subr.mxu0 0.0
    %6278 = vmatpush1.msra.mxu0 0.0
    %6279 = vmatprep.subr.mxu0 0.0
    %6280 = vmatpush1.msra.mxu0 0.0
    %6281 = vmatprep.subr.mxu0 0.0
    %6282 = vmatpush1.msra.mxu0 0.0
    %6283 = vmatprep.subr.mxu0 0.0
    %6284 = vmatpush1.msra.mxu0 0.0
    %6285 = vmatprep.subr.mxu0 0.0
    %6286 = vmatpush1.msra.mxu0 0.0
    %6287 = vmatprep.subr.mxu0 0.0
    %6288 = vmatpush1.msra.mxu0 0.0
    %6289 = vmatprep.subr.mxu0 0.0
    %6290 = vmatpush1.msra.mxu0 0.0
    %6291 = vmatprep.subr.mxu0 0.0
    %6292 = vmatpush1.msra.mxu0 0.0
    %6293 = vmatprep.subr.mxu0 0.0
    %6294 = vmatpush1.msra.mxu0 0.0
    %6295 = vmatprep.subr.mxu0 0.0
    %6296 = vmatpush1.msra.mxu0 0.0
    %6297 = vmatprep.subr.mxu0 0.0
    %6298 = vmatpush1.msra.mxu0 0.0
    %6299 = vmatprep.subr.mxu0 0.0
    %6300 = vmatpush1.msra.mxu0 0.0
    %6301 = vmatprep.subr.mxu0 0.0
    %6302 = vmatpush1.msra.mxu0 0.0
    %6303 = vmatprep.subr.mxu0 0.0
    %6304 = vmatpush1.msra.mxu0 0.0
    %6305 = vmatprep.subr.mxu0 0.0
    %6306 = vmatpush1.msra.mxu0 0.0
    %6307 = vmatprep.subr.mxu0 0.0
    %6308 = vmatpush1.msra.mxu0 0.0
    %6309 = vmatprep.subr.mxu0 0.0
    %6310 = vmatpush1.msra.mxu0 0.0
    %6311 = vmatprep.subr.mxu0 0.0
    %6312 = vmatpush1.msra.mxu0 0.0
    %6313 = vmatprep.subr.mxu0 0.0
    %6314 = vmatpush1.msra.mxu0 0.0
    %6315 = vmatprep.subr.mxu0 0.0
    %6316 = vmatpush1.msra.mxu0 0.0
    %6317 = vmatprep.mubr.f32.mxu0 0.0
    %v6318 = vand.u32 %v6022, 4294901760
    %v6319 = vsub.f32 %v6022, %v6318
    %v6320 = vand.u32 %v6319, 4294901760
    %6321 = vmatmul.mubr.f32.gmra.mrb[0].mxu0 %v6320
    %v6322 = vpop.f32.mrb[0].mxu0
    %v6323 = vadd.f32 %v6249, %v6322
    %v6324 = vpop.f32.mrb[0].mxu0
    %6325 = vdwg.mxu0
    %6326 = vmatprep.subr.mxu0 0.0
    %v6327 = vand.u32 %v6024, 4294901760
    %v6328 = vsub.f32 %v6024, %v6327
    %v6329 = vand.u32 %v6328, 4294901760
    %6330 = vmatpush1.msra.mxu0 %v6329
    %6331 = vmatprep.subr.mxu0 0.0
    %6332 = vmatpush1.msra.mxu0 0.0
    %6333 = vmatprep.subr.mxu0 0.0
    %6334 = vmatpush1.msra.mxu0 0.0
    %6335 = vmatprep.subr.mxu0 0.0
    %6336 = vmatpush1.msra.mxu0 0.0
    %6337 = vmatprep.subr.mxu0 0.0
    %6338 = vmatpush1.msra.mxu0 0.0
    %6339 = vmatprep.subr.mxu0 0.0
    %6340 = vmatpush1.msra.mxu0 0.0
    %6341 = vmatprep.subr.mxu0 0.0
    %6342 = vmatpush1.msra.mxu0 0.0
    %6343 = vmatprep.subr.mxu0 0.0
    %6344 = vmatpush1.msra.mxu0 0.0
    %6345 = vmatprep.subr.mxu0 0.0
    %6346 = vmatpush1.msra.mxu0 0.0
    %6347 = vmatprep.subr.mxu0 0.0
    %6348 = vmatpush1.msra.mxu0 0.0
    %6349 = vmatprep.subr.mxu0 0.0
    %6350 = vmatpush1.msra.mxu0 0.0
    %6351 = vmatprep.subr.mxu0 0.0
    %6352 = vmatpush1.msra.mxu0 0.0
    %6353 = vmatprep.subr.mxu0 0.0
    %6354 = vmatpush1.msra.mxu0 0.0
    %6355 = vmatprep.subr.mxu0 0.0
    %6356 = vmatpush1.msra.mxu0 0.0
    %6357 = vmatprep.subr.mxu0 0.0
    %6358 = vmatpush1.msra.mxu0 0.0
    %6359 = vmatprep.subr.mxu0 0.0
    %6360 = vmatpush1.msra.mxu0 0.0
    %6361 = vmatprep.subr.mxu0 0.0
    %6362 = vmatpush1.msra.mxu0 0.0
    %6363 = vmatprep.subr.mxu0 0.0
    %6364 = vmatpush1.msra.mxu0 0.0
    %6365 = vmatprep.subr.mxu0 0.0
    %6366 = vmatpush1.msra.mxu0 0.0
    %6367 = vmatprep.subr.mxu0 0.0
    %6368 = vmatpush1.msra.mxu0 0.0
    %6369 = vmatprep.subr.mxu0 0.0
    %6370 = vmatpush1.msra.mxu0 0.0
    %6371 = vmatprep.subr.mxu0 0.0
    %6372 = vmatpush1.msra.mxu0 0.0
    %6373 = vmatprep.subr.mxu0 0.0
    %6374 = vmatpush1.msra.mxu0 0.0
    %6375 = vmatprep.subr.mxu0 0.0
    %6376 = vmatpush1.msra.mxu0 0.0
    %6377 = vmatprep.subr.mxu0 0.0
    %6378 = vmatpush1.msra.mxu0 0.0
    %6379 = vmatprep.subr.mxu0 0.0
    %6380 = vmatpush1.msra.mxu0 0.0
    %6381 = vmatprep.subr.mxu0 0.0
    %6382 = vmatpush1.msra.mxu0 0.0
    %6383 = vmatprep.subr.mxu0 0.0
    %6384 = vmatpush1.msra.mxu0 0.0
    %6385 = vmatprep.subr.mxu0 0.0
    %6386 = vmatpush1.msra.mxu0 0.0
    %6387 = vmatprep.subr.mxu0 0.0
    %6388 = vmatpush1.msra.mxu0 0.0
    %6389 = vmatprep.subr.mxu0 0.0
    %6390 = vmatpush1.msra.mxu0 0.0
    %6391 = vmatprep.subr.mxu0 0.0
    %6392 = vmatpush1.msra.mxu0 0.0
    %6393 = vmatprep.mubr.f32.mxu0 0.0
    %v6394 = vand.u32 %v6022, 4294901760
    %6395 = vmatmul.mubr.f32.gmra.mrb[0].mxu0 %v6394
    %v6396 = vpop.f32.mrb[0].mxu0
    %v6397 = vadd.f32 %v6323, %v6396
    %v6398 = vpop.f32.mrb[0].mxu0
    %6399 = vdwg.mxu0
    %6400 = vmatprep.subr.mxu0 0.0
    %v6401 = vand.u32 %v6024, 4294901760
    %6402 = vmatpush1.msra.mxu0 %v6401
    %6403 = vmatprep.subr.mxu0 0.0
    %6404 = vmatpush1.msra.mxu0 0.0
    %6405 = vmatprep.subr.mxu0 0.0
    %6406 = vmatpush1.msra.mxu0 0.0
    %6407 = vmatprep.subr.mxu0 0.0
    %6408 = vmatpush1.msra.mxu0 0.0
    %6409 = vmatprep.subr.mxu0 0.0
    %6410 = vmatpush1.msra.mxu0 0.0
    %6411 = vmatprep.subr.mxu0 0.0
    %6412 = vmatpush1.msra.mxu0 0.0
    %6413 = vmatprep.subr.mxu0 0.0
    %6414 = vmatpush1.msra.mxu0 0.0
    %6415 = vmatprep.subr.mxu0 0.0
    %6416 = vmatpush1.msra.mxu0 0.0
    %6417 = vmatprep.subr.mxu0 0.0
    %6418 = vmatpush1.msra.mxu0 0.0
    %6419 = vmatprep.subr.mxu0 0.0
    %6420 = vmatpush1.msra.mxu0 0.0
    %6421 = vmatprep.subr.mxu0 0.0
    %6422 = vmatpush1.msra.mxu0 0.0
    %6423 = vmatprep.subr.mxu0 0.0
    %6424 = vmatpush1.msra.mxu0 0.0
    %6425 = vmatprep.subr.mxu0 0.0
    %6426 = vmatpush1.msra.mxu0 0.0
    %6427 = vmatprep.subr.mxu0 0.0
    %6428 = vmatpush1.msra.mxu0 0.0
    %6429 = vmatprep.subr.mxu0 0.0
    %6430 = vmatpush1.msra.mxu0 0.0
    %6431 = vmatprep.subr.mxu0 0.0
    %6432 = vmatpush1.msra.mxu0 0.0
    %6433 = vmatprep.subr.mxu0 0.0
    %6434 = vmatpush1.msra.mxu0 0.0
    %6435 = vmatprep.subr.mxu0 0.0
    %6436 = vmatpush1.msra.mxu0 0.0
    %6437 = vmatprep.subr.mxu0 0.0
    %6438 = vmatpush1.msra.mxu0 0.0
    %6439 = vmatprep.subr.mxu0 0.0
    %6440 = vmatpush1.msra.mxu0 0.0
    %6441 = vmatprep.subr.mxu0 0.0
    %6442 = vmatpush1.msra.mxu0 0.0
    %6443 = vmatprep.subr.mxu0 0.0
    %6444 = vmatpush1.msra.mxu0 0.0
    %6445 = vmatprep.subr.mxu0 0.0
    %6446 = vmatpush1.msra.mxu0 0.0
    %6447 = vmatprep.subr.mxu0 0.0
    %6448 = vmatpush1.msra.mxu0 0.0
    %6449 = vmatprep.subr.mxu0 0.0
    %6450 = vmatpush1.msra.mxu0 0.0
    %6451 = vmatprep.subr.mxu0 0.0
    %6452 = vmatpush1.msra.mxu0 0.0
    %6453 = vmatprep.subr.mxu0 0.0
    %6454 = vmatpush1.msra.mxu0 0.0
    %6455 = vmatprep.subr.mxu0 0.0
    %6456 = vmatpush1.msra.mxu0 0.0
    %6457 = vmatprep.subr.mxu0 0.0
    %6458 = vmatpush1.msra.mxu0 0.0
    %6459 = vmatprep.subr.mxu0 0.0
    %6460 = vmatpush1.msra.mxu0 0.0
    %6461 = vmatprep.subr.mxu0 0.0
    %6462 = vmatpush1.msra.mxu0 0.0
    %6463 = vmatprep.subr.mxu0 0.0
    %6464 = vmatpush1.msra.mxu0 0.0
    %6465 = vmatprep.mubr.f32.mxu0 0.0
    %v6466 = vand.u32 %v6022, 4294901760
    %6467 = vmatmul.mubr.f32.gmra.mrb[0].mxu0 %v6466
    %v6468 = vpop.f32.mrb[0].mxu0
    %v6469 = vadd.f32 %v6397, %v6468
    %v6470 = vpop.f32.mrb[0].mxu0
    %6471 = vdwg.mxu0
    %v6472 = vmul.f32 %v6016, %v6469
    %v6474 = vsel %vm167, %v5566, 0
    %6476 = vmatprep.subr.mxu0 0.0
    %v6477 = vand.u32 %v5571, 4294901760
    %6478 = vmatpush1.msra.mxu0 %v6477
    %6479 = vmatprep.subr.mxu0 0.0
    %6480 = vmatpush1.msra.mxu0 0.0
    %6481 = vmatprep.subr.mxu0 0.0
    %6482 = vmatpush1.msra.mxu0 0.0
    %6483 = vmatprep.subr.mxu0 0.0
    %6484 = vmatpush1.msra.mxu0 0.0
    %6485 = vmatprep.subr.mxu0 0.0
    %6486 = vmatpush1.msra.mxu0 0.0
    %6487 = vmatprep.subr.mxu0 0.0
    %6488 = vmatpush1.msra.mxu0 0.0
    %6489 = vmatprep.subr.mxu0 0.0
    %6490 = vmatpush1.msra.mxu0 0.0
    %6491 = vmatprep.subr.mxu0 0.0
    %6492 = vmatpush1.msra.mxu0 0.0
    %6493 = vmatprep.subr.mxu0 0.0
    %6494 = vmatpush1.msra.mxu0 0.0
    %6495 = vmatprep.subr.mxu0 0.0
    %6496 = vmatpush1.msra.mxu0 0.0
    %6497 = vmatprep.subr.mxu0 0.0
    %6498 = vmatpush1.msra.mxu0 0.0
    %6499 = vmatprep.subr.mxu0 0.0
    %6500 = vmatpush1.msra.mxu0 0.0
    %6501 = vmatprep.subr.mxu0 0.0
    %6502 = vmatpush1.msra.mxu0 0.0
    %6503 = vmatprep.subr.mxu0 0.0
    %6504 = vmatpush1.msra.mxu0 0.0
    %6505 = vmatprep.subr.mxu0 0.0
    %6506 = vmatpush1.msra.mxu0 0.0
    %6507 = vmatprep.subr.mxu0 0.0
    %6508 = vmatpush1.msra.mxu0 0.0
    %6509 = vmatprep.subr.mxu0 0.0
    %6510 = vmatpush1.msra.mxu0 0.0
    %6511 = vmatprep.subr.mxu0 0.0
    %6512 = vmatpush1.msra.mxu0 0.0
    %6513 = vmatprep.subr.mxu0 0.0
    %6514 = vmatpush1.msra.mxu0 0.0
    %6515 = vmatprep.subr.mxu0 0.0
    %6516 = vmatpush1.msra.mxu0 0.0
    %6517 = vmatprep.subr.mxu0 0.0
    %6518 = vmatpush1.msra.mxu0 0.0
    %6519 = vmatprep.subr.mxu0 0.0
    %6520 = vmatpush1.msra.mxu0 0.0
    %6521 = vmatprep.subr.mxu0 0.0
    %6522 = vmatpush1.msra.mxu0 0.0
    %6523 = vmatprep.subr.mxu0 0.0
    %6524 = vmatpush1.msra.mxu0 0.0
    %6525 = vmatprep.subr.mxu0 0.0
    %6526 = vmatpush1.msra.mxu0 0.0
    %6527 = vmatprep.subr.mxu0 0.0
    %6528 = vmatpush1.msra.mxu0 0.0
    %6529 = vmatprep.subr.mxu0 0.0
    %6530 = vmatpush1.msra.mxu0 0.0
    %6531 = vmatprep.subr.mxu0 0.0
    %6532 = vmatpush1.msra.mxu0 0.0
    %6533 = vmatprep.subr.mxu0 0.0
    %6534 = vmatpush1.msra.mxu0 0.0
    %6535 = vmatprep.subr.mxu0 0.0
    %6536 = vmatpush1.msra.mxu0 0.0
    %6537 = vmatprep.subr.mxu0 0.0
    %6538 = vmatpush1.msra.mxu0 0.0
    %6539 = vmatprep.subr.mxu0 0.0
    %6540 = vmatpush1.msra.mxu0 0.0
    %6541 = vmatprep.mubr.f32.mxu0 0.0
    %v6542 = vand.u32 %v6474, 4294901760
    %v6543 = vsub.f32 %v6474, %v6542
    %v6544 = vand.u32 %v6543, 4294901760
    %v6545 = vsub.f32 %v6543, %v6544
    %v6546 = vand.u32 %v6545, 4294901760
    %6547 = vmatmul.mubr.f32.gmra.mrb[0].mxu0 %v6546
    %v6548 = vpop.f32.mrb[0].mxu0
    %v6549 = vadd.f32 0.0, %v6548
    %v6550 = vpop.f32.mrb[0].mxu0
    %6551 = vdwg.mxu0
    %6552 = vmatprep.subr.mxu0 0.0
    %v6553 = vand.u32 %v5571, 4294901760
    %v6554 = vsub.f32 %v5571, %v6553
    %v6555 = vand.u32 %v6554, 4294901760
    %v6556 = vsub.f32 %v6554, %v6555
    %v6557 = vand.u32 %v6556, 4294901760
    %6558 = vmatpush1.msra.mxu0 %v6557
    %6559 = vmatprep.subr.mxu0 0.0
    %6560 = vmatpush1.msra.mxu0 0.0
    %6561 = vmatprep.subr.mxu0 0.0
    %6562 = vmatpush1.msra.mxu0 0.0
    %6563 = vmatprep.subr.mxu0 0.0
    %6564 = vmatpush1.msra.mxu0 0.0
    %6565 = vmatprep.subr.mxu0 0.0
    %6566 = vmatpush1.msra.mxu0 0.0
    %6567 = vmatprep.subr.mxu0 0.0
    %6568 = vmatpush1.msra.mxu0 0.0
    %6569 = vmatprep.subr.mxu0 0.0
    %6570 = vmatpush1.msra.mxu0 0.0
    %6571 = vmatprep.subr.mxu0 0.0
    %6572 = vmatpush1.msra.mxu0 0.0
    %6573 = vmatprep.subr.mxu0 0.0
    %6574 = vmatpush1.msra.mxu0 0.0
    %6575 = vmatprep.subr.mxu0 0.0
    %6576 = vmatpush1.msra.mxu0 0.0
    %6577 = vmatprep.subr.mxu0 0.0
    %6578 = vmatpush1.msra.mxu0 0.0
    %6579 = vmatprep.subr.mxu0 0.0
    %6580 = vmatpush1.msra.mxu0 0.0
    %6581 = vmatprep.subr.mxu0 0.0
    %6582 = vmatpush1.msra.mxu0 0.0
    %6583 = vmatprep.subr.mxu0 0.0
    %6584 = vmatpush1.msra.mxu0 0.0
    %6585 = vmatprep.subr.mxu0 0.0
    %6586 = vmatpush1.msra.mxu0 0.0
    %6587 = vmatprep.subr.mxu0 0.0
    %6588 = vmatpush1.msra.mxu0 0.0
    %6589 = vmatprep.subr.mxu0 0.0
    %6590 = vmatpush1.msra.mxu0 0.0
    %6591 = vmatprep.subr.mxu0 0.0
    %6592 = vmatpush1.msra.mxu0 0.0
    %6593 = vmatprep.subr.mxu0 0.0
    %6594 = vmatpush1.msra.mxu0 0.0
    %6595 = vmatprep.subr.mxu0 0.0
    %6596 = vmatpush1.msra.mxu0 0.0
    %6597 = vmatprep.subr.mxu0 0.0
    %6598 = vmatpush1.msra.mxu0 0.0
    %6599 = vmatprep.subr.mxu0 0.0
    %6600 = vmatpush1.msra.mxu0 0.0
    %6601 = vmatprep.subr.mxu0 0.0
    %6602 = vmatpush1.msra.mxu0 0.0
    %6603 = vmatprep.subr.mxu0 0.0
    %6604 = vmatpush1.msra.mxu0 0.0
    %6605 = vmatprep.subr.mxu0 0.0
    %6606 = vmatpush1.msra.mxu0 0.0
    %6607 = vmatprep.subr.mxu0 0.0
    %6608 = vmatpush1.msra.mxu0 0.0
    %6609 = vmatprep.subr.mxu0 0.0
    %6610 = vmatpush1.msra.mxu0 0.0
    %6611 = vmatprep.subr.mxu0 0.0
    %6612 = vmatpush1.msra.mxu0 0.0
    %6613 = vmatprep.subr.mxu0 0.0
    %6614 = vmatpush1.msra.mxu0 0.0
    %6615 = vmatprep.subr.mxu0 0.0
    %6616 = vmatpush1.msra.mxu0 0.0
    %6617 = vmatprep.subr.mxu0 0.0
    %6618 = vmatpush1.msra.mxu0 0.0
    %6619 = vmatprep.subr.mxu0 0.0
    %6620 = vmatpush1.msra.mxu0 0.0
    %6621 = vmatprep.mubr.f32.mxu0 0.0
    %v6622 = vand.u32 %v6474, 4294901760
    %6623 = vmatmul.mubr.f32.gmra.mrb[0].mxu0 %v6622
    %v6624 = vpop.f32.mrb[0].mxu0
    %v6625 = vadd.f32 %v6549, %v6624
    %v6626 = vpop.f32.mrb[0].mxu0
    %6627 = vdwg.mxu0
    %6628 = vmatprep.subr.mxu0 0.0
    %v6629 = vand.u32 %v5571, 4294901760
    %v6630 = vsub.f32 %v5571, %v6629
    %6631 = vmatpush1.msra.mxu0 %v6630
    %6632 = vmatprep.subr.mxu0 0.0
    %6633 = vmatpush1.msra.mxu0 0.0
    %6634 = vmatprep.subr.mxu0 0.0
    %6635 = vmatpush1.msra.mxu0 0.0
    %6636 = vmatprep.subr.mxu0 0.0
    %6637 = vmatpush1.msra.mxu0 0.0
    %6638 = vmatprep.subr.mxu0 0.0
    %6639 = vmatpush1.msra.mxu0 0.0
    %6640 = vmatprep.subr.mxu0 0.0
    %6641 = vmatpush1.msra.mxu0 0.0
    %6642 = vmatprep.subr.mxu0 0.0
    %6643 = vmatpush1.msra.mxu0 0.0
    %6644 = vmatprep.subr.mxu0 0.0
    %6645 = vmatpush1.msra.mxu0 0.0
    %6646 = vmatprep.subr.mxu0 0.0
    %6647 = vmatpush1.msra.mxu0 0.0
    %6648 = vmatprep.subr.mxu0 0.0
    %6649 = vmatpush1.msra.mxu0 0.0
    %6650 = vmatprep.subr.mxu0 0.0
    %6651 = vmatpush1.msra.mxu0 0.0
    %6652 = vmatprep.subr.mxu0 0.0
    %6653 = vmatpush1.msra.mxu0 0.0
    %6654 = vmatprep.subr.mxu0 0.0
    %6655 = vmatpush1.msra.mxu0 0.0
    %6656 = vmatprep.subr.mxu0 0.0
    %6657 = vmatpush1.msra.mxu0 0.0
    %6658 = vmatprep.subr.mxu0 0.0
    %6659 = vmatpush1.msra.mxu0 0.0
    %6660 = vmatprep.subr.mxu0 0.0
    %6661 = vmatpush1.msra.mxu0 0.0
    %6662 = vmatprep.subr.mxu0 0.0
    %6663 = vmatpush1.msra.mxu0 0.0
    %6664 = vmatprep.subr.mxu0 0.0
    %6665 = vmatpush1.msra.mxu0 0.0
    %6666 = vmatprep.subr.mxu0 0.0
    %6667 = vmatpush1.msra.mxu0 0.0
    %6668 = vmatprep.subr.mxu0 0.0
    %6669 = vmatpush1.msra.mxu0 0.0
    %6670 = vmatprep.subr.mxu0 0.0
    %6671 = vmatpush1.msra.mxu0 0.0
    %6672 = vmatprep.subr.mxu0 0.0
    %6673 = vmatpush1.msra.mxu0 0.0
    %6674 = vmatprep.subr.mxu0 0.0
    %6675 = vmatpush1.msra.mxu0 0.0
    %6676 = vmatprep.subr.mxu0 0.0
    %6677 = vmatpush1.msra.mxu0 0.0
    %6678 = vmatprep.subr.mxu0 0.0
    %6679 = vmatpush1.msra.mxu0 0.0
    %6680 = vmatprep.subr.mxu0 0.0
    %6681 = vmatpush1.msra.mxu0 0.0
    %6682 = vmatprep.subr.mxu0 0.0
    %6683 = vmatpush1.msra.mxu0 0.0
    %6684 = vmatprep.subr.mxu0 0.0
    %6685 = vmatpush1.msra.mxu0 0.0
    %6686 = vmatprep.subr.mxu0 0.0
    %6687 = vmatpush1.msra.mxu0 0.0
    %6688 = vmatprep.subr.mxu0 0.0
    %6689 = vmatpush1.msra.mxu0 0.0
    %6690 = vmatprep.subr.mxu0 0.0
    %6691 = vmatpush1.msra.mxu0 0.0
    %6692 = vmatprep.subr.mxu0 0.0
    %6693 = vmatpush1.msra.mxu0 0.0
    %6694 = vmatprep.mubr.f32.mxu0 0.0
    %v6695 = vand.u32 %v6474, 4294901760
    %v6696 = vsub.f32 %v6474, %v6695
    %6697 = vmatmul.mubr.f32.gmra.mrb[0].mxu0 %v6696
    %v6698 = vpop.f32.mrb[0].mxu0
    %v6699 = vadd.f32 %v6625, %v6698
    %v6700 = vpop.f32.mrb[0].mxu0
    %6701 = vdwg.mxu0
    %6702 = vmatprep.subr.mxu0 0.0
    %v6703 = vand.u32 %v5571, 4294901760
    %6704 = vmatpush1.msra.mxu0 %v6703
    %6705 = vmatprep.subr.mxu0 0.0
    %6706 = vmatpush1.msra.mxu0 0.0
    %6707 = vmatprep.subr.mxu0 0.0
    %6708 = vmatpush1.msra.mxu0 0.0
    %6709 = vmatprep.subr.mxu0 0.0
    %6710 = vmatpush1.msra.mxu0 0.0
    %6711 = vmatprep.subr.mxu0 0.0
    %6712 = vmatpush1.msra.mxu0 0.0
    %6713 = vmatprep.subr.mxu0 0.0
    %6714 = vmatpush1.msra.mxu0 0.0
    %6715 = vmatprep.subr.mxu0 0.0
    %6716 = vmatpush1.msra.mxu0 0.0
    %6717 = vmatprep.subr.mxu0 0.0
    %6718 = vmatpush1.msra.mxu0 0.0
    %6719 = vmatprep.subr.mxu0 0.0
    %6720 = vmatpush1.msra.mxu0 0.0
    %6721 = vmatprep.subr.mxu0 0.0
    %6722 = vmatpush1.msra.mxu0 0.0
    %6723 = vmatprep.subr.mxu0 0.0
    %6724 = vmatpush1.msra.mxu0 0.0
    %6725 = vmatprep.subr.mxu0 0.0
    %6726 = vmatpush1.msra.mxu0 0.0
    %6727 = vmatprep.subr.mxu0 0.0
    %6728 = vmatpush1.msra.mxu0 0.0
    %6729 = vmatprep.subr.mxu0 0.0
    %6730 = vmatpush1.msra.mxu0 0.0
    %6731 = vmatprep.subr.mxu0 0.0
    %6732 = vmatpush1.msra.mxu0 0.0
    %6733 = vmatprep.subr.mxu0 0.0
    %6734 = vmatpush1.msra.mxu0 0.0
    %6735 = vmatprep.subr.mxu0 0.0
    %6736 = vmatpush1.msra.mxu0 0.0
    %6737 = vmatprep.subr.mxu0 0.0
    %6738 = vmatpush1.msra.mxu0 0.0
    %6739 = vmatprep.subr.mxu0 0.0
    %6740 = vmatpush1.msra.mxu0 0.0
    %6741 = vmatprep.subr.mxu0 0.0
    %6742 = vmatpush1.msra.mxu0 0.0
    %6743 = vmatprep.subr.mxu0 0.0
    %6744 = vmatpush1.msra.mxu0 0.0
    %6745 = vmatprep.subr.mxu0 0.0
    %6746 = vmatpush1.msra.mxu0 0.0
    %6747 = vmatprep.subr.mxu0 0.0
    %6748 = vmatpush1.msra.mxu0 0.0
    %6749 = vmatprep.subr.mxu0 0.0
    %6750 = vmatpush1.msra.mxu0 0.0
    %6751 = vmatprep.subr.mxu0 0.0
    %6752 = vmatpush1.msra.mxu0 0.0
    %6753 = vmatprep.subr.mxu0 0.0
    %6754 = vmatpush1.msra.mxu0 0.0
    %6755 = vmatprep.subr.mxu0 0.0
    %6756 = vmatpush1.msra.mxu0 0.0
    %6757 = vmatprep.subr.mxu0 0.0
    %6758 = vmatpush1.msra.mxu0 0.0
    %6759 = vmatprep.subr.mxu0 0.0
    %6760 = vmatpush1.msra.mxu0 0.0
    %6761 = vmatprep.subr.mxu0 0.0
    %6762 = vmatpush1.msra.mxu0 0.0
    %6763 = vmatprep.subr.mxu0 0.0
    %6764 = vmatpush1.msra.mxu0 0.0
    %6765 = vmatprep.subr.mxu0 0.0
    %6766 = vmatpush1.msra.mxu0 0.0
    %6767 = vmatprep.mubr.f32.mxu0 0.0
    %v6768 = vand.u32 %v6474, 4294901760
    %v6769 = vsub.f32 %v6474, %v6768
    %v6770 = vand.u32 %v6769, 4294901760
    %6771 = vmatmul.mubr.f32.gmra.mrb[0].mxu0 %v6770
    %v6772 = vpop.f32.mrb[0].mxu0
    %v6773 = vadd.f32 %v6699, %v6772
    %v6774 = vpop.f32.mrb[0].mxu0
    %6775 = vdwg.mxu0
    %6776 = vmatprep.subr.mxu0 0.0
    %v6777 = vand.u32 %v5571, 4294901760
    %v6778 = vsub.f32 %v5571, %v6777
    %v6779 = vand.u32 %v6778, 4294901760
    %6780 = vmatpush1.msra.mxu0 %v6779
    %6781 = vmatprep.subr.mxu0 0.0
    %6782 = vmatpush1.msra.mxu0 0.0
    %6783 = vmatprep.subr.mxu0 0.0
    %6784 = vmatpush1.msra.mxu0 0.0
    %6785 = vmatprep.subr.mxu0 0.0
    %6786 = vmatpush1.msra.mxu0 0.0
    %6787 = vmatprep.subr.mxu0 0.0
    %6788 = vmatpush1.msra.mxu0 0.0
    %6789 = vmatprep.subr.mxu0 0.0
    %6790 = vmatpush1.msra.mxu0 0.0
    %6791 = vmatprep.subr.mxu0 0.0
    %6792 = vmatpush1.msra.mxu0 0.0
    %6793 = vmatprep.subr.mxu0 0.0
    %6794 = vmatpush1.msra.mxu0 0.0
    %6795 = vmatprep.subr.mxu0 0.0
    %6796 = vmatpush1.msra.mxu0 0.0
    %6797 = vmatprep.subr.mxu0 0.0
    %6798 = vmatpush1.msra.mxu0 0.0
    %6799 = vmatprep.subr.mxu0 0.0
    %6800 = vmatpush1.msra.mxu0 0.0
    %6801 = vmatprep.subr.mxu0 0.0
    %6802 = vmatpush1.msra.mxu0 0.0
    %6803 = vmatprep.subr.mxu0 0.0
    %6804 = vmatpush1.msra.mxu0 0.0
    %6805 = vmatprep.subr.mxu0 0.0
    %6806 = vmatpush1.msra.mxu0 0.0
    %6807 = vmatprep.subr.mxu0 0.0
    %6808 = vmatpush1.msra.mxu0 0.0
    %6809 = vmatprep.subr.mxu0 0.0
    %6810 = vmatpush1.msra.mxu0 0.0
    %6811 = vmatprep.subr.mxu0 0.0
    %6812 = vmatpush1.msra.mxu0 0.0
    %6813 = vmatprep.subr.mxu0 0.0
    %6814 = vmatpush1.msra.mxu0 0.0
    %6815 = vmatprep.subr.mxu0 0.0
    %6816 = vmatpush1.msra.mxu0 0.0
    %6817 = vmatprep.subr.mxu0 0.0
    %6818 = vmatpush1.msra.mxu0 0.0
    %6819 = vmatprep.subr.mxu0 0.0
    %6820 = vmatpush1.msra.mxu0 0.0
    %6821 = vmatprep.subr.mxu0 0.0
    %6822 = vmatpush1.msra.mxu0 0.0
    %6823 = vmatprep.subr.mxu0 0.0
    %6824 = vmatpush1.msra.mxu0 0.0
    %6825 = vmatprep.subr.mxu0 0.0
    %6826 = vmatpush1.msra.mxu0 0.0
    %6827 = vmatprep.subr.mxu0 0.0
    %6828 = vmatpush1.msra.mxu0 0.0
    %6829 = vmatprep.subr.mxu0 0.0
    %6830 = vmatpush1.msra.mxu0 0.0
    %6831 = vmatprep.subr.mxu0 0.0
    %6832 = vmatpush1.msra.mxu0 0.0
    %6833 = vmatprep.subr.mxu0 0.0
    %6834 = vmatpush1.msra.mxu0 0.0
    %6835 = vmatprep.subr.mxu0 0.0
    %6836 = vmatpush1.msra.mxu0 0.0
    %6837 = vmatprep.subr.mxu0 0.0
    %6838 = vmatpush1.msra.mxu0 0.0
    %6839 = vmatprep.subr.mxu0 0.0
    %6840 = vmatpush1.msra.mxu0 0.0
    %6841 = vmatprep.subr.mxu0 0.0
    %6842 = vmatpush1.msra.mxu0 0.0
    %6843 = vmatprep.mubr.f32.mxu0 0.0
    %v6844 = vand.u32 %v6474, 4294901760
    %6845 = vmatmul.mubr.f32.gmra.mrb[0].mxu0 %v6844
    %v6846 = vpop.f32.mrb[0].mxu0
    %v6847 = vadd.f32 %v6773, %v6846
    %v6848 = vpop.f32.mrb[0].mxu0
    %6849 = vdwg.mxu0
    %6850 = vmatprep.subr.mxu0 0.0
    %v6851 = vand.u32 %v5571, 4294901760
    %6852 = vmatpush1.msra.mxu0 %v6851
    %6853 = vmatprep.subr.mxu0 0.0
    %6854 = vmatpush1.msra.mxu0 0.0
    %6855 = vmatprep.subr.mxu0 0.0
    %6856 = vmatpush1.msra.mxu0 0.0
    %6857 = vmatprep.subr.mxu0 0.0
    %6858 = vmatpush1.msra.mxu0 0.0
    %6859 = vmatprep.subr.mxu0 0.0
    %6860 = vmatpush1.msra.mxu0 0.0
    %6861 = vmatprep.subr.mxu0 0.0
    %6862 = vmatpush1.msra.mxu0 0.0
    %6863 = vmatprep.subr.mxu0 0.0
    %6864 = vmatpush1.msra.mxu0 0.0
    %6865 = vmatprep.subr.mxu0 0.0
    %6866 = vmatpush1.msra.mxu0 0.0
    %6867 = vmatprep.subr.mxu0 0.0
    %6868 = vmatpush1.msra.mxu0 0.0
    %6869 = vmatprep.subr.mxu0 0.0
    %6870 = vmatpush1.msra.mxu0 0.0
    %6871 = vmatprep.subr.mxu0 0.0
    %6872 = vmatpush1.msra.mxu0 0.0
    %6873 = vmatprep.subr.mxu0 0.0
    %6874 = vmatpush1.msra.mxu0 0.0
    %6875 = vmatprep.subr.mxu0 0.0
    %6876 = vmatpush1.msra.mxu0 0.0
    %6877 = vmatprep.subr.mxu0 0.0
    %6878 = vmatpush1.msra.mxu0 0.0
    %6879 = vmatprep.subr.mxu0 0.0
    %6880 = vmatpush1.msra.mxu0 0.0
    %6881 = vmatprep.subr.mxu0 0.0
    %6882 = vmatpush1.msra.mxu0 0.0
    %6883 = vmatprep.subr.mxu0 0.0
    %6884 = vmatpush1.msra.mxu0 0.0
    %6885 = vmatprep.subr.mxu0 0.0
    %6886 = vmatpush1.msra.mxu0 0.0
    %6887 = vmatprep.subr.mxu0 0.0
    %6888 = vmatpush1.msra.mxu0 0.0
    %6889 = vmatprep.subr.mxu0 0.0
    %6890 = vmatpush1.msra.mxu0 0.0
    %6891 = vmatprep.subr.mxu0 0.0
    %6892 = vmatpush1.msra.mxu0 0.0
    %6893 = vmatprep.subr.mxu0 0.0
    %6894 = vmatpush1.msra.mxu0 0.0
    %6895 = vmatprep.subr.mxu0 0.0
    %6896 = vmatpush1.msra.mxu0 0.0
    %6897 = vmatprep.subr.mxu0 0.0
    %6898 = vmatpush1.msra.mxu0 0.0
    %6899 = vmatprep.subr.mxu0 0.0
    %6900 = vmatpush1.msra.mxu0 0.0
    %6901 = vmatprep.subr.mxu0 0.0
    %6902 = vmatpush1.msra.mxu0 0.0
    %6903 = vmatprep.subr.mxu0 0.0
    %6904 = vmatpush1.msra.mxu0 0.0
    %6905 = vmatprep.subr.mxu0 0.0
    %6906 = vmatpush1.msra.mxu0 0.0
    %6907 = vmatprep.subr.mxu0 0.0
    %6908 = vmatpush1.msra.mxu0 0.0
    %6909 = vmatprep.subr.mxu0 0.0
    %6910 = vmatpush1.msra.mxu0 0.0
    %6911 = vmatprep.subr.mxu0 0.0
    %6912 = vmatpush1.msra.mxu0 0.0
    %6913 = vmatprep.subr.mxu0 0.0
    %6914 = vmatpush1.msra.mxu0 0.0
    %6915 = vmatprep.mubr.f32.mxu0 0.0
    %v6916 = vand.u32 %v6474, 4294901760
    %6917 = vmatmul.mubr.f32.gmra.mrb[0].mxu0 %v6916
    %v6918 = vpop.f32.mrb[0].mxu0
    %v6919 = vadd.f32 %v6847, %v6918
    %v6920 = vpop.f32.mrb[0].mxu0
    %6921 = vdwg.mxu0
    %v6923 = vsel %vm167, %v5531, 0
    %6925 = vmatprep.subr.mxu0 0.0
    %v6926 = vand.u32 %v6024, 4294901760
    %6927 = vmatpush1.msra.mxu0 %v6926
    %6928 = vmatprep.subr.mxu0 0.0
    %6929 = vmatpush1.msra.mxu0 0.0
    %6930 = vmatprep.subr.mxu0 0.0
    %6931 = vmatpush1.msra.mxu0 0.0
    %6932 = vmatprep.subr.mxu0 0.0
    %6933 = vmatpush1.msra.mxu0 0.0
    %6934 = vmatprep.subr.mxu0 0.0
    %6935 = vmatpush1.msra.mxu0 0.0
    %6936 = vmatprep.subr.mxu0 0.0
    %6937 = vmatpush1.msra.mxu0 0.0
    %6938 = vmatprep.subr.mxu0 0.0
    %6939 = vmatpush1.msra.mxu0 0.0
    %6940 = vmatprep.subr.mxu0 0.0
    %6941 = vmatpush1.msra.mxu0 0.0
    %6942 = vmatprep.subr.mxu0 0.0
    %6943 = vmatpush1.msra.mxu0 0.0
    %6944 = vmatprep.subr.mxu0 0.0
    %6945 = vmatpush1.msra.mxu0 0.0
    %6946 = vmatprep.subr.mxu0 0.0
    %6947 = vmatpush1.msra.mxu0 0.0
    %6948 = vmatprep.subr.mxu0 0.0
    %6949 = vmatpush1.msra.mxu0 0.0
    %6950 = vmatprep.subr.mxu0 0.0
    %6951 = vmatpush1.msra.mxu0 0.0
    %6952 = vmatprep.subr.mxu0 0.0
    %6953 = vmatpush1.msra.mxu0 0.0
    %6954 = vmatprep.subr.mxu0 0.0
    %6955 = vmatpush1.msra.mxu0 0.0
    %6956 = vmatprep.subr.mxu0 0.0
    %6957 = vmatpush1.msra.mxu0 0.0
    %6958 = vmatprep.subr.mxu0 0.0
    %6959 = vmatpush1.msra.mxu0 0.0
    %6960 = vmatprep.subr.mxu0 0.0
    %6961 = vmatpush1.msra.mxu0 0.0
    %6962 = vmatprep.subr.mxu0 0.0
    %6963 = vmatpush1.msra.mxu0 0.0
    %6964 = vmatprep.subr.mxu0 0.0
    %6965 = vmatpush1.msra.mxu0 0.0
    %6966 = vmatprep.subr.mxu0 0.0
    %6967 = vmatpush1.msra.mxu0 0.0
    %6968 = vmatprep.subr.mxu0 0.0
    %6969 = vmatpush1.msra.mxu0 0.0
    %6970 = vmatprep.subr.mxu0 0.0
    %6971 = vmatpush1.msra.mxu0 0.0
    %6972 = vmatprep.subr.mxu0 0.0
    %6973 = vmatpush1.msra.mxu0 0.0
    %6974 = vmatprep.subr.mxu0 0.0
    %6975 = vmatpush1.msra.mxu0 0.0
    %6976 = vmatprep.subr.mxu0 0.0
    %6977 = vmatpush1.msra.mxu0 0.0
    %6978 = vmatprep.subr.mxu0 0.0
    %6979 = vmatpush1.msra.mxu0 0.0
    %6980 = vmatprep.subr.mxu0 0.0
    %6981 = vmatpush1.msra.mxu0 0.0
    %6982 = vmatprep.subr.mxu0 0.0
    %6983 = vmatpush1.msra.mxu0 0.0
    %6984 = vmatprep.subr.mxu0 0.0
    %6985 = vmatpush1.msra.mxu0 0.0
    %6986 = vmatprep.subr.mxu0 0.0
    %6987 = vmatpush1.msra.mxu0 0.0
    %6988 = vmatprep.subr.mxu0 0.0
    %6989 = vmatpush1.msra.mxu0 0.0
    %6990 = vmatprep.mubr.f32.mxu0 0.0
    %v6991 = vand.u32 %v6923, 4294901760
    %v6992 = vsub.f32 %v6923, %v6991
    %v6993 = vand.u32 %v6992, 4294901760
    %v6994 = vsub.f32 %v6992, %v6993
    %v6995 = vand.u32 %v6994, 4294901760
    %6996 = vmatmul.mubr.f32.gmra.mrb[0].mxu0 %v6995
    %v6997 = vpop.f32.mrb[0].mxu0
    %v6998 = vadd.f32 0.0, %v6997
    %v6999 = vpop.f32.mrb[0].mxu0
    %7000 = vdwg.mxu0
    %7001 = vmatprep.subr.mxu0 0.0
    %v7002 = vand.u32 %v6024, 4294901760
    %v7003 = vsub.f32 %v6024, %v7002
    %v7004 = vand.u32 %v7003, 4294901760
    %v7005 = vsub.f32 %v7003, %v7004
    %v7006 = vand.u32 %v7005, 4294901760
    %7007 = vmatpush1.msra.mxu0 %v7006
    %7008 = vmatprep.subr.mxu0 0.0
    %7009 = vmatpush1.msra.mxu0 0.0
    %7010 = vmatprep.subr.mxu0 0.0
    %7011 = vmatpush1.msra.mxu0 0.0
    %7012 = vmatprep.subr.mxu0 0.0
    %7013 = vmatpush1.msra.mxu0 0.0
    %7014 = vmatprep.subr.mxu0 0.0
    %7015 = vmatpush1.msra.mxu0 0.0
    %7016 = vmatprep.subr.mxu0 0.0
    %7017 = vmatpush1.msra.mxu0 0.0
    %7018 = vmatprep.subr.mxu0 0.0
    %7019 = vmatpush1.msra.mxu0 0.0
    %7020 = vmatprep.subr.mxu0 0.0
    %7021 = vmatpush1.msra.mxu0 0.0
    %7022 = vmatprep.subr.mxu0 0.0
    %7023 = vmatpush1.msra.mxu0 0.0
    %7024 = vmatprep.subr.mxu0 0.0
    %7025 = vmatpush1.msra.mxu0 0.0
    %7026 = vmatprep.subr.mxu0 0.0
    %7027 = vmatpush1.msra.mxu0 0.0
    %7028 = vmatprep.subr.mxu0 0.0
    %7029 = vmatpush1.msra.mxu0 0.0
    %7030 = vmatprep.subr.mxu0 0.0
    %7031 = vmatpush1.msra.mxu0 0.0
    %7032 = vmatprep.subr.mxu0 0.0
    %7033 = vmatpush1.msra.mxu0 0.0
    %7034 = vmatprep.subr.mxu0 0.0
    %7035 = vmatpush1.msra.mxu0 0.0
    %7036 = vmatprep.subr.mxu0 0.0
    %7037 = vmatpush1.msra.mxu0 0.0
    %7038 = vmatprep.subr.mxu0 0.0
    %7039 = vmatpush1.msra.mxu0 0.0
    %7040 = vmatprep.subr.mxu0 0.0
    %7041 = vmatpush1.msra.mxu0 0.0
    %7042 = vmatprep.subr.mxu0 0.0
    %7043 = vmatpush1.msra.mxu0 0.0
    %7044 = vmatprep.subr.mxu0 0.0
    %7045 = vmatpush1.msra.mxu0 0.0
    %7046 = vmatprep.subr.mxu0 0.0
    %7047 = vmatpush1.msra.mxu0 0.0
    %7048 = vmatprep.subr.mxu0 0.0
    %7049 = vmatpush1.msra.mxu0 0.0
    %7050 = vmatprep.subr.mxu0 0.0
    %7051 = vmatpush1.msra.mxu0 0.0
    %7052 = vmatprep.subr.mxu0 0.0
    %7053 = vmatpush1.msra.mxu0 0.0
    %7054 = vmatprep.subr.mxu0 0.0
    %7055 = vmatpush1.msra.mxu0 0.0
    %7056 = vmatprep.subr.mxu0 0.0
    %7057 = vmatpush1.msra.mxu0 0.0
    %7058 = vmatprep.subr.mxu0 0.0
    %7059 = vmatpush1.msra.mxu0 0.0
    %7060 = vmatprep.subr.mxu0 0.0
    %7061 = vmatpush1.msra.mxu0 0.0
    %7062 = vmatprep.subr.mxu0 0.0
    %7063 = vmatpush1.msra.mxu0 0.0
    %7064 = vmatprep.subr.mxu0 0.0
    %7065 = vmatpush1.msra.mxu0 0.0
    %7066 = vmatprep.subr.mxu0 0.0
    %7067 = vmatpush1.msra.mxu0 0.0
    %7068 = vmatprep.subr.mxu0 0.0
    %7069 = vmatpush1.msra.mxu0 0.0
    %7070 = vmatprep.mubr.f32.mxu0 0.0
    %v7071 = vand.u32 %v6923, 4294901760
    %7072 = vmatmul.mubr.f32.gmra.mrb[0].mxu0 %v7071
    %v7073 = vpop.f32.mrb[0].mxu0
    %v7074 = vadd.f32 %v6998, %v7073
    %v7075 = vpop.f32.mrb[0].mxu0
    %7076 = vdwg.mxu0
    %7077 = vmatprep.subr.mxu0 0.0
    %v7078 = vand.u32 %v6024, 4294901760
    %v7079 = vsub.f32 %v6024, %v7078
    %7080 = vmatpush1.msra.mxu0 %v7079
    %7081 = vmatprep.subr.mxu0 0.0
    %7082 = vmatpush1.msra.mxu0 0.0
    %7083 = vmatprep.subr.mxu0 0.0
    %7084 = vmatpush1.msra.mxu0 0.0
    %7085 = vmatprep.subr.mxu0 0.0
    %7086 = vmatpush1.msra.mxu0 0.0
    %7087 = vmatprep.subr.mxu0 0.0
    %7088 = vmatpush1.msra.mxu0 0.0
    %7089 = vmatprep.subr.mxu0 0.0
    %7090 = vmatpush1.msra.mxu0 0.0
    %7091 = vmatprep.subr.mxu0 0.0
    %7092 = vmatpush1.msra.mxu0 0.0
    %7093 = vmatprep.subr.mxu0 0.0
    %7094 = vmatpush1.msra.mxu0 0.0
    %7095 = vmatprep.subr.mxu0 0.0
    %7096 = vmatpush1.msra.mxu0 0.0
    %7097 = vmatprep.subr.mxu0 0.0
    %7098 = vmatpush1.msra.mxu0 0.0
    %7099 = vmatprep.subr.mxu0 0.0
    %7100 = vmatpush1.msra.mxu0 0.0
    %7101 = vmatprep.subr.mxu0 0.0
    %7102 = vmatpush1.msra.mxu0 0.0
    %7103 = vmatprep.subr.mxu0 0.0
    %7104 = vmatpush1.msra.mxu0 0.0
    %7105 = vmatprep.subr.mxu0 0.0
    %7106 = vmatpush1.msra.mxu0 0.0
    %7107 = vmatprep.subr.mxu0 0.0
    %7108 = vmatpush1.msra.mxu0 0.0
    %7109 = vmatprep.subr.mxu0 0.0
    %7110 = vmatpush1.msra.mxu0 0.0
    %7111 = vmatprep.subr.mxu0 0.0
    %7112 = vmatpush1.msra.mxu0 0.0
    %7113 = vmatprep.subr.mxu0 0.0
    %7114 = vmatpush1.msra.mxu0 0.0
    %7115 = vmatprep.subr.mxu0 0.0
    %7116 = vmatpush1.msra.mxu0 0.0
    %7117 = vmatprep.subr.mxu0 0.0
    %7118 = vmatpush1.msra.mxu0 0.0
    %7119 = vmatprep.subr.mxu0 0.0
    %7120 = vmatpush1.msra.mxu0 0.0
    %7121 = vmatprep.subr.mxu0 0.0
    %7122 = vmatpush1.msra.mxu0 0.0
    %7123 = vmatprep.subr.mxu0 0.0
    %7124 = vmatpush1.msra.mxu0 0.0
    %7125 = vmatprep.subr.mxu0 0.0
    %7126 = vmatpush1.msra.mxu0 0.0
    %7127 = vmatprep.subr.mxu0 0.0
    %7128 = vmatpush1.msra.mxu0 0.0
    %7129 = vmatprep.subr.mxu0 0.0
    %7130 = vmatpush1.msra.mxu0 0.0
    %7131 = vmatprep.subr.mxu0 0.0
    %7132 = vmatpush1.msra.mxu0 0.0
    %7133 = vmatprep.subr.mxu0 0.0
    %7134 = vmatpush1.msra.mxu0 0.0
    %7135 = vmatprep.subr.mxu0 0.0
    %7136 = vmatpush1.msra.mxu0 0.0
    %7137 = vmatprep.subr.mxu0 0.0
    %7138 = vmatpush1.msra.mxu0 0.0
    %7139 = vmatprep.subr.mxu0 0.0
    %7140 = vmatpush1.msra.mxu0 0.0
    %7141 = vmatprep.subr.mxu0 0.0
    %7142 = vmatpush1.msra.mxu0 0.0
    %7143 = vmatprep.mubr.f32.mxu0 0.0
    %v7144 = vand.u32 %v6923, 4294901760
    %v7145 = vsub.f32 %v6923, %v7144
    %7146 = vmatmul.mubr.f32.gmra.mrb[0].mxu0 %v7145
    %v7147 = vpop.f32.mrb[0].mxu0
    %v7148 = vadd.f32 %v7074, %v7147
    %v7149 = vpop.f32.mrb[0].mxu0
    %7150 = vdwg.mxu0
    %7151 = vmatprep.subr.mxu0 0.0
    %v7152 = vand.u32 %v6024, 4294901760
    %7153 = vmatpush1.msra.mxu0 %v7152
    %7154 = vmatprep.subr.mxu0 0.0
    %7155 = vmatpush1.msra.mxu0 0.0
    %7156 = vmatprep.subr.mxu0 0.0
    %7157 = vmatpush1.msra.mxu0 0.0
    %7158 = vmatprep.subr.mxu0 0.0
    %7159 = vmatpush1.msra.mxu0 0.0
    %7160 = vmatprep.subr.mxu0 0.0
    %7161 = vmatpush1.msra.mxu0 0.0
    %7162 = vmatprep.subr.mxu0 0.0
    %7163 = vmatpush1.msra.mxu0 0.0
    %7164 = vmatprep.subr.mxu0 0.0
    %7165 = vmatpush1.msra.mxu0 0.0
    %7166 = vmatprep.subr.mxu0 0.0
    %7167 = vmatpush1.msra.mxu0 0.0
    %7168 = vmatprep.subr.mxu0 0.0
    %7169 = vmatpush1.msra.mxu0 0.0
    %7170 = vmatprep.subr.mxu0 0.0
    %7171 = vmatpush1.msra.mxu0 0.0
    %7172 = vmatprep.subr.mxu0 0.0
    %7173 = vmatpush1.msra.mxu0 0.0
    %7174 = vmatprep.subr.mxu0 0.0
    %7175 = vmatpush1.msra.mxu0 0.0
    %7176 = vmatprep.subr.mxu0 0.0
    %7177 = vmatpush1.msra.mxu0 0.0
    %7178 = vmatprep.subr.mxu0 0.0
    %7179 = vmatpush1.msra.mxu0 0.0
    %7180 = vmatprep.subr.mxu0 0.0
    %7181 = vmatpush1.msra.mxu0 0.0
    %7182 = vmatprep.subr.mxu0 0.0
    %7183 = vmatpush1.msra.mxu0 0.0
    %7184 = vmatprep.subr.mxu0 0.0
    %7185 = vmatpush1.msra.mxu0 0.0
    %7186 = vmatprep.subr.mxu0 0.0
    %7187 = vmatpush1.msra.mxu0 0.0
    %7188 = vmatprep.subr.mxu0 0.0
    %7189 = vmatpush1.msra.mxu0 0.0
    %7190 = vmatprep.subr.mxu0 0.0
    %7191 = vmatpush1.msra.mxu0 0.0
    %7192 = vmatprep.subr.mxu0 0.0
    %7193 = vmatpush1.msra.mxu0 0.0
    %7194 = vmatprep.subr.mxu0 0.0
    %7195 = vmatpush1.msra.mxu0 0.0
    %7196 = vmatprep.subr.mxu0 0.0
    %7197 = vmatpush1.msra.mxu0 0.0
    %7198 = vmatprep.subr.mxu0 0.0
    %7199 = vmatpush1.msra.mxu0 0.0
    %7200 = vmatprep.subr.mxu0 0.0
    %7201 = vmatpush1.msra.mxu0 0.0
    %7202 = vmatprep.subr.mxu0 0.0
    %7203 = vmatpush1.msra.mxu0 0.0
    %7204 = vmatprep.subr.mxu0 0.0
    %7205 = vmatpush1.msra.mxu0 0.0
    %7206 = vmatprep.subr.mxu0 0.0
    %7207 = vmatpush1.msra.mxu0 0.0
    %7208 = vmatprep.subr.mxu0 0.0
    %7209 = vmatpush1.msra.mxu0 0.0
    %7210 = vmatprep.subr.mxu0 0.0
    %7211 = vmatpush1.msra.mxu0 0.0
    %7212 = vmatprep.subr.mxu0 0.0
    %7213 = vmatpush1.msra.mxu0 0.0
    %7214 = vmatprep.subr.mxu0 0.0
    %7215 = vmatpush1.msra.mxu0 0.0
    %7216 = vmatprep.mubr.f32.mxu0 0.0
    %v7217 = vand.u32 %v6923, 4294901760
    %v7218 = vsub.f32 %v6923, %v7217
    %v7219 = vand.u32 %v7218, 4294901760
    %7220 = vmatmul.mubr.f32.gmra.mrb[0].mxu0 %v7219
    %v7221 = vpop.f32.mrb[0].mxu0
    %v7222 = vadd.f32 %v7148, %v7221
    %v7223 = vpop.f32.mrb[0].mxu0
    %7224 = vdwg.mxu0
    %7225 = vmatprep.subr.mxu0 0.0
    %v7226 = vand.u32 %v6024, 4294901760
    %v7227 = vsub.f32 %v6024, %v7226
    %v7228 = vand.u32 %v7227, 4294901760
    %7229 = vmatpush1.msra.mxu0 %v7228
    %7230 = vmatprep.subr.mxu0 0.0
    %7231 = vmatpush1.msra.mxu0 0.0
    %7232 = vmatprep.subr.mxu0 0.0
    %7233 = vmatpush1.msra.mxu0 0.0
    %7234 = vmatprep.subr.mxu0 0.0
    %7235 = vmatpush1.msra.mxu0 0.0
    %7236 = vmatprep.subr.mxu0 0.0
    %7237 = vmatpush1.msra.mxu0 0.0
    %7238 = vmatprep.subr.mxu0 0.0
    %7239 = vmatpush1.msra.mxu0 0.0
    %7240 = vmatprep.subr.mxu0 0.0
    %7241 = vmatpush1.msra.mxu0 0.0
    %7242 = vmatprep.subr.mxu0 0.0
    %7243 = vmatpush1.msra.mxu0 0.0
    %7244 = vmatprep.subr.mxu0 0.0
    %7245 = vmatpush1.msra.mxu0 0.0
    %7246 = vmatprep.subr.mxu0 0.0
    %7247 = vmatpush1.msra.mxu0 0.0
    %7248 = vmatprep.subr.mxu0 0.0
    %7249 = vmatpush1.msra.mxu0 0.0
    %7250 = vmatprep.subr.mxu0 0.0
    %7251 = vmatpush1.msra.mxu0 0.0
    %7252 = vmatprep.subr.mxu0 0.0
    %7253 = vmatpush1.msra.mxu0 0.0
    %7254 = vmatprep.subr.mxu0 0.0
    %7255 = vmatpush1.msra.mxu0 0.0
    %7256 = vmatprep.subr.mxu0 0.0
    %7257 = vmatpush1.msra.mxu0 0.0
    %7258 = vmatprep.subr.mxu0 0.0
    %7259 = vmatpush1.msra.mxu0 0.0
    %7260 = vmatprep.subr.mxu0 0.0
    %7261 = vmatpush1.msra.mxu0 0.0
    %7262 = vmatprep.subr.mxu0 0.0
    %7263 = vmatpush1.msra.mxu0 0.0
    %7264 = vmatprep.subr.mxu0 0.0
    %7265 = vmatpush1.msra.mxu0 0.0
    %7266 = vmatprep.subr.mxu0 0.0
    %7267 = vmatpush1.msra.mxu0 0.0
    %7268 = vmatprep.subr.mxu0 0.0
    %7269 = vmatpush1.msra.mxu0 0.0
    %7270 = vmatprep.subr.mxu0 0.0
    %7271 = vmatpush1.msra.mxu0 0.0
    %7272 = vmatprep.subr.mxu0 0.0
    %7273 = vmatpush1.msra.mxu0 0.0
    %7274 = vmatprep.subr.mxu0 0.0
    %7275 = vmatpush1.msra.mxu0 0.0
    %7276 = vmatprep.subr.mxu0 0.0
    %7277 = vmatpush1.msra.mxu0 0.0
    %7278 = vmatprep.subr.mxu0 0.0
    %7279 = vmatpush1.msra.mxu0 0.0
    %7280 = vmatprep.subr.mxu0 0.0
    %7281 = vmatpush1.msra.mxu0 0.0
    %7282 = vmatprep.subr.mxu0 0.0
    %7283 = vmatpush1.msra.mxu0 0.0
    %7284 = vmatprep.subr.mxu0 0.0
    %7285 = vmatpush1.msra.mxu0 0.0
    %7286 = vmatprep.subr.mxu0 0.0
    %7287 = vmatpush1.msra.mxu0 0.0
    %7288 = vmatprep.subr.mxu0 0.0
    %7289 = vmatpush1.msra.mxu0 0.0
    %7290 = vmatprep.subr.mxu0 0.0
    %7291 = vmatpush1.msra.mxu0 0.0
    %7292 = vmatprep.mubr.f32.mxu0 0.0
    %v7293 = vand.u32 %v6923, 4294901760
    %7294 = vmatmul.mubr.f32.gmra.mrb[0].mxu0 %v7293
    %v7295 = vpop.f32.mrb[0].mxu0
    %v7296 = vadd.f32 %v7222, %v7295
    %v7297 = vpop.f32.mrb[0].mxu0
    %7298 = vdwg.mxu0
    %7299 = vmatprep.subr.mxu0 0.0
    %v7300 = vand.u32 %v6024, 4294901760
    %7301 = vmatpush1.msra.mxu0 %v7300
    %7302 = vmatprep.subr.mxu0 0.0
    %7303 = vmatpush1.msra.mxu0 0.0
    %7304 = vmatprep.subr.mxu0 0.0
    %7305 = vmatpush1.msra.mxu0 0.0
    %7306 = vmatprep.subr.mxu0 0.0
    %7307 = vmatpush1.msra.mxu0 0.0
    %7308 = vmatprep.subr.mxu0 0.0
    %7309 = vmatpush1.msra.mxu0 0.0
    %7310 = vmatprep.subr.mxu0 0.0
    %7311 = vmatpush1.msra.mxu0 0.0
    %7312 = vmatprep.subr.mxu0 0.0
    %7313 = vmatpush1.msra.mxu0 0.0
    %7314 = vmatprep.subr.mxu0 0.0
    %7315 = vmatpush1.msra.mxu0 0.0
    %7316 = vmatprep.subr.mxu0 0.0
    %7317 = vmatpush1.msra.mxu0 0.0
    %7318 = vmatprep.subr.mxu0 0.0
    %7319 = vmatpush1.msra.mxu0 0.0
    %7320 = vmatprep.subr.mxu0 0.0
    %7321 = vmatpush1.msra.mxu0 0.0
    %7322 = vmatprep.subr.mxu0 0.0
    %7323 = vmatpush1.msra.mxu0 0.0
    %7324 = vmatprep.subr.mxu0 0.0
    %7325 = vmatpush1.msra.mxu0 0.0
    %7326 = vmatprep.subr.mxu0 0.0
    %7327 = vmatpush1.msra.mxu0 0.0
    %7328 = vmatprep.subr.mxu0 0.0
    %7329 = vmatpush1.msra.mxu0 0.0
    %7330 = vmatprep.subr.mxu0 0.0
    %7331 = vmatpush1.msra.mxu0 0.0
    %7332 = vmatprep.subr.mxu0 0.0
    %7333 = vmatpush1.msra.mxu0 0.0
    %7334 = vmatprep.subr.mxu0 0.0
    %7335 = vmatpush1.msra.mxu0 0.0
    %7336 = vmatprep.subr.mxu0 0.0
    %7337 = vmatpush1.msra.mxu0 0.0
    %7338 = vmatprep.subr.mxu0 0.0
    %7339 = vmatpush1.msra.mxu0 0.0
    %7340 = vmatprep.subr.mxu0 0.0
    %7341 = vmatpush1.msra.mxu0 0.0
    %7342 = vmatprep.subr.mxu0 0.0
    %7343 = vmatpush1.msra.mxu0 0.0
    %7344 = vmatprep.subr.mxu0 0.0
    %7345 = vmatpush1.msra.mxu0 0.0
    %7346 = vmatprep.subr.mxu0 0.0
    %7347 = vmatpush1.msra.mxu0 0.0
    %7348 = vmatprep.subr.mxu0 0.0
    %7349 = vmatpush1.msra.mxu0 0.0
    %7350 = vmatprep.subr.mxu0 0.0
    %7351 = vmatpush1.msra.mxu0 0.0
    %7352 = vmatprep.subr.mxu0 0.0
    %7353 = vmatpush1.msra.mxu0 0.0
    %7354 = vmatprep.subr.mxu0 0.0
    %7355 = vmatpush1.msra.mxu0 0.0
    %7356 = vmatprep.subr.mxu0 0.0
    %7357 = vmatpush1.msra.mxu0 0.0
    %7358 = vmatprep.subr.mxu0 0.0
    %7359 = vmatpush1.msra.mxu0 0.0
    %7360 = vmatprep.subr.mxu0 0.0
    %7361 = vmatpush1.msra.mxu0 0.0
    %7362 = vmatprep.subr.mxu0 0.0
    %7363 = vmatpush1.msra.mxu0 0.0
    %7364 = vmatprep.mubr.f32.mxu0 0.0
    %v7365 = vand.u32 %v6923, 4294901760
    %7366 = vmatmul.mubr.f32.gmra.mrb[0].mxu0 %v7365
    %v7367 = vpop.f32.mrb[0].mxu0
    %v7368 = vadd.f32 %v7296, %v7367
    %v7369 = vpop.f32.mrb[0].mxu0
    %7370 = vdwg.mxu0
    %v7371 = vmul.f32 %v6919, %v7368
    %v7372 = vadd.f32 %v6472, %v7371
    %v7373 = vsub.f32 %v4542, %v7372
    %s7374 = scalar_lea.vmem %s14, %s164
    %vm7375 = vcmask 27648
    %7376 = vst.msk [vmem:[%s7374] sm:$0xf] %vm7375, %v5544
    %7379 = vrot.lane.b32.xlu0 %v1621, 96
    %v7380 = vpop.permute.xlu0 %7379
  $region66: #{tpu_custom_call.1} parent=0 // loop_footer
    %s158 = sadd.s32 1, %s154
  $region67: #{tpu_custom_call.1} parent=0 // loop_footer_branch
    %153 = sbr.rel target = $region63
  $region68: #{tpu_custom_call.1} parent=0 // loop_exit
    _
  %vm7382 = vcmask 257024
  %7383 = vst.msk [vmem:[#allocation2] sm:$0xf] %vm7382, %v159
  %7384 = vst.msk [vmem:[#allocation3] sm:$0xf] %vm7382, %v161
  %vm7385 = vcmask 27648
  %7386 = vst.msk [vmem:[#allocation4] sm:$0xf] %vm7385, %v162
  %vm7387 = vcmask 125952
  %7388 = vst.msk [vmem:[#allocation5] sm:$0xf] %vm7387, %v163
  // Predicated region
  $region69: #{tpu_custom_call.1} parent=0 // pred_check
    _
  $region70: #{tpu_custom_call.1} parent=0 // pred_check_branch
    %7390 = sbr.rel (0) target = $region72
  $region71: #{tpu_custom_call.1} parent=0 // pred_region
    _
  $region72: #{tpu_custom_call.1} parent=0 // pred_fallthru
    _
  // Predicated region
  $region73: #{tpu_custom_call.1} parent=0 // pred_check
    _
  $region74: #{tpu_custom_call.1} parent=0 // pred_check_branch
    %7392 = sbr.rel (0) target = $region76
  $region75: #{tpu_custom_call.1} parent=0 // pred_region
    _
  $region76: #{tpu_custom_call.1} parent=0 // pred_fallthru
    _

</llo_original>
